<compile_context>
chip_gen: v5e
topology: v5e:2x2
jax: 0.10.0
libtpu: 0.0.40
codegen_flags: <defaults>
</compile_context>

<pallas_src>
import numpy as np
import jax
import jax.numpy as jnp
from jax.experimental import pallas as pl
from jax.experimental.pallas import tpu as pltpu


def _round_up(x, m):
    return (x + m - 1) // m * m


# ----------------------------------------------------------------------------
# Static "dot plans": group conv taps that read the same activation lane slab
# with the same (sublane-aligned) row shift into a single MXU dot.
# ----------------------------------------------------------------------------
def _l2_plan(n_pad, c1, c2):
    """Layer-2 (5x5 / stride 2 / pad 2) plan.

    a1 layout: rows = (hp*6 + wp)*n_pad + n over a zero-padded 6x6 coarse grid,
    lanes = (pw*4 + ph)*c1 + c   (mod-4 spatial phase blocks, lane dense).
    One dot per key (pa, gh, gw, pw): LHS = the full 128-lane tile of phase
    column pw read at row shift (6*gh+gw)*n_pad; RHS = (4*c1, 4*c2) with each
    tap's weights at rows ph*c1 and columns (pa*2+pb)*c2.  Taps of different
    output phases that share a key share the dot; absent ph rows stay zero.
    """
    groups, order = {}, []
    for pa in range(2):
        for pb in range(2):
            for i in range(5):
                for j in range(5):
                    rh, rw = 2 * pa + i - 2, 2 * pb + j - 2
                    ph, gh = rh % 4, rh // 4
                    pw, gw = rw % 4, rw // 4
                    key = (pa, gh, gw, pw)
                    if key not in groups:
                        groups[key] = []
                        order.append(key)
                    groups[key].append((ph, i, j, pa, pb))
    plan = []
    for idx, key in enumerate(order):
        _, gh, gw, pw = key
        plan.append(dict(shift=(6 * gh + gw) * n_pad,
                         lane_lo=pw * 4 * c1,
                         k=4 * c1,
                         wrow=idx * 4 * c1,
                         taps=tuple(groups[key])))
    return plan, len(order) * 4 * c1


def _pack_w2(w2, plan, rows, c1, c2):
    w2 = np.asarray(w2, np.float32)                      # (5,5,c1,c2) HWIO
    W = np.zeros((rows, 4 * c2), np.float32)
    for g in plan:
        for (ph, i, j, pa, pb) in g['taps']:
            W[g['wrow'] + ph * c1:g['wrow'] + (ph + 1) * c1,
              (pa * 2 + pb) * c2:(pa * 2 + pb + 1) * c2] = w2[i, j]
    return W


def _l3_plan(n_pad, c2):
    """Layer-3 (5x5 / stride 2 / pad 2) plan over a2.

    a2 layout: rows as above, lanes = (pa*2 + pb)*c2 + c (mod-2 phase blocks).
    Taps are grouped by coarse row shift (di, dj); within a group the source
    phase blocks are K-concatenated whenever they are lane-contiguous.
    """
    I3 = {-1: (0, 1), 0: (2, 3), 1: (4,)}
    plan, wrow = [], 0
    for di in (-1, 0, 1):
        for dj in (-1, 0, 1):
            entries = sorted(((i % 2) * 2 + (j % 2), i, j)
                             for i in I3[di] for j in I3[dj])
            runs = [[entries[0]]]
            for e in entries[1:]:
                if e[0] == runs[-1][-1][0] + 1:
                    runs[-1].append(e)
                else:
                    runs.append([e])
            for run in runs:
                plan.append(dict(shift=(6 * di + dj) * n_pad,
                                 lane_lo=run[0][0] * c2,
                                 k=len(run) * c2,
                                 wrow=wrow,
                                 taps=tuple((idx, i, j)
                                            for idx, (_, i, j) in enumerate(run))))
                wrow += len(run) * c2
    return plan, wrow


def _pack_w3(w3, plan, rows, c2, c3):
    w3 = np.asarray(w3, np.float32)                      # (5,5,c2,c3)
    W = np.zeros((rows, c3), np.float32)
    for g in plan:
        for (idx, i, j) in g['taps']:
            W[g['wrow'] + idx * c2:g['wrow'] + (idx + 1) * c2, :] = w3[i, j]
    return W


# ----------------------------------------------------------------------------
# Fused encoder builder: packs weights once, builds one pallas_call, returns a
# jitted forward(x_nhwc) -> (mu, logvar).
# ----------------------------------------------------------------------------
def make_encoder(params, N):
    (w1, b1, *_), (w2, b2, *_), (w3, b3, *_), (w4, b4, *_), (w5, b5, *_) = params
    d_model = w1.shape[-1]
    assert d_model % 8 == 0
    C1, C2, C3, C4 = d_model, d_model // 2, d_model // 4, d_model // 8
    C5 = 2 * C4
    NP = max(8, _round_up(N, 8))   # padded batch stride -> all row shifts % 8 == 0
    G = 7 * NP                     # guard rows (>= max |row shift|)
    R = 36 * NP                    # 6x6 zero-padded coarse grid * padded batch
    RT = R + 2 * G
    A1W = 16 * C1                  # a1 lane width (16 mod-4 phase blocks)
    A2W = 4 * C2                   # a2 lane width (4 mod-2 phase blocks)
    XW = 32                        # x slab lane width (16 phases + mask + zero pad)

    l2_plan, l2_rows = _l2_plan(NP, C1, C2)
    l3_plan, l3_rows = _l3_plan(NP, C2)

    # ---- host-side packing: everything lands in three lane-dense weight slabs
    w1aug = np.zeros((XW, A1W), np.float32)
    w1f = np.asarray(w1, np.float32).reshape(C1)
    b1f = np.asarray(b1, np.float32).reshape(C1)
    for p in range(16):
        w1aug[p, p * C1:(p + 1) * C1] = w1f
        w1aug[16, p * C1:(p + 1) * C1] = b1f   # bias rides the mask column of x

    w2pack = _pack_w2(w2, l2_plan, l2_rows, C1, C2)

    W4_OFF = _round_up(l3_rows, 8)
    W5_OFF = _round_up(W4_OFF + 16 * C3, 8)
    B2_OFF = _round_up(W5_OFF + C4, 8)
    B3_OFF = B2_OFF + 8
    B4_OFF = B3_OFF + 8
    B5_OFF = B4_OFF + 8
    WT_ROWS = B5_OFF + 8
    wtail = np.zeros((WT_ROWS, A2W), np.float32)
    wtail[:l3_rows, :C3] = _pack_w3(w3, l3_plan, l3_rows, C2, C3)
    w4np = np.asarray(w4, np.float32)
    for i in range(4):
        for j in range(4):
            r = W4_OFF + (i * 4 + j) * C3
            wtail[r:r + C3, :C4] = w4np[i, j]
    wtail[W5_OFF:W5_OFF + C4, :C5] = np.asarray(w5, np.float32).reshape(C4, C5)
    wtail[B2_OFF, :A2W] = np.tile(np.asarray(b2, np.float32).reshape(C2), 4)
    wtail[B3_OFF, :C3] = np.asarray(b3, np.float32).reshape(C3)
    wtail[B4_OFF, :C4] = np.asarray(b4, np.float32).reshape(C4)
    wtail[B5_OFF, :C5] = np.asarray(b5, np.float32).reshape(C5)

    # interior mask column: 1 on real (non conv-padding) coarse rows
    mask_np = np.zeros((6, 6, NP, 1), np.float32)
    mask_np[1:5, 1:5, :, :] = 1.0
    mask_np = mask_np.reshape(R, 1)

    # ------------------------------------------------------------------------
    def kernel(x_ref, w1_ref, w2_ref, wt_ref, o_ref, a1g, a2g, lhs4):
        # layer 1: 1x1 conv (+ bias via the mask column of x) as one MXU dot.
        # Guard / conv-padding / batch-padding rows of x are all-zero, so the
        # corresponding a1 rows come out exactly zero.
        a1g[...] = jnp.maximum(
            jnp.dot(x_ref[...], w1_ref[...], preferred_element_type=jnp.float32),
            0.0)
        mask = x_ref[G:G + R, 16:17]                       # (R, 1)

        # layer 2: 28 grouped dots (K = 4*C1, lane-tile aligned LHS, sublane
        # aligned row shifts), register accumulation, single epilogue + store.
        acc2 = None
        for g in l2_plan:
            lhs = a1g[G + g['shift']:G + g['shift'] + R,
                      g['lane_lo']:g['lane_lo'] + g['k']]
            rhs = w2_ref[g['wrow']:g['wrow'] + g['k'], :]
            d = jnp.dot(lhs, rhs, preferred_element_type=jnp.float32)
            acc2 = d if acc2 is None else acc2 + d
        b2v = wt_ref[B2_OFF:B2_OFF + 1, :A2W]
        a2g[G:G + R, :] = jnp.maximum(acc2 + b2v, 0.0) * mask
        a2g[0:G, :] = jnp.zeros((G, A2W), jnp.float32)
        a2g[G + R:RT, :] = jnp.zeros((G, A2W), jnp.float32)

        # layer 3: 11 grouped dots, register accumulation.
        acc3 = None
        for g in l3_plan:
            lhs = a2g[G + g['shift']:G + g['shift'] + R,
                      g['lane_lo']:g['lane_lo'] + g['k']]
            rhs = wt_ref[g['wrow']:g['wrow'] + g['k'], :C3]
            d = jnp.dot(lhs, rhs, preferred_element_type=jnp.float32)
            acc3 = d if acc3 is None else acc3 + d
        b3v = wt_ref[B3_OFF:B3_OFF + 1, :C3]
        # mask is not strictly required here (layer 4 only reads interior rows)
        # but keeps padding rows exactly zero.
        a3 = jnp.maximum(acc3 + b3v, 0.0) * mask           # (R, C3)

        # layer 4: K-concatenate the 16 interior 4x4 windows into a tiny VMEM
        # slab and run a single (NP, 16*C3) x (16*C3, C4) dot.
        for i in range(4):
            for j in range(4):
                r0 = ((i + 1) * 6 + (j + 1)) * NP
                lhs4[:, (i * 4 + j) * C3:(i * 4 + j + 1) * C3] = a3[r0:r0 + NP, :]
        w4v = wt_ref[W4_OFF:W4_OFF + 16 * C3, :C4]
        b4v = wt_ref[B4_OFF:B4_OFF + 1, :C4]
        a4 = jnp.maximum(
            jnp.dot(lhs4[...], w4v, preferred_element_type=jnp.float32) + b4v, 0.0)

        # layer 5: 1x1 conv, no ReLU.
        w5v = wt_ref[W5_OFF:W5_OFF + C4, :C5]
        b5v = wt_ref[B5_OFF:B5_OFF + 1, :C5]
        o_ref[...] = jnp.dot(a4, w5v, preferred_element_type=jnp.float32) + b5v

    vmem = pl.BlockSpec(memory_space=pltpu.MemorySpace.VMEM)
    call = pl.pallas_call(
        kernel,
        out_shape=jax.ShapeDtypeStruct((NP, C5), jnp.float32),
        in_specs=[vmem] * 4,
        out_specs=vmem,
        scratch_shapes=[
            pltpu.VMEM((RT, A1W), jnp.float32),       # a1 (guard-banded, lane dense)
            pltpu.VMEM((RT, A2W), jnp.float32),       # a2 (guard-banded, lane dense)
            pltpu.VMEM((NP, 16 * C3), jnp.float32),   # layer-4 K-concat LHS
        ],
        compiler_params=pltpu.CompilerParams(vmem_limit_bytes=32 * 1024 * 1024),
    )
    # TODO(synk): for large batches add a ("parallel",) grid over batch chunks so
    # v7x's two TensorCores are both used; at N=2 a single grid-less call is best.

    w1aug_d = jnp.asarray(w1aug)
    w2pack_d = jnp.asarray(w2pack)
    wtail_d = jnp.asarray(wtail)
    mask_d = jnp.asarray(mask_np)
    zpad_d = jnp.zeros((R, XW - 17), jnp.float32)

    @jax.jit
    def forward(x_nhwc):
        # phase-split x (mod-4 spatial phases on lanes), zero-pad the coarse grid,
        # the batch (to NP) and the guard rows, and append the interior-mask column.
        xs = x_nhwc[..., 0].reshape(N, 4, 4, 4, 4)          # (n, h4, ph, w4, pw)
        xs = jnp.transpose(xs, (1, 3, 0, 4, 2))             # (h4, w4, n, pw, ph)
        xs = jnp.pad(xs, ((1, 1), (1, 1), (0, NP - N), (0, 0), (0, 0)))
        xs = xs.reshape(R, 16).astype(jnp.float32)
        xaug = jnp.concatenate([xs, mask_d, zpad_d], axis=1)
        xaug = jnp.pad(xaug, ((G, G), (0, 0)))              # (RT, 32)
        out = call(xaug, w1aug_d, w2pack_d, wtail_d)        # (NP, C5)
        out = out[:N].reshape(N, 1, 1, C5)
        # PyTorch .chunk(2, dim=1) on NCHW == split channel (last) dim in NHWC
        mu, logvar = jnp.split(out, 2, axis=-1)
        return mu, logvar

    return forward


# ----------------------------------------------------------------------------
# weight_norm parameter construction (deterministic, in-script)
# ----------------------------------------------------------------------------
def init_wn_conv(key, cin, cout, kh, kw):
    kv, kg, kb = jax.random.split(key, 3)
    v = jax.random.normal(kv, (kh, kw, cin, cout), jnp.float32) * 0.1
    g = jax.random.uniform(kg, (cout,), jnp.float32, minval=0.5, maxval=1.5)
    b = jax.random.normal(kb, (cout,), jnp.float32) * 0.1
    # PyTorch weight_norm(dim=0): w[o] = g[o] * v[o] / ||v[o]||_F  (norm over cin,kh,kw)
    norm = jnp.sqrt(jnp.sum(v * v, axis=(0, 1, 2), keepdims=True) + 1e-12)
    w = v / norm * g.reshape(1, 1, 1, cout)
    return w, b


def build_encoder_params(d_model, key):
    cfg = [
        (1, d_model, 1, 1, 1, 0, True),
        (d_model, d_model // 2, 5, 5, 2, 2, True),
        (d_model // 2, d_model // 4, 5, 5, 2, 2, True),
        (d_model // 4, d_model // 8, 4, 4, 1, 0, True),
        (d_model // 8, 2 * d_model // 8, 1, 1, 1, 0, False),
    ]
    params = []
    keys = jax.random.split(key, len(cfg))
    for k, (cin, cout, kh, kw, stride, pad, relu) in zip(keys, cfg):
        w, b = init_wn_conv(k, cin, cout, kh, kw)
        params.append((w, b, stride, pad, relu))
    return params


# ----------------------------------------------------------------------------
# Pure-JAX reference (for correctness check)
# ----------------------------------------------------------------------------
def encoder_forward_ref(params, x_nhwc):
    h = x_nhwc
    for (w, b, stride, pad, relu) in params:
        h = jax.lax.conv_general_dilated(
            h, w, window_strides=(stride, stride),
            padding=[(pad, pad), (pad, pad)],
            dimension_numbers=("NHWC", "HWIO", "NHWC"),
        ) + b.reshape(1, 1, 1, -1)
        if relu:
            h = jnp.maximum(h, 0.0)
    return jnp.split(h, 2, axis=-1)


if __name__ == "__main__":
    d_model = 32
    key = jax.random.PRNGKey(0)
    k_x, k_p = jax.random.split(key)

    # Input consistent with the PyTorch module: NCHW (2, 1, 16, 16)
    x_nchw = jax.random.normal(k_x, (2, 1, 16, 16), jnp.float32)
    x_nhwc = jnp.transpose(x_nchw, (0, 2, 3, 1))

    params = build_encoder_params(d_model, k_p)
    forward = make_encoder(params, N=2)

    mu, logvar = forward(x_nhwc)
    mu, logvar = jax.block_until_ready((mu, logvar))

    mu_ref, logvar_ref = encoder_forward_ref(params, x_nhwc)

    assert mu.shape == (2, 1, 1, d_model // 8), mu.shape
    assert logvar.shape == (2, 1, 1, d_model // 8), logvar.shape
    assert jnp.allclose(mu, mu_ref, rtol=1e-4, atol=1e-4)
    assert jnp.allclose(logvar, logvar_ref, rtol=1e-4, atol=1e-4)

    print("KERNEL_OK")
</pallas_src>

<mosaic_0001>
module attributes {stable_mosaic.version = 11 : i64} {
  func.func @kernel(%arg0: memref<400x32xf32, #tpu.memory_space<vmem>>, %arg1: memref<32x512xf32, #tpu.memory_space<vmem>>, %arg2: memref<3584x64xf32, #tpu.memory_space<vmem>>, %arg3: memref<568x64xf32, #tpu.memory_space<vmem>>, %arg4: memref<8x8xf32, #tpu.memory_space<vmem>>, %arg5: memref<400x512xf32, #tpu.memory_space<vmem>>, %arg6: memref<400x64xf32, #tpu.memory_space<vmem>>, %arg7: memref<8x128xf32, #tpu.memory_space<vmem>>) attributes {dimension_semantics = [], scalar_prefetch = 0 : i64, scratch_operands = 3 : i64, tpu.core_type = #tpu.core_type<tc>} {
    %c0 = arith.constant 0 : index
    %c0_0 = arith.constant 0 : index
    %0 = vector.load %arg0[%c0, %c0_0] : memref<400x32xf32, #tpu.memory_space<vmem>>, vector<400x32xf32>
    %c0_1 = arith.constant 0 : index
    %c0_2 = arith.constant 0 : index
    %1 = vector.load %arg1[%c0_1, %c0_2] : memref<32x512xf32, #tpu.memory_space<vmem>>, vector<32x512xf32>
    %cst = arith.constant dense<0.000000e+00> : vector<400x512xf32>
    %2 = tpu.matmul %0, %1, %cst {dimension_numbers = #tpu.dot_dimension_numbers<[1], [0], [0], [1], [0, 0, 1, 1], [], []>} : vector<400x32xf32>, vector<32x512xf32>, vector<400x512xf32> -> vector<400x512xf32>
    %cst_3 = arith.constant 0.000000e+00 : f32
    %3 = vector.broadcast %cst_3 : f32 to vector<400x512xf32>
    %4 = arith.maximumf %2, %3 : vector<400x512xf32>
    %c0_4 = arith.constant 0 : index
    %c0_5 = arith.constant 0 : index
    %5 = vector.load %arg5[%c0_4, %c0_5] : memref<400x512xf32, #tpu.memory_space<vmem>>, vector<400x512xf32>
    tpu.vector_store %arg5[%c0_4, %c0_5], %4 {strides = array<i32>} : memref<400x512xf32, #tpu.memory_space<vmem>>, vector<400x512xf32>,
    %c56 = arith.constant 56 : index
    %c16 = arith.constant 16 : index
    %6 = vector.load %arg0[%c56, %c16] : memref<400x32xf32, #tpu.memory_space<vmem>>, vector<288x1xf32>
    %c0_6 = arith.constant 0 : index
    %c256 = arith.constant 256 : index
    %7 = vector.load %arg5[%c0_6, %c256] : memref<400x512xf32, #tpu.memory_space<vmem>>, vector<288x128xf32>
    %c0_7 = arith.constant 0 : index
    %c0_8 = arith.constant 0 : index
    %8 = vector.load %arg2[%c0_7, %c0_8] : memref<3584x64xf32, #tpu.memory_space<vmem>>, vector<128x64xf32>
    %cst_9 = arith.constant dense<0.000000e+00> : vector<288x64xf32>
    %9 = tpu.matmul %7, %8, %cst_9 {dimension_numbers = #tpu.dot_dimension_numbers<[1], [0], [0], [1], [0, 0, 1, 1], [], []>} : vector<288x128xf32>, vector<128x64xf32>, vector<288x64xf32> -> vector<288x64xf32>
    %c0_10 = arith.constant 0 : index
    %c384 = arith.constant 384 : index
    %10 = vector.load %arg5[%c0_10, %c384] : memref<400x512xf32, #tpu.memory_space<vmem>>, vector<288x128xf32>
    %c128 = arith.constant 128 : index
    %c0_11 = arith.constant 0 : index
    %11 = vector.load %arg2[%c128, %c0_11] : memref<3584x64xf32, #tpu.memory_space<vmem>>, vector<128x64xf32>
    %cst_12 = arith.constant dense<0.000000e+00> : vector<288x64xf32>
    %12 = tpu.matmul %10, %11, %cst_12 {dimension_numbers = #tpu.dot_dimension_numbers<[1], [0], [0], [1], [0, 0, 1, 1], [], []>} : vector<288x128xf32>, vector<128x64xf32>, vector<288x64xf32> -> vector<288x64xf32>
    %13 = arith.addf %9, %12 : vector<288x64xf32>
    %c8 = arith.constant 8 : index
    %c0_13 = arith.constant 0 : index
    %14 = vector.load %arg5[%c8, %c0_13] : memref<400x512xf32, #tpu.memory_space<vmem>>, vector<288x128xf32>
    %c256_14 = arith.constant 256 : index
    %c0_15 = arith.constant 0 : index
    %15 = vector.load %arg2[%c256_14, %c0_15] : memref<3584x64xf32, #tpu.memory_space<vmem>>, vector<128x64xf32>
    %cst_16 = arith.constant dense<0.000000e+00> : vector<288x64xf32>
    %16 = tpu.matmul %14, %15, %cst_16 {dimension_numbers = #tpu.dot_dimension_numbers<[1], [0], [0], [1], [0, 0, 1, 1], [], []>} : vector<288x128xf32>, vector<128x64xf32>, vector<288x64xf32> -> vector<288x64xf32>
    %17 = arith.addf %13, %16 : vector<288x64xf32>
    %c8_17 = arith.constant 8 : index
    %c128_18 = arith.constant 128 : index
    %18 = vector.load %arg5[%c8_17, %c128_18] : memref<400x512xf32, #tpu.memory_space<vmem>>, vector<288x128xf32>
    %c384_19 = arith.constant 384 : index
    %c0_20 = arith.constant 0 : index
    %19 = vector.load %arg2[%c384_19, %c0_20] : memref<3584x64xf32, #tpu.memory_space<vmem>>, vector<128x64xf32>
    %cst_21 = arith.constant dense<0.000000e+00> : vector<288x64xf32>
    %20 = tpu.matmul %18, %19, %cst_21 {dimension_numbers = #tpu.dot_dimension_numbers<[1], [0], [0], [1], [0, 0, 1, 1], [], []>} : vector<288x128xf32>, vector<128x64xf32>, vector<288x64xf32> -> vector<288x64xf32>
    %21 = arith.addf %17, %20 : vector<288x64xf32>
    %c8_22 = arith.constant 8 : index
    %c256_23 = arith.constant 256 : index
    %22 = vector.load %arg5[%c8_22, %c256_23] : memref<400x512xf32, #tpu.memory_space<vmem>>, vector<288x128xf32>
    %c512 = arith.constant 512 : index
    %c0_24 = arith.constant 0 : index
    %23 = vector.load %arg2[%c512, %c0_24] : memref<3584x64xf32, #tpu.memory_space<vmem>>, vector<128x64xf32>
    %cst_25 = arith.constant dense<0.000000e+00> : vector<288x64xf32>
    %24 = tpu.matmul %22, %23, %cst_25 {dimension_numbers = #tpu.dot_dimension_numbers<[1], [0], [0], [1], [0, 0, 1, 1], [], []>} : vector<288x128xf32>, vector<128x64xf32>, vector<288x64xf32> -> vector<288x64xf32>
    %25 = arith.addf %21, %24 : vector<288x64xf32>
    %c48 = arith.constant 48 : index
    %c256_26 = arith.constant 256 : index
    %26 = vector.load %arg5[%c48, %c256_26] : memref<400x512xf32, #tpu.memory_space<vmem>>, vector<288x128xf32>
    %c640 = arith.constant 640 : index
    %c0_27 = arith.constant 0 : index
    %27 = vector.load %arg2[%c640, %c0_27] : memref<3584x64xf32, #tpu.memory_space<vmem>>, vector<128x64xf32>
    %cst_28 = arith.constant dense<0.000000e+00> : vector<288x64xf32>
    %28 = tpu.matmul %26, %27, %cst_28 {dimension_numbers = #tpu.dot_dimension_numbers<[1], [0], [0], [1], [0, 0, 1, 1], [], []>} : vector<288x128xf32>, vector<128x64xf32>, vector<288x64xf32> -> vector<288x64xf32>
    %29 = arith.addf %25, %28 : vector<288x64xf32>
    %c48_29 = arith.constant 48 : index
    %c384_30 = arith.constant 384 : index
    %30 = vector.load %arg5[%c48_29, %c384_30] : memref<400x512xf32, #tpu.memory_space<vmem>>, vector<288x128xf32>
    %c768 = arith.constant 768 : index
    %c0_31 = arith.constant 0 : index
    %31 = vector.load %arg2[%c768, %c0_31] : memref<3584x64xf32, #tpu.memory_space<vmem>>, vector<128x64xf32>
    %cst_32 = arith.constant dense<0.000000e+00> : vector<288x64xf32>
    %32 = tpu.matmul %30, %31, %cst_32 {dimension_numbers = #tpu.dot_dimension_numbers<[1], [0], [0], [1], [0, 0, 1, 1], [], []>} : vector<288x128xf32>, vector<128x64xf32>, vector<288x64xf32> -> vector<288x64xf32>
    %33 = arith.addf %29, %32 : vector<288x64xf32>
    %c56_33 = arith.constant 56 : index
    %c0_34 = arith.constant 0 : index
    %34 = vector.load %arg5[%c56_33, %c0_34] : memref<400x512xf32, #tpu.memory_space<vmem>>, vector<288x128xf32>
    %c896 = arith.constant 896 : index
    %c0_35 = arith.constant 0 : index
    %35 = vector.load %arg2[%c896, %c0_35] : memref<3584x64xf32, #tpu.memory_space<vmem>>, vector<128x64xf32>
    %cst_36 = arith.constant dense<0.000000e+00> : vector<288x64xf32>
    %36 = tpu.matmul %34, %35, %cst_36 {dimension_numbers = #tpu.dot_dimension_numbers<[1], [0], [0], [1], [0, 0, 1, 1], [], []>} : vector<288x128xf32>, vector<128x64xf32>, vector<288x64xf32> -> vector<288x64xf32>
    %37 = arith.addf %33, %36 : vector<288x64xf32>
    %c56_37 = arith.constant 56 : index
    %c128_38 = arith.constant 128 : index
    %38 = vector.load %arg5[%c56_37, %c128_38] : memref<400x512xf32, #tpu.memory_space<vmem>>, vector<288x128xf32>
    %c1024 = arith.constant 1024 : index
    %c0_39 = arith.constant 0 : index
    %39 = vector.load %arg2[%c1024, %c0_39] : memref<3584x64xf32, #tpu.memory_space<vmem>>, vector<128x64xf32>
    %cst_40 = arith.constant dense<0.000000e+00> : vector<288x64xf32>
    %40 = tpu.matmul %38, %39, %cst_40 {dimension_numbers = #tpu.dot_dimension_numbers<[1], [0], [0], [1], [0, 0, 1, 1], [], []>} : vector<288x128xf32>, vector<128x64xf32>, vector<288x64xf32> -> vector<288x64xf32>
    %41 = arith.addf %37, %40 : vector<288x64xf32>
    %c56_41 = arith.constant 56 : index
    %c256_42 = arith.constant 256 : index
    %42 = vector.load %arg5[%c56_41, %c256_42] : memref<400x512xf32, #tpu.memory_space<vmem>>, vector<288x128xf32>
    %c1152 = arith.constant 1152 : index
    %c0_43 = arith.constant 0 : index
    %43 = vector.load %arg2[%c1152, %c0_43] : memref<3584x64xf32, #tpu.memory_space<vmem>>, vector<128x64xf32>
    %cst_44 = arith.constant dense<0.000000e+00> : vector<288x64xf32>
    %44 = tpu.matmul %42, %43, %cst_44 {dimension_numbers = #tpu.dot_dimension_numbers<[1], [0], [0], [1], [0, 0, 1, 1], [], []>} : vector<288x128xf32>, vector<128x64xf32>, vector<288x64xf32> -> vector<288x64xf32>
    %45 = arith.addf %41, %44 : vector<288x64xf32>
    %c8_45 = arith.constant 8 : index
    %c384_46 = arith.constant 384 : index
    %46 = vector.load %arg5[%c8_45, %c384_46] : memref<400x512xf32, #tpu.memory_space<vmem>>, vector<288x128xf32>
    %c1280 = arith.constant 1280 : index
    %c0_47 = arith.constant 0 : index
    %47 = vector.load %arg2[%c1280, %c0_47] : memref<3584x64xf32, #tpu.memory_space<vmem>>, vector<128x64xf32>
    %cst_48 = arith.constant dense<0.000000e+00> : vector<288x64xf32>
    %48 = tpu.matmul %46, %47, %cst_48 {dimension_numbers = #tpu.dot_dimension_numbers<[1], [0], [0], [1], [0, 0, 1, 1], [], []>} : vector<288x128xf32>, vector<128x64xf32>, vector<288x64xf32> -> vector<288x64xf32>
    %49 = arith.addf %45, %48 : vector<288x64xf32>
    %c16_49 = arith.constant 16 : index
    %c0_50 = arith.constant 0 : index
    %50 = vector.load %arg5[%c16_49, %c0_50] : memref<400x512xf32, #tpu.memory_space<vmem>>, vector<288x128xf32>
    %c1408 = arith.constant 1408 : index
    %c0_51 = arith.constant 0 : index
    %51 = vector.load %arg2[%c1408, %c0_51] : memref<3584x64xf32, #tpu.memory_space<vmem>>, vector<128x64xf32>
    %cst_52 = arith.constant dense<0.000000e+00> : vector<288x64xf32>
    %52 = tpu.matmul %50, %51, %cst_52 {dimension_numbers = #tpu.dot_dimension_numbers<[1], [0], [0], [1], [0, 0, 1, 1], [], []>} : vector<288x128xf32>, vector<128x64xf32>, vector<288x64xf32> -> vector<288x64xf32>
    %53 = arith.addf %49, %52 : vector<288x64xf32>
    %c56_53 = arith.constant 56 : index
    %c384_54 = arith.constant 384 : index
    %54 = vector.load %arg5[%c56_53, %c384_54] : memref<400x512xf32, #tpu.memory_space<vmem>>, vector<288x128xf32>
    %c1536 = arith.constant 1536 : index
    %c0_55 = arith.constant 0 : index
    %55 = vector.load %arg2[%c1536, %c0_55] : memref<3584x64xf32, #tpu.memory_space<vmem>>, vector<128x64xf32>
    %cst_56 = arith.constant dense<0.000000e+00> : vector<288x64xf32>
    %56 = tpu.matmul %54, %55, %cst_56 {dimension_numbers = #tpu.dot_dimension_numbers<[1], [0], [0], [1], [0, 0, 1, 1], [], []>} : vector<288x128xf32>, vector<128x64xf32>, vector<288x64xf32> -> vector<288x64xf32>
    %57 = arith.addf %53, %56 : vector<288x64xf32>
    %c64 = arith.constant 64 : index
    %c0_57 = arith.constant 0 : index
    %58 = vector.load %arg5[%c64, %c0_57] : memref<400x512xf32, #tpu.memory_space<vmem>>, vector<288x128xf32>
    %c1664 = arith.constant 1664 : index
    %c0_58 = arith.constant 0 : index
    %59 = vector.load %arg2[%c1664, %c0_58] : memref<3584x64xf32, #tpu.memory_space<vmem>>, vector<128x64xf32>
    %cst_59 = arith.constant dense<0.000000e+00> : vector<288x64xf32>
    %60 = tpu.matmul %58, %59, %cst_59 {dimension_numbers = #tpu.dot_dimension_numbers<[1], [0], [0], [1], [0, 0, 1, 1], [], []>} : vector<288x128xf32>, vector<128x64xf32>, vector<288x64xf32> -> vector<288x64xf32>
    %61 = arith.addf %57, %60 : vector<288x64xf32>
    %c48_60 = arith.constant 48 : index
    %c256_61 = arith.constant 256 : index
    %62 = vector.load %arg5[%c48_60, %c256_61] : memref<400x512xf32, #tpu.memory_space<vmem>>, vector<288x128xf32>
    %c1792 = arith.constant 1792 : index
    %c0_62 = arith.constant 0 : index
    %63 = vector.load %arg2[%c1792, %c0_62] : memref<3584x64xf32, #tpu.memory_space<vmem>>, vector<128x64xf32>
    %cst_63 = arith.constant dense<0.000000e+00> : vector<288x64xf32>
    %64 = tpu.matmul %62, %63, %cst_63 {dimension_numbers = #tpu.dot_dimension_numbers<[1], [0], [0], [1], [0, 0, 1, 1], [], []>} : vector<288x128xf32>, vector<128x64xf32>, vector<288x64xf32> -> vector<288x64xf32>
    %65 = arith.addf %61, %64 : vector<288x64xf32>
    %c48_64 = arith.constant 48 : index
    %c384_65 = arith.constant 384 : index
    %66 = vector.load %arg5[%c48_64, %c384_65] : memref<400x512xf32, #tpu.memory_space<vmem>>, vector<288x128xf32>
    %c1920 = arith.constant 1920 : index
    %c0_66 = arith.constant 0 : index
    %67 = vector.load %arg2[%c1920, %c0_66] : memref<3584x64xf32, #tpu.memory_space<vmem>>, vector<128x64xf32>
    %cst_67 = arith.constant dense<0.000000e+00> : vector<288x64xf32>
    %68 = tpu.matmul %66, %67, %cst_67 {dimension_numbers = #tpu.dot_dimension_numbers<[1], [0], [0], [1], [0, 0, 1, 1], [], []>} : vector<288x128xf32>, vector<128x64xf32>, vector<288x64xf32> -> vector<288x64xf32>
    %69 = arith.addf %65, %68 : vector<288x64xf32>
    %c56_68 = arith.constant 56 : index
    %c0_69 = arith.constant 0 : index
    %70 = vector.load %arg5[%c56_68, %c0_69] : memref<400x512xf32, #tpu.memory_space<vmem>>, vector<288x128xf32>
    %c2048 = arith.constant 2048 : index
    %c0_70 = arith.constant 0 : index
    %71 = vector.load %arg2[%c2048, %c0_70] : memref<3584x64xf32, #tpu.memory_space<vmem>>, vector<128x64xf32>
    %cst_71 = arith.constant dense<0.000000e+00> : vector<288x64xf32>
    %72 = tpu.matmul %70, %71, %cst_71 {dimension_numbers = #tpu.dot_dimension_numbers<[1], [0], [0], [1], [0, 0, 1, 1], [], []>} : vector<288x128xf32>, vector<128x64xf32>, vector<288x64xf32> -> vector<288x64xf32>
    %73 = arith.addf %69, %72 : vector<288x64xf32>
    %c56_72 = arith.constant 56 : index
    %c128_73 = arith.constant 128 : index
    %74 = vector.load %arg5[%c56_72, %c128_73] : memref<400x512xf32, #tpu.memory_space<vmem>>, vector<288x128xf32>
    %c2176 = arith.constant 2176 : index
    %c0_74 = arith.constant 0 : index
    %75 = vector.load %arg2[%c2176, %c0_74] : memref<3584x64xf32, #tpu.memory_space<vmem>>, vector<128x64xf32>
    %cst_75 = arith.constant dense<0.000000e+00> : vector<288x64xf32>
    %76 = tpu.matmul %74, %75, %cst_75 {dimension_numbers = #tpu.dot_dimension_numbers<[1], [0], [0], [1], [0, 0, 1, 1], [], []>} : vector<288x128xf32>, vector<128x64xf32>, vector<288x64xf32> -> vector<288x64xf32>
    %77 = arith.addf %73, %76 : vector<288x64xf32>
    %c56_76 = arith.constant 56 : index
    %c256_77 = arith.constant 256 : index
    %78 = vector.load %arg5[%c56_76, %c256_77] : memref<400x512xf32, #tpu.memory_space<vmem>>, vector<288x128xf32>
    %c2304 = arith.constant 2304 : index
    %c0_78 = arith.constant 0 : index
    %79 = vector.load %arg2[%c2304, %c0_78] : memref<3584x64xf32, #tpu.memory_space<vmem>>, vector<128x64xf32>
    %cst_79 = arith.constant dense<0.000000e+00> : vector<288x64xf32>
    %80 = tpu.matmul %78, %79, %cst_79 {dimension_numbers = #tpu.dot_dimension_numbers<[1], [0], [0], [1], [0, 0, 1, 1], [], []>} : vector<288x128xf32>, vector<128x64xf32>, vector<288x64xf32> -> vector<288x64xf32>
    %81 = arith.addf %77, %80 : vector<288x64xf32>
    %c96 = arith.constant 96 : index
    %c256_80 = arith.constant 256 : index
    %82 = vector.load %arg5[%c96, %c256_80] : memref<400x512xf32, #tpu.memory_space<vmem>>, vector<288x128xf32>
    %c2432 = arith.constant 2432 : index
    %c0_81 = arith.constant 0 : index
    %83 = vector.load %arg2[%c2432, %c0_81] : memref<3584x64xf32, #tpu.memory_space<vmem>>, vector<128x64xf32>
    %cst_82 = arith.constant dense<0.000000e+00> : vector<288x64xf32>
    %84 = tpu.matmul %82, %83, %cst_82 {dimension_numbers = #tpu.dot_dimension_numbers<[1], [0], [0], [1], [0, 0, 1, 1], [], []>} : vector<288x128xf32>, vector<128x64xf32>, vector<288x64xf32> -> vector<288x64xf32>
    %85 = arith.addf %81, %84 : vector<288x64xf32>
    %c96_83 = arith.constant 96 : index
    %c384_84 = arith.constant 384 : index
    %86 = vector.load %arg5[%c96_83, %c384_84] : memref<400x512xf32, #tpu.memory_space<vmem>>, vector<288x128xf32>
    %c2560 = arith.constant 2560 : index
    %c0_85 = arith.constant 0 : index
    %87 = vector.load %arg2[%c2560, %c0_85] : memref<3584x64xf32, #tpu.memory_space<vmem>>, vector<128x64xf32>
    %cst_86 = arith.constant dense<0.000000e+00> : vector<288x64xf32>
    %88 = tpu.matmul %86, %87, %cst_86 {dimension_numbers = #tpu.dot_dimension_numbers<[1], [0], [0], [1], [0, 0, 1, 1], [], []>} : vector<288x128xf32>, vector<128x64xf32>, vector<288x64xf32> -> vector<288x64xf32>
    %89 = arith.addf %85, %88 : vector<288x64xf32>
    %c104 = arith.constant 104 : index
    %c0_87 = arith.constant 0 : index
    %90 = vector.load %arg5[%c104, %c0_87] : memref<400x512xf32, #tpu.memory_space<vmem>>, vector<288x128xf32>
    %c2688 = arith.constant 2688 : index
    %c0_88 = arith.constant 0 : index
    %91 = vector.load %arg2[%c2688, %c0_88] : memref<3584x64xf32, #tpu.memory_space<vmem>>, vector<128x64xf32>
    %cst_89 = arith.constant dense<0.000000e+00> : vector<288x64xf32>
    %92 = tpu.matmul %90, %91, %cst_89 {dimension_numbers = #tpu.dot_dimension_numbers<[1], [0], [0], [1], [0, 0, 1, 1], [], []>} : vector<288x128xf32>, vector<128x64xf32>, vector<288x64xf32> -> vector<288x64xf32>
    %93 = arith.addf %89, %92 : vector<288x64xf32>
    %c104_90 = arith.constant 104 : index
    %c128_91 = arith.constant 128 : index
    %94 = vector.load %arg5[%c104_90, %c128_91] : memref<400x512xf32, #tpu.memory_space<vmem>>, vector<288x128xf32>
    %c2816 = arith.constant 2816 : index
    %c0_92 = arith.constant 0 : index
    %95 = vector.load %arg2[%c2816, %c0_92] : memref<3584x64xf32, #tpu.memory_space<vmem>>, vector<128x64xf32>
    %cst_93 = arith.constant dense<0.000000e+00> : vector<288x64xf32>
    %96 = tpu.matmul %94, %95, %cst_93 {dimension_numbers = #tpu.dot_dimension_numbers<[1], [0], [0], [1], [0, 0, 1, 1], [], []>} : vector<288x128xf32>, vector<128x64xf32>, vector<288x64xf32> -> vector<288x64xf32>
    %97 = arith.addf %93, %96 : vector<288x64xf32>
    %c104_94 = arith.constant 104 : index
    %c256_95 = arith.constant 256 : index
    %98 = vector.load %arg5[%c104_94, %c256_95] : memref<400x512xf32, #tpu.memory_space<vmem>>, vector<288x128xf32>
    %c2944 = arith.constant 2944 : index
    %c0_96 = arith.constant 0 : index
    %99 = vector.load %arg2[%c2944, %c0_96] : memref<3584x64xf32, #tpu.memory_space<vmem>>, vector<128x64xf32>
    %cst_97 = arith.constant dense<0.000000e+00> : vector<288x64xf32>
    %100 = tpu.matmul %98, %99, %cst_97 {dimension_numbers = #tpu.dot_dimension_numbers<[1], [0], [0], [1], [0, 0, 1, 1], [], []>} : vector<288x128xf32>, vector<128x64xf32>, vector<288x64xf32> -> vector<288x64xf32>
    %101 = arith.addf %97, %100 : vector<288x64xf32>
    %c56_98 = arith.constant 56 : index
    %c384_99 = arith.constant 384 : index
    %102 = vector.load %arg5[%c56_98, %c384_99] : memref<400x512xf32, #tpu.memory_space<vmem>>, vector<288x128xf32>
    %c3072 = arith.constant 3072 : index
    %c0_100 = arith.constant 0 : index
    %103 = vector.load %arg2[%c3072, %c0_100] : memref<3584x64xf32, #tpu.memory_space<vmem>>, vector<128x64xf32>
    %cst_101 = arith.constant dense<0.000000e+00> : vector<288x64xf32>
    %104 = tpu.matmul %102, %103, %cst_101 {dimension_numbers = #tpu.dot_dimension_numbers<[1], [0], [0], [1], [0, 0, 1, 1], [], []>} : vector<288x128xf32>, vector<128x64xf32>, vector<288x64xf32> -> vector<288x64xf32>
    %105 = arith.addf %101, %104 : vector<288x64xf32>
    %c64_102 = arith.constant 64 : index
    %c0_103 = arith.constant 0 : index
    %106 = vector.load %arg5[%c64_102, %c0_103] : memref<400x512xf32, #tpu.memory_space<vmem>>, vector<288x128xf32>
    %c3200 = arith.constant 3200 : index
    %c0_104 = arith.constant 0 : index
    %107 = vector.load %arg2[%c3200, %c0_104] : memref<3584x64xf32, #tpu.memory_space<vmem>>, vector<128x64xf32>
    %cst_105 = arith.constant dense<0.000000e+00> : vector<288x64xf32>
    %108 = tpu.matmul %106, %107, %cst_105 {dimension_numbers = #tpu.dot_dimension_numbers<[1], [0], [0], [1], [0, 0, 1, 1], [], []>} : vector<288x128xf32>, vector<128x64xf32>, vector<288x64xf32> -> vector<288x64xf32>
    %109 = arith.addf %105, %108 : vector<288x64xf32>
    %c104_106 = arith.constant 104 : index
    %c384_107 = arith.constant 384 : index
    %110 = vector.load %arg5[%c104_106, %c384_107] : memref<400x512xf32, #tpu.memory_space<vmem>>, vector<288x128xf32>
    %c3328 = arith.constant 3328 : index
    %c0_108 = arith.constant 0 : index
    %111 = vector.load %arg2[%c3328, %c0_108] : memref<3584x64xf32, #tpu.memory_space<vmem>>, vector<128x64xf32>
    %cst_109 = arith.constant dense<0.000000e+00> : vector<288x64xf32>
    %112 = tpu.matmul %110, %111, %cst_109 {dimension_numbers = #tpu.dot_dimension_numbers<[1], [0], [0], [1], [0, 0, 1, 1], [], []>} : vector<288x128xf32>, vector<128x64xf32>, vector<288x64xf32> -> vector<288x64xf32>
    %113 = arith.addf %109, %112 : vector<288x64xf32>
    %c112 = arith.constant 112 : index
    %c0_110 = arith.constant 0 : index
    %114 = vector.load %arg5[%c112, %c0_110] : memref<400x512xf32, #tpu.memory_space<vmem>>, vector<288x128xf32>
    %c3456 = arith.constant 3456 : index
    %c0_111 = arith.constant 0 : index
    %115 = vector.load %arg2[%c3456, %c0_111] : memref<3584x64xf32, #tpu.memory_space<vmem>>, vector<128x64xf32>
    %cst_112 = arith.constant dense<0.000000e+00> : vector<288x64xf32>
    %116 = tpu.matmul %114, %115, %cst_112 {dimension_numbers = #tpu.dot_dimension_numbers<[1], [0], [0], [1], [0, 0, 1, 1], [], []>} : vector<288x128xf32>, vector<128x64xf32>, vector<288x64xf32> -> vector<288x64xf32>
    %117 = arith.addf %113, %116 : vector<288x64xf32>
    %c536 = arith.constant 536 : index
    %c0_113 = arith.constant 0 : index
    %118 = vector.load %arg3[%c536, %c0_113] : memref<568x64xf32, #tpu.memory_space<vmem>>, vector<1x64xf32>
    %119 = vector.broadcast %118 : vector<1x64xf32> to vector<288x64xf32>
    %120 = arith.addf %117, %119 : vector<288x64xf32>
    %cst_114 = arith.constant 0.000000e+00 : f32
    %121 = vector.broadcast %cst_114 : f32 to vector<288x64xf32>
    %122 = arith.maximumf %120, %121 : vector<288x64xf32>
    %123 = vector.broadcast %6 : vector<288x1xf32> to vector<288x64xf32>
    %124 = arith.mulf %122, %123 : vector<288x64xf32>
    %c56_115 = arith.constant 56 : index
    %c0_116 = arith.constant 0 : index
    %125 = vector.load %arg6[%c56_115, %c0_116] : memref<400x64xf32, #tpu.memory_space<vmem>>, vector<288x64xf32>
    tpu.vector_store %arg6[%c56_115, %c0_116], %124 {strides = array<i32>} : memref<400x64xf32, #tpu.memory_space<vmem>>, vector<288x64xf32>,
    %cst_117 = arith.constant 0.000000e+00 : f32
    %126 = vector.broadcast %cst_117 : f32 to vector<56x64xf32>
    %c0_118 = arith.constant 0 : index
    %c0_119 = arith.constant 0 : index
    %127 = vector.load %arg6[%c0_118, %c0_119] : memref<400x64xf32, #tpu.memory_space<vmem>>, vector<56x64xf32>
    tpu.vector_store %arg6[%c0_118, %c0_119], %126 {strides = array<i32>} : memref<400x64xf32, #tpu.memory_space<vmem>>, vector<56x64xf32>,
    %cst_120 = arith.constant 0.000000e+00 : f32
    %128 = vector.broadcast %cst_120 : f32 to vector<56x64xf32>
    %c344 = arith.constant 344 : index
    %c0_121 = arith.constant 0 : index
    %129 = vector.load %arg6[%c344, %c0_121] : memref<400x64xf32, #tpu.memory_space<vmem>>, vector<56x64xf32>
    tpu.vector_store %arg6[%c344, %c0_121], %128 {strides = array<i32>} : memref<400x64xf32, #tpu.memory_space<vmem>>, vector<56x64xf32>,
    %c0_122 = arith.constant 0 : index
    %c0_123 = arith.constant 0 : index
    %130 = vector.load %arg6[%c0_122, %c0_123] : memref<400x64xf32, #tpu.memory_space<vmem>>, vector<288x64xf32>
    %c0_124 = arith.constant 0 : index
    %c0_125 = arith.constant 0 : index
    %131 = vector.load %arg3[%c0_124, %c0_125] : memref<568x64xf32, #tpu.memory_space<vmem>>, vector<64x8xf32>
    %cst_126 = arith.constant dense<0.000000e+00> : vector<288x8xf32>
    %132 = tpu.matmul %130, %131, %cst_126 {dimension_numbers = #tpu.dot_dimension_numbers<[1], [0], [0], [1], [0, 0, 1, 1], [], []>} : vector<288x64xf32>, vector<64x8xf32>, vector<288x8xf32> -> vector<288x8xf32>
    %c8_127 = arith.constant 8 : index
    %c0_128 = arith.constant 0 : index
    %133 = vector.load %arg6[%c8_127, %c0_128] : memref<400x64xf32, #tpu.memory_space<vmem>>, vector<288x64xf32>
    %c64_129 = arith.constant 64 : index
    %c0_130 = arith.constant 0 : index
    %134 = vector.load %arg3[%c64_129, %c0_130] : memref<568x64xf32, #tpu.memory_space<vmem>>, vector<64x8xf32>
    %cst_131 = arith.constant dense<0.000000e+00> : vector<288x8xf32>
    %135 = tpu.matmul %133, %134, %cst_131 {dimension_numbers = #tpu.dot_dimension_numbers<[1], [0], [0], [1], [0, 0, 1, 1], [], []>} : vector<288x64xf32>, vector<64x8xf32>, vector<288x8xf32> -> vector<288x8xf32>
    %136 = arith.addf %132, %135 : vector<288x8xf32>
    %c16_132 = arith.constant 16 : index
    %c0_133 = arith.constant 0 : index
    %137 = vector.load %arg6[%c16_132, %c0_133] : memref<400x64xf32, #tpu.memory_space<vmem>>, vector<288x16xf32>
    %c128_134 = arith.constant 128 : index
    %c0_135 = arith.constant 0 : index
    %138 = vector.load %arg3[%c128_134, %c0_135] : memref<568x64xf32, #tpu.memory_space<vmem>>, vector<16x8xf32>
    %cst_136 = arith.constant dense<0.000000e+00> : vector<288x8xf32>
    %139 = tpu.matmul %137, %138, %cst_136 {dimension_numbers = #tpu.dot_dimension_numbers<[1], [0], [0], [1], [0, 0, 1, 1], [], []>} : vector<288x16xf32>, vector<16x8xf32>, vector<288x8xf32> -> vector<288x8xf32>
    %140 = arith.addf %136, %139 : vector<288x8xf32>
    %c16_137 = arith.constant 16 : index
    %c32 = arith.constant 32 : index
    %141 = vector.load %arg6[%c16_137, %c32] : memref<400x64xf32, #tpu.memory_space<vmem>>, vector<288x16xf32>
    %c144 = arith.constant 144 : index
    %c0_138 = arith.constant 0 : index
    %142 = vector.load %arg3[%c144, %c0_138] : memref<568x64xf32, #tpu.memory_space<vmem>>, vector<16x8xf32>
    %cst_139 = arith.constant dense<0.000000e+00> : vector<288x8xf32>
    %143 = tpu.matmul %141, %142, %cst_139 {dimension_numbers = #tpu.dot_dimension_numbers<[1], [0], [0], [1], [0, 0, 1, 1], [], []>} : vector<288x16xf32>, vector<16x8xf32>, vector<288x8xf32> -> vector<288x8xf32>
    %144 = arith.addf %140, %143 : vector<288x8xf32>
    %c48_140 = arith.constant 48 : index
    %c0_141 = arith.constant 0 : index
    %145 = vector.load %arg6[%c48_140, %c0_141] : memref<400x64xf32, #tpu.memory_space<vmem>>, vector<288x64xf32>
    %c160 = arith.constant 160 : index
    %c0_142 = arith.constant 0 : index
    %146 = vector.load %arg3[%c160, %c0_142] : memref<568x64xf32, #tpu.memory_space<vmem>>, vector<64x8xf32>
    %cst_143 = arith.constant dense<0.000000e+00> : vector<288x8xf32>
    %147 = tpu.matmul %145, %146, %cst_143 {dimension_numbers = #tpu.dot_dimension_numbers<[1], [0], [0], [1], [0, 0, 1, 1], [], []>} : vector<288x64xf32>, vector<64x8xf32>, vector<288x8xf32> -> vector<288x8xf32>
    %148 = arith.addf %144, %147 : vector<288x8xf32>
    %c56_144 = arith.constant 56 : index
    %c0_145 = arith.constant 0 : index
    %149 = vector.load %arg6[%c56_144, %c0_145] : memref<400x64xf32, #tpu.memory_space<vmem>>, vector<288x64xf32>
    %c224 = arith.constant 224 : index
    %c0_146 = arith.constant 0 : index
    %150 = vector.load %arg3[%c224, %c0_146] : memref<568x64xf32, #tpu.memory_space<vmem>>, vector<64x8xf32>
    %cst_147 = arith.constant dense<0.000000e+00> : vector<288x8xf32>
    %151 = tpu.matmul %149, %150, %cst_147 {dimension_numbers = #tpu.dot_dimension_numbers<[1], [0], [0], [1], [0, 0, 1, 1], [], []>} : vector<288x64xf32>, vector<64x8xf32>, vector<288x8xf32> -> vector<288x8xf32>
    %152 = arith.addf %148, %151 : vector<288x8xf32>
    %c64_148 = arith.constant 64 : index
    %c0_149 = arith.constant 0 : index
    %153 = vector.load %arg6[%c64_148, %c0_149] : memref<400x64xf32, #tpu.memory_space<vmem>>, vector<288x16xf32>
    %c288 = arith.constant 288 : index
    %c0_150 = arith.constant 0 : index
    %154 = vector.load %arg3[%c288, %c0_150] : memref<568x64xf32, #tpu.memory_space<vmem>>, vector<16x8xf32>
    %cst_151 = arith.constant dense<0.000000e+00> : vector<288x8xf32>
    %155 = tpu.matmul %153, %154, %cst_151 {dimension_numbers = #tpu.dot_dimension_numbers<[1], [0], [0], [1], [0, 0, 1, 1], [], []>} : vector<288x16xf32>, vector<16x8xf32>, vector<288x8xf32> -> vector<288x8xf32>
    %156 = arith.addf %152, %155 : vector<288x8xf32>
    %c64_152 = arith.constant 64 : index
    %c32_153 = arith.constant 32 : index
    %157 = vector.load %arg6[%c64_152, %c32_153] : memref<400x64xf32, #tpu.memory_space<vmem>>, vector<288x16xf32>
    %c304 = arith.constant 304 : index
    %c0_154 = arith.constant 0 : index
    %158 = vector.load %arg3[%c304, %c0_154] : memref<568x64xf32, #tpu.memory_space<vmem>>, vector<16x8xf32>
    %cst_155 = arith.constant dense<0.000000e+00> : vector<288x8xf32>
    %159 = tpu.matmul %157, %158, %cst_155 {dimension_numbers = #tpu.dot_dimension_numbers<[1], [0], [0], [1], [0, 0, 1, 1], [], []>} : vector<288x16xf32>, vector<16x8xf32>, vector<288x8xf32> -> vector<288x8xf32>
    %160 = arith.addf %156, %159 : vector<288x8xf32>
    %c96_156 = arith.constant 96 : index
    %c0_157 = arith.constant 0 : index
    %161 = vector.load %arg6[%c96_156, %c0_157] : memref<400x64xf32, #tpu.memory_space<vmem>>, vector<288x32xf32>
    %c320 = arith.constant 320 : index
    %c0_158 = arith.constant 0 : index
    %162 = vector.load %arg3[%c320, %c0_158] : memref<568x64xf32, #tpu.memory_space<vmem>>, vector<32x8xf32>
    %cst_159 = arith.constant dense<0.000000e+00> : vector<288x8xf32>
    %163 = tpu.matmul %161, %162, %cst_159 {dimension_numbers = #tpu.dot_dimension_numbers<[1], [0], [0], [1], [0, 0, 1, 1], [], []>} : vector<288x32xf32>, vector<32x8xf32>, vector<288x8xf32> -> vector<288x8xf32>
    %164 = arith.addf %160, %163 : vector<288x8xf32>
    %c104_160 = arith.constant 104 : index
    %c0_161 = arith.constant 0 : index
    %165 = vector.load %arg6[%c104_160, %c0_161] : memref<400x64xf32, #tpu.memory_space<vmem>>, vector<288x32xf32>
    %c352 = arith.constant 352 : index
    %c0_162 = arith.constant 0 : index
    %166 = vector.load %arg3[%c352, %c0_162] : memref<568x64xf32, #tpu.memory_space<vmem>>, vector<32x8xf32>
    %cst_163 = arith.constant dense<0.000000e+00> : vector<288x8xf32>
    %167 = tpu.matmul %165, %166, %cst_163 {dimension_numbers = #tpu.dot_dimension_numbers<[1], [0], [0], [1], [0, 0, 1, 1], [], []>} : vector<288x32xf32>, vector<32x8xf32>, vector<288x8xf32> -> vector<288x8xf32>
    %168 = arith.addf %164, %167 : vector<288x8xf32>
    %c112_164 = arith.constant 112 : index
    %c0_165 = arith.constant 0 : index
    %169 = vector.load %arg6[%c112_164, %c0_165] : memref<400x64xf32, #tpu.memory_space<vmem>>, vector<288x16xf32>
    %c384_166 = arith.constant 384 : index
    %c0_167 = arith.constant 0 : index
    %170 = vector.load %arg3[%c384_166, %c0_167] : memref<568x64xf32, #tpu.memory_space<vmem>>, vector<16x8xf32>
    %cst_168 = arith.constant dense<0.000000e+00> : vector<288x8xf32>
    %171 = tpu.matmul %169, %170, %cst_168 {dimension_numbers = #tpu.dot_dimension_numbers<[1], [0], [0], [1], [0, 0, 1, 1], [], []>} : vector<288x16xf32>, vector<16x8xf32>, vector<288x8xf32> -> vector<288x8xf32>
    %172 = arith.addf %168, %171 : vector<288x8xf32>
    %c544 = arith.constant 544 : index
    %c0_169 = arith.constant 0 : index
    %173 = vector.load %arg3[%c544, %c0_169] : memref<568x64xf32, #tpu.memory_space<vmem>>, vector<1x8xf32>
    %174 = vector.broadcast %173 : vector<1x8xf32> to vector<288x8xf32>
    %175 = arith.addf %172, %174 : vector<288x8xf32>
    %cst_170 = arith.constant 0.000000e+00 : f32
    %176 = vector.broadcast %cst_170 : f32 to vector<288x8xf32>
    %177 = arith.maximumf %175, %176 : vector<288x8xf32>
    %178 = vector.broadcast %6 : vector<288x1xf32> to vector<288x8xf32>
    %179 = arith.mulf %177, %178 : vector<288x8xf32>
    %180 = vector.extract_strided_slice %179 {offsets = [56, 0], sizes = [8, 8], strides = [1, 1]} : vector<288x8xf32> to vector<8x8xf32>
    %c0_171 = arith.constant 0 : index
    %c0_172 = arith.constant 0 : index
    %181 = vector.load %arg7[%c0_171, %c0_172] : memref<8x128xf32, #tpu.memory_space<vmem>>, vector<8x8xf32>
    tpu.vector_store %arg7[%c0_171, %c0_172], %180 {strides = array<i32>} : memref<8x128xf32, #tpu.memory_space<vmem>>, vector<8x8xf32>,
    %182 = vector.extract_strided_slice %179 {offsets = [64, 0], sizes = [8, 8], strides = [1, 1]} : vector<288x8xf32> to vector<8x8xf32>
    %c0_173 = arith.constant 0 : index
    %c8_174 = arith.constant 8 : index
    %183 = vector.load %arg7[%c0_173, %c8_174] : memref<8x128xf32, #tpu.memory_space<vmem>>, vector<8x8xf32>
    tpu.vector_store %arg7[%c0_173, %c8_174], %182 {strides = array<i32>} : memref<8x128xf32, #tpu.memory_space<vmem>>, vector<8x8xf32>,
    %184 = vector.extract_strided_slice %179 {offsets = [72, 0], sizes = [8, 8], strides = [1, 1]} : vector<288x8xf32> to vector<8x8xf32>
    %c0_175 = arith.constant 0 : index
    %c16_176 = arith.constant 16 : index
    %185 = vector.load %arg7[%c0_175, %c16_176] : memref<8x128xf32, #tpu.memory_space<vmem>>, vector<8x8xf32>
    tpu.vector_store %arg7[%c0_175, %c16_176], %184 {strides = array<i32>} : memref<8x128xf32, #tpu.memory_space<vmem>>, vector<8x8xf32>,
    %186 = vector.extract_strided_slice %179 {offsets = [80, 0], sizes = [8, 8], strides = [1, 1]} : vector<288x8xf32> to vector<8x8xf32>
    %c0_177 = arith.constant 0 : index
    %c24 = arith.constant 24 : index
    %187 = vector.load %arg7[%c0_177, %c24] : memref<8x128xf32, #tpu.memory_space<vmem>>, vector<8x8xf32>
    tpu.vector_store %arg7[%c0_177, %c24], %186 {strides = array<i32>} : memref<8x128xf32, #tpu.memory_space<vmem>>, vector<8x8xf32>,
    %188 = vector.extract_strided_slice %179 {offsets = [104, 0], sizes = [8, 8], strides = [1, 1]} : vector<288x8xf32> to vector<8x8xf32>
    %c0_178 = arith.constant 0 : index
    %c32_179 = arith.constant 32 : index
    %189 = vector.load %arg7[%c0_178, %c32_179] : memref<8x128xf32, #tpu.memory_space<vmem>>, vector<8x8xf32>
    tpu.vector_store %arg7[%c0_178, %c32_179], %188 {strides = array<i32>} : memref<8x128xf32, #tpu.memory_space<vmem>>, vector<8x8xf32>,
    %190 = vector.extract_strided_slice %179 {offsets = [112, 0], sizes = [8, 8], strides = [1, 1]} : vector<288x8xf32> to vector<8x8xf32>
    %c0_180 = arith.constant 0 : index
    %c40 = arith.constant 40 : index
    %191 = vector.load %arg7[%c0_180, %c40] : memref<8x128xf32, #tpu.memory_space<vmem>>, vector<8x8xf32>
    tpu.vector_store %arg7[%c0_180, %c40], %190 {strides = array<i32>} : memref<8x128xf32, #tpu.memory_space<vmem>>, vector<8x8xf32>,
    %192 = vector.extract_strided_slice %179 {offsets = [120, 0], sizes = [8, 8], strides = [1, 1]} : vector<288x8xf32> to vector<8x8xf32>
    %c0_181 = arith.constant 0 : index
    %c48_182 = arith.constant 48 : index
    %193 = vector.load %arg7[%c0_181, %c48_182] : memref<8x128xf32, #tpu.memory_space<vmem>>, vector<8x8xf32>
    tpu.vector_store %arg7[%c0_181, %c48_182], %192 {strides = array<i32>} : memref<8x128xf32, #tpu.memory_space<vmem>>, vector<8x8xf32>,
    %194 = vector.extract_strided_slice %179 {offsets = [128, 0], sizes = [8, 8], strides = [1, 1]} : vector<288x8xf32> to vector<8x8xf32>
    %c0_183 = arith.constant 0 : index
    %c56_184 = arith.constant 56 : index
    %195 = vector.load %arg7[%c0_183, %c56_184] : memref<8x128xf32, #tpu.memory_space<vmem>>, vector<8x8xf32>
    tpu.vector_store %arg7[%c0_183, %c56_184], %194 {strides = array<i32>} : memref<8x128xf32, #tpu.memory_space<vmem>>, vector<8x8xf32>,
    %196 = vector.extract_strided_slice %179 {offsets = [152, 0], sizes = [8, 8], strides = [1, 1]} : vector<288x8xf32> to vector<8x8xf32>
    %c0_185 = arith.constant 0 : index
    %c64_186 = arith.constant 64 : index
    %197 = vector.load %arg7[%c0_185, %c64_186] : memref<8x128xf32, #tpu.memory_space<vmem>>, vector<8x8xf32>
    tpu.vector_store %arg7[%c0_185, %c64_186], %196 {strides = array<i32>} : memref<8x128xf32, #tpu.memory_space<vmem>>, vector<8x8xf32>,
    %198 = vector.extract_strided_slice %179 {offsets = [160, 0], sizes = [8, 8], strides = [1, 1]} : vector<288x8xf32> to vector<8x8xf32>
    %c0_187 = arith.constant 0 : index
    %c72 = arith.constant 72 : index
    %199 = vector.load %arg7[%c0_187, %c72] : memref<8x128xf32, #tpu.memory_space<vmem>>, vector<8x8xf32>
    tpu.vector_store %arg7[%c0_187, %c72], %198 {strides = array<i32>} : memref<8x128xf32, #tpu.memory_space<vmem>>, vector<8x8xf32>,
    %200 = vector.extract_strided_slice %179 {offsets = [168, 0], sizes = [8, 8], strides = [1, 1]} : vector<288x8xf32> to vector<8x8xf32>
    %c0_188 = arith.constant 0 : index
    %c80 = arith.constant 80 : index
    %201 = vector.load %arg7[%c0_188, %c80] : memref<8x128xf32, #tpu.memory_space<vmem>>, vector<8x8xf32>
    tpu.vector_store %arg7[%c0_188, %c80], %200 {strides = array<i32>} : memref<8x128xf32, #tpu.memory_space<vmem>>, vector<8x8xf32>,
    %202 = vector.extract_strided_slice %179 {offsets = [176, 0], sizes = [8, 8], strides = [1, 1]} : vector<288x8xf32> to vector<8x8xf32>
    %c0_189 = arith.constant 0 : index
    %c88 = arith.constant 88 : index
    %203 = vector.load %arg7[%c0_189, %c88] : memref<8x128xf32, #tpu.memory_space<vmem>>, vector<8x8xf32>
    tpu.vector_store %arg7[%c0_189, %c88], %202 {strides = array<i32>} : memref<8x128xf32, #tpu.memory_space<vmem>>, vector<8x8xf32>,
    %204 = vector.extract_strided_slice %179 {offsets = [200, 0], sizes = [8, 8], strides = [1, 1]} : vector<288x8xf32> to vector<8x8xf32>
    %c0_190 = arith.constant 0 : index
    %c96_191 = arith.constant 96 : index
    %205 = vector.load %arg7[%c0_190, %c96_191] : memref<8x128xf32, #tpu.memory_space<vmem>>, vector<8x8xf32>
    tpu.vector_store %arg7[%c0_190, %c96_191], %204 {strides = array<i32>} : memref<8x128xf32, #tpu.memory_space<vmem>>, vector<8x8xf32>,
    %206 = vector.extract_strided_slice %179 {offsets = [208, 0], sizes = [8, 8], strides = [1, 1]} : vector<288x8xf32> to vector<8x8xf32>
    %c0_192 = arith.constant 0 : index
    %c104_193 = arith.constant 104 : index
    %207 = vector.load %arg7[%c0_192, %c104_193] : memref<8x128xf32, #tpu.memory_space<vmem>>, vector<8x8xf32>
    tpu.vector_store %arg7[%c0_192, %c104_193], %206 {strides = array<i32>} : memref<8x128xf32, #tpu.memory_space<vmem>>, vector<8x8xf32>,
    %208 = vector.extract_strided_slice %179 {offsets = [216, 0], sizes = [8, 8], strides = [1, 1]} : vector<288x8xf32> to vector<8x8xf32>
    %c0_194 = arith.constant 0 : index
    %c112_195 = arith.constant 112 : index
    %209 = vector.load %arg7[%c0_194, %c112_195] : memref<8x128xf32, #tpu.memory_space<vmem>>, vector<8x8xf32>
    tpu.vector_store %arg7[%c0_194, %c112_195], %208 {strides = array<i32>} : memref<8x128xf32, #tpu.memory_space<vmem>>, vector<8x8xf32>,
    %210 = vector.extract_strided_slice %179 {offsets = [224, 0], sizes = [8, 8], strides = [1, 1]} : vector<288x8xf32> to vector<8x8xf32>
    %c0_196 = arith.constant 0 : index
    %c120 = arith.constant 120 : index
    %211 = vector.load %arg7[%c0_196, %c120] : memref<8x128xf32, #tpu.memory_space<vmem>>, vector<8x8xf32>
    tpu.vector_store %arg7[%c0_196, %c120], %210 {strides = array<i32>} : memref<8x128xf32, #tpu.memory_space<vmem>>, vector<8x8xf32>,
    %c400 = arith.constant 400 : index
    %c0_197 = arith.constant 0 : index
    %212 = vector.load %arg3[%c400, %c0_197] : memref<568x64xf32, #tpu.memory_space<vmem>>, vector<128x4xf32>
    %c552 = arith.constant 552 : index
    %c0_198 = arith.constant 0 : index
    %213 = vector.load %arg3[%c552, %c0_198] : memref<568x64xf32, #tpu.memory_space<vmem>>, vector<1x4xf32>
    %c0_199 = arith.constant 0 : index
    %c0_200 = arith.constant 0 : index
    %214 = vector.load %arg7[%c0_199, %c0_200] : memref<8x128xf32, #tpu.memory_space<vmem>>, vector<8x128xf32>
    %cst_201 = arith.constant dense<0.000000e+00> : vector<8x4xf32>
    %215 = tpu.matmul %214, %212, %cst_201 {dimension_numbers = #tpu.dot_dimension_numbers<[1], [0], [0], [1], [0, 0, 1, 1], [], []>} : vector<8x128xf32>, vector<128x4xf32>, vector<8x4xf32> -> vector<8x4xf32>
    %216 = vector.broadcast %213 : vector<1x4xf32> to vector<8x4xf32>
    %217 = arith.addf %215, %216 : vector<8x4xf32>
    %cst_202 = arith.constant 0.000000e+00 : f32
    %218 = vector.broadcast %cst_202 : f32 to vector<8x4xf32>
    %219 = arith.maximumf %217, %218 : vector<8x4xf32>
    %c528 = arith.constant 528 : index
    %c0_203 = arith.constant 0 : index
    %220 = vector.load %arg3[%c528, %c0_203] : memref<568x64xf32, #tpu.memory_space<vmem>>, vector<4x8xf32>
    %c560 = arith.constant 560 : index
    %c0_204 = arith.constant 0 : index
    %221 = vector.load %arg3[%c560, %c0_204] : memref<568x64xf32, #tpu.memory_space<vmem>>, vector<1x8xf32>
    %cst_205 = arith.constant dense<0.000000e+00> : vector<8x8xf32>
    %222 = tpu.matmul %219, %220, %cst_205 {dimension_numbers = #tpu.dot_dimension_numbers<[1], [0], [0], [1], [0, 0, 1, 1], [], []>} : vector<8x4xf32>, vector<4x8xf32>, vector<8x8xf32> -> vector<8x8xf32>
    %223 = vector.broadcast %221 : vector<1x8xf32> to vector<8x8xf32>
    %224 = arith.addf %222, %223 : vector<8x8xf32>
    %c0_206 = arith.constant 0 : index
    %c0_207 = arith.constant 0 : index
    %225 = vector.load %arg4[%c0_206, %c0_207] : memref<8x8xf32, #tpu.memory_space<vmem>>, vector<8x8xf32>
    tpu.vector_store %arg4[%c0_206, %c0_207], %224 {strides = array<i32>} : memref<8x8xf32, #tpu.memory_space<vmem>>, vector<8x8xf32>,
    return
  }
}

</mosaic_0001>

<llo_original>
// kernel: squeeze.1
$region0: #{squeeze.1}
  %s0 = inlined_call_operand.vmem [shape: f32[2,16,16], index: 0, kind: input, shape index: {}]
  %s1 = inlined_call_operand.vmem [shape: f32[2,4,4,4,4], index: 1, kind: output, shape index: {}]
  $region1: #{squeeze.1} parent=0
    #allocation0 [shape = 'u8[131072]{0}', space=vmem, size = 0x20000, scoped, tag = 'scoped mem for output reshape']
    %v2 = vld [vmem:[%s0] sm:$0xff]
    %vm3 = vcmask 31744
    %4 = vst.msk [vmem:[#allocation0] ss:$8 sm:$0xf] %vm3, %v2
    %5 = vst.msk [vmem:[#allocation0] ss:$8 sm:$0xf0] %vm3, %v2
    %s6 = scalar_lea.vmem %s0, 8
    %v7 = vld [vmem:[%s6] sm:$0xff]
    %vm8 = vcmask 31744
    %s9 = scalar_lea.vmem [#allocation0], 64
    %10 = vst.msk [vmem:[%s9] ss:$8 sm:$0xf] %vm8, %v7
    %s11 = scalar_lea.vmem [#allocation0], 64
    %12 = vst.msk [vmem:[%s11] ss:$8 sm:$0xf0] %vm8, %v7
    %s13 = scalar_lea.vmem %s0, 16
    %v14 = vld [vmem:[%s13] sm:$0xff]
    %vm15 = vcmask 31744
    %s16 = scalar_lea.vmem [#allocation0], 128
    %17 = vst.msk [vmem:[%s16] ss:$8 sm:$0xf] %vm15, %v14
    %s18 = scalar_lea.vmem [#allocation0], 128
    %19 = vst.msk [vmem:[%s18] ss:$8 sm:$0xf0] %vm15, %v14
    %s20 = scalar_lea.vmem %s0, 24
    %v21 = vld [vmem:[%s20] sm:$0xff]
    %vm22 = vcmask 31744
    %s23 = scalar_lea.vmem [#allocation0], 192
    %24 = vst.msk [vmem:[%s23] ss:$8 sm:$0xf] %vm22, %v21
    %s25 = scalar_lea.vmem [#allocation0], 192
    %26 = vst.msk [vmem:[%s25] ss:$8 sm:$0xf0] %vm22, %v21
    %v27 = vld [vmem:[%s0] sm:$0xff]
    %28 = vrot.lane.b32.xlu0 %v27, 124
    %v29 = vpop.permute.xlu0 %28
    %vm30 = vcmask 31744
    %s31 = scalar_lea.vmem [#allocation0], 1
    %32 = vst.msk [vmem:[%s31] ss:$8 sm:$0xf] %vm30, %v29
    %s33 = scalar_lea.vmem [#allocation0], 1
    %34 = vst.msk [vmem:[%s33] ss:$8 sm:$0xf0] %vm30, %v29
    %s35 = scalar_lea.vmem %s0, 8
    %v36 = vld [vmem:[%s35] sm:$0xff]
    %37 = vrot.lane.b32.xlu0 %v36, 124
    %v38 = vpop.permute.xlu0 %37
    %vm39 = vcmask 31744
    %s40 = scalar_lea.vmem [#allocation0], 65
    %41 = vst.msk [vmem:[%s40] ss:$8 sm:$0xf] %vm39, %v38
    %s42 = scalar_lea.vmem [#allocation0], 65
    %43 = vst.msk [vmem:[%s42] ss:$8 sm:$0xf0] %vm39, %v38
    %s44 = scalar_lea.vmem %s0, 16
    %v45 = vld [vmem:[%s44] sm:$0xff]
    %46 = vrot.lane.b32.xlu0 %v45, 124
    %v47 = vpop.permute.xlu0 %46
    %vm48 = vcmask 31744
    %s49 = scalar_lea.vmem [#allocation0], 129
    %50 = vst.msk [vmem:[%s49] ss:$8 sm:$0xf] %vm48, %v47
    %s51 = scalar_lea.vmem [#allocation0], 129
    %52 = vst.msk [vmem:[%s51] ss:$8 sm:$0xf0] %vm48, %v47
    %s53 = scalar_lea.vmem %s0, 24
    %v54 = vld [vmem:[%s53] sm:$0xff]
    %55 = vrot.lane.b32.xlu0 %v54, 124
    %v56 = vpop.permute.xlu0 %55
    %vm57 = vcmask 31744
    %s58 = scalar_lea.vmem [#allocation0], 193
    %59 = vst.msk [vmem:[%s58] ss:$8 sm:$0xf] %vm57, %v56
    %s60 = scalar_lea.vmem [#allocation0], 193
    %61 = vst.msk [vmem:[%s60] ss:$8 sm:$0xf0] %vm57, %v56
    %v62 = vld [vmem:[%s0] sm:$0xff]
    %63 = vrot.lane.b32.xlu0 %v62, 120
    %v64 = vpop.permute.xlu0 %63
    %vm65 = vcmask 31744
    %s66 = scalar_lea.vmem [#allocation0], 2
    %67 = vst.msk [vmem:[%s66] ss:$8 sm:$0xf] %vm65, %v64
    %s68 = scalar_lea.vmem [#allocation0], 2
    %69 = vst.msk [vmem:[%s68] ss:$8 sm:$0xf0] %vm65, %v64
    %s70 = scalar_lea.vmem %s0, 8
    %v71 = vld [vmem:[%s70] sm:$0xff]
    %72 = vrot.lane.b32.xlu0 %v71, 120
    %v73 = vpop.permute.xlu0 %72
    %vm74 = vcmask 31744
    %s75 = scalar_lea.vmem [#allocation0], 66
    %76 = vst.msk [vmem:[%s75] ss:$8 sm:$0xf] %vm74, %v73
    %s77 = scalar_lea.vmem [#allocation0], 66
    %78 = vst.msk [vmem:[%s77] ss:$8 sm:$0xf0] %vm74, %v73
    %s79 = scalar_lea.vmem %s0, 16
    %v80 = vld [vmem:[%s79] sm:$0xff]
    %81 = vrot.lane.b32.xlu0 %v80, 120
    %v82 = vpop.permute.xlu0 %81
    %vm83 = vcmask 31744
    %s84 = scalar_lea.vmem [#allocation0], 130
    %85 = vst.msk [vmem:[%s84] ss:$8 sm:$0xf] %vm83, %v82
    %s86 = scalar_lea.vmem [#allocation0], 130
    %87 = vst.msk [vmem:[%s86] ss:$8 sm:$0xf0] %vm83, %v82
    %s88 = scalar_lea.vmem %s0, 24
    %v89 = vld [vmem:[%s88] sm:$0xff]
    %90 = vrot.lane.b32.xlu0 %v89, 120
    %v91 = vpop.permute.xlu0 %90
    %vm92 = vcmask 31744
    %s93 = scalar_lea.vmem [#allocation0], 194
    %94 = vst.msk [vmem:[%s93] ss:$8 sm:$0xf] %vm92, %v91
    %s95 = scalar_lea.vmem [#allocation0], 194
    %96 = vst.msk [vmem:[%s95] ss:$8 sm:$0xf0] %vm92, %v91
    %v97 = vld [vmem:[%s0] sm:$0xff]
    %98 = vrot.lane.b32.xlu0 %v97, 116
    %v99 = vpop.permute.xlu0 %98
    %vm100 = vcmask 31744
    %s101 = scalar_lea.vmem [#allocation0], 3
    %102 = vst.msk [vmem:[%s101] ss:$8 sm:$0xf] %vm100, %v99
    %s103 = scalar_lea.vmem [#allocation0], 3
    %104 = vst.msk [vmem:[%s103] ss:$8 sm:$0xf0] %vm100, %v99
    %s105 = scalar_lea.vmem %s0, 8
    %v106 = vld [vmem:[%s105] sm:$0xff]
    %107 = vrot.lane.b32.xlu0 %v106, 116
    %v108 = vpop.permute.xlu0 %107
    %vm109 = vcmask 31744
    %s110 = scalar_lea.vmem [#allocation0], 67
    %111 = vst.msk [vmem:[%s110] ss:$8 sm:$0xf] %vm109, %v108
    %s112 = scalar_lea.vmem [#allocation0], 67
    %113 = vst.msk [vmem:[%s112] ss:$8 sm:$0xf0] %vm109, %v108
    %s114 = scalar_lea.vmem %s0, 16
    %v115 = vld [vmem:[%s114] sm:$0xff]
    %116 = vrot.lane.b32.xlu0 %v115, 116
    %v117 = vpop.permute.xlu0 %116
    %vm118 = vcmask 31744
    %s119 = scalar_lea.vmem [#allocation0], 131
    %120 = vst.msk [vmem:[%s119] ss:$8 sm:$0xf] %vm118, %v117
    %s121 = scalar_lea.vmem [#allocation0], 131
    %122 = vst.msk [vmem:[%s121] ss:$8 sm:$0xf0] %vm118, %v117
    %s123 = scalar_lea.vmem %s0, 24
    %v124 = vld [vmem:[%s123] sm:$0xff]
    %125 = vrot.lane.b32.xlu0 %v124, 116
    %v126 = vpop.permute.xlu0 %125
    %vm127 = vcmask 31744
    %s128 = scalar_lea.vmem [#allocation0], 195
    %129 = vst.msk [vmem:[%s128] ss:$8 sm:$0xf] %vm127, %v126
    %s130 = scalar_lea.vmem [#allocation0], 195
    %131 = vst.msk [vmem:[%s130] ss:$8 sm:$0xf0] %vm127, %v126
    %s133 = ssub.s32 16, 1
    %v134 = vld [vmem:[#allocation0] sm:%s133]
    %s136 = ssub.s32 16, 1
    %137 = vst [vmem:[%s1] sm:%s136] %v134
    %s138 = scalar_lea.vmem [#allocation0], 8
    %v139 = vld [vmem:[%s138] sm:%s133]
    %s141 = ssub.s32 16, 1
    %s142 = scalar_lea.vmem %s1, 4
    %143 = vst [vmem:[%s142] sm:%s141] %v139
    %s144 = scalar_lea.vmem [#allocation0], 16
    %v145 = vld [vmem:[%s144] sm:%s133]
    %s147 = ssub.s32 16, 1
    %s148 = scalar_lea.vmem %s1, 8
    %149 = vst [vmem:[%s148] sm:%s147] %v145
    %s150 = scalar_lea.vmem [#allocation0], 24
    %v151 = vld [vmem:[%s150] sm:%s133]
    %s153 = ssub.s32 16, 1
    %s154 = scalar_lea.vmem %s1, 12
    %155 = vst [vmem:[%s154] sm:%s153] %v151
    %s156 = scalar_lea.vmem [#allocation0], 32
    %v157 = vld [vmem:[%s156] sm:%s133]
    %s159 = ssub.s32 16, 1
    %s160 = scalar_lea.vmem %s1, 16
    %161 = vst [vmem:[%s160] sm:%s159] %v157
    %s162 = scalar_lea.vmem [#allocation0], 40
    %v163 = vld [vmem:[%s162] sm:%s133]
    %s165 = ssub.s32 16, 1
    %s166 = scalar_lea.vmem %s1, 20
    %167 = vst [vmem:[%s166] sm:%s165] %v163
    %s168 = scalar_lea.vmem [#allocation0], 48
    %v169 = vld [vmem:[%s168] sm:%s133]
    %s171 = ssub.s32 16, 1
    %s172 = scalar_lea.vmem %s1, 24
    %173 = vst [vmem:[%s172] sm:%s171] %v169
    %s174 = scalar_lea.vmem [#allocation0], 56
    %v175 = vld [vmem:[%s174] sm:%s133]
    %s177 = ssub.s32 16, 1
    %s178 = scalar_lea.vmem %s1, 28
    %179 = vst [vmem:[%s178] sm:%s177] %v175
    %s180 = scalar_lea.vmem [#allocation0], 64
    %v181 = vld [vmem:[%s180] sm:%s133]
    %s183 = ssub.s32 16, 1
    %s184 = scalar_lea.vmem %s1, 32
    %185 = vst [vmem:[%s184] sm:%s183] %v181
    %s186 = scalar_lea.vmem [#allocation0], 72
    %v187 = vld [vmem:[%s186] sm:%s133]
    %s189 = ssub.s32 16, 1
    %s190 = scalar_lea.vmem %s1, 36
    %191 = vst [vmem:[%s190] sm:%s189] %v187
    %s192 = scalar_lea.vmem [#allocation0], 80
    %v193 = vld [vmem:[%s192] sm:%s133]
    %s195 = ssub.s32 16, 1
    %s196 = scalar_lea.vmem %s1, 40
    %197 = vst [vmem:[%s196] sm:%s195] %v193
    %s198 = scalar_lea.vmem [#allocation0], 88
    %v199 = vld [vmem:[%s198] sm:%s133]
    %s201 = ssub.s32 16, 1
    %s202 = scalar_lea.vmem %s1, 44
    %203 = vst [vmem:[%s202] sm:%s201] %v199
    %s204 = scalar_lea.vmem [#allocation0], 96
    %v205 = vld [vmem:[%s204] sm:%s133]
    %s207 = ssub.s32 16, 1
    %s208 = scalar_lea.vmem %s1, 48
    %209 = vst [vmem:[%s208] sm:%s207] %v205
    %s210 = scalar_lea.vmem [#allocation0], 104
    %v211 = vld [vmem:[%s210] sm:%s133]
    %s213 = ssub.s32 16, 1
    %s214 = scalar_lea.vmem %s1, 52
    %215 = vst [vmem:[%s214] sm:%s213] %v211
    %s216 = scalar_lea.vmem [#allocation0], 112
    %v217 = vld [vmem:[%s216] sm:%s133]
    %s219 = ssub.s32 16, 1
    %s220 = scalar_lea.vmem %s1, 56
    %221 = vst [vmem:[%s220] sm:%s219] %v217
    %s222 = scalar_lea.vmem [#allocation0], 120
    %v223 = vld [vmem:[%s222] sm:%s133]
    %s225 = ssub.s32 16, 1
    %s226 = scalar_lea.vmem %s1, 60
    %227 = vst [vmem:[%s226] sm:%s225] %v223
    %s228 = scalar_lea.vmem [#allocation0], 128
    %v229 = vld [vmem:[%s228] sm:%s133]
    %s231 = ssub.s32 16, 1
    %s232 = scalar_lea.vmem %s1, 64
    %233 = vst [vmem:[%s232] sm:%s231] %v229
    %s234 = scalar_lea.vmem [#allocation0], 136
    %v235 = vld [vmem:[%s234] sm:%s133]
    %s237 = ssub.s32 16, 1
    %s238 = scalar_lea.vmem %s1, 68
    %239 = vst [vmem:[%s238] sm:%s237] %v235
    %s240 = scalar_lea.vmem [#allocation0], 144
    %v241 = vld [vmem:[%s240] sm:%s133]
    %s243 = ssub.s32 16, 1
    %s244 = scalar_lea.vmem %s1, 72
    %245 = vst [vmem:[%s244] sm:%s243] %v241
    %s246 = scalar_lea.vmem [#allocation0], 152
    %v247 = vld [vmem:[%s246] sm:%s133]
    %s249 = ssub.s32 16, 1
    %s250 = scalar_lea.vmem %s1, 76
    %251 = vst [vmem:[%s250] sm:%s249] %v247
    %s252 = scalar_lea.vmem [#allocation0], 160
    %v253 = vld [vmem:[%s252] sm:%s133]
    %s255 = ssub.s32 16, 1
    %s256 = scalar_lea.vmem %s1, 80
    %257 = vst [vmem:[%s256] sm:%s255] %v253
    %s258 = scalar_lea.vmem [#allocation0], 168
    %v259 = vld [vmem:[%s258] sm:%s133]
    %s261 = ssub.s32 16, 1
    %s262 = scalar_lea.vmem %s1, 84
    %263 = vst [vmem:[%s262] sm:%s261] %v259
    %s264 = scalar_lea.vmem [#allocation0], 176
    %v265 = vld [vmem:[%s264] sm:%s133]
    %s267 = ssub.s32 16, 1
    %s268 = scalar_lea.vmem %s1, 88
    %269 = vst [vmem:[%s268] sm:%s267] %v265
    %s270 = scalar_lea.vmem [#allocation0], 184
    %v271 = vld [vmem:[%s270] sm:%s133]
    %s273 = ssub.s32 16, 1
    %s274 = scalar_lea.vmem %s1, 92
    %275 = vst [vmem:[%s274] sm:%s273] %v271
    %s276 = scalar_lea.vmem [#allocation0], 192
    %v277 = vld [vmem:[%s276] sm:%s133]
    %s279 = ssub.s32 16, 1
    %s280 = scalar_lea.vmem %s1, 96
    %281 = vst [vmem:[%s280] sm:%s279] %v277
    %s282 = scalar_lea.vmem [#allocation0], 200
    %v283 = vld [vmem:[%s282] sm:%s133]
    %s285 = ssub.s32 16, 1
    %s286 = scalar_lea.vmem %s1, 100
    %287 = vst [vmem:[%s286] sm:%s285] %v283
    %s288 = scalar_lea.vmem [#allocation0], 208
    %v289 = vld [vmem:[%s288] sm:%s133]
    %s291 = ssub.s32 16, 1
    %s292 = scalar_lea.vmem %s1, 104
    %293 = vst [vmem:[%s292] sm:%s291] %v289
    %s294 = scalar_lea.vmem [#allocation0], 216
    %v295 = vld [vmem:[%s294] sm:%s133]
    %s297 = ssub.s32 16, 1
    %s298 = scalar_lea.vmem %s1, 108
    %299 = vst [vmem:[%s298] sm:%s297] %v295
    %s300 = scalar_lea.vmem [#allocation0], 224
    %v301 = vld [vmem:[%s300] sm:%s133]
    %s303 = ssub.s32 16, 1
    %s304 = scalar_lea.vmem %s1, 112
    %305 = vst [vmem:[%s304] sm:%s303] %v301
    %s306 = scalar_lea.vmem [#allocation0], 232
    %v307 = vld [vmem:[%s306] sm:%s133]
    %s309 = ssub.s32 16, 1
    %s310 = scalar_lea.vmem %s1, 116
    %311 = vst [vmem:[%s310] sm:%s309] %v307
    %s312 = scalar_lea.vmem [#allocation0], 240
    %v313 = vld [vmem:[%s312] sm:%s133]
    %s315 = ssub.s32 16, 1
    %s316 = scalar_lea.vmem %s1, 120
    %317 = vst [vmem:[%s316] sm:%s315] %v313
    %s318 = scalar_lea.vmem [#allocation0], 248
    %v319 = vld [vmem:[%s318] sm:%s133]
    %s321 = ssub.s32 16, 1
    %s322 = scalar_lea.vmem %s1, 124
    %323 = vst [vmem:[%s322] sm:%s321] %v319

// kernel: forward.1
$region0: #{forward.1}
  #allocation0 [shape = 'u32[]', space=smem, size = 0x4, offset = 0x4, fixed_abs, tag = 'smem constant byte address 0x4 - core index']
  #allocation1 [shape = 'u32[72,128]{1,0:T(1,128)}', space=vmem, size = 0x9000, scoped, tag = 'internal scratch']
  #allocation2 [shape = 'f32[400,512]{1,0:T(8,128)}', space=vmem, size = 0xc8000, scoped, tag = 'scratch operand']
  #allocation3 [shape = 'f32[400,64]{1,0:T(8,128)}', space=vmem, size = 0x32000, scoped, tag = 'scratch operand']
  #allocation4 [shape = 'f32[8,128]{1,0:T(8,128)}', space=vmem, size = 0x1000, scoped, tag = 'scratch operand']
  %s0 = inlined_call_operand.vmem [shape: f32[400,32], index: 0, kind: input, shape index: {}]
  %s1 = inlined_call_operand.hbm [shape: f32[32,512], index: 1, kind: input, shape index: {}]
  %s2 = inlined_call_operand.vmem [shape: f32[3584,64], index: 2, kind: input, shape index: {}]
  %s3 = inlined_call_operand.hbm [shape: f32[568,64], index: 3, kind: input, shape index: {}]
  %s4 = inlined_call_operand.vmem [shape: f32[8,8], index: 4, kind: output, shape index: {}]
  %s5 = sld [smem:[#allocation0]]
  $region34: #{forward.1} parent=0
    _
  %s7 = ssub.s32 1, %s5
  %s8 = scalar_select 0, %s7, %s5
  $region1: #{forward.1} parent=0
    #allocation5 [shape = 'u8[65536]{0}', space=vmem, size = 0x10000, scoped, tag = 'input window, operand 1, single buffered']
    #allocation6 [shape = 's32[1]{0}', space=sflag, size = 0x4, scoped, tag = 'scoped memory for forward.1']
    #allocation7 [shape = 'u8[290816]{0}', space=vmem, size = 0x47000, scoped, tag = 'input window, operand 3, single buffered']
    #allocation8 [shape = 's32[1]{0}', space=sflag, size = 0x4, scoped, tag = 'scoped memory for forward.1']
    %9 = vsyncpa [#allocation6], 0
    %10 = vsyncpa [#allocation8], 0
    // Predicated region
    $region2: #{forward.1} parent=1 // pred_check
      _
    $region3: #{forward.1} parent=1 // pred_check_branch
      %12 = sbr.rel (0) target = $region5
    $region4: #{forward.1} parent=1 // pred_region
      _
    $region5: #{forward.1} parent=1 // pred_fallthru
      _
    // Predicated region
    $region6: #{forward.1} parent=1 // pred_check
      _
    $region7: #{forward.1} parent=1 // pred_check_branch
      %14 = sbr.rel (0) target = $region9
    $region8: #{forward.1} parent=1 // pred_region
      %16 = vsyncadd [#allocation6], 0
      %s17 = sshll.u32 %s1, 4
      %s18 = int_to_ptr.hbm [resolvable:$true] %s17
      %s19 = sshll.u32 [#allocation5], 4
      %s20 = int_to_ptr.vmem [resolvable:$true] %s19
      %25 = dma.hbm_to_vmem [thread:$0]  %s18, 2048, %s20, [#allocation6], 512, 512, 32
    $region9: #{forward.1} parent=1 // pred_fallthru
      _
    // Predicated region
    $region10: #{forward.1} parent=1 // pred_check
      _
    $region11: #{forward.1} parent=1 // pred_check_branch
      %27 = sbr.rel (0) target = $region13
    $region12: #{forward.1} parent=1 // pred_region
      _
    $region13: #{forward.1} parent=1 // pred_fallthru
      _
    // Predicated region
    $region14: #{forward.1} parent=1 // pred_check
      _
    $region15: #{forward.1} parent=1 // pred_check_branch
      %29 = sbr.rel (0) target = $region17
    $region16: #{forward.1} parent=1 // pred_region
      %31 = vsyncadd [#allocation8], 0
      %s32 = sshll.u32 %s3, 4
      %s33 = int_to_ptr.hbm [resolvable:$true] %s32
      %s34 = sshll.u32 [#allocation7], 4
      %s35 = int_to_ptr.vmem [resolvable:$true] %s34
      %40 = dma.hbm_to_vmem [thread:$0]  %s33, 9088, %s35, [#allocation8], 128, 128, 8
    $region17: #{forward.1} parent=1 // pred_fallthru
      _
    // Predicated region
    $region18: #{forward.1} parent=1 // pred_check
      _
    $region19: #{forward.1} parent=1 // pred_check_branch
      %42 = sbr.rel (0) target = $region21
    $region20: #{forward.1} parent=1 // pred_region
      %44 = dma.done [#allocation6], 2048
    $region21: #{forward.1} parent=1 // pred_fallthru
      _
    // Predicated region
    $region22: #{forward.1} parent=1 // pred_check
      _
    $region23: #{forward.1} parent=1 // pred_check_branch
      %46 = sbr.rel (0) target = $region25
    $region24: #{forward.1} parent=1 // pred_region
      %48 = dma.done [#allocation8], 9088
    $region25: #{forward.1} parent=1 // pred_fallthru
      _
    %v49 = vld [vmem:[%s0] sm:$0xff]
    %v50 = vld [vmem:[%s0 + $0x8] sm:$0xff]
    %v51 = vld [vmem:[%s0 + $0x10] sm:$0xff]
    %v52 = vld [vmem:[%s0 + $0x18] sm:$0xff]
    %v53 = vld [vmem:[%s0 + $0x20] sm:$0xff]
    %v54 = vld [vmem:[%s0 + $0x28] sm:$0xff]
    %v55 = vld [vmem:[%s0 + $0x30] sm:$0xff]
    %v56 = vld [vmem:[%s0 + $0x38] sm:$0xff]
    %v57 = vld [vmem:[%s0 + $0x40] sm:$0xff]
    %v58 = vld [vmem:[%s0 + $0x48] sm:$0xff]
    %v59 = vld [vmem:[%s0 + $0x50] sm:$0xff]
    %v60 = vld [vmem:[%s0 + $0x58] sm:$0xff]
    %v61 = vld [vmem:[%s0 + $0x60] sm:$0xff]
    %v62 = vld [vmem:[%s0 + $0x68] sm:$0xff]
    %v63 = vld [vmem:[%s0 + $0x70] sm:$0xff]
    %v64 = vld [vmem:[%s0 + $0x78] sm:$0xff]
    %v65 = vld [vmem:[%s0 + $0x80] sm:$0xff]
    %v66 = vld [vmem:[%s0 + $0x88] sm:$0xff]
    %v67 = vld [vmem:[%s0 + $0x90] sm:$0xff]
    %v68 = vld [vmem:[%s0 + $0x98] sm:$0xff]
    %v69 = vld [vmem:[%s0 + $0xa0] sm:$0xff]
    %v70 = vld [vmem:[%s0 + $0xa8] sm:$0xff]
    %v71 = vld [vmem:[%s0 + $0xb0] sm:$0xff]
    %v72 = vld [vmem:[%s0 + $0xb8] sm:$0xff]
    %v73 = vld [vmem:[%s0 + $0xc0] sm:$0xff]
    %v74 = vld [vmem:[%s0 + $0xc8] sm:$0xff]
    %v75 = vld [vmem:[%s0 + $0xd0] sm:$0xff]
    %v76 = vld [vmem:[%s0 + $0xd8] sm:$0xff]
    %v77 = vld [vmem:[%s0 + $0xe0] sm:$0xff]
    %v78 = vld [vmem:[%s0 + $0xe8] sm:$0xff]
    %v79 = vld [vmem:[%s0 + $0xf0] sm:$0xff]
    %v80 = vld [vmem:[%s0 + $0xf8] sm:$0xff]
    %v81 = vld [vmem:[%s0 + $0x100] sm:$0xff]
    %v82 = vld [vmem:[%s0 + $0x108] sm:$0xff]
    %v83 = vld [vmem:[%s0 + $0x110] sm:$0xff]
    %v84 = vld [vmem:[%s0 + $0x118] sm:$0xff]
    %v85 = vld [vmem:[%s0 + $0x120] sm:$0xff]
    %v86 = vld [vmem:[%s0 + $0x128] sm:$0xff]
    %v87 = vld [vmem:[%s0 + $0x130] sm:$0xff]
    %v88 = vld [vmem:[%s0 + $0x138] sm:$0xff]
    %v89 = vld [vmem:[%s0 + $0x140] sm:$0xff]
    %v90 = vld [vmem:[%s0 + $0x148] sm:$0xff]
    %v91 = vld [vmem:[%s0 + $0x150] sm:$0xff]
    %v92 = vld [vmem:[%s0 + $0x158] sm:$0xff]
    %v93 = vld [vmem:[%s0 + $0x160] sm:$0xff]
    %v94 = vld [vmem:[%s0 + $0x168] sm:$0xff]
    %v95 = vld [vmem:[%s0 + $0x170] sm:$0xff]
    %v96 = vld [vmem:[%s0 + $0x178] sm:$0xff]
    %v97 = vld [vmem:[%s0 + $0x180] sm:$0xff]
    %v98 = vld [vmem:[%s0 + $0x188] sm:$0xff]
    %v99 = vld [vmem:[#allocation5] sm:$0xff]
    %v100 = vld [vmem:[#allocation5 + $0x8] sm:$0xff]
    %v101 = vld [vmem:[#allocation5 + $0x10] sm:$0xff]
    %v102 = vld [vmem:[#allocation5 + $0x18] sm:$0xff]
    %v103 = vld [vmem:[#allocation5 + $0x20] sm:$0xff]
    %v104 = vld [vmem:[#allocation5 + $0x28] sm:$0xff]
    %v105 = vld [vmem:[#allocation5 + $0x30] sm:$0xff]
    %v106 = vld [vmem:[#allocation5 + $0x38] sm:$0xff]
    %v107 = vld [vmem:[#allocation5 + $0x40] sm:$0xff]
    %v108 = vld [vmem:[#allocation5 + $0x48] sm:$0xff]
    %v109 = vld [vmem:[#allocation5 + $0x50] sm:$0xff]
    %v110 = vld [vmem:[#allocation5 + $0x58] sm:$0xff]
    %v111 = vld [vmem:[#allocation5 + $0x60] sm:$0xff]
    %v112 = vld [vmem:[#allocation5 + $0x68] sm:$0xff]
    %v113 = vld [vmem:[#allocation5 + $0x70] sm:$0xff]
    %v114 = vld [vmem:[#allocation5 + $0x78] sm:$0xff]
    %vm115 = vcmask 261120
    %v117 = vsel %vm115, %v49, 0
    %v120 = vsel %vm115, %v50, 0
    %v123 = vsel %vm115, %v51, 0
    %v126 = vsel %vm115, %v52, 0
    %v129 = vsel %vm115, %v53, 0
    %v132 = vsel %vm115, %v54, 0
    %v135 = vsel %vm115, %v55, 0
    %v138 = vsel %vm115, %v56, 0
    %v141 = vsel %vm115, %v57, 0
    %v144 = vsel %vm115, %v58, 0
    %v147 = vsel %vm115, %v59, 0
    %v150 = vsel %vm115, %v60, 0
    %v153 = vsel %vm115, %v61, 0
    %v156 = vsel %vm115, %v62, 0
    %v159 = vsel %vm115, %v63, 0
    %v162 = vsel %vm115, %v64, 0
    %v165 = vsel %vm115, %v65, 0
    %v168 = vsel %vm115, %v66, 0
    %v171 = vsel %vm115, %v67, 0
    %v174 = vsel %vm115, %v68, 0
    %v177 = vsel %vm115, %v69, 0
    %v180 = vsel %vm115, %v70, 0
    %v183 = vsel %vm115, %v71, 0
    %v186 = vsel %vm115, %v72, 0
    %v189 = vsel %vm115, %v73, 0
    %v192 = vsel %vm115, %v74, 0
    %v195 = vsel %vm115, %v75, 0
    %v198 = vsel %vm115, %v76, 0
    %v201 = vsel %vm115, %v77, 0
    %v204 = vsel %vm115, %v78, 0
    %v207 = vsel %vm115, %v79, 0
    %v210 = vsel %vm115, %v80, 0
    %v213 = vsel %vm115, %v81, 0
    %v216 = vsel %vm115, %v82, 0
    %v219 = vsel %vm115, %v83, 0
    %v222 = vsel %vm115, %v84, 0
    %v225 = vsel %vm115, %v85, 0
    %v228 = vsel %vm115, %v86, 0
    %v231 = vsel %vm115, %v87, 0
    %v234 = vsel %vm115, %v88, 0
    %v237 = vsel %vm115, %v89, 0
    %v240 = vsel %vm115, %v90, 0
    %v243 = vsel %vm115, %v91, 0
    %v246 = vsel %vm115, %v92, 0
    %v249 = vsel %vm115, %v93, 0
    %v252 = vsel %vm115, %v94, 0
    %v255 = vsel %vm115, %v95, 0
    %v258 = vsel %vm115, %v96, 0
    %v261 = vsel %vm115, %v97, 0
    %v264 = vsel %vm115, %v98, 0
    %266 = vmatpush.msra.mxu0 0.0
    %267 = vmatpush.msra.mxu0 0.0
    %268 = vmatpush.msra.mxu0 0.0
    %269 = vmatpush.msra.mxu0 0.0
    %270 = vmatpush.msra.mxu0 0.0
    %271 = vmatpush.msra.mxu0 0.0
    %272 = vmatpush.msra.mxu0 0.0
    %273 = vmatpush.msra.mxu0 0.0
    %274 = vmatpush.msra.mxu0 0.0
    %275 = vmatpush.msra.mxu0 0.0
    %276 = vmatpush.msra.mxu0 0.0
    %277 = vmatpush.msra.mxu0 0.0
    %278 = vmatpush.msra.mxu0 %v111
    %279 = vmatpush.msra.mxu0 %v107
    %280 = vmatpush.msra.mxu0 %v103
    %281 = vmatpush.msra.mxu0 %v99
    %282 = vmatmul.f32.gmra.mxu0 %v117
    %v283 = vpop.f32.mrf.mxu0
    %v284 = vadd.f32 0.0, %v283
    %285 = vmatmul.f32.gmra.mxu0 %v120
    %v286 = vpop.f32.mrf.mxu0
    %v287 = vadd.f32 0.0, %v286
    %288 = vmatmul.f32.gmra.mxu0 %v123
    %v289 = vpop.f32.mrf.mxu0
    %v290 = vadd.f32 0.0, %v289
    %291 = vmatmul.f32.gmra.mxu0 %v126
    %v292 = vpop.f32.mrf.mxu0
    %v293 = vadd.f32 0.0, %v292
    %294 = vmatmul.f32.gmra.mxu0 %v129
    %v295 = vpop.f32.mrf.mxu0
    %v296 = vadd.f32 0.0, %v295
    %297 = vmatmul.f32.gmra.mxu0 %v132
    %v298 = vpop.f32.mrf.mxu0
    %v299 = vadd.f32 0.0, %v298
    %300 = vmatmul.f32.gmra.mxu0 %v135
    %v301 = vpop.f32.mrf.mxu0
    %v302 = vadd.f32 0.0, %v301
    %303 = vmatmul.f32.gmra.mxu0 %v138
    %v304 = vpop.f32.mrf.mxu0
    %v305 = vadd.f32 0.0, %v304
    %306 = vmatmul.f32.gmra.mxu0 %v141
    %v307 = vpop.f32.mrf.mxu0
    %v308 = vadd.f32 0.0, %v307
    %309 = vmatmul.f32.gmra.mxu0 %v144
    %v310 = vpop.f32.mrf.mxu0
    %v311 = vadd.f32 0.0, %v310
    %312 = vmatmul.f32.gmra.mxu0 %v147
    %v313 = vpop.f32.mrf.mxu0
    %v314 = vadd.f32 0.0, %v313
    %315 = vmatmul.f32.gmra.mxu0 %v150
    %v316 = vpop.f32.mrf.mxu0
    %v317 = vadd.f32 0.0, %v316
    %318 = vmatmul.f32.gmra.mxu0 %v153
    %v319 = vpop.f32.mrf.mxu0
    %v320 = vadd.f32 0.0, %v319
    %321 = vmatmul.f32.gmra.mxu0 %v156
    %v322 = vpop.f32.mrf.mxu0
    %v323 = vadd.f32 0.0, %v322
    %324 = vmatmul.f32.gmra.mxu0 %v159
    %v325 = vpop.f32.mrf.mxu0
    %v326 = vadd.f32 0.0, %v325
    %327 = vmatmul.f32.gmra.mxu0 %v162
    %v328 = vpop.f32.mrf.mxu0
    %v329 = vadd.f32 0.0, %v328
    %330 = vmatmul.f32.gmra.mxu0 %v165
    %v331 = vpop.f32.mrf.mxu0
    %v332 = vadd.f32 0.0, %v331
    %333 = vmatmul.f32.gmra.mxu0 %v168
    %v334 = vpop.f32.mrf.mxu0
    %v335 = vadd.f32 0.0, %v334
    %336 = vmatmul.f32.gmra.mxu0 %v171
    %v337 = vpop.f32.mrf.mxu0
    %v338 = vadd.f32 0.0, %v337
    %339 = vmatmul.f32.gmra.mxu0 %v174
    %v340 = vpop.f32.mrf.mxu0
    %v341 = vadd.f32 0.0, %v340
    %342 = vmatmul.f32.gmra.mxu0 %v177
    %v343 = vpop.f32.mrf.mxu0
    %v344 = vadd.f32 0.0, %v343
    %345 = vmatmul.f32.gmra.mxu0 %v180
    %v346 = vpop.f32.mrf.mxu0
    %v347 = vadd.f32 0.0, %v346
    %348 = vmatmul.f32.gmra.mxu0 %v183
    %v349 = vpop.f32.mrf.mxu0
    %v350 = vadd.f32 0.0, %v349
    %351 = vmatmul.f32.gmra.mxu0 %v186
    %v352 = vpop.f32.mrf.mxu0
    %v353 = vadd.f32 0.0, %v352
    %354 = vmatmul.f32.gmra.mxu0 %v189
    %v355 = vpop.f32.mrf.mxu0
    %v356 = vadd.f32 0.0, %v355
    %357 = vmatmul.f32.gmra.mxu0 %v192
    %v358 = vpop.f32.mrf.mxu0
    %v359 = vadd.f32 0.0, %v358
    %360 = vmatmul.f32.gmra.mxu0 %v195
    %v361 = vpop.f32.mrf.mxu0
    %v362 = vadd.f32 0.0, %v361
    %363 = vmatmul.f32.gmra.mxu0 %v198
    %v364 = vpop.f32.mrf.mxu0
    %v365 = vadd.f32 0.0, %v364
    %366 = vmatmul.f32.gmra.mxu0 %v201
    %v367 = vpop.f32.mrf.mxu0
    %v368 = vadd.f32 0.0, %v367
    %369 = vmatmul.f32.gmra.mxu0 %v204
    %v370 = vpop.f32.mrf.mxu0
    %v371 = vadd.f32 0.0, %v370
    %372 = vmatmul.f32.gmra.mxu0 %v207
    %v373 = vpop.f32.mrf.mxu0
    %v374 = vadd.f32 0.0, %v373
    %375 = vmatmul.f32.gmra.mxu0 %v210
    %v376 = vpop.f32.mrf.mxu0
    %v377 = vadd.f32 0.0, %v376
    %378 = vmatmul.f32.gmra.mxu0 %v213
    %v379 = vpop.f32.mrf.mxu0
    %v380 = vadd.f32 0.0, %v379
    %381 = vmatmul.f32.gmra.mxu0 %v216
    %v382 = vpop.f32.mrf.mxu0
    %v383 = vadd.f32 0.0, %v382
    %384 = vmatmul.f32.gmra.mxu0 %v219
    %v385 = vpop.f32.mrf.mxu0
    %v386 = vadd.f32 0.0, %v385
    %387 = vmatmul.f32.gmra.mxu0 %v222
    %v388 = vpop.f32.mrf.mxu0
    %v389 = vadd.f32 0.0, %v388
    %390 = vmatmul.f32.gmra.mxu0 %v225
    %v391 = vpop.f32.mrf.mxu0
    %v392 = vadd.f32 0.0, %v391
    %393 = vmatmul.f32.gmra.mxu0 %v228
    %v394 = vpop.f32.mrf.mxu0
    %v395 = vadd.f32 0.0, %v394
    %396 = vmatmul.f32.gmra.mxu0 %v231
    %v397 = vpop.f32.mrf.mxu0
    %v398 = vadd.f32 0.0, %v397
    %399 = vmatmul.f32.gmra.mxu0 %v234
    %v400 = vpop.f32.mrf.mxu0
    %v401 = vadd.f32 0.0, %v400
    %402 = vmatmul.f32.gmra.mxu0 %v237
    %v403 = vpop.f32.mrf.mxu0
    %v404 = vadd.f32 0.0, %v403
    %405 = vmatmul.f32.gmra.mxu0 %v240
    %v406 = vpop.f32.mrf.mxu0
    %v407 = vadd.f32 0.0, %v406
    %408 = vmatmul.f32.gmra.mxu0 %v243
    %v409 = vpop.f32.mrf.mxu0
    %v410 = vadd.f32 0.0, %v409
    %411 = vmatmul.f32.gmra.mxu0 %v246
    %v412 = vpop.f32.mrf.mxu0
    %v413 = vadd.f32 0.0, %v412
    %414 = vmatmul.f32.gmra.mxu0 %v249
    %v415 = vpop.f32.mrf.mxu0
    %v416 = vadd.f32 0.0, %v415
    %417 = vmatmul.f32.gmra.mxu0 %v252
    %v418 = vpop.f32.mrf.mxu0
    %v419 = vadd.f32 0.0, %v418
    %420 = vmatmul.f32.gmra.mxu0 %v255
    %v421 = vpop.f32.mrf.mxu0
    %v422 = vadd.f32 0.0, %v421
    %423 = vmatmul.f32.gmra.mxu0 %v258
    %v424 = vpop.f32.mrf.mxu0
    %v425 = vadd.f32 0.0, %v424
    %426 = vmatmul.f32.gmra.mxu0 %v261
    %v427 = vpop.f32.mrf.mxu0
    %v428 = vadd.f32 0.0, %v427
    %429 = vmatmul.f32.gmra.mxu0 %v264
    %v430 = vpop.f32.mrf.mxu0
    %v431 = vadd.f32 0.0, %v430
    %432 = vdwg.mxu0
    %433 = vmatpush.msra.mxu0 0.0
    %434 = vmatpush.msra.mxu0 0.0
    %435 = vmatpush.msra.mxu0 0.0
    %436 = vmatpush.msra.mxu0 0.0
    %437 = vmatpush.msra.mxu0 0.0
    %438 = vmatpush.msra.mxu0 0.0
    %439 = vmatpush.msra.mxu0 0.0
    %440 = vmatpush.msra.mxu0 0.0
    %441 = vmatpush.msra.mxu0 0.0
    %442 = vmatpush.msra.mxu0 0.0
    %443 = vmatpush.msra.mxu0 0.0
    %444 = vmatpush.msra.mxu0 0.0
    %445 = vmatpush.msra.mxu0 %v112
    %446 = vmatpush.msra.mxu0 %v108
    %447 = vmatpush.msra.mxu0 %v104
    %448 = vmatpush.msra.mxu0 %v100
    %449 = vmatmul.f32.gmra.mxu0 %v117
    %v450 = vpop.f32.mrf.mxu0
    %v451 = vadd.f32 0.0, %v450
    %452 = vmatmul.f32.gmra.mxu0 %v120
    %v453 = vpop.f32.mrf.mxu0
    %v454 = vadd.f32 0.0, %v453
    %455 = vmatmul.f32.gmra.mxu0 %v123
    %v456 = vpop.f32.mrf.mxu0
    %v457 = vadd.f32 0.0, %v456
    %458 = vmatmul.f32.gmra.mxu0 %v126
    %v459 = vpop.f32.mrf.mxu0
    %v460 = vadd.f32 0.0, %v459
    %461 = vmatmul.f32.gmra.mxu0 %v129
    %v462 = vpop.f32.mrf.mxu0
    %v463 = vadd.f32 0.0, %v462
    %464 = vmatmul.f32.gmra.mxu0 %v132
    %v465 = vpop.f32.mrf.mxu0
    %v466 = vadd.f32 0.0, %v465
    %467 = vmatmul.f32.gmra.mxu0 %v135
    %v468 = vpop.f32.mrf.mxu0
    %v469 = vadd.f32 0.0, %v468
    %470 = vmatmul.f32.gmra.mxu0 %v138
    %v471 = vpop.f32.mrf.mxu0
    %v472 = vadd.f32 0.0, %v471
    %473 = vmatmul.f32.gmra.mxu0 %v141
    %v474 = vpop.f32.mrf.mxu0
    %v475 = vadd.f32 0.0, %v474
    %476 = vmatmul.f32.gmra.mxu0 %v144
    %v477 = vpop.f32.mrf.mxu0
    %v478 = vadd.f32 0.0, %v477
    %479 = vmatmul.f32.gmra.mxu0 %v147
    %v480 = vpop.f32.mrf.mxu0
    %v481 = vadd.f32 0.0, %v480
    %482 = vmatmul.f32.gmra.mxu0 %v150
    %v483 = vpop.f32.mrf.mxu0
    %v484 = vadd.f32 0.0, %v483
    %485 = vmatmul.f32.gmra.mxu0 %v153
    %v486 = vpop.f32.mrf.mxu0
    %v487 = vadd.f32 0.0, %v486
    %488 = vmatmul.f32.gmra.mxu0 %v156
    %v489 = vpop.f32.mrf.mxu0
    %v490 = vadd.f32 0.0, %v489
    %491 = vmatmul.f32.gmra.mxu0 %v159
    %v492 = vpop.f32.mrf.mxu0
    %v493 = vadd.f32 0.0, %v492
    %494 = vmatmul.f32.gmra.mxu0 %v162
    %v495 = vpop.f32.mrf.mxu0
    %v496 = vadd.f32 0.0, %v495
    %497 = vmatmul.f32.gmra.mxu0 %v165
    %v498 = vpop.f32.mrf.mxu0
    %v499 = vadd.f32 0.0, %v498
    %500 = vmatmul.f32.gmra.mxu0 %v168
    %v501 = vpop.f32.mrf.mxu0
    %v502 = vadd.f32 0.0, %v501
    %503 = vmatmul.f32.gmra.mxu0 %v171
    %v504 = vpop.f32.mrf.mxu0
    %v505 = vadd.f32 0.0, %v504
    %506 = vmatmul.f32.gmra.mxu0 %v174
    %v507 = vpop.f32.mrf.mxu0
    %v508 = vadd.f32 0.0, %v507
    %509 = vmatmul.f32.gmra.mxu0 %v177
    %v510 = vpop.f32.mrf.mxu0
    %v511 = vadd.f32 0.0, %v510
    %512 = vmatmul.f32.gmra.mxu0 %v180
    %v513 = vpop.f32.mrf.mxu0
    %v514 = vadd.f32 0.0, %v513
    %515 = vmatmul.f32.gmra.mxu0 %v183
    %v516 = vpop.f32.mrf.mxu0
    %v517 = vadd.f32 0.0, %v516
    %518 = vmatmul.f32.gmra.mxu0 %v186
    %v519 = vpop.f32.mrf.mxu0
    %v520 = vadd.f32 0.0, %v519
    %521 = vmatmul.f32.gmra.mxu0 %v189
    %v522 = vpop.f32.mrf.mxu0
    %v523 = vadd.f32 0.0, %v522
    %524 = vmatmul.f32.gmra.mxu0 %v192
    %v525 = vpop.f32.mrf.mxu0
    %v526 = vadd.f32 0.0, %v525
    %527 = vmatmul.f32.gmra.mxu0 %v195
    %v528 = vpop.f32.mrf.mxu0
    %v529 = vadd.f32 0.0, %v528
    %530 = vmatmul.f32.gmra.mxu0 %v198
    %v531 = vpop.f32.mrf.mxu0
    %v532 = vadd.f32 0.0, %v531
    %533 = vmatmul.f32.gmra.mxu0 %v201
    %v534 = vpop.f32.mrf.mxu0
    %v535 = vadd.f32 0.0, %v534
    %536 = vmatmul.f32.gmra.mxu0 %v204
    %v537 = vpop.f32.mrf.mxu0
    %v538 = vadd.f32 0.0, %v537
    %539 = vmatmul.f32.gmra.mxu0 %v207
    %v540 = vpop.f32.mrf.mxu0
    %v541 = vadd.f32 0.0, %v540
    %542 = vmatmul.f32.gmra.mxu0 %v210
    %v543 = vpop.f32.mrf.mxu0
    %v544 = vadd.f32 0.0, %v543
    %545 = vmatmul.f32.gmra.mxu0 %v213
    %v546 = vpop.f32.mrf.mxu0
    %v547 = vadd.f32 0.0, %v546
    %548 = vmatmul.f32.gmra.mxu0 %v216
    %v549 = vpop.f32.mrf.mxu0
    %v550 = vadd.f32 0.0, %v549
    %551 = vmatmul.f32.gmra.mxu0 %v219
    %v552 = vpop.f32.mrf.mxu0
    %v553 = vadd.f32 0.0, %v552
    %554 = vmatmul.f32.gmra.mxu0 %v222
    %v555 = vpop.f32.mrf.mxu0
    %v556 = vadd.f32 0.0, %v555
    %557 = vmatmul.f32.gmra.mxu0 %v225
    %v558 = vpop.f32.mrf.mxu0
    %v559 = vadd.f32 0.0, %v558
    %560 = vmatmul.f32.gmra.mxu0 %v228
    %v561 = vpop.f32.mrf.mxu0
    %v562 = vadd.f32 0.0, %v561
    %563 = vmatmul.f32.gmra.mxu0 %v231
    %v564 = vpop.f32.mrf.mxu0
    %v565 = vadd.f32 0.0, %v564
    %566 = vmatmul.f32.gmra.mxu0 %v234
    %v567 = vpop.f32.mrf.mxu0
    %v568 = vadd.f32 0.0, %v567
    %569 = vmatmul.f32.gmra.mxu0 %v237
    %v570 = vpop.f32.mrf.mxu0
    %v571 = vadd.f32 0.0, %v570
    %572 = vmatmul.f32.gmra.mxu0 %v240
    %v573 = vpop.f32.mrf.mxu0
    %v574 = vadd.f32 0.0, %v573
    %575 = vmatmul.f32.gmra.mxu0 %v243
    %v576 = vpop.f32.mrf.mxu0
    %v577 = vadd.f32 0.0, %v576
    %578 = vmatmul.f32.gmra.mxu0 %v246
    %v579 = vpop.f32.mrf.mxu0
    %v580 = vadd.f32 0.0, %v579
    %581 = vmatmul.f32.gmra.mxu0 %v249
    %v582 = vpop.f32.mrf.mxu0
    %v583 = vadd.f32 0.0, %v582
    %584 = vmatmul.f32.gmra.mxu0 %v252
    %v585 = vpop.f32.mrf.mxu0
    %v586 = vadd.f32 0.0, %v585
    %587 = vmatmul.f32.gmra.mxu0 %v255
    %v588 = vpop.f32.mrf.mxu0
    %v589 = vadd.f32 0.0, %v588
    %590 = vmatmul.f32.gmra.mxu0 %v258
    %v591 = vpop.f32.mrf.mxu0
    %v592 = vadd.f32 0.0, %v591
    %593 = vmatmul.f32.gmra.mxu0 %v261
    %v594 = vpop.f32.mrf.mxu0
    %v595 = vadd.f32 0.0, %v594
    %596 = vmatmul.f32.gmra.mxu0 %v264
    %v597 = vpop.f32.mrf.mxu0
    %v598 = vadd.f32 0.0, %v597
    %599 = vdwg.mxu0
    %600 = vmatpush.msra.mxu0 0.0
    %601 = vmatpush.msra.mxu0 0.0
    %602 = vmatpush.msra.mxu0 0.0
    %603 = vmatpush.msra.mxu0 0.0
    %604 = vmatpush.msra.mxu0 0.0
    %605 = vmatpush.msra.mxu0 0.0
    %606 = vmatpush.msra.mxu0 0.0
    %607 = vmatpush.msra.mxu0 0.0
    %608 = vmatpush.msra.mxu0 0.0
    %609 = vmatpush.msra.mxu0 0.0
    %610 = vmatpush.msra.mxu0 0.0
    %611 = vmatpush.msra.mxu0 0.0
    %612 = vmatpush.msra.mxu0 %v113
    %613 = vmatpush.msra.mxu0 %v109
    %614 = vmatpush.msra.mxu0 %v105
    %615 = vmatpush.msra.mxu0 %v101
    %616 = vmatmul.f32.gmra.mxu0 %v117
    %v617 = vpop.f32.mrf.mxu0
    %v618 = vadd.f32 0.0, %v617
    %619 = vmatmul.f32.gmra.mxu0 %v120
    %v620 = vpop.f32.mrf.mxu0
    %v621 = vadd.f32 0.0, %v620
    %622 = vmatmul.f32.gmra.mxu0 %v123
    %v623 = vpop.f32.mrf.mxu0
    %v624 = vadd.f32 0.0, %v623
    %625 = vmatmul.f32.gmra.mxu0 %v126
    %v626 = vpop.f32.mrf.mxu0
    %v627 = vadd.f32 0.0, %v626
    %628 = vmatmul.f32.gmra.mxu0 %v129
    %v629 = vpop.f32.mrf.mxu0
    %v630 = vadd.f32 0.0, %v629
    %631 = vmatmul.f32.gmra.mxu0 %v132
    %v632 = vpop.f32.mrf.mxu0
    %v633 = vadd.f32 0.0, %v632
    %634 = vmatmul.f32.gmra.mxu0 %v135
    %v635 = vpop.f32.mrf.mxu0
    %v636 = vadd.f32 0.0, %v635
    %637 = vmatmul.f32.gmra.mxu0 %v138
    %v638 = vpop.f32.mrf.mxu0
    %v639 = vadd.f32 0.0, %v638
    %640 = vmatmul.f32.gmra.mxu0 %v141
    %v641 = vpop.f32.mrf.mxu0
    %v642 = vadd.f32 0.0, %v641
    %643 = vmatmul.f32.gmra.mxu0 %v144
    %v644 = vpop.f32.mrf.mxu0
    %v645 = vadd.f32 0.0, %v644
    %646 = vmatmul.f32.gmra.mxu0 %v147
    %v647 = vpop.f32.mrf.mxu0
    %v648 = vadd.f32 0.0, %v647
    %649 = vmatmul.f32.gmra.mxu0 %v150
    %v650 = vpop.f32.mrf.mxu0
    %v651 = vadd.f32 0.0, %v650
    %652 = vmatmul.f32.gmra.mxu0 %v153
    %v653 = vpop.f32.mrf.mxu0
    %v654 = vadd.f32 0.0, %v653
    %655 = vmatmul.f32.gmra.mxu0 %v156
    %v656 = vpop.f32.mrf.mxu0
    %v657 = vadd.f32 0.0, %v656
    %658 = vmatmul.f32.gmra.mxu0 %v159
    %v659 = vpop.f32.mrf.mxu0
    %v660 = vadd.f32 0.0, %v659
    %661 = vmatmul.f32.gmra.mxu0 %v162
    %v662 = vpop.f32.mrf.mxu0
    %v663 = vadd.f32 0.0, %v662
    %664 = vmatmul.f32.gmra.mxu0 %v165
    %v665 = vpop.f32.mrf.mxu0
    %v666 = vadd.f32 0.0, %v665
    %667 = vmatmul.f32.gmra.mxu0 %v168
    %v668 = vpop.f32.mrf.mxu0
    %v669 = vadd.f32 0.0, %v668
    %670 = vmatmul.f32.gmra.mxu0 %v171
    %v671 = vpop.f32.mrf.mxu0
    %v672 = vadd.f32 0.0, %v671
    %673 = vmatmul.f32.gmra.mxu0 %v174
    %v674 = vpop.f32.mrf.mxu0
    %v675 = vadd.f32 0.0, %v674
    %676 = vmatmul.f32.gmra.mxu0 %v177
    %v677 = vpop.f32.mrf.mxu0
    %v678 = vadd.f32 0.0, %v677
    %679 = vmatmul.f32.gmra.mxu0 %v180
    %v680 = vpop.f32.mrf.mxu0
    %v681 = vadd.f32 0.0, %v680
    %682 = vmatmul.f32.gmra.mxu0 %v183
    %v683 = vpop.f32.mrf.mxu0
    %v684 = vadd.f32 0.0, %v683
    %685 = vmatmul.f32.gmra.mxu0 %v186
    %v686 = vpop.f32.mrf.mxu0
    %v687 = vadd.f32 0.0, %v686
    %688 = vmatmul.f32.gmra.mxu0 %v189
    %v689 = vpop.f32.mrf.mxu0
    %v690 = vadd.f32 0.0, %v689
    %691 = vmatmul.f32.gmra.mxu0 %v192
    %v692 = vpop.f32.mrf.mxu0
    %v693 = vadd.f32 0.0, %v692
    %694 = vmatmul.f32.gmra.mxu0 %v195
    %v695 = vpop.f32.mrf.mxu0
    %v696 = vadd.f32 0.0, %v695
    %697 = vmatmul.f32.gmra.mxu0 %v198
    %v698 = vpop.f32.mrf.mxu0
    %v699 = vadd.f32 0.0, %v698
    %700 = vmatmul.f32.gmra.mxu0 %v201
    %v701 = vpop.f32.mrf.mxu0
    %v702 = vadd.f32 0.0, %v701
    %703 = vmatmul.f32.gmra.mxu0 %v204
    %v704 = vpop.f32.mrf.mxu0
    %v705 = vadd.f32 0.0, %v704
    %706 = vmatmul.f32.gmra.mxu0 %v207
    %v707 = vpop.f32.mrf.mxu0
    %v708 = vadd.f32 0.0, %v707
    %709 = vmatmul.f32.gmra.mxu0 %v210
    %v710 = vpop.f32.mrf.mxu0
    %v711 = vadd.f32 0.0, %v710
    %712 = vmatmul.f32.gmra.mxu0 %v213
    %v713 = vpop.f32.mrf.mxu0
    %v714 = vadd.f32 0.0, %v713
    %715 = vmatmul.f32.gmra.mxu0 %v216
    %v716 = vpop.f32.mrf.mxu0
    %v717 = vadd.f32 0.0, %v716
    %718 = vmatmul.f32.gmra.mxu0 %v219
    %v719 = vpop.f32.mrf.mxu0
    %v720 = vadd.f32 0.0, %v719
    %721 = vmatmul.f32.gmra.mxu0 %v222
    %v722 = vpop.f32.mrf.mxu0
    %v723 = vadd.f32 0.0, %v722
    %724 = vmatmul.f32.gmra.mxu0 %v225
    %v725 = vpop.f32.mrf.mxu0
    %v726 = vadd.f32 0.0, %v725
    %727 = vmatmul.f32.gmra.mxu0 %v228
    %v728 = vpop.f32.mrf.mxu0
    %v729 = vadd.f32 0.0, %v728
    %730 = vmatmul.f32.gmra.mxu0 %v231
    %v731 = vpop.f32.mrf.mxu0
    %v732 = vadd.f32 0.0, %v731
    %733 = vmatmul.f32.gmra.mxu0 %v234
    %v734 = vpop.f32.mrf.mxu0
    %v735 = vadd.f32 0.0, %v734
    %736 = vmatmul.f32.gmra.mxu0 %v237
    %v737 = vpop.f32.mrf.mxu0
    %v738 = vadd.f32 0.0, %v737
    %739 = vmatmul.f32.gmra.mxu0 %v240
    %v740 = vpop.f32.mrf.mxu0
    %v741 = vadd.f32 0.0, %v740
    %742 = vmatmul.f32.gmra.mxu0 %v243
    %v743 = vpop.f32.mrf.mxu0
    %v744 = vadd.f32 0.0, %v743
    %745 = vmatmul.f32.gmra.mxu0 %v246
    %v746 = vpop.f32.mrf.mxu0
    %v747 = vadd.f32 0.0, %v746
    %748 = vmatmul.f32.gmra.mxu0 %v249
    %v749 = vpop.f32.mrf.mxu0
    %v750 = vadd.f32 0.0, %v749
    %751 = vmatmul.f32.gmra.mxu0 %v252
    %v752 = vpop.f32.mrf.mxu0
    %v753 = vadd.f32 0.0, %v752
    %754 = vmatmul.f32.gmra.mxu0 %v255
    %v755 = vpop.f32.mrf.mxu0
    %v756 = vadd.f32 0.0, %v755
    %757 = vmatmul.f32.gmra.mxu0 %v258
    %v758 = vpop.f32.mrf.mxu0
    %v759 = vadd.f32 0.0, %v758
    %760 = vmatmul.f32.gmra.mxu0 %v261
    %v761 = vpop.f32.mrf.mxu0
    %v762 = vadd.f32 0.0, %v761
    %763 = vmatmul.f32.gmra.mxu0 %v264
    %v764 = vpop.f32.mrf.mxu0
    %v765 = vadd.f32 0.0, %v764
    %766 = vdwg.mxu0
    %767 = vmatpush.msra.mxu0 0.0
    %768 = vmatpush.msra.mxu0 0.0
    %769 = vmatpush.msra.mxu0 0.0
    %770 = vmatpush.msra.mxu0 0.0
    %771 = vmatpush.msra.mxu0 0.0
    %772 = vmatpush.msra.mxu0 0.0
    %773 = vmatpush.msra.mxu0 0.0
    %774 = vmatpush.msra.mxu0 0.0
    %775 = vmatpush.msra.mxu0 0.0
    %776 = vmatpush.msra.mxu0 0.0
    %777 = vmatpush.msra.mxu0 0.0
    %778 = vmatpush.msra.mxu0 0.0
    %779 = vmatpush.msra.mxu0 %v114
    %780 = vmatpush.msra.mxu0 %v110
    %781 = vmatpush.msra.mxu0 %v106
    %782 = vmatpush.msra.mxu0 %v102
    %783 = vmatmul.f32.gmra.mxu0 %v117
    %v784 = vpop.f32.mrf.mxu0
    %v785 = vadd.f32 0.0, %v784
    %786 = vmatmul.f32.gmra.mxu0 %v120
    %v787 = vpop.f32.mrf.mxu0
    %v788 = vadd.f32 0.0, %v787
    %789 = vmatmul.f32.gmra.mxu0 %v123
    %v790 = vpop.f32.mrf.mxu0
    %v791 = vadd.f32 0.0, %v790
    %792 = vmatmul.f32.gmra.mxu0 %v126
    %v793 = vpop.f32.mrf.mxu0
    %v794 = vadd.f32 0.0, %v793
    %795 = vmatmul.f32.gmra.mxu0 %v129
    %v796 = vpop.f32.mrf.mxu0
    %v797 = vadd.f32 0.0, %v796
    %798 = vmatmul.f32.gmra.mxu0 %v132
    %v799 = vpop.f32.mrf.mxu0
    %v800 = vadd.f32 0.0, %v799
    %801 = vmatmul.f32.gmra.mxu0 %v135
    %v802 = vpop.f32.mrf.mxu0
    %v803 = vadd.f32 0.0, %v802
    %804 = vmatmul.f32.gmra.mxu0 %v138
    %v805 = vpop.f32.mrf.mxu0
    %v806 = vadd.f32 0.0, %v805
    %807 = vmatmul.f32.gmra.mxu0 %v141
    %v808 = vpop.f32.mrf.mxu0
    %v809 = vadd.f32 0.0, %v808
    %810 = vmatmul.f32.gmra.mxu0 %v144
    %v811 = vpop.f32.mrf.mxu0
    %v812 = vadd.f32 0.0, %v811
    %813 = vmatmul.f32.gmra.mxu0 %v147
    %v814 = vpop.f32.mrf.mxu0
    %v815 = vadd.f32 0.0, %v814
    %816 = vmatmul.f32.gmra.mxu0 %v150
    %v817 = vpop.f32.mrf.mxu0
    %v818 = vadd.f32 0.0, %v817
    %819 = vmatmul.f32.gmra.mxu0 %v153
    %v820 = vpop.f32.mrf.mxu0
    %v821 = vadd.f32 0.0, %v820
    %822 = vmatmul.f32.gmra.mxu0 %v156
    %v823 = vpop.f32.mrf.mxu0
    %v824 = vadd.f32 0.0, %v823
    %825 = vmatmul.f32.gmra.mxu0 %v159
    %v826 = vpop.f32.mrf.mxu0
    %v827 = vadd.f32 0.0, %v826
    %828 = vmatmul.f32.gmra.mxu0 %v162
    %v829 = vpop.f32.mrf.mxu0
    %v830 = vadd.f32 0.0, %v829
    %831 = vmatmul.f32.gmra.mxu0 %v165
    %v832 = vpop.f32.mrf.mxu0
    %v833 = vadd.f32 0.0, %v832
    %834 = vmatmul.f32.gmra.mxu0 %v168
    %v835 = vpop.f32.mrf.mxu0
    %v836 = vadd.f32 0.0, %v835
    %837 = vmatmul.f32.gmra.mxu0 %v171
    %v838 = vpop.f32.mrf.mxu0
    %v839 = vadd.f32 0.0, %v838
    %840 = vmatmul.f32.gmra.mxu0 %v174
    %v841 = vpop.f32.mrf.mxu0
    %v842 = vadd.f32 0.0, %v841
    %843 = vmatmul.f32.gmra.mxu0 %v177
    %v844 = vpop.f32.mrf.mxu0
    %v845 = vadd.f32 0.0, %v844
    %846 = vmatmul.f32.gmra.mxu0 %v180
    %v847 = vpop.f32.mrf.mxu0
    %v848 = vadd.f32 0.0, %v847
    %849 = vmatmul.f32.gmra.mxu0 %v183
    %v850 = vpop.f32.mrf.mxu0
    %v851 = vadd.f32 0.0, %v850
    %852 = vmatmul.f32.gmra.mxu0 %v186
    %v853 = vpop.f32.mrf.mxu0
    %v854 = vadd.f32 0.0, %v853
    %855 = vmatmul.f32.gmra.mxu0 %v189
    %v856 = vpop.f32.mrf.mxu0
    %v857 = vadd.f32 0.0, %v856
    %858 = vmatmul.f32.gmra.mxu0 %v192
    %v859 = vpop.f32.mrf.mxu0
    %v860 = vadd.f32 0.0, %v859
    %861 = vmatmul.f32.gmra.mxu0 %v195
    %v862 = vpop.f32.mrf.mxu0
    %v863 = vadd.f32 0.0, %v862
    %864 = vmatmul.f32.gmra.mxu0 %v198
    %v865 = vpop.f32.mrf.mxu0
    %v866 = vadd.f32 0.0, %v865
    %867 = vmatmul.f32.gmra.mxu0 %v201
    %v868 = vpop.f32.mrf.mxu0
    %v869 = vadd.f32 0.0, %v868
    %870 = vmatmul.f32.gmra.mxu0 %v204
    %v871 = vpop.f32.mrf.mxu0
    %v872 = vadd.f32 0.0, %v871
    %873 = vmatmul.f32.gmra.mxu0 %v207
    %v874 = vpop.f32.mrf.mxu0
    %v875 = vadd.f32 0.0, %v874
    %876 = vmatmul.f32.gmra.mxu0 %v210
    %v877 = vpop.f32.mrf.mxu0
    %v878 = vadd.f32 0.0, %v877
    %879 = vmatmul.f32.gmra.mxu0 %v213
    %v880 = vpop.f32.mrf.mxu0
    %v881 = vadd.f32 0.0, %v880
    %882 = vmatmul.f32.gmra.mxu0 %v216
    %v883 = vpop.f32.mrf.mxu0
    %v884 = vadd.f32 0.0, %v883
    %885 = vmatmul.f32.gmra.mxu0 %v219
    %v886 = vpop.f32.mrf.mxu0
    %v887 = vadd.f32 0.0, %v886
    %888 = vmatmul.f32.gmra.mxu0 %v222
    %v889 = vpop.f32.mrf.mxu0
    %v890 = vadd.f32 0.0, %v889
    %891 = vmatmul.f32.gmra.mxu0 %v225
    %v892 = vpop.f32.mrf.mxu0
    %v893 = vadd.f32 0.0, %v892
    %894 = vmatmul.f32.gmra.mxu0 %v228
    %v895 = vpop.f32.mrf.mxu0
    %v896 = vadd.f32 0.0, %v895
    %897 = vmatmul.f32.gmra.mxu0 %v231
    %v898 = vpop.f32.mrf.mxu0
    %v899 = vadd.f32 0.0, %v898
    %900 = vmatmul.f32.gmra.mxu0 %v234
    %v901 = vpop.f32.mrf.mxu0
    %v902 = vadd.f32 0.0, %v901
    %903 = vmatmul.f32.gmra.mxu0 %v237
    %v904 = vpop.f32.mrf.mxu0
    %v905 = vadd.f32 0.0, %v904
    %906 = vmatmul.f32.gmra.mxu0 %v240
    %v907 = vpop.f32.mrf.mxu0
    %v908 = vadd.f32 0.0, %v907
    %909 = vmatmul.f32.gmra.mxu0 %v243
    %v910 = vpop.f32.mrf.mxu0
    %v911 = vadd.f32 0.0, %v910
    %912 = vmatmul.f32.gmra.mxu0 %v246
    %v913 = vpop.f32.mrf.mxu0
    %v914 = vadd.f32 0.0, %v913
    %915 = vmatmul.f32.gmra.mxu0 %v249
    %v916 = vpop.f32.mrf.mxu0
    %v917 = vadd.f32 0.0, %v916
    %918 = vmatmul.f32.gmra.mxu0 %v252
    %v919 = vpop.f32.mrf.mxu0
    %v920 = vadd.f32 0.0, %v919
    %921 = vmatmul.f32.gmra.mxu0 %v255
    %v922 = vpop.f32.mrf.mxu0
    %v923 = vadd.f32 0.0, %v922
    %924 = vmatmul.f32.gmra.mxu0 %v258
    %v925 = vpop.f32.mrf.mxu0
    %v926 = vadd.f32 0.0, %v925
    %927 = vmatmul.f32.gmra.mxu0 %v261
    %v928 = vpop.f32.mrf.mxu0
    %v929 = vadd.f32 0.0, %v928
    %930 = vmatmul.f32.gmra.mxu0 %v264
    %v931 = vpop.f32.mrf.mxu0
    %v932 = vadd.f32 0.0, %v931
    %933 = vdwg.mxu0
    %v934 = vmax.f32 %v284, 0.0
    %v935 = vmax.f32 %v451, 0.0
    %v936 = vmax.f32 %v618, 0.0
    %v937 = vmax.f32 %v785, 0.0
    %v938 = vmax.f32 %v287, 0.0
    %v939 = vmax.f32 %v454, 0.0
    %v940 = vmax.f32 %v621, 0.0
    %v941 = vmax.f32 %v788, 0.0
    %v942 = vmax.f32 %v290, 0.0
    %v943 = vmax.f32 %v457, 0.0
    %v944 = vmax.f32 %v624, 0.0
    %v945 = vmax.f32 %v791, 0.0
    %v946 = vmax.f32 %v293, 0.0
    %v947 = vmax.f32 %v460, 0.0
    %v948 = vmax.f32 %v627, 0.0
    %v949 = vmax.f32 %v794, 0.0
    %v950 = vmax.f32 %v296, 0.0
    %v951 = vmax.f32 %v463, 0.0
    %v952 = vmax.f32 %v630, 0.0
    %v953 = vmax.f32 %v797, 0.0
    %v954 = vmax.f32 %v299, 0.0
    %v955 = vmax.f32 %v466, 0.0
    %v956 = vmax.f32 %v633, 0.0
    %v957 = vmax.f32 %v800, 0.0
    %v958 = vmax.f32 %v302, 0.0
    %v959 = vmax.f32 %v469, 0.0
    %v960 = vmax.f32 %v636, 0.0
    %v961 = vmax.f32 %v803, 0.0
    %v962 = vmax.f32 %v305, 0.0
    %v963 = vmax.f32 %v472, 0.0
    %v964 = vmax.f32 %v639, 0.0
    %v965 = vmax.f32 %v806, 0.0
    %v966 = vmax.f32 %v308, 0.0
    %v967 = vmax.f32 %v475, 0.0
    %v968 = vmax.f32 %v642, 0.0
    %v969 = vmax.f32 %v809, 0.0
    %v970 = vmax.f32 %v311, 0.0
    %v971 = vmax.f32 %v478, 0.0
    %v972 = vmax.f32 %v645, 0.0
    %v973 = vmax.f32 %v812, 0.0
    %v974 = vmax.f32 %v314, 0.0
    %v975 = vmax.f32 %v481, 0.0
    %v976 = vmax.f32 %v648, 0.0
    %v977 = vmax.f32 %v815, 0.0
    %v978 = vmax.f32 %v317, 0.0
    %v979 = vmax.f32 %v484, 0.0
    %v980 = vmax.f32 %v651, 0.0
    %v981 = vmax.f32 %v818, 0.0
    %v982 = vmax.f32 %v320, 0.0
    %v983 = vmax.f32 %v487, 0.0
    %v984 = vmax.f32 %v654, 0.0
    %v985 = vmax.f32 %v821, 0.0
    %v986 = vmax.f32 %v323, 0.0
    %v987 = vmax.f32 %v490, 0.0
    %v988 = vmax.f32 %v657, 0.0
    %v989 = vmax.f32 %v824, 0.0
    %v990 = vmax.f32 %v326, 0.0
    %v991 = vmax.f32 %v493, 0.0
    %v992 = vmax.f32 %v660, 0.0
    %v993 = vmax.f32 %v827, 0.0
    %v994 = vmax.f32 %v329, 0.0
    %v995 = vmax.f32 %v496, 0.0
    %v996 = vmax.f32 %v663, 0.0
    %v997 = vmax.f32 %v830, 0.0
    %v998 = vmax.f32 %v332, 0.0
    %v999 = vmax.f32 %v499, 0.0
    %v1000 = vmax.f32 %v666, 0.0
    %v1001 = vmax.f32 %v833, 0.0
    %v1002 = vmax.f32 %v335, 0.0
    %v1003 = vmax.f32 %v502, 0.0
    %v1004 = vmax.f32 %v669, 0.0
    %v1005 = vmax.f32 %v836, 0.0
    %v1006 = vmax.f32 %v338, 0.0
    %v1007 = vmax.f32 %v505, 0.0
    %v1008 = vmax.f32 %v672, 0.0
    %v1009 = vmax.f32 %v839, 0.0
    %v1010 = vmax.f32 %v341, 0.0
    %v1011 = vmax.f32 %v508, 0.0
    %v1012 = vmax.f32 %v675, 0.0
    %v1013 = vmax.f32 %v842, 0.0
    %v1014 = vmax.f32 %v344, 0.0
    %v1015 = vmax.f32 %v511, 0.0
    %v1016 = vmax.f32 %v678, 0.0
    %v1017 = vmax.f32 %v845, 0.0
    %v1018 = vmax.f32 %v347, 0.0
    %v1019 = vmax.f32 %v514, 0.0
    %v1020 = vmax.f32 %v681, 0.0
    %v1021 = vmax.f32 %v848, 0.0
    %v1022 = vmax.f32 %v350, 0.0
    %v1023 = vmax.f32 %v517, 0.0
    %v1024 = vmax.f32 %v684, 0.0
    %v1025 = vmax.f32 %v851, 0.0
    %v1026 = vmax.f32 %v353, 0.0
    %v1027 = vmax.f32 %v520, 0.0
    %v1028 = vmax.f32 %v687, 0.0
    %v1029 = vmax.f32 %v854, 0.0
    %v1030 = vmax.f32 %v356, 0.0
    %v1031 = vmax.f32 %v523, 0.0
    %v1032 = vmax.f32 %v690, 0.0
    %v1033 = vmax.f32 %v857, 0.0
    %v1034 = vmax.f32 %v359, 0.0
    %v1035 = vmax.f32 %v526, 0.0
    %v1036 = vmax.f32 %v693, 0.0
    %v1037 = vmax.f32 %v860, 0.0
    %v1038 = vmax.f32 %v362, 0.0
    %v1039 = vmax.f32 %v529, 0.0
    %v1040 = vmax.f32 %v696, 0.0
    %v1041 = vmax.f32 %v863, 0.0
    %v1042 = vmax.f32 %v365, 0.0
    %v1043 = vmax.f32 %v532, 0.0
    %v1044 = vmax.f32 %v699, 0.0
    %v1045 = vmax.f32 %v866, 0.0
    %v1046 = vmax.f32 %v368, 0.0
    %v1047 = vmax.f32 %v535, 0.0
    %v1048 = vmax.f32 %v702, 0.0
    %v1049 = vmax.f32 %v869, 0.0
    %v1050 = vmax.f32 %v371, 0.0
    %v1051 = vmax.f32 %v538, 0.0
    %v1052 = vmax.f32 %v705, 0.0
    %v1053 = vmax.f32 %v872, 0.0
    %v1054 = vmax.f32 %v374, 0.0
    %v1055 = vmax.f32 %v541, 0.0
    %v1056 = vmax.f32 %v708, 0.0
    %v1057 = vmax.f32 %v875, 0.0
    %v1058 = vmax.f32 %v377, 0.0
    %v1059 = vmax.f32 %v544, 0.0
    %v1060 = vmax.f32 %v711, 0.0
    %v1061 = vmax.f32 %v878, 0.0
    %v1062 = vmax.f32 %v380, 0.0
    %v1063 = vmax.f32 %v547, 0.0
    %v1064 = vmax.f32 %v714, 0.0
    %v1065 = vmax.f32 %v881, 0.0
    %v1066 = vmax.f32 %v383, 0.0
    %v1067 = vmax.f32 %v550, 0.0
    %v1068 = vmax.f32 %v717, 0.0
    %v1069 = vmax.f32 %v884, 0.0
    %v1070 = vmax.f32 %v386, 0.0
    %v1071 = vmax.f32 %v553, 0.0
    %v1072 = vmax.f32 %v720, 0.0
    %v1073 = vmax.f32 %v887, 0.0
    %v1074 = vmax.f32 %v389, 0.0
    %v1075 = vmax.f32 %v556, 0.0
    %v1076 = vmax.f32 %v723, 0.0
    %v1077 = vmax.f32 %v890, 0.0
    %v1078 = vmax.f32 %v392, 0.0
    %v1079 = vmax.f32 %v559, 0.0
    %v1080 = vmax.f32 %v726, 0.0
    %v1081 = vmax.f32 %v893, 0.0
    %v1082 = vmax.f32 %v395, 0.0
    %v1083 = vmax.f32 %v562, 0.0
    %v1084 = vmax.f32 %v729, 0.0
    %v1085 = vmax.f32 %v896, 0.0
    %v1086 = vmax.f32 %v398, 0.0
    %v1087 = vmax.f32 %v565, 0.0
    %v1088 = vmax.f32 %v732, 0.0
    %v1089 = vmax.f32 %v899, 0.0
    %v1090 = vmax.f32 %v401, 0.0
    %v1091 = vmax.f32 %v568, 0.0
    %v1092 = vmax.f32 %v735, 0.0
    %v1093 = vmax.f32 %v902, 0.0
    %v1094 = vmax.f32 %v404, 0.0
    %v1095 = vmax.f32 %v571, 0.0
    %v1096 = vmax.f32 %v738, 0.0
    %v1097 = vmax.f32 %v905, 0.0
    %v1098 = vmax.f32 %v407, 0.0
    %v1099 = vmax.f32 %v574, 0.0
    %v1100 = vmax.f32 %v741, 0.0
    %v1101 = vmax.f32 %v908, 0.0
    %v1102 = vmax.f32 %v410, 0.0
    %v1103 = vmax.f32 %v577, 0.0
    %v1104 = vmax.f32 %v744, 0.0
    %v1105 = vmax.f32 %v911, 0.0
    %v1106 = vmax.f32 %v413, 0.0
    %v1107 = vmax.f32 %v580, 0.0
    %v1108 = vmax.f32 %v747, 0.0
    %v1109 = vmax.f32 %v914, 0.0
    %v1110 = vmax.f32 %v416, 0.0
    %v1111 = vmax.f32 %v583, 0.0
    %v1112 = vmax.f32 %v750, 0.0
    %v1113 = vmax.f32 %v917, 0.0
    %v1114 = vmax.f32 %v419, 0.0
    %v1115 = vmax.f32 %v586, 0.0
    %v1116 = vmax.f32 %v753, 0.0
    %v1117 = vmax.f32 %v920, 0.0
    %v1118 = vmax.f32 %v422, 0.0
    %v1119 = vmax.f32 %v589, 0.0
    %v1120 = vmax.f32 %v756, 0.0
    %v1121 = vmax.f32 %v923, 0.0
    %v1122 = vmax.f32 %v425, 0.0
    %v1123 = vmax.f32 %v592, 0.0
    %v1124 = vmax.f32 %v759, 0.0
    %v1125 = vmax.f32 %v926, 0.0
    %v1126 = vmax.f32 %v428, 0.0
    %v1127 = vmax.f32 %v595, 0.0
    %v1128 = vmax.f32 %v762, 0.0
    %v1129 = vmax.f32 %v929, 0.0
    %v1130 = vmax.f32 %v431, 0.0
    %v1131 = vmax.f32 %v598, 0.0
    %v1132 = vmax.f32 %v765, 0.0
    %v1133 = vmax.f32 %v932, 0.0
    %1134 = vst [vmem:[#allocation2] sm:$0xff] %v934
    %1135 = vst [vmem:[#allocation2 + $0x8] sm:$0xff] %v935
    %1136 = vst [vmem:[#allocation2 + $0x10] sm:$0xff] %v936
    %1137 = vst [vmem:[#allocation2 + $0x18] sm:$0xff] %v937
    %1138 = vst [vmem:[#allocation2 + $0x20] sm:$0xff] %v938
    %1139 = vst [vmem:[#allocation2 + $0x28] sm:$0xff] %v939
    %1140 = vst [vmem:[#allocation2 + $0x30] sm:$0xff] %v940
    %1141 = vst [vmem:[#allocation2 + $0x38] sm:$0xff] %v941
    %1142 = vst [vmem:[#allocation2 + $0x40] sm:$0xff] %v942
    %1143 = vst [vmem:[#allocation2 + $0x48] sm:$0xff] %v943
    %1144 = vst [vmem:[#allocation2 + $0x50] sm:$0xff] %v944
    %1145 = vst [vmem:[#allocation2 + $0x58] sm:$0xff] %v945
    %1146 = vst [vmem:[#allocation2 + $0x60] sm:$0xff] %v946
    %1147 = vst [vmem:[#allocation2 + $0x68] sm:$0xff] %v947
    %1148 = vst [vmem:[#allocation2 + $0x70] sm:$0xff] %v948
    %1149 = vst [vmem:[#allocation2 + $0x78] sm:$0xff] %v949
    %1150 = vst [vmem:[#allocation2 + $0x80] sm:$0xff] %v950
    %1151 = vst [vmem:[#allocation2 + $0x88] sm:$0xff] %v951
    %1152 = vst [vmem:[#allocation2 + $0x90] sm:$0xff] %v952
    %1153 = vst [vmem:[#allocation2 + $0x98] sm:$0xff] %v953
    %1154 = vst [vmem:[#allocation2 + $0xa0] sm:$0xff] %v954
    %1155 = vst [vmem:[#allocation2 + $0xa8] sm:$0xff] %v955
    %1156 = vst [vmem:[#allocation2 + $0xb0] sm:$0xff] %v956
    %1157 = vst [vmem:[#allocation2 + $0xb8] sm:$0xff] %v957
    %1158 = vst [vmem:[#allocation2 + $0xc0] sm:$0xff] %v958
    %1159 = vst [vmem:[#allocation2 + $0xc8] sm:$0xff] %v959
    %1160 = vst [vmem:[#allocation2 + $0xd0] sm:$0xff] %v960
    %1161 = vst [vmem:[#allocation2 + $0xd8] sm:$0xff] %v961
    %1162 = vst [vmem:[#allocation2 + $0xe0] sm:$0xff] %v962
    %1163 = vst [vmem:[#allocation2 + $0xe8] sm:$0xff] %v963
    %1164 = vst [vmem:[#allocation2 + $0xf0] sm:$0xff] %v964
    %1165 = vst [vmem:[#allocation2 + $0xf8] sm:$0xff] %v965
    %1166 = vst [vmem:[#allocation2 + $0x100] sm:$0xff] %v966
    %1167 = vst [vmem:[#allocation2 + $0x108] sm:$0xff] %v967
    %1168 = vst [vmem:[#allocation2 + $0x110] sm:$0xff] %v968
    %1169 = vst [vmem:[#allocation2 + $0x118] sm:$0xff] %v969
    %1170 = vst [vmem:[#allocation2 + $0x120] sm:$0xff] %v970
    %1171 = vst [vmem:[#allocation2 + $0x128] sm:$0xff] %v971
    %1172 = vst [vmem:[#allocation2 + $0x130] sm:$0xff] %v972
    %1173 = vst [vmem:[#allocation2 + $0x138] sm:$0xff] %v973
    %1174 = vst [vmem:[#allocation2 + $0x140] sm:$0xff] %v974
    %1175 = vst [vmem:[#allocation2 + $0x148] sm:$0xff] %v975
    %1176 = vst [vmem:[#allocation2 + $0x150] sm:$0xff] %v976
    %1177 = vst [vmem:[#allocation2 + $0x158] sm:$0xff] %v977
    %1178 = vst [vmem:[#allocation2 + $0x160] sm:$0xff] %v978
    %1179 = vst [vmem:[#allocation2 + $0x168] sm:$0xff] %v979
    %1180 = vst [vmem:[#allocation2 + $0x170] sm:$0xff] %v980
    %1181 = vst [vmem:[#allocation2 + $0x178] sm:$0xff] %v981
    %1182 = vst [vmem:[#allocation2 + $0x180] sm:$0xff] %v982
    %1183 = vst [vmem:[#allocation2 + $0x188] sm:$0xff] %v983
    %1184 = vst [vmem:[#allocation2 + $0x190] sm:$0xff] %v984
    %1185 = vst [vmem:[#allocation2 + $0x198] sm:$0xff] %v985
    %1186 = vst [vmem:[#allocation2 + $0x1a0] sm:$0xff] %v986
    %1187 = vst [vmem:[#allocation2 + $0x1a8] sm:$0xff] %v987
    %1188 = vst [vmem:[#allocation2 + $0x1b0] sm:$0xff] %v988
    %1189 = vst [vmem:[#allocation2 + $0x1b8] sm:$0xff] %v989
    %1190 = vst [vmem:[#allocation2 + $0x1c0] sm:$0xff] %v990
    %1191 = vst [vmem:[#allocation2 + $0x1c8] sm:$0xff] %v991
    %1192 = vst [vmem:[#allocation2 + $0x1d0] sm:$0xff] %v992
    %1193 = vst [vmem:[#allocation2 + $0x1d8] sm:$0xff] %v993
    %1194 = vst [vmem:[#allocation2 + $0x1e0] sm:$0xff] %v994
    %1195 = vst [vmem:[#allocation2 + $0x1e8] sm:$0xff] %v995
    %1196 = vst [vmem:[#allocation2 + $0x1f0] sm:$0xff] %v996
    %1197 = vst [vmem:[#allocation2 + $0x1f8] sm:$0xff] %v997
    %1198 = vst [vmem:[#allocation2 + $0x200] sm:$0xff] %v998
    %1199 = vst [vmem:[#allocation2 + $0x208] sm:$0xff] %v999
    %1200 = vst [vmem:[#allocation2 + $0x210] sm:$0xff] %v1000
    %1201 = vst [vmem:[#allocation2 + $0x218] sm:$0xff] %v1001
    %1202 = vst [vmem:[#allocation2 + $0x220] sm:$0xff] %v1002
    %1203 = vst [vmem:[#allocation2 + $0x228] sm:$0xff] %v1003
    %1204 = vst [vmem:[#allocation2 + $0x230] sm:$0xff] %v1004
    %1205 = vst [vmem:[#allocation2 + $0x238] sm:$0xff] %v1005
    %1206 = vst [vmem:[#allocation2 + $0x240] sm:$0xff] %v1006
    %1207 = vst [vmem:[#allocation2 + $0x248] sm:$0xff] %v1007
    %1208 = vst [vmem:[#allocation2 + $0x250] sm:$0xff] %v1008
    %1209 = vst [vmem:[#allocation2 + $0x258] sm:$0xff] %v1009
    %1210 = vst [vmem:[#allocation2 + $0x260] sm:$0xff] %v1010
    %1211 = vst [vmem:[#allocation2 + $0x268] sm:$0xff] %v1011
    %1212 = vst [vmem:[#allocation2 + $0x270] sm:$0xff] %v1012
    %1213 = vst [vmem:[#allocation2 + $0x278] sm:$0xff] %v1013
    %1214 = vst [vmem:[#allocation2 + $0x280] sm:$0xff] %v1014
    %1215 = vst [vmem:[#allocation2 + $0x288] sm:$0xff] %v1015
    %1216 = vst [vmem:[#allocation2 + $0x290] sm:$0xff] %v1016
    %1217 = vst [vmem:[#allocation2 + $0x298] sm:$0xff] %v1017
    %1218 = vst [vmem:[#allocation2 + $0x2a0] sm:$0xff] %v1018
    %1219 = vst [vmem:[#allocation2 + $0x2a8] sm:$0xff] %v1019
    %1220 = vst [vmem:[#allocation2 + $0x2b0] sm:$0xff] %v1020
    %1221 = vst [vmem:[#allocation2 + $0x2b8] sm:$0xff] %v1021
    %1222 = vst [vmem:[#allocation2 + $0x2c0] sm:$0xff] %v1022
    %1223 = vst [vmem:[#allocation2 + $0x2c8] sm:$0xff] %v1023
    %1224 = vst [vmem:[#allocation2 + $0x2d0] sm:$0xff] %v1024
    %1225 = vst [vmem:[#allocation2 + $0x2d8] sm:$0xff] %v1025
    %1226 = vst [vmem:[#allocation2 + $0x2e0] sm:$0xff] %v1026
    %1227 = vst [vmem:[#allocation2 + $0x2e8] sm:$0xff] %v1027
    %1228 = vst [vmem:[#allocation2 + $0x2f0] sm:$0xff] %v1028
    %1229 = vst [vmem:[#allocation2 + $0x2f8] sm:$0xff] %v1029
    %1230 = vst [vmem:[#allocation2 + $0x300] sm:$0xff] %v1030
    %1231 = vst [vmem:[#allocation2 + $0x308] sm:$0xff] %v1031
    %1232 = vst [vmem:[#allocation2 + $0x310] sm:$0xff] %v1032
    %1233 = vst [vmem:[#allocation2 + $0x318] sm:$0xff] %v1033
    %1234 = vst [vmem:[#allocation2 + $0x320] sm:$0xff] %v1034
    %1235 = vst [vmem:[#allocation2 + $0x328] sm:$0xff] %v1035
    %1236 = vst [vmem:[#allocation2 + $0x330] sm:$0xff] %v1036
    %1237 = vst [vmem:[#allocation2 + $0x338] sm:$0xff] %v1037
    %1238 = vst [vmem:[#allocation2 + $0x340] sm:$0xff] %v1038
    %1239 = vst [vmem:[#allocation2 + $0x348] sm:$0xff] %v1039
    %1240 = vst [vmem:[#allocation2 + $0x350] sm:$0xff] %v1040
    %1241 = vst [vmem:[#allocation2 + $0x358] sm:$0xff] %v1041
    %1242 = vst [vmem:[#allocation2 + $0x360] sm:$0xff] %v1042
    %1243 = vst [vmem:[#allocation2 + $0x368] sm:$0xff] %v1043
    %1244 = vst [vmem:[#allocation2 + $0x370] sm:$0xff] %v1044
    %1245 = vst [vmem:[#allocation2 + $0x378] sm:$0xff] %v1045
    %1246 = vst [vmem:[#allocation2 + $0x380] sm:$0xff] %v1046
    %1247 = vst [vmem:[#allocation2 + $0x388] sm:$0xff] %v1047
    %1248 = vst [vmem:[#allocation2 + $0x390] sm:$0xff] %v1048
    %1249 = vst [vmem:[#allocation2 + $0x398] sm:$0xff] %v1049
    %1250 = vst [vmem:[#allocation2 + $0x3a0] sm:$0xff] %v1050
    %1251 = vst [vmem:[#allocation2 + $0x3a8] sm:$0xff] %v1051
    %1252 = vst [vmem:[#allocation2 + $0x3b0] sm:$0xff] %v1052
    %1253 = vst [vmem:[#allocation2 + $0x3b8] sm:$0xff] %v1053
    %1254 = vst [vmem:[#allocation2 + $0x3c0] sm:$0xff] %v1054
    %1255 = vst [vmem:[#allocation2 + $0x3c8] sm:$0xff] %v1055
    %1256 = vst [vmem:[#allocation2 + $0x3d0] sm:$0xff] %v1056
    %1257 = vst [vmem:[#allocation2 + $0x3d8] sm:$0xff] %v1057
    %1258 = vst [vmem:[#allocation2 + $0x3e0] sm:$0xff] %v1058
    %1259 = vst [vmem:[#allocation2 + $0x3e8] sm:$0xff] %v1059
    %1260 = vst [vmem:[#allocation2 + $0x3f0] sm:$0xff] %v1060
    %1261 = vst [vmem:[#allocation2 + $0x3f8] sm:$0xff] %v1061
    %1262 = vst [vmem:[#allocation2 + $0x400] sm:$0xff] %v1062
    %1263 = vst [vmem:[#allocation2 + $0x408] sm:$0xff] %v1063
    %1264 = vst [vmem:[#allocation2 + $0x410] sm:$0xff] %v1064
    %1265 = vst [vmem:[#allocation2 + $0x418] sm:$0xff] %v1065
    %1266 = vst [vmem:[#allocation2 + $0x420] sm:$0xff] %v1066
    %1267 = vst [vmem:[#allocation2 + $0x428] sm:$0xff] %v1067
    %1268 = vst [vmem:[#allocation2 + $0x430] sm:$0xff] %v1068
    %1269 = vst [vmem:[#allocation2 + $0x438] sm:$0xff] %v1069
    %1270 = vst [vmem:[#allocation2 + $0x440] sm:$0xff] %v1070
    %1271 = vst [vmem:[#allocation2 + $0x448] sm:$0xff] %v1071
    %1272 = vst [vmem:[#allocation2 + $0x450] sm:$0xff] %v1072
    %1273 = vst [vmem:[#allocation2 + $0x458] sm:$0xff] %v1073
    %1274 = vst [vmem:[#allocation2 + $0x460] sm:$0xff] %v1074
    %1275 = vst [vmem:[#allocation2 + $0x468] sm:$0xff] %v1075
    %1276 = vst [vmem:[#allocation2 + $0x470] sm:$0xff] %v1076
    %1277 = vst [vmem:[#allocation2 + $0x478] sm:$0xff] %v1077
    %1278 = vst [vmem:[#allocation2 + $0x480] sm:$0xff] %v1078
    %1279 = vst [vmem:[#allocation2 + $0x488] sm:$0xff] %v1079
    %1280 = vst [vmem:[#allocation2 + $0x490] sm:$0xff] %v1080
    %1281 = vst [vmem:[#allocation2 + $0x498] sm:$0xff] %v1081
    %1282 = vst [vmem:[#allocation2 + $0x4a0] sm:$0xff] %v1082
    %1283 = vst [vmem:[#allocation2 + $0x4a8] sm:$0xff] %v1083
    %1284 = vst [vmem:[#allocation2 + $0x4b0] sm:$0xff] %v1084
    %1285 = vst [vmem:[#allocation2 + $0x4b8] sm:$0xff] %v1085
    %1286 = vst [vmem:[#allocation2 + $0x4c0] sm:$0xff] %v1086
    %1287 = vst [vmem:[#allocation2 + $0x4c8] sm:$0xff] %v1087
    %1288 = vst [vmem:[#allocation2 + $0x4d0] sm:$0xff] %v1088
    %1289 = vst [vmem:[#allocation2 + $0x4d8] sm:$0xff] %v1089
    %1290 = vst [vmem:[#allocation2 + $0x4e0] sm:$0xff] %v1090
    %1291 = vst [vmem:[#allocation2 + $0x4e8] sm:$0xff] %v1091
    %1292 = vst [vmem:[#allocation2 + $0x4f0] sm:$0xff] %v1092
    %1293 = vst [vmem:[#allocation2 + $0x4f8] sm:$0xff] %v1093
    %1294 = vst [vmem:[#allocation2 + $0x500] sm:$0xff] %v1094
    %1295 = vst [vmem:[#allocation2 + $0x508] sm:$0xff] %v1095
    %1296 = vst [vmem:[#allocation2 + $0x510] sm:$0xff] %v1096
    %1297 = vst [vmem:[#allocation2 + $0x518] sm:$0xff] %v1097
    %1298 = vst [vmem:[#allocation2 + $0x520] sm:$0xff] %v1098
    %1299 = vst [vmem:[#allocation2 + $0x528] sm:$0xff] %v1099
    %1300 = vst [vmem:[#allocation2 + $0x530] sm:$0xff] %v1100
    %1301 = vst [vmem:[#allocation2 + $0x538] sm:$0xff] %v1101
    %1302 = vst [vmem:[#allocation2 + $0x540] sm:$0xff] %v1102
    %1303 = vst [vmem:[#allocation2 + $0x548] sm:$0xff] %v1103
    %1304 = vst [vmem:[#allocation2 + $0x550] sm:$0xff] %v1104
    %1305 = vst [vmem:[#allocation2 + $0x558] sm:$0xff] %v1105
    %1306 = vst [vmem:[#allocation2 + $0x560] sm:$0xff] %v1106
    %1307 = vst [vmem:[#allocation2 + $0x568] sm:$0xff] %v1107
    %1308 = vst [vmem:[#allocation2 + $0x570] sm:$0xff] %v1108
    %1309 = vst [vmem:[#allocation2 + $0x578] sm:$0xff] %v1109
    %1310 = vst [vmem:[#allocation2 + $0x580] sm:$0xff] %v1110
    %1311 = vst [vmem:[#allocation2 + $0x588] sm:$0xff] %v1111
    %1312 = vst [vmem:[#allocation2 + $0x590] sm:$0xff] %v1112
    %1313 = vst [vmem:[#allocation2 + $0x598] sm:$0xff] %v1113
    %1314 = vst [vmem:[#allocation2 + $0x5a0] sm:$0xff] %v1114
    %1315 = vst [vmem:[#allocation2 + $0x5a8] sm:$0xff] %v1115
    %1316 = vst [vmem:[#allocation2 + $0x5b0] sm:$0xff] %v1116
    %1317 = vst [vmem:[#allocation2 + $0x5b8] sm:$0xff] %v1117
    %1318 = vst [vmem:[#allocation2 + $0x5c0] sm:$0xff] %v1118
    %1319 = vst [vmem:[#allocation2 + $0x5c8] sm:$0xff] %v1119
    %1320 = vst [vmem:[#allocation2 + $0x5d0] sm:$0xff] %v1120
    %1321 = vst [vmem:[#allocation2 + $0x5d8] sm:$0xff] %v1121
    %1322 = vst [vmem:[#allocation2 + $0x5e0] sm:$0xff] %v1122
    %1323 = vst [vmem:[#allocation2 + $0x5e8] sm:$0xff] %v1123
    %1324 = vst [vmem:[#allocation2 + $0x5f0] sm:$0xff] %v1124
    %1325 = vst [vmem:[#allocation2 + $0x5f8] sm:$0xff] %v1125
    %1326 = vst [vmem:[#allocation2 + $0x600] sm:$0xff] %v1126
    %1327 = vst [vmem:[#allocation2 + $0x608] sm:$0xff] %v1127
    %1328 = vst [vmem:[#allocation2 + $0x610] sm:$0xff] %v1128
    %1329 = vst [vmem:[#allocation2 + $0x618] sm:$0xff] %v1129
    %1330 = vst [vmem:[#allocation2 + $0x620] sm:$0xff] %v1130
    %1331 = vst [vmem:[#allocation2 + $0x628] sm:$0xff] %v1131
    %1332 = vst [vmem:[#allocation2 + $0x630] sm:$0xff] %v1132
    %1333 = vst [vmem:[#allocation2 + $0x638] sm:$0xff] %v1133
    %v1334 = vld [vmem:[%s0 + $0x38] sm:$0xff]
    %v1335 = vld [vmem:[%s0 + $0x40] sm:$0xff]
    %v1336 = vld [vmem:[%s0 + $0x48] sm:$0xff]
    %v1337 = vld [vmem:[%s0 + $0x50] sm:$0xff]
    %v1338 = vld [vmem:[%s0 + $0x58] sm:$0xff]
    %v1339 = vld [vmem:[%s0 + $0x60] sm:$0xff]
    %v1340 = vld [vmem:[%s0 + $0x68] sm:$0xff]
    %v1341 = vld [vmem:[%s0 + $0x70] sm:$0xff]
    %v1342 = vld [vmem:[%s0 + $0x78] sm:$0xff]
    %v1343 = vld [vmem:[%s0 + $0x80] sm:$0xff]
    %v1344 = vld [vmem:[%s0 + $0x88] sm:$0xff]
    %v1345 = vld [vmem:[%s0 + $0x90] sm:$0xff]
    %v1346 = vld [vmem:[%s0 + $0x98] sm:$0xff]
    %v1347 = vld [vmem:[%s0 + $0xa0] sm:$0xff]
    %v1348 = vld [vmem:[%s0 + $0xa8] sm:$0xff]
    %v1349 = vld [vmem:[%s0 + $0xb0] sm:$0xff]
    %v1350 = vld [vmem:[%s0 + $0xb8] sm:$0xff]
    %v1351 = vld [vmem:[%s0 + $0xc0] sm:$0xff]
    %v1352 = vld [vmem:[%s0 + $0xc8] sm:$0xff]
    %v1353 = vld [vmem:[%s0 + $0xd0] sm:$0xff]
    %v1354 = vld [vmem:[%s0 + $0xd8] sm:$0xff]
    %v1355 = vld [vmem:[%s0 + $0xe0] sm:$0xff]
    %v1356 = vld [vmem:[%s0 + $0xe8] sm:$0xff]
    %v1357 = vld [vmem:[%s0 + $0xf0] sm:$0xff]
    %v1358 = vld [vmem:[%s0 + $0xf8] sm:$0xff]
    %v1359 = vld [vmem:[%s0 + $0x100] sm:$0xff]
    %v1360 = vld [vmem:[%s0 + $0x108] sm:$0xff]
    %v1361 = vld [vmem:[%s0 + $0x110] sm:$0xff]
    %v1362 = vld [vmem:[%s0 + $0x118] sm:$0xff]
    %v1363 = vld [vmem:[%s0 + $0x120] sm:$0xff]
    %v1364 = vld [vmem:[%s0 + $0x128] sm:$0xff]
    %v1365 = vld [vmem:[%s0 + $0x130] sm:$0xff]
    %v1366 = vld [vmem:[%s0 + $0x138] sm:$0xff]
    %v1367 = vld [vmem:[%s0 + $0x140] sm:$0xff]
    %v1368 = vld [vmem:[%s0 + $0x148] sm:$0xff]
    %v1369 = vld [vmem:[%s0 + $0x150] sm:$0xff]
    %v1370 = vld [vmem:[#allocation2 + $0x10] sm:$0xff]
    %v1371 = vld [vmem:[#allocation2 + $0x30] sm:$0xff]
    %v1372 = vld [vmem:[#allocation2 + $0x50] sm:$0xff]
    %v1373 = vld [vmem:[#allocation2 + $0x70] sm:$0xff]
    %v1374 = vld [vmem:[#allocation2 + $0x90] sm:$0xff]
    %v1375 = vld [vmem:[#allocation2 + $0xb0] sm:$0xff]
    %v1376 = vld [vmem:[#allocation2 + $0xd0] sm:$0xff]
    %v1377 = vld [vmem:[#allocation2 + $0xf0] sm:$0xff]
    %v1378 = vld [vmem:[#allocation2 + $0x110] sm:$0xff]
    %v1379 = vld [vmem:[#allocation2 + $0x130] sm:$0xff]
    %v1380 = vld [vmem:[#allocation2 + $0x150] sm:$0xff]
    %v1381 = vld [vmem:[#allocation2 + $0x170] sm:$0xff]
    %v1382 = vld [vmem:[#allocation2 + $0x190] sm:$0xff]
    %v1383 = vld [vmem:[#allocation2 + $0x1b0] sm:$0xff]
    %v1384 = vld [vmem:[#allocation2 + $0x1d0] sm:$0xff]
    %v1385 = vld [vmem:[#allocation2 + $0x1f0] sm:$0xff]
    %v1386 = vld [vmem:[#allocation2 + $0x210] sm:$0xff]
    %v1387 = vld [vmem:[#allocation2 + $0x230] sm:$0xff]
    %v1388 = vld [vmem:[#allocation2 + $0x250] sm:$0xff]
    %v1389 = vld [vmem:[#allocation2 + $0x270] sm:$0xff]
    %v1390 = vld [vmem:[#allocation2 + $0x290] sm:$0xff]
    %v1391 = vld [vmem:[#allocation2 + $0x2b0] sm:$0xff]
    %v1392 = vld [vmem:[#allocation2 + $0x2d0] sm:$0xff]
    %v1393 = vld [vmem:[#allocation2 + $0x2f0] sm:$0xff]
    %v1394 = vld [vmem:[#allocation2 + $0x310] sm:$0xff]
    %v1395 = vld [vmem:[#allocation2 + $0x330] sm:$0xff]
    %v1396 = vld [vmem:[#allocation2 + $0x350] sm:$0xff]
    %v1397 = vld [vmem:[#allocation2 + $0x370] sm:$0xff]
    %v1398 = vld [vmem:[#allocation2 + $0x390] sm:$0xff]
    %v1399 = vld [vmem:[#allocation2 + $0x3b0] sm:$0xff]
    %v1400 = vld [vmem:[#allocation2 + $0x3d0] sm:$0xff]
    %v1401 = vld [vmem:[#allocation2 + $0x3f0] sm:$0xff]
    %v1402 = vld [vmem:[#allocation2 + $0x410] sm:$0xff]
    %v1403 = vld [vmem:[#allocation2 + $0x430] sm:$0xff]
    %v1404 = vld [vmem:[#allocation2 + $0x450] sm:$0xff]
    %v1405 = vld [vmem:[#allocation2 + $0x470] sm:$0xff]
    %v1406 = vld [vmem:[%s2] sm:$0xff]
    %v1407 = vld [vmem:[%s2 + $0x8] sm:$0xff]
    %v1408 = vld [vmem:[%s2 + $0x10] sm:$0xff]
    %v1409 = vld [vmem:[%s2 + $0x18] sm:$0xff]
    %v1410 = vld [vmem:[%s2 + $0x20] sm:$0xff]
    %v1411 = vld [vmem:[%s2 + $0x28] sm:$0xff]
    %v1412 = vld [vmem:[%s2 + $0x30] sm:$0xff]
    %v1413 = vld [vmem:[%s2 + $0x38] sm:$0xff]
    %v1414 = vld [vmem:[%s2 + $0x40] sm:$0xff]
    %v1415 = vld [vmem:[%s2 + $0x48] sm:$0xff]
    %v1416 = vld [vmem:[%s2 + $0x50] sm:$0xff]
    %v1417 = vld [vmem:[%s2 + $0x58] sm:$0xff]
    %v1418 = vld [vmem:[%s2 + $0x60] sm:$0xff]
    %v1419 = vld [vmem:[%s2 + $0x68] sm:$0xff]
    %v1420 = vld [vmem:[%s2 + $0x70] sm:$0xff]
    %v1421 = vld [vmem:[%s2 + $0x78] sm:$0xff]
    %v1422 = vld [vmem:[#allocation2 + $0x18] sm:$0xff]
    %v1423 = vld [vmem:[#allocation2 + $0x38] sm:$0xff]
    %v1424 = vld [vmem:[#allocation2 + $0x58] sm:$0xff]
    %v1425 = vld [vmem:[#allocation2 + $0x78] sm:$0xff]
    %v1426 = vld [vmem:[#allocation2 + $0x98] sm:$0xff]
    %v1427 = vld [vmem:[#allocation2 + $0xb8] sm:$0xff]
    %v1428 = vld [vmem:[#allocation2 + $0xd8] sm:$0xff]
    %v1429 = vld [vmem:[#allocation2 + $0xf8] sm:$0xff]
    %v1430 = vld [vmem:[#allocation2 + $0x118] sm:$0xff]
    %v1431 = vld [vmem:[#allocation2 + $0x138] sm:$0xff]
    %v1432 = vld [vmem:[#allocation2 + $0x158] sm:$0xff]
    %v1433 = vld [vmem:[#allocation2 + $0x178] sm:$0xff]
    %v1434 = vld [vmem:[#allocation2 + $0x198] sm:$0xff]
    %v1435 = vld [vmem:[#allocation2 + $0x1b8] sm:$0xff]
    %v1436 = vld [vmem:[#allocation2 + $0x1d8] sm:$0xff]
    %v1437 = vld [vmem:[#allocation2 + $0x1f8] sm:$0xff]
    %v1438 = vld [vmem:[#allocation2 + $0x218] sm:$0xff]
    %v1439 = vld [vmem:[#allocation2 + $0x238] sm:$0xff]
    %v1440 = vld [vmem:[#allocation2 + $0x258] sm:$0xff]
    %v1441 = vld [vmem:[#allocation2 + $0x278] sm:$0xff]
    %v1442 = vld [vmem:[#allocation2 + $0x298] sm:$0xff]
    %v1443 = vld [vmem:[#allocation2 + $0x2b8] sm:$0xff]
    %v1444 = vld [vmem:[#allocation2 + $0x2d8] sm:$0xff]
    %v1445 = vld [vmem:[#allocation2 + $0x2f8] sm:$0xff]
    %v1446 = vld [vmem:[#allocation2 + $0x318] sm:$0xff]
    %v1447 = vld [vmem:[#allocation2 + $0x338] sm:$0xff]
    %v1448 = vld [vmem:[#allocation2 + $0x358] sm:$0xff]
    %v1449 = vld [vmem:[#allocation2 + $0x378] sm:$0xff]
    %v1450 = vld [vmem:[#allocation2 + $0x398] sm:$0xff]
    %v1451 = vld [vmem:[#allocation2 + $0x3b8] sm:$0xff]
    %v1452 = vld [vmem:[#allocation2 + $0x3d8] sm:$0xff]
    %v1453 = vld [vmem:[#allocation2 + $0x3f8] sm:$0xff]
    %v1454 = vld [vmem:[#allocation2 + $0x418] sm:$0xff]
    %v1455 = vld [vmem:[#allocation2 + $0x438] sm:$0xff]
    %v1456 = vld [vmem:[#allocation2 + $0x458] sm:$0xff]
    %v1457 = vld [vmem:[#allocation2 + $0x478] sm:$0xff]
    %v1458 = vld [vmem:[%s2 + $0x80] sm:$0xff]
    %v1459 = vld [vmem:[%s2 + $0x88] sm:$0xff]
    %v1460 = vld [vmem:[%s2 + $0x90] sm:$0xff]
    %v1461 = vld [vmem:[%s2 + $0x98] sm:$0xff]
    %v1462 = vld [vmem:[%s2 + $0xa0] sm:$0xff]
    %v1463 = vld [vmem:[%s2 + $0xa8] sm:$0xff]
    %v1464 = vld [vmem:[%s2 + $0xb0] sm:$0xff]
    %v1465 = vld [vmem:[%s2 + $0xb8] sm:$0xff]
    %v1466 = vld [vmem:[%s2 + $0xc0] sm:$0xff]
    %v1467 = vld [vmem:[%s2 + $0xc8] sm:$0xff]
    %v1468 = vld [vmem:[%s2 + $0xd0] sm:$0xff]
    %v1469 = vld [vmem:[%s2 + $0xd8] sm:$0xff]
    %v1470 = vld [vmem:[%s2 + $0xe0] sm:$0xff]
    %v1471 = vld [vmem:[%s2 + $0xe8] sm:$0xff]
    %v1472 = vld [vmem:[%s2 + $0xf0] sm:$0xff]
    %v1473 = vld [vmem:[%s2 + $0xf8] sm:$0xff]
    %1474 = vmatpush.msra.mxu0 %v1473
    %1475 = vmatpush.msra.mxu0 %v1472
    %1476 = vmatpush.msra.mxu0 %v1471
    %1477 = vmatpush.msra.mxu0 %v1470
    %1478 = vmatpush.msra.mxu0 %v1469
    %1479 = vmatpush.msra.mxu0 %v1468
    %1480 = vmatpush.msra.mxu0 %v1467
    %1481 = vmatpush.msra.mxu0 %v1466
    %1482 = vmatpush.msra.mxu0 %v1465
    %1483 = vmatpush.msra.mxu0 %v1464
    %1484 = vmatpush.msra.mxu0 %v1463
    %1485 = vmatpush.msra.mxu0 %v1462
    %1486 = vmatpush.msra.mxu0 %v1461
    %1487 = vmatpush.msra.mxu0 %v1460
    %1488 = vmatpush.msra.mxu0 %v1459
    %1489 = vmatpush.msra.mxu0 %v1458
    %1490 = vmatmul.f32.gmra.mxu0 %v1422
    %v1491 = vpop.f32.mrf.mxu0
    %v1492 = vadd.f32 0.0, %v1491
    %1493 = vmatmul.f32.gmra.mxu0 %v1423
    %v1494 = vpop.f32.mrf.mxu0
    %v1495 = vadd.f32 0.0, %v1494
    %1496 = vmatmul.f32.gmra.mxu0 %v1424
    %v1497 = vpop.f32.mrf.mxu0
    %v1498 = vadd.f32 0.0, %v1497
    %1499 = vmatmul.f32.gmra.mxu0 %v1425
    %v1500 = vpop.f32.mrf.mxu0
    %v1501 = vadd.f32 0.0, %v1500
    %1502 = vmatmul.f32.gmra.mxu0 %v1426
    %v1503 = vpop.f32.mrf.mxu0
    %v1504 = vadd.f32 0.0, %v1503
    %1505 = vmatmul.f32.gmra.mxu0 %v1427
    %v1506 = vpop.f32.mrf.mxu0
    %v1507 = vadd.f32 0.0, %v1506
    %1508 = vmatmul.f32.gmra.mxu0 %v1428
    %v1509 = vpop.f32.mrf.mxu0
    %v1510 = vadd.f32 0.0, %v1509
    %1511 = vmatmul.f32.gmra.mxu0 %v1429
    %v1512 = vpop.f32.mrf.mxu0
    %v1513 = vadd.f32 0.0, %v1512
    %1514 = vmatmul.f32.gmra.mxu0 %v1430
    %v1515 = vpop.f32.mrf.mxu0
    %v1516 = vadd.f32 0.0, %v1515
    %1517 = vmatmul.f32.gmra.mxu0 %v1431
    %v1518 = vpop.f32.mrf.mxu0
    %v1519 = vadd.f32 0.0, %v1518
    %1520 = vmatmul.f32.gmra.mxu0 %v1432
    %v1521 = vpop.f32.mrf.mxu0
    %v1522 = vadd.f32 0.0, %v1521
    %1523 = vmatmul.f32.gmra.mxu0 %v1433
    %v1524 = vpop.f32.mrf.mxu0
    %v1525 = vadd.f32 0.0, %v1524
    %1526 = vmatmul.f32.gmra.mxu0 %v1434
    %v1527 = vpop.f32.mrf.mxu0
    %v1528 = vadd.f32 0.0, %v1527
    %1529 = vmatmul.f32.gmra.mxu0 %v1435
    %v1530 = vpop.f32.mrf.mxu0
    %v1531 = vadd.f32 0.0, %v1530
    %1532 = vmatmul.f32.gmra.mxu0 %v1436
    %v1533 = vpop.f32.mrf.mxu0
    %v1534 = vadd.f32 0.0, %v1533
    %1535 = vmatmul.f32.gmra.mxu0 %v1437
    %v1536 = vpop.f32.mrf.mxu0
    %v1537 = vadd.f32 0.0, %v1536
    %1538 = vmatmul.f32.gmra.mxu0 %v1438
    %v1539 = vpop.f32.mrf.mxu0
    %v1540 = vadd.f32 0.0, %v1539
    %1541 = vmatmul.f32.gmra.mxu0 %v1439
    %v1542 = vpop.f32.mrf.mxu0
    %v1543 = vadd.f32 0.0, %v1542
    %1544 = vmatmul.f32.gmra.mxu0 %v1440
    %v1545 = vpop.f32.mrf.mxu0
    %v1546 = vadd.f32 0.0, %v1545
    %1547 = vmatmul.f32.gmra.mxu0 %v1441
    %v1548 = vpop.f32.mrf.mxu0
    %v1549 = vadd.f32 0.0, %v1548
    %1550 = vmatmul.f32.gmra.mxu0 %v1442
    %v1551 = vpop.f32.mrf.mxu0
    %v1552 = vadd.f32 0.0, %v1551
    %1553 = vmatmul.f32.gmra.mxu0 %v1443
    %v1554 = vpop.f32.mrf.mxu0
    %v1555 = vadd.f32 0.0, %v1554
    %1556 = vmatmul.f32.gmra.mxu0 %v1444
    %v1557 = vpop.f32.mrf.mxu0
    %v1558 = vadd.f32 0.0, %v1557
    %1559 = vmatmul.f32.gmra.mxu0 %v1445
    %v1560 = vpop.f32.mrf.mxu0
    %v1561 = vadd.f32 0.0, %v1560
    %1562 = vmatmul.f32.gmra.mxu0 %v1446
    %v1563 = vpop.f32.mrf.mxu0
    %v1564 = vadd.f32 0.0, %v1563
    %1565 = vmatmul.f32.gmra.mxu0 %v1447
    %v1566 = vpop.f32.mrf.mxu0
    %v1567 = vadd.f32 0.0, %v1566
    %1568 = vmatmul.f32.gmra.mxu0 %v1448
    %v1569 = vpop.f32.mrf.mxu0
    %v1570 = vadd.f32 0.0, %v1569
    %1571 = vmatmul.f32.gmra.mxu0 %v1449
    %v1572 = vpop.f32.mrf.mxu0
    %v1573 = vadd.f32 0.0, %v1572
    %1574 = vmatmul.f32.gmra.mxu0 %v1450
    %v1575 = vpop.f32.mrf.mxu0
    %v1576 = vadd.f32 0.0, %v1575
    %1577 = vmatmul.f32.gmra.mxu0 %v1451
    %v1578 = vpop.f32.mrf.mxu0
    %v1579 = vadd.f32 0.0, %v1578
    %1580 = vmatmul.f32.gmra.mxu0 %v1452
    %v1581 = vpop.f32.mrf.mxu0
    %v1582 = vadd.f32 0.0, %v1581
    %1583 = vmatmul.f32.gmra.mxu0 %v1453
    %v1584 = vpop.f32.mrf.mxu0
    %v1585 = vadd.f32 0.0, %v1584
    %1586 = vmatmul.f32.gmra.mxu0 %v1454
    %v1587 = vpop.f32.mrf.mxu0
    %v1588 = vadd.f32 0.0, %v1587
    %1589 = vmatmul.f32.gmra.mxu0 %v1455
    %v1590 = vpop.f32.mrf.mxu0
    %v1591 = vadd.f32 0.0, %v1590
    %1592 = vmatmul.f32.gmra.mxu0 %v1456
    %v1593 = vpop.f32.mrf.mxu0
    %v1594 = vadd.f32 0.0, %v1593
    %1595 = vmatmul.f32.gmra.mxu0 %v1457
    %v1596 = vpop.f32.mrf.mxu0
    %v1597 = vadd.f32 0.0, %v1596
    %1598 = vdwg.mxu0
    %1599 = vmatpush.msra.mxu0 %v1421
    %1600 = vmatpush.msra.mxu0 %v1420
    %1601 = vmatpush.msra.mxu0 %v1419
    %1602 = vmatpush.msra.mxu0 %v1418
    %1603 = vmatpush.msra.mxu0 %v1417
    %1604 = vmatpush.msra.mxu0 %v1416
    %1605 = vmatpush.msra.mxu0 %v1415
    %1606 = vmatpush.msra.mxu0 %v1414
    %1607 = vmatpush.msra.mxu0 %v1413
    %1608 = vmatpush.msra.mxu0 %v1412
    %1609 = vmatpush.msra.mxu0 %v1411
    %1610 = vmatpush.msra.mxu0 %v1410
    %1611 = vmatpush.msra.mxu0 %v1409
    %1612 = vmatpush.msra.mxu0 %v1408
    %1613 = vmatpush.msra.mxu0 %v1407
    %1614 = vmatpush.msra.mxu0 %v1406
    %1615 = vmatmul.f32.gmra.mxu0 %v1370
    %v1616 = vpop.f32.mrf.mxu0
    %v1617 = vadd.f32 %v1492, %v1616
    %1618 = vmatmul.f32.gmra.mxu0 %v1371
    %v1619 = vpop.f32.mrf.mxu0
    %v1620 = vadd.f32 %v1495, %v1619
    %1621 = vmatmul.f32.gmra.mxu0 %v1372
    %v1622 = vpop.f32.mrf.mxu0
    %v1623 = vadd.f32 %v1498, %v1622
    %1624 = vmatmul.f32.gmra.mxu0 %v1373
    %v1625 = vpop.f32.mrf.mxu0
    %v1626 = vadd.f32 %v1501, %v1625
    %1627 = vmatmul.f32.gmra.mxu0 %v1374
    %v1628 = vpop.f32.mrf.mxu0
    %v1629 = vadd.f32 %v1504, %v1628
    %1630 = vmatmul.f32.gmra.mxu0 %v1375
    %v1631 = vpop.f32.mrf.mxu0
    %v1632 = vadd.f32 %v1507, %v1631
    %1633 = vmatmul.f32.gmra.mxu0 %v1376
    %v1634 = vpop.f32.mrf.mxu0
    %v1635 = vadd.f32 %v1510, %v1634
    %1636 = vmatmul.f32.gmra.mxu0 %v1377
    %v1637 = vpop.f32.mrf.mxu0
    %v1638 = vadd.f32 %v1513, %v1637
    %1639 = vmatmul.f32.gmra.mxu0 %v1378
    %v1640 = vpop.f32.mrf.mxu0
    %v1641 = vadd.f32 %v1516, %v1640
    %1642 = vmatmul.f32.gmra.mxu0 %v1379
    %v1643 = vpop.f32.mrf.mxu0
    %v1644 = vadd.f32 %v1519, %v1643
    %1645 = vmatmul.f32.gmra.mxu0 %v1380
    %v1646 = vpop.f32.mrf.mxu0
    %v1647 = vadd.f32 %v1522, %v1646
    %1648 = vmatmul.f32.gmra.mxu0 %v1381
    %v1649 = vpop.f32.mrf.mxu0
    %v1650 = vadd.f32 %v1525, %v1649
    %1651 = vmatmul.f32.gmra.mxu0 %v1382
    %v1652 = vpop.f32.mrf.mxu0
    %v1653 = vadd.f32 %v1528, %v1652
    %1654 = vmatmul.f32.gmra.mxu0 %v1383
    %v1655 = vpop.f32.mrf.mxu0
    %v1656 = vadd.f32 %v1531, %v1655
    %1657 = vmatmul.f32.gmra.mxu0 %v1384
    %v1658 = vpop.f32.mrf.mxu0
    %v1659 = vadd.f32 %v1534, %v1658
    %1660 = vmatmul.f32.gmra.mxu0 %v1385
    %v1661 = vpop.f32.mrf.mxu0
    %v1662 = vadd.f32 %v1537, %v1661
    %1663 = vmatmul.f32.gmra.mxu0 %v1386
    %v1664 = vpop.f32.mrf.mxu0
    %v1665 = vadd.f32 %v1540, %v1664
    %1666 = vmatmul.f32.gmra.mxu0 %v1387
    %v1667 = vpop.f32.mrf.mxu0
    %v1668 = vadd.f32 %v1543, %v1667
    %1669 = vmatmul.f32.gmra.mxu0 %v1388
    %v1670 = vpop.f32.mrf.mxu0
    %v1671 = vadd.f32 %v1546, %v1670
    %1672 = vmatmul.f32.gmra.mxu0 %v1389
    %v1673 = vpop.f32.mrf.mxu0
    %v1674 = vadd.f32 %v1549, %v1673
    %1675 = vmatmul.f32.gmra.mxu0 %v1390
    %v1676 = vpop.f32.mrf.mxu0
    %v1677 = vadd.f32 %v1552, %v1676
    %1678 = vmatmul.f32.gmra.mxu0 %v1391
    %v1679 = vpop.f32.mrf.mxu0
    %v1680 = vadd.f32 %v1555, %v1679
    %1681 = vmatmul.f32.gmra.mxu0 %v1392
    %v1682 = vpop.f32.mrf.mxu0
    %v1683 = vadd.f32 %v1558, %v1682
    %1684 = vmatmul.f32.gmra.mxu0 %v1393
    %v1685 = vpop.f32.mrf.mxu0
    %v1686 = vadd.f32 %v1561, %v1685
    %1687 = vmatmul.f32.gmra.mxu0 %v1394
    %v1688 = vpop.f32.mrf.mxu0
    %v1689 = vadd.f32 %v1564, %v1688
    %1690 = vmatmul.f32.gmra.mxu0 %v1395
    %v1691 = vpop.f32.mrf.mxu0
    %v1692 = vadd.f32 %v1567, %v1691
    %1693 = vmatmul.f32.gmra.mxu0 %v1396
    %v1694 = vpop.f32.mrf.mxu0
    %v1695 = vadd.f32 %v1570, %v1694
    %1696 = vmatmul.f32.gmra.mxu0 %v1397
    %v1697 = vpop.f32.mrf.mxu0
    %v1698 = vadd.f32 %v1573, %v1697
    %1699 = vmatmul.f32.gmra.mxu0 %v1398
    %v1700 = vpop.f32.mrf.mxu0
    %v1701 = vadd.f32 %v1576, %v1700
    %1702 = vmatmul.f32.gmra.mxu0 %v1399
    %v1703 = vpop.f32.mrf.mxu0
    %v1704 = vadd.f32 %v1579, %v1703
    %1705 = vmatmul.f32.gmra.mxu0 %v1400
    %v1706 = vpop.f32.mrf.mxu0
    %v1707 = vadd.f32 %v1582, %v1706
    %1708 = vmatmul.f32.gmra.mxu0 %v1401
    %v1709 = vpop.f32.mrf.mxu0
    %v1710 = vadd.f32 %v1585, %v1709
    %1711 = vmatmul.f32.gmra.mxu0 %v1402
    %v1712 = vpop.f32.mrf.mxu0
    %v1713 = vadd.f32 %v1588, %v1712
    %1714 = vmatmul.f32.gmra.mxu0 %v1403
    %v1715 = vpop.f32.mrf.mxu0
    %v1716 = vadd.f32 %v1591, %v1715
    %1717 = vmatmul.f32.gmra.mxu0 %v1404
    %v1718 = vpop.f32.mrf.mxu0
    %v1719 = vadd.f32 %v1594, %v1718
    %1720 = vmatmul.f32.gmra.mxu0 %v1405
    %v1721 = vpop.f32.mrf.mxu0
    %v1722 = vadd.f32 %v1597, %v1721
    %1723 = vdwg.mxu0
    %v1724 = vld [vmem:[#allocation2 + $0x20] sm:$0xff]
    %v1725 = vld [vmem:[#allocation2 + $0x40] sm:$0xff]
    %v1726 = vld [vmem:[#allocation2 + $0x60] sm:$0xff]
    %v1727 = vld [vmem:[#allocation2 + $0x80] sm:$0xff]
    %v1728 = vld [vmem:[#allocation2 + $0xa0] sm:$0xff]
    %v1729 = vld [vmem:[#allocation2 + $0xc0] sm:$0xff]
    %v1730 = vld [vmem:[#allocation2 + $0xe0] sm:$0xff]
    %v1731 = vld [vmem:[#allocation2 + $0x100] sm:$0xff]
    %v1732 = vld [vmem:[#allocation2 + $0x120] sm:$0xff]
    %v1733 = vld [vmem:[#allocation2 + $0x140] sm:$0xff]
    %v1734 = vld [vmem:[#allocation2 + $0x160] sm:$0xff]
    %v1735 = vld [vmem:[#allocation2 + $0x180] sm:$0xff]
    %v1736 = vld [vmem:[#allocation2 + $0x1a0] sm:$0xff]
    %v1737 = vld [vmem:[#allocation2 + $0x1c0] sm:$0xff]
    %v1738 = vld [vmem:[#allocation2 + $0x1e0] sm:$0xff]
    %v1739 = vld [vmem:[#allocation2 + $0x200] sm:$0xff]
    %v1740 = vld [vmem:[#allocation2 + $0x220] sm:$0xff]
    %v1741 = vld [vmem:[#allocation2 + $0x240] sm:$0xff]
    %v1742 = vld [vmem:[#allocation2 + $0x260] sm:$0xff]
    %v1743 = vld [vmem:[#allocation2 + $0x280] sm:$0xff]
    %v1744 = vld [vmem:[#allocation2 + $0x2a0] sm:$0xff]
    %v1745 = vld [vmem:[#allocation2 + $0x2c0] sm:$0xff]
    %v1746 = vld [vmem:[#allocation2 + $0x2e0] sm:$0xff]
    %v1747 = vld [vmem:[#allocation2 + $0x300] sm:$0xff]
    %v1748 = vld [vmem:[#allocation2 + $0x320] sm:$0xff]
    %v1749 = vld [vmem:[#allocation2 + $0x340] sm:$0xff]
    %v1750 = vld [vmem:[#allocation2 + $0x360] sm:$0xff]
    %v1751 = vld [vmem:[#allocation2 + $0x380] sm:$0xff]
    %v1752 = vld [vmem:[#allocation2 + $0x3a0] sm:$0xff]
    %v1753 = vld [vmem:[#allocation2 + $0x3c0] sm:$0xff]
    %v1754 = vld [vmem:[#allocation2 + $0x3e0] sm:$0xff]
    %v1755 = vld [vmem:[#allocation2 + $0x400] sm:$0xff]
    %v1756 = vld [vmem:[#allocation2 + $0x420] sm:$0xff]
    %v1757 = vld [vmem:[#allocation2 + $0x440] sm:$0xff]
    %v1758 = vld [vmem:[#allocation2 + $0x460] sm:$0xff]
    %v1759 = vld [vmem:[#allocation2 + $0x480] sm:$0xff]
    %v1760 = vld [vmem:[%s2 + $0x100] sm:$0xff]
    %v1761 = vld [vmem:[%s2 + $0x108] sm:$0xff]
    %v1762 = vld [vmem:[%s2 + $0x110] sm:$0xff]
    %v1763 = vld [vmem:[%s2 + $0x118] sm:$0xff]
    %v1764 = vld [vmem:[%s2 + $0x120] sm:$0xff]
    %v1765 = vld [vmem:[%s2 + $0x128] sm:$0xff]
    %v1766 = vld [vmem:[%s2 + $0x130] sm:$0xff]
    %v1767 = vld [vmem:[%s2 + $0x138] sm:$0xff]
    %v1768 = vld [vmem:[%s2 + $0x140] sm:$0xff]
    %v1769 = vld [vmem:[%s2 + $0x148] sm:$0xff]
    %v1770 = vld [vmem:[%s2 + $0x150] sm:$0xff]
    %v1771 = vld [vmem:[%s2 + $0x158] sm:$0xff]
    %v1772 = vld [vmem:[%s2 + $0x160] sm:$0xff]
    %v1773 = vld [vmem:[%s2 + $0x168] sm:$0xff]
    %v1774 = vld [vmem:[%s2 + $0x170] sm:$0xff]
    %v1775 = vld [vmem:[%s2 + $0x178] sm:$0xff]
    %1776 = vmatpush.msra.mxu0 %v1775
    %1777 = vmatpush.msra.mxu0 %v1774
    %1778 = vmatpush.msra.mxu0 %v1773
    %1779 = vmatpush.msra.mxu0 %v1772
    %1780 = vmatpush.msra.mxu0 %v1771
    %1781 = vmatpush.msra.mxu0 %v1770
    %1782 = vmatpush.msra.mxu0 %v1769
    %1783 = vmatpush.msra.mxu0 %v1768
    %1784 = vmatpush.msra.mxu0 %v1767
    %1785 = vmatpush.msra.mxu0 %v1766
    %1786 = vmatpush.msra.mxu0 %v1765
    %1787 = vmatpush.msra.mxu0 %v1764
    %1788 = vmatpush.msra.mxu0 %v1763
    %1789 = vmatpush.msra.mxu0 %v1762
    %1790 = vmatpush.msra.mxu0 %v1761
    %1791 = vmatpush.msra.mxu0 %v1760
    %1792 = vmatmul.f32.gmra.mxu0 %v1724
    %v1793 = vpop.f32.mrf.mxu0
    %v1794 = vadd.f32 0.0, %v1793
    %1795 = vmatmul.f32.gmra.mxu0 %v1725
    %v1796 = vpop.f32.mrf.mxu0
    %v1797 = vadd.f32 0.0, %v1796
    %1798 = vmatmul.f32.gmra.mxu0 %v1726
    %v1799 = vpop.f32.mrf.mxu0
    %v1800 = vadd.f32 0.0, %v1799
    %1801 = vmatmul.f32.gmra.mxu0 %v1727
    %v1802 = vpop.f32.mrf.mxu0
    %v1803 = vadd.f32 0.0, %v1802
    %1804 = vmatmul.f32.gmra.mxu0 %v1728
    %v1805 = vpop.f32.mrf.mxu0
    %v1806 = vadd.f32 0.0, %v1805
    %1807 = vmatmul.f32.gmra.mxu0 %v1729
    %v1808 = vpop.f32.mrf.mxu0
    %v1809 = vadd.f32 0.0, %v1808
    %1810 = vmatmul.f32.gmra.mxu0 %v1730
    %v1811 = vpop.f32.mrf.mxu0
    %v1812 = vadd.f32 0.0, %v1811
    %1813 = vmatmul.f32.gmra.mxu0 %v1731
    %v1814 = vpop.f32.mrf.mxu0
    %v1815 = vadd.f32 0.0, %v1814
    %1816 = vmatmul.f32.gmra.mxu0 %v1732
    %v1817 = vpop.f32.mrf.mxu0
    %v1818 = vadd.f32 0.0, %v1817
    %1819 = vmatmul.f32.gmra.mxu0 %v1733
    %v1820 = vpop.f32.mrf.mxu0
    %v1821 = vadd.f32 0.0, %v1820
    %1822 = vmatmul.f32.gmra.mxu0 %v1734
    %v1823 = vpop.f32.mrf.mxu0
    %v1824 = vadd.f32 0.0, %v1823
    %1825 = vmatmul.f32.gmra.mxu0 %v1735
    %v1826 = vpop.f32.mrf.mxu0
    %v1827 = vadd.f32 0.0, %v1826
    %1828 = vmatmul.f32.gmra.mxu0 %v1736
    %v1829 = vpop.f32.mrf.mxu0
    %v1830 = vadd.f32 0.0, %v1829
    %1831 = vmatmul.f32.gmra.mxu0 %v1737
    %v1832 = vpop.f32.mrf.mxu0
    %v1833 = vadd.f32 0.0, %v1832
    %1834 = vmatmul.f32.gmra.mxu0 %v1738
    %v1835 = vpop.f32.mrf.mxu0
    %v1836 = vadd.f32 0.0, %v1835
    %1837 = vmatmul.f32.gmra.mxu0 %v1739
    %v1838 = vpop.f32.mrf.mxu0
    %v1839 = vadd.f32 0.0, %v1838
    %1840 = vmatmul.f32.gmra.mxu0 %v1740
    %v1841 = vpop.f32.mrf.mxu0
    %v1842 = vadd.f32 0.0, %v1841
    %1843 = vmatmul.f32.gmra.mxu0 %v1741
    %v1844 = vpop.f32.mrf.mxu0
    %v1845 = vadd.f32 0.0, %v1844
    %1846 = vmatmul.f32.gmra.mxu0 %v1742
    %v1847 = vpop.f32.mrf.mxu0
    %v1848 = vadd.f32 0.0, %v1847
    %1849 = vmatmul.f32.gmra.mxu0 %v1743
    %v1850 = vpop.f32.mrf.mxu0
    %v1851 = vadd.f32 0.0, %v1850
    %1852 = vmatmul.f32.gmra.mxu0 %v1744
    %v1853 = vpop.f32.mrf.mxu0
    %v1854 = vadd.f32 0.0, %v1853
    %1855 = vmatmul.f32.gmra.mxu0 %v1745
    %v1856 = vpop.f32.mrf.mxu0
    %v1857 = vadd.f32 0.0, %v1856
    %1858 = vmatmul.f32.gmra.mxu0 %v1746
    %v1859 = vpop.f32.mrf.mxu0
    %v1860 = vadd.f32 0.0, %v1859
    %1861 = vmatmul.f32.gmra.mxu0 %v1747
    %v1862 = vpop.f32.mrf.mxu0
    %v1863 = vadd.f32 0.0, %v1862
    %1864 = vmatmul.f32.gmra.mxu0 %v1748
    %v1865 = vpop.f32.mrf.mxu0
    %v1866 = vadd.f32 0.0, %v1865
    %1867 = vmatmul.f32.gmra.mxu0 %v1749
    %v1868 = vpop.f32.mrf.mxu0
    %v1869 = vadd.f32 0.0, %v1868
    %1870 = vmatmul.f32.gmra.mxu0 %v1750
    %v1871 = vpop.f32.mrf.mxu0
    %v1872 = vadd.f32 0.0, %v1871
    %1873 = vmatmul.f32.gmra.mxu0 %v1751
    %v1874 = vpop.f32.mrf.mxu0
    %v1875 = vadd.f32 0.0, %v1874
    %1876 = vmatmul.f32.gmra.mxu0 %v1752
    %v1877 = vpop.f32.mrf.mxu0
    %v1878 = vadd.f32 0.0, %v1877
    %1879 = vmatmul.f32.gmra.mxu0 %v1753
    %v1880 = vpop.f32.mrf.mxu0
    %v1881 = vadd.f32 0.0, %v1880
    %1882 = vmatmul.f32.gmra.mxu0 %v1754
    %v1883 = vpop.f32.mrf.mxu0
    %v1884 = vadd.f32 0.0, %v1883
    %1885 = vmatmul.f32.gmra.mxu0 %v1755
    %v1886 = vpop.f32.mrf.mxu0
    %v1887 = vadd.f32 0.0, %v1886
    %1888 = vmatmul.f32.gmra.mxu0 %v1756
    %v1889 = vpop.f32.mrf.mxu0
    %v1890 = vadd.f32 0.0, %v1889
    %1891 = vmatmul.f32.gmra.mxu0 %v1757
    %v1892 = vpop.f32.mrf.mxu0
    %v1893 = vadd.f32 0.0, %v1892
    %1894 = vmatmul.f32.gmra.mxu0 %v1758
    %v1895 = vpop.f32.mrf.mxu0
    %v1896 = vadd.f32 0.0, %v1895
    %1897 = vmatmul.f32.gmra.mxu0 %v1759
    %v1898 = vpop.f32.mrf.mxu0
    %v1899 = vadd.f32 0.0, %v1898
    %1900 = vdwg.mxu0
    %v1901 = vadd.f32 %v1617, %v1794
    %v1902 = vadd.f32 %v1620, %v1797
    %v1903 = vadd.f32 %v1623, %v1800
    %v1904 = vadd.f32 %v1626, %v1803
    %v1905 = vadd.f32 %v1629, %v1806
    %v1906 = vadd.f32 %v1632, %v1809
    %v1907 = vadd.f32 %v1635, %v1812
    %v1908 = vadd.f32 %v1638, %v1815
    %v1909 = vadd.f32 %v1641, %v1818
    %v1910 = vadd.f32 %v1644, %v1821
    %v1911 = vadd.f32 %v1647, %v1824
    %v1912 = vadd.f32 %v1650, %v1827
    %v1913 = vadd.f32 %v1653, %v1830
    %v1914 = vadd.f32 %v1656, %v1833
    %v1915 = vadd.f32 %v1659, %v1836
    %v1916 = vadd.f32 %v1662, %v1839
    %v1917 = vadd.f32 %v1665, %v1842
    %v1918 = vadd.f32 %v1668, %v1845
    %v1919 = vadd.f32 %v1671, %v1848
    %v1920 = vadd.f32 %v1674, %v1851
    %v1921 = vadd.f32 %v1677, %v1854
    %v1922 = vadd.f32 %v1680, %v1857
    %v1923 = vadd.f32 %v1683, %v1860
    %v1924 = vadd.f32 %v1686, %v1863
    %v1925 = vadd.f32 %v1689, %v1866
    %v1926 = vadd.f32 %v1692, %v1869
    %v1927 = vadd.f32 %v1695, %v1872
    %v1928 = vadd.f32 %v1698, %v1875
    %v1929 = vadd.f32 %v1701, %v1878
    %v1930 = vadd.f32 %v1704, %v1881
    %v1931 = vadd.f32 %v1707, %v1884
    %v1932 = vadd.f32 %v1710, %v1887
    %v1933 = vadd.f32 %v1713, %v1890
    %v1934 = vadd.f32 %v1716, %v1893
    %v1935 = vadd.f32 %v1719, %v1896
    %v1936 = vadd.f32 %v1722, %v1899
    %v1937 = vld [vmem:[#allocation2 + $0x28] sm:$0xff]
    %v1938 = vld [vmem:[#allocation2 + $0x48] sm:$0xff]
    %v1939 = vld [vmem:[#allocation2 + $0x68] sm:$0xff]
    %v1940 = vld [vmem:[#allocation2 + $0x88] sm:$0xff]
    %v1941 = vld [vmem:[#allocation2 + $0xa8] sm:$0xff]
    %v1942 = vld [vmem:[#allocation2 + $0xc8] sm:$0xff]
    %v1943 = vld [vmem:[#allocation2 + $0xe8] sm:$0xff]
    %v1944 = vld [vmem:[#allocation2 + $0x108] sm:$0xff]
    %v1945 = vld [vmem:[#allocation2 + $0x128] sm:$0xff]
    %v1946 = vld [vmem:[#allocation2 + $0x148] sm:$0xff]
    %v1947 = vld [vmem:[#allocation2 + $0x168] sm:$0xff]
    %v1948 = vld [vmem:[#allocation2 + $0x188] sm:$0xff]
    %v1949 = vld [vmem:[#allocation2 + $0x1a8] sm:$0xff]
    %v1950 = vld [vmem:[#allocation2 + $0x1c8] sm:$0xff]
    %v1951 = vld [vmem:[#allocation2 + $0x1e8] sm:$0xff]
    %v1952 = vld [vmem:[#allocation2 + $0x208] sm:$0xff]
    %v1953 = vld [vmem:[#allocation2 + $0x228] sm:$0xff]
    %v1954 = vld [vmem:[#allocation2 + $0x248] sm:$0xff]
    %v1955 = vld [vmem:[#allocation2 + $0x268] sm:$0xff]
    %v1956 = vld [vmem:[#allocation2 + $0x288] sm:$0xff]
    %v1957 = vld [vmem:[#allocation2 + $0x2a8] sm:$0xff]
    %v1958 = vld [vmem:[#allocation2 + $0x2c8] sm:$0xff]
    %v1959 = vld [vmem:[#allocation2 + $0x2e8] sm:$0xff]
    %v1960 = vld [vmem:[#allocation2 + $0x308] sm:$0xff]
    %v1961 = vld [vmem:[#allocation2 + $0x328] sm:$0xff]
    %v1962 = vld [vmem:[#allocation2 + $0x348] sm:$0xff]
    %v1963 = vld [vmem:[#allocation2 + $0x368] sm:$0xff]
    %v1964 = vld [vmem:[#allocation2 + $0x388] sm:$0xff]
    %v1965 = vld [vmem:[#allocation2 + $0x3a8] sm:$0xff]
    %v1966 = vld [vmem:[#allocation2 + $0x3c8] sm:$0xff]
    %v1967 = vld [vmem:[#allocation2 + $0x3e8] sm:$0xff]
    %v1968 = vld [vmem:[#allocation2 + $0x408] sm:$0xff]
    %v1969 = vld [vmem:[#allocation2 + $0x428] sm:$0xff]
    %v1970 = vld [vmem:[#allocation2 + $0x448] sm:$0xff]
    %v1971 = vld [vmem:[#allocation2 + $0x468] sm:$0xff]
    %v1972 = vld [vmem:[#allocation2 + $0x488] sm:$0xff]
    %v1973 = vld [vmem:[%s2 + $0x180] sm:$0xff]
    %v1974 = vld [vmem:[%s2 + $0x188] sm:$0xff]
    %v1975 = vld [vmem:[%s2 + $0x190] sm:$0xff]
    %v1976 = vld [vmem:[%s2 + $0x198] sm:$0xff]
    %v1977 = vld [vmem:[%s2 + $0x1a0] sm:$0xff]
    %v1978 = vld [vmem:[%s2 + $0x1a8] sm:$0xff]
    %v1979 = vld [vmem:[%s2 + $0x1b0] sm:$0xff]
    %v1980 = vld [vmem:[%s2 + $0x1b8] sm:$0xff]
    %v1981 = vld [vmem:[%s2 + $0x1c0] sm:$0xff]
    %v1982 = vld [vmem:[%s2 + $0x1c8] sm:$0xff]
    %v1983 = vld [vmem:[%s2 + $0x1d0] sm:$0xff]
    %v1984 = vld [vmem:[%s2 + $0x1d8] sm:$0xff]
    %v1985 = vld [vmem:[%s2 + $0x1e0] sm:$0xff]
    %v1986 = vld [vmem:[%s2 + $0x1e8] sm:$0xff]
    %v1987 = vld [vmem:[%s2 + $0x1f0] sm:$0xff]
    %v1988 = vld [vmem:[%s2 + $0x1f8] sm:$0xff]
    %1989 = vmatpush.msra.mxu0 %v1988
    %1990 = vmatpush.msra.mxu0 %v1987
    %1991 = vmatpush.msra.mxu0 %v1986
    %1992 = vmatpush.msra.mxu0 %v1985
    %1993 = vmatpush.msra.mxu0 %v1984
    %1994 = vmatpush.msra.mxu0 %v1983
    %1995 = vmatpush.msra.mxu0 %v1982
    %1996 = vmatpush.msra.mxu0 %v1981
    %1997 = vmatpush.msra.mxu0 %v1980
    %1998 = vmatpush.msra.mxu0 %v1979
    %1999 = vmatpush.msra.mxu0 %v1978
    %2000 = vmatpush.msra.mxu0 %v1977
    %2001 = vmatpush.msra.mxu0 %v1976
    %2002 = vmatpush.msra.mxu0 %v1975
    %2003 = vmatpush.msra.mxu0 %v1974
    %2004 = vmatpush.msra.mxu0 %v1973
    %2005 = vmatmul.f32.gmra.mxu0 %v1937
    %v2006 = vpop.f32.mrf.mxu0
    %v2007 = vadd.f32 0.0, %v2006
    %2008 = vmatmul.f32.gmra.mxu0 %v1938
    %v2009 = vpop.f32.mrf.mxu0
    %v2010 = vadd.f32 0.0, %v2009
    %2011 = vmatmul.f32.gmra.mxu0 %v1939
    %v2012 = vpop.f32.mrf.mxu0
    %v2013 = vadd.f32 0.0, %v2012
    %2014 = vmatmul.f32.gmra.mxu0 %v1940
    %v2015 = vpop.f32.mrf.mxu0
    %v2016 = vadd.f32 0.0, %v2015
    %2017 = vmatmul.f32.gmra.mxu0 %v1941
    %v2018 = vpop.f32.mrf.mxu0
    %v2019 = vadd.f32 0.0, %v2018
    %2020 = vmatmul.f32.gmra.mxu0 %v1942
    %v2021 = vpop.f32.mrf.mxu0
    %v2022 = vadd.f32 0.0, %v2021
    %2023 = vmatmul.f32.gmra.mxu0 %v1943
    %v2024 = vpop.f32.mrf.mxu0
    %v2025 = vadd.f32 0.0, %v2024
    %2026 = vmatmul.f32.gmra.mxu0 %v1944
    %v2027 = vpop.f32.mrf.mxu0
    %v2028 = vadd.f32 0.0, %v2027
    %2029 = vmatmul.f32.gmra.mxu0 %v1945
    %v2030 = vpop.f32.mrf.mxu0
    %v2031 = vadd.f32 0.0, %v2030
    %2032 = vmatmul.f32.gmra.mxu0 %v1946
    %v2033 = vpop.f32.mrf.mxu0
    %v2034 = vadd.f32 0.0, %v2033
    %2035 = vmatmul.f32.gmra.mxu0 %v1947
    %v2036 = vpop.f32.mrf.mxu0
    %v2037 = vadd.f32 0.0, %v2036
    %2038 = vmatmul.f32.gmra.mxu0 %v1948
    %v2039 = vpop.f32.mrf.mxu0
    %v2040 = vadd.f32 0.0, %v2039
    %2041 = vmatmul.f32.gmra.mxu0 %v1949
    %v2042 = vpop.f32.mrf.mxu0
    %v2043 = vadd.f32 0.0, %v2042
    %2044 = vmatmul.f32.gmra.mxu0 %v1950
    %v2045 = vpop.f32.mrf.mxu0
    %v2046 = vadd.f32 0.0, %v2045
    %2047 = vmatmul.f32.gmra.mxu0 %v1951
    %v2048 = vpop.f32.mrf.mxu0
    %v2049 = vadd.f32 0.0, %v2048
    %2050 = vmatmul.f32.gmra.mxu0 %v1952
    %v2051 = vpop.f32.mrf.mxu0
    %v2052 = vadd.f32 0.0, %v2051
    %2053 = vmatmul.f32.gmra.mxu0 %v1953
    %v2054 = vpop.f32.mrf.mxu0
    %v2055 = vadd.f32 0.0, %v2054
    %2056 = vmatmul.f32.gmra.mxu0 %v1954
    %v2057 = vpop.f32.mrf.mxu0
    %v2058 = vadd.f32 0.0, %v2057
    %2059 = vmatmul.f32.gmra.mxu0 %v1955
    %v2060 = vpop.f32.mrf.mxu0
    %v2061 = vadd.f32 0.0, %v2060
    %2062 = vmatmul.f32.gmra.mxu0 %v1956
    %v2063 = vpop.f32.mrf.mxu0
    %v2064 = vadd.f32 0.0, %v2063
    %2065 = vmatmul.f32.gmra.mxu0 %v1957
    %v2066 = vpop.f32.mrf.mxu0
    %v2067 = vadd.f32 0.0, %v2066
    %2068 = vmatmul.f32.gmra.mxu0 %v1958
    %v2069 = vpop.f32.mrf.mxu0
    %v2070 = vadd.f32 0.0, %v2069
    %2071 = vmatmul.f32.gmra.mxu0 %v1959
    %v2072 = vpop.f32.mrf.mxu0
    %v2073 = vadd.f32 0.0, %v2072
    %2074 = vmatmul.f32.gmra.mxu0 %v1960
    %v2075 = vpop.f32.mrf.mxu0
    %v2076 = vadd.f32 0.0, %v2075
    %2077 = vmatmul.f32.gmra.mxu0 %v1961
    %v2078 = vpop.f32.mrf.mxu0
    %v2079 = vadd.f32 0.0, %v2078
    %2080 = vmatmul.f32.gmra.mxu0 %v1962
    %v2081 = vpop.f32.mrf.mxu0
    %v2082 = vadd.f32 0.0, %v2081
    %2083 = vmatmul.f32.gmra.mxu0 %v1963
    %v2084 = vpop.f32.mrf.mxu0
    %v2085 = vadd.f32 0.0, %v2084
    %2086 = vmatmul.f32.gmra.mxu0 %v1964
    %v2087 = vpop.f32.mrf.mxu0
    %v2088 = vadd.f32 0.0, %v2087
    %2089 = vmatmul.f32.gmra.mxu0 %v1965
    %v2090 = vpop.f32.mrf.mxu0
    %v2091 = vadd.f32 0.0, %v2090
    %2092 = vmatmul.f32.gmra.mxu0 %v1966
    %v2093 = vpop.f32.mrf.mxu0
    %v2094 = vadd.f32 0.0, %v2093
    %2095 = vmatmul.f32.gmra.mxu0 %v1967
    %v2096 = vpop.f32.mrf.mxu0
    %v2097 = vadd.f32 0.0, %v2096
    %2098 = vmatmul.f32.gmra.mxu0 %v1968
    %v2099 = vpop.f32.mrf.mxu0
    %v2100 = vadd.f32 0.0, %v2099
    %2101 = vmatmul.f32.gmra.mxu0 %v1969
    %v2102 = vpop.f32.mrf.mxu0
    %v2103 = vadd.f32 0.0, %v2102
    %2104 = vmatmul.f32.gmra.mxu0 %v1970
    %v2105 = vpop.f32.mrf.mxu0
    %v2106 = vadd.f32 0.0, %v2105
    %2107 = vmatmul.f32.gmra.mxu0 %v1971
    %v2108 = vpop.f32.mrf.mxu0
    %v2109 = vadd.f32 0.0, %v2108
    %2110 = vmatmul.f32.gmra.mxu0 %v1972
    %v2111 = vpop.f32.mrf.mxu0
    %v2112 = vadd.f32 0.0, %v2111
    %2113 = vdwg.mxu0
    %v2114 = vadd.f32 %v1901, %v2007
    %v2115 = vadd.f32 %v1902, %v2010
    %v2116 = vadd.f32 %v1903, %v2013
    %v2117 = vadd.f32 %v1904, %v2016
    %v2118 = vadd.f32 %v1905, %v2019
    %v2119 = vadd.f32 %v1906, %v2022
    %v2120 = vadd.f32 %v1907, %v2025
    %v2121 = vadd.f32 %v1908, %v2028
    %v2122 = vadd.f32 %v1909, %v2031
    %v2123 = vadd.f32 %v1910, %v2034
    %v2124 = vadd.f32 %v1911, %v2037
    %v2125 = vadd.f32 %v1912, %v2040
    %v2126 = vadd.f32 %v1913, %v2043
    %v2127 = vadd.f32 %v1914, %v2046
    %v2128 = vadd.f32 %v1915, %v2049
    %v2129 = vadd.f32 %v1916, %v2052
    %v2130 = vadd.f32 %v1917, %v2055
    %v2131 = vadd.f32 %v1918, %v2058
    %v2132 = vadd.f32 %v1919, %v2061
    %v2133 = vadd.f32 %v1920, %v2064
    %v2134 = vadd.f32 %v1921, %v2067
    %v2135 = vadd.f32 %v1922, %v2070
    %v2136 = vadd.f32 %v1923, %v2073
    %v2137 = vadd.f32 %v1924, %v2076
    %v2138 = vadd.f32 %v1925, %v2079
    %v2139 = vadd.f32 %v1926, %v2082
    %v2140 = vadd.f32 %v1927, %v2085
    %v2141 = vadd.f32 %v1928, %v2088
    %v2142 = vadd.f32 %v1929, %v2091
    %v2143 = vadd.f32 %v1930, %v2094
    %v2144 = vadd.f32 %v1931, %v2097
    %v2145 = vadd.f32 %v1932, %v2100
    %v2146 = vadd.f32 %v1933, %v2103
    %v2147 = vadd.f32 %v1934, %v2106
    %v2148 = vadd.f32 %v1935, %v2109
    %v2149 = vadd.f32 %v1936, %v2112
    %v2150 = vld [vmem:[#allocation2 + $0x30] sm:$0xff]
    %v2151 = vld [vmem:[#allocation2 + $0x50] sm:$0xff]
    %v2152 = vld [vmem:[#allocation2 + $0x70] sm:$0xff]
    %v2153 = vld [vmem:[#allocation2 + $0x90] sm:$0xff]
    %v2154 = vld [vmem:[#allocation2 + $0xb0] sm:$0xff]
    %v2155 = vld [vmem:[#allocation2 + $0xd0] sm:$0xff]
    %v2156 = vld [vmem:[#allocation2 + $0xf0] sm:$0xff]
    %v2157 = vld [vmem:[#allocation2 + $0x110] sm:$0xff]
    %v2158 = vld [vmem:[#allocation2 + $0x130] sm:$0xff]
    %v2159 = vld [vmem:[#allocation2 + $0x150] sm:$0xff]
    %v2160 = vld [vmem:[#allocation2 + $0x170] sm:$0xff]
    %v2161 = vld [vmem:[#allocation2 + $0x190] sm:$0xff]
    %v2162 = vld [vmem:[#allocation2 + $0x1b0] sm:$0xff]
    %v2163 = vld [vmem:[#allocation2 + $0x1d0] sm:$0xff]
    %v2164 = vld [vmem:[#allocation2 + $0x1f0] sm:$0xff]
    %v2165 = vld [vmem:[#allocation2 + $0x210] sm:$0xff]
    %v2166 = vld [vmem:[#allocation2 + $0x230] sm:$0xff]
    %v2167 = vld [vmem:[#allocation2 + $0x250] sm:$0xff]
    %v2168 = vld [vmem:[#allocation2 + $0x270] sm:$0xff]
    %v2169 = vld [vmem:[#allocation2 + $0x290] sm:$0xff]
    %v2170 = vld [vmem:[#allocation2 + $0x2b0] sm:$0xff]
    %v2171 = vld [vmem:[#allocation2 + $0x2d0] sm:$0xff]
    %v2172 = vld [vmem:[#allocation2 + $0x2f0] sm:$0xff]
    %v2173 = vld [vmem:[#allocation2 + $0x310] sm:$0xff]
    %v2174 = vld [vmem:[#allocation2 + $0x330] sm:$0xff]
    %v2175 = vld [vmem:[#allocation2 + $0x350] sm:$0xff]
    %v2176 = vld [vmem:[#allocation2 + $0x370] sm:$0xff]
    %v2177 = vld [vmem:[#allocation2 + $0x390] sm:$0xff]
    %v2178 = vld [vmem:[#allocation2 + $0x3b0] sm:$0xff]
    %v2179 = vld [vmem:[#allocation2 + $0x3d0] sm:$0xff]
    %v2180 = vld [vmem:[#allocation2 + $0x3f0] sm:$0xff]
    %v2181 = vld [vmem:[#allocation2 + $0x410] sm:$0xff]
    %v2182 = vld [vmem:[#allocation2 + $0x430] sm:$0xff]
    %v2183 = vld [vmem:[#allocation2 + $0x450] sm:$0xff]
    %v2184 = vld [vmem:[#allocation2 + $0x470] sm:$0xff]
    %v2185 = vld [vmem:[#allocation2 + $0x490] sm:$0xff]
    %v2186 = vld [vmem:[%s2 + $0x200] sm:$0xff]
    %v2187 = vld [vmem:[%s2 + $0x208] sm:$0xff]
    %v2188 = vld [vmem:[%s2 + $0x210] sm:$0xff]
    %v2189 = vld [vmem:[%s2 + $0x218] sm:$0xff]
    %v2190 = vld [vmem:[%s2 + $0x220] sm:$0xff]
    %v2191 = vld [vmem:[%s2 + $0x228] sm:$0xff]
    %v2192 = vld [vmem:[%s2 + $0x230] sm:$0xff]
    %v2193 = vld [vmem:[%s2 + $0x238] sm:$0xff]
    %v2194 = vld [vmem:[%s2 + $0x240] sm:$0xff]
    %v2195 = vld [vmem:[%s2 + $0x248] sm:$0xff]
    %v2196 = vld [vmem:[%s2 + $0x250] sm:$0xff]
    %v2197 = vld [vmem:[%s2 + $0x258] sm:$0xff]
    %v2198 = vld [vmem:[%s2 + $0x260] sm:$0xff]
    %v2199 = vld [vmem:[%s2 + $0x268] sm:$0xff]
    %v2200 = vld [vmem:[%s2 + $0x270] sm:$0xff]
    %v2201 = vld [vmem:[%s2 + $0x278] sm:$0xff]
    %2202 = vmatpush.msra.mxu0 %v2201
    %2203 = vmatpush.msra.mxu0 %v2200
    %2204 = vmatpush.msra.mxu0 %v2199
    %2205 = vmatpush.msra.mxu0 %v2198
    %2206 = vmatpush.msra.mxu0 %v2197
    %2207 = vmatpush.msra.mxu0 %v2196
    %2208 = vmatpush.msra.mxu0 %v2195
    %2209 = vmatpush.msra.mxu0 %v2194
    %2210 = vmatpush.msra.mxu0 %v2193
    %2211 = vmatpush.msra.mxu0 %v2192
    %2212 = vmatpush.msra.mxu0 %v2191
    %2213 = vmatpush.msra.mxu0 %v2190
    %2214 = vmatpush.msra.mxu0 %v2189
    %2215 = vmatpush.msra.mxu0 %v2188
    %2216 = vmatpush.msra.mxu0 %v2187
    %2217 = vmatpush.msra.mxu0 %v2186
    %2218 = vmatmul.f32.gmra.mxu0 %v2150
    %v2219 = vpop.f32.mrf.mxu0
    %v2220 = vadd.f32 0.0, %v2219
    %2221 = vmatmul.f32.gmra.mxu0 %v2151
    %v2222 = vpop.f32.mrf.mxu0
    %v2223 = vadd.f32 0.0, %v2222
    %2224 = vmatmul.f32.gmra.mxu0 %v2152
    %v2225 = vpop.f32.mrf.mxu0
    %v2226 = vadd.f32 0.0, %v2225
    %2227 = vmatmul.f32.gmra.mxu0 %v2153
    %v2228 = vpop.f32.mrf.mxu0
    %v2229 = vadd.f32 0.0, %v2228
    %2230 = vmatmul.f32.gmra.mxu0 %v2154
    %v2231 = vpop.f32.mrf.mxu0
    %v2232 = vadd.f32 0.0, %v2231
    %2233 = vmatmul.f32.gmra.mxu0 %v2155
    %v2234 = vpop.f32.mrf.mxu0
    %v2235 = vadd.f32 0.0, %v2234
    %2236 = vmatmul.f32.gmra.mxu0 %v2156
    %v2237 = vpop.f32.mrf.mxu0
    %v2238 = vadd.f32 0.0, %v2237
    %2239 = vmatmul.f32.gmra.mxu0 %v2157
    %v2240 = vpop.f32.mrf.mxu0
    %v2241 = vadd.f32 0.0, %v2240
    %2242 = vmatmul.f32.gmra.mxu0 %v2158
    %v2243 = vpop.f32.mrf.mxu0
    %v2244 = vadd.f32 0.0, %v2243
    %2245 = vmatmul.f32.gmra.mxu0 %v2159
    %v2246 = vpop.f32.mrf.mxu0
    %v2247 = vadd.f32 0.0, %v2246
    %2248 = vmatmul.f32.gmra.mxu0 %v2160
    %v2249 = vpop.f32.mrf.mxu0
    %v2250 = vadd.f32 0.0, %v2249
    %2251 = vmatmul.f32.gmra.mxu0 %v2161
    %v2252 = vpop.f32.mrf.mxu0
    %v2253 = vadd.f32 0.0, %v2252
    %2254 = vmatmul.f32.gmra.mxu0 %v2162
    %v2255 = vpop.f32.mrf.mxu0
    %v2256 = vadd.f32 0.0, %v2255
    %2257 = vmatmul.f32.gmra.mxu0 %v2163
    %v2258 = vpop.f32.mrf.mxu0
    %v2259 = vadd.f32 0.0, %v2258
    %2260 = vmatmul.f32.gmra.mxu0 %v2164
    %v2261 = vpop.f32.mrf.mxu0
    %v2262 = vadd.f32 0.0, %v2261
    %2263 = vmatmul.f32.gmra.mxu0 %v2165
    %v2264 = vpop.f32.mrf.mxu0
    %v2265 = vadd.f32 0.0, %v2264
    %2266 = vmatmul.f32.gmra.mxu0 %v2166
    %v2267 = vpop.f32.mrf.mxu0
    %v2268 = vadd.f32 0.0, %v2267
    %2269 = vmatmul.f32.gmra.mxu0 %v2167
    %v2270 = vpop.f32.mrf.mxu0
    %v2271 = vadd.f32 0.0, %v2270
    %2272 = vmatmul.f32.gmra.mxu0 %v2168
    %v2273 = vpop.f32.mrf.mxu0
    %v2274 = vadd.f32 0.0, %v2273
    %2275 = vmatmul.f32.gmra.mxu0 %v2169
    %v2276 = vpop.f32.mrf.mxu0
    %v2277 = vadd.f32 0.0, %v2276
    %2278 = vmatmul.f32.gmra.mxu0 %v2170
    %v2279 = vpop.f32.mrf.mxu0
    %v2280 = vadd.f32 0.0, %v2279
    %2281 = vmatmul.f32.gmra.mxu0 %v2171
    %v2282 = vpop.f32.mrf.mxu0
    %v2283 = vadd.f32 0.0, %v2282
    %2284 = vmatmul.f32.gmra.mxu0 %v2172
    %v2285 = vpop.f32.mrf.mxu0
    %v2286 = vadd.f32 0.0, %v2285
    %2287 = vmatmul.f32.gmra.mxu0 %v2173
    %v2288 = vpop.f32.mrf.mxu0
    %v2289 = vadd.f32 0.0, %v2288
    %2290 = vmatmul.f32.gmra.mxu0 %v2174
    %v2291 = vpop.f32.mrf.mxu0
    %v2292 = vadd.f32 0.0, %v2291
    %2293 = vmatmul.f32.gmra.mxu0 %v2175
    %v2294 = vpop.f32.mrf.mxu0
    %v2295 = vadd.f32 0.0, %v2294
    %2296 = vmatmul.f32.gmra.mxu0 %v2176
    %v2297 = vpop.f32.mrf.mxu0
    %v2298 = vadd.f32 0.0, %v2297
    %2299 = vmatmul.f32.gmra.mxu0 %v2177
    %v2300 = vpop.f32.mrf.mxu0
    %v2301 = vadd.f32 0.0, %v2300
    %2302 = vmatmul.f32.gmra.mxu0 %v2178
    %v2303 = vpop.f32.mrf.mxu0
    %v2304 = vadd.f32 0.0, %v2303
    %2305 = vmatmul.f32.gmra.mxu0 %v2179
    %v2306 = vpop.f32.mrf.mxu0
    %v2307 = vadd.f32 0.0, %v2306
    %2308 = vmatmul.f32.gmra.mxu0 %v2180
    %v2309 = vpop.f32.mrf.mxu0
    %v2310 = vadd.f32 0.0, %v2309
    %2311 = vmatmul.f32.gmra.mxu0 %v2181
    %v2312 = vpop.f32.mrf.mxu0
    %v2313 = vadd.f32 0.0, %v2312
    %2314 = vmatmul.f32.gmra.mxu0 %v2182
    %v2315 = vpop.f32.mrf.mxu0
    %v2316 = vadd.f32 0.0, %v2315
    %2317 = vmatmul.f32.gmra.mxu0 %v2183
    %v2318 = vpop.f32.mrf.mxu0
    %v2319 = vadd.f32 0.0, %v2318
    %2320 = vmatmul.f32.gmra.mxu0 %v2184
    %v2321 = vpop.f32.mrf.mxu0
    %v2322 = vadd.f32 0.0, %v2321
    %2323 = vmatmul.f32.gmra.mxu0 %v2185
    %v2324 = vpop.f32.mrf.mxu0
    %v2325 = vadd.f32 0.0, %v2324
    %2326 = vdwg.mxu0
    %v2327 = vadd.f32 %v2114, %v2220
    %v2328 = vadd.f32 %v2115, %v2223
    %v2329 = vadd.f32 %v2116, %v2226
    %v2330 = vadd.f32 %v2117, %v2229
    %v2331 = vadd.f32 %v2118, %v2232
    %v2332 = vadd.f32 %v2119, %v2235
    %v2333 = vadd.f32 %v2120, %v2238
    %v2334 = vadd.f32 %v2121, %v2241
    %v2335 = vadd.f32 %v2122, %v2244
    %v2336 = vadd.f32 %v2123, %v2247
    %v2337 = vadd.f32 %v2124, %v2250
    %v2338 = vadd.f32 %v2125, %v2253
    %v2339 = vadd.f32 %v2126, %v2256
    %v2340 = vadd.f32 %v2127, %v2259
    %v2341 = vadd.f32 %v2128, %v2262
    %v2342 = vadd.f32 %v2129, %v2265
    %v2343 = vadd.f32 %v2130, %v2268
    %v2344 = vadd.f32 %v2131, %v2271
    %v2345 = vadd.f32 %v2132, %v2274
    %v2346 = vadd.f32 %v2133, %v2277
    %v2347 = vadd.f32 %v2134, %v2280
    %v2348 = vadd.f32 %v2135, %v2283
    %v2349 = vadd.f32 %v2136, %v2286
    %v2350 = vadd.f32 %v2137, %v2289
    %v2351 = vadd.f32 %v2138, %v2292
    %v2352 = vadd.f32 %v2139, %v2295
    %v2353 = vadd.f32 %v2140, %v2298
    %v2354 = vadd.f32 %v2141, %v2301
    %v2355 = vadd.f32 %v2142, %v2304
    %v2356 = vadd.f32 %v2143, %v2307
    %v2357 = vadd.f32 %v2144, %v2310
    %v2358 = vadd.f32 %v2145, %v2313
    %v2359 = vadd.f32 %v2146, %v2316
    %v2360 = vadd.f32 %v2147, %v2319
    %v2361 = vadd.f32 %v2148, %v2322
    %v2362 = vadd.f32 %v2149, %v2325
    %v2363 = vld [vmem:[#allocation2 + $0xd0] sm:$0xff]
    %v2364 = vld [vmem:[#allocation2 + $0xf0] sm:$0xff]
    %v2365 = vld [vmem:[#allocation2 + $0x110] sm:$0xff]
    %v2366 = vld [vmem:[#allocation2 + $0x130] sm:$0xff]
    %v2367 = vld [vmem:[#allocation2 + $0x150] sm:$0xff]
    %v2368 = vld [vmem:[#allocation2 + $0x170] sm:$0xff]
    %v2369 = vld [vmem:[#allocation2 + $0x190] sm:$0xff]
    %v2370 = vld [vmem:[#allocation2 + $0x1b0] sm:$0xff]
    %v2371 = vld [vmem:[#allocation2 + $0x1d0] sm:$0xff]
    %v2372 = vld [vmem:[#allocation2 + $0x1f0] sm:$0xff]
    %v2373 = vld [vmem:[#allocation2 + $0x210] sm:$0xff]
    %v2374 = vld [vmem:[#allocation2 + $0x230] sm:$0xff]
    %v2375 = vld [vmem:[#allocation2 + $0x250] sm:$0xff]
    %v2376 = vld [vmem:[#allocation2 + $0x270] sm:$0xff]
    %v2377 = vld [vmem:[#allocation2 + $0x290] sm:$0xff]
    %v2378 = vld [vmem:[#allocation2 + $0x2b0] sm:$0xff]
    %v2379 = vld [vmem:[#allocation2 + $0x2d0] sm:$0xff]
    %v2380 = vld [vmem:[#allocation2 + $0x2f0] sm:$0xff]
    %v2381 = vld [vmem:[#allocation2 + $0x310] sm:$0xff]
    %v2382 = vld [vmem:[#allocation2 + $0x330] sm:$0xff]
    %v2383 = vld [vmem:[#allocation2 + $0x350] sm:$0xff]
    %v2384 = vld [vmem:[#allocation2 + $0x370] sm:$0xff]
    %v2385 = vld [vmem:[#allocation2 + $0x390] sm:$0xff]
    %v2386 = vld [vmem:[#allocation2 + $0x3b0] sm:$0xff]
    %v2387 = vld [vmem:[#allocation2 + $0x3d0] sm:$0xff]
    %v2388 = vld [vmem:[#allocation2 + $0x3f0] sm:$0xff]
    %v2389 = vld [vmem:[#allocation2 + $0x410] sm:$0xff]
    %v2390 = vld [vmem:[#allocation2 + $0x430] sm:$0xff]
    %v2391 = vld [vmem:[#allocation2 + $0x450] sm:$0xff]
    %v2392 = vld [vmem:[#allocation2 + $0x470] sm:$0xff]
    %v2393 = vld [vmem:[#allocation2 + $0x490] sm:$0xff]
    %v2394 = vld [vmem:[#allocation2 + $0x4b0] sm:$0xff]
    %v2395 = vld [vmem:[#allocation2 + $0x4d0] sm:$0xff]
    %v2396 = vld [vmem:[#allocation2 + $0x4f0] sm:$0xff]
    %v2397 = vld [vmem:[#allocation2 + $0x510] sm:$0xff]
    %v2398 = vld [vmem:[#allocation2 + $0x530] sm:$0xff]
    %v2399 = vld [vmem:[%s2 + $0x280] sm:$0xff]
    %v2400 = vld [vmem:[%s2 + $0x288] sm:$0xff]
    %v2401 = vld [vmem:[%s2 + $0x290] sm:$0xff]
    %v2402 = vld [vmem:[%s2 + $0x298] sm:$0xff]
    %v2403 = vld [vmem:[%s2 + $0x2a0] sm:$0xff]
    %v2404 = vld [vmem:[%s2 + $0x2a8] sm:$0xff]
    %v2405 = vld [vmem:[%s2 + $0x2b0] sm:$0xff]
    %v2406 = vld [vmem:[%s2 + $0x2b8] sm:$0xff]
    %v2407 = vld [vmem:[%s2 + $0x2c0] sm:$0xff]
    %v2408 = vld [vmem:[%s2 + $0x2c8] sm:$0xff]
    %v2409 = vld [vmem:[%s2 + $0x2d0] sm:$0xff]
    %v2410 = vld [vmem:[%s2 + $0x2d8] sm:$0xff]
    %v2411 = vld [vmem:[%s2 + $0x2e0] sm:$0xff]
    %v2412 = vld [vmem:[%s2 + $0x2e8] sm:$0xff]
    %v2413 = vld [vmem:[%s2 + $0x2f0] sm:$0xff]
    %v2414 = vld [vmem:[%s2 + $0x2f8] sm:$0xff]
    %2415 = vmatpush.msra.mxu0 %v2414
    %2416 = vmatpush.msra.mxu0 %v2413
    %2417 = vmatpush.msra.mxu0 %v2412
    %2418 = vmatpush.msra.mxu0 %v2411
    %2419 = vmatpush.msra.mxu0 %v2410
    %2420 = vmatpush.msra.mxu0 %v2409
    %2421 = vmatpush.msra.mxu0 %v2408
    %2422 = vmatpush.msra.mxu0 %v2407
    %2423 = vmatpush.msra.mxu0 %v2406
    %2424 = vmatpush.msra.mxu0 %v2405
    %2425 = vmatpush.msra.mxu0 %v2404
    %2426 = vmatpush.msra.mxu0 %v2403
    %2427 = vmatpush.msra.mxu0 %v2402
    %2428 = vmatpush.msra.mxu0 %v2401
    %2429 = vmatpush.msra.mxu0 %v2400
    %2430 = vmatpush.msra.mxu0 %v2399
    %2431 = vmatmul.f32.gmra.mxu0 %v2363
    %v2432 = vpop.f32.mrf.mxu0
    %v2433 = vadd.f32 0.0, %v2432
    %2434 = vmatmul.f32.gmra.mxu0 %v2364
    %v2435 = vpop.f32.mrf.mxu0
    %v2436 = vadd.f32 0.0, %v2435
    %2437 = vmatmul.f32.gmra.mxu0 %v2365
    %v2438 = vpop.f32.mrf.mxu0
    %v2439 = vadd.f32 0.0, %v2438
    %2440 = vmatmul.f32.gmra.mxu0 %v2366
    %v2441 = vpop.f32.mrf.mxu0
    %v2442 = vadd.f32 0.0, %v2441
    %2443 = vmatmul.f32.gmra.mxu0 %v2367
    %v2444 = vpop.f32.mrf.mxu0
    %v2445 = vadd.f32 0.0, %v2444
    %2446 = vmatmul.f32.gmra.mxu0 %v2368
    %v2447 = vpop.f32.mrf.mxu0
    %v2448 = vadd.f32 0.0, %v2447
    %2449 = vmatmul.f32.gmra.mxu0 %v2369
    %v2450 = vpop.f32.mrf.mxu0
    %v2451 = vadd.f32 0.0, %v2450
    %2452 = vmatmul.f32.gmra.mxu0 %v2370
    %v2453 = vpop.f32.mrf.mxu0
    %v2454 = vadd.f32 0.0, %v2453
    %2455 = vmatmul.f32.gmra.mxu0 %v2371
    %v2456 = vpop.f32.mrf.mxu0
    %v2457 = vadd.f32 0.0, %v2456
    %2458 = vmatmul.f32.gmra.mxu0 %v2372
    %v2459 = vpop.f32.mrf.mxu0
    %v2460 = vadd.f32 0.0, %v2459
    %2461 = vmatmul.f32.gmra.mxu0 %v2373
    %v2462 = vpop.f32.mrf.mxu0
    %v2463 = vadd.f32 0.0, %v2462
    %2464 = vmatmul.f32.gmra.mxu0 %v2374
    %v2465 = vpop.f32.mrf.mxu0
    %v2466 = vadd.f32 0.0, %v2465
    %2467 = vmatmul.f32.gmra.mxu0 %v2375
    %v2468 = vpop.f32.mrf.mxu0
    %v2469 = vadd.f32 0.0, %v2468
    %2470 = vmatmul.f32.gmra.mxu0 %v2376
    %v2471 = vpop.f32.mrf.mxu0
    %v2472 = vadd.f32 0.0, %v2471
    %2473 = vmatmul.f32.gmra.mxu0 %v2377
    %v2474 = vpop.f32.mrf.mxu0
    %v2475 = vadd.f32 0.0, %v2474
    %2476 = vmatmul.f32.gmra.mxu0 %v2378
    %v2477 = vpop.f32.mrf.mxu0
    %v2478 = vadd.f32 0.0, %v2477
    %2479 = vmatmul.f32.gmra.mxu0 %v2379
    %v2480 = vpop.f32.mrf.mxu0
    %v2481 = vadd.f32 0.0, %v2480
    %2482 = vmatmul.f32.gmra.mxu0 %v2380
    %v2483 = vpop.f32.mrf.mxu0
    %v2484 = vadd.f32 0.0, %v2483
    %2485 = vmatmul.f32.gmra.mxu0 %v2381
    %v2486 = vpop.f32.mrf.mxu0
    %v2487 = vadd.f32 0.0, %v2486
    %2488 = vmatmul.f32.gmra.mxu0 %v2382
    %v2489 = vpop.f32.mrf.mxu0
    %v2490 = vadd.f32 0.0, %v2489
    %2491 = vmatmul.f32.gmra.mxu0 %v2383
    %v2492 = vpop.f32.mrf.mxu0
    %v2493 = vadd.f32 0.0, %v2492
    %2494 = vmatmul.f32.gmra.mxu0 %v2384
    %v2495 = vpop.f32.mrf.mxu0
    %v2496 = vadd.f32 0.0, %v2495
    %2497 = vmatmul.f32.gmra.mxu0 %v2385
    %v2498 = vpop.f32.mrf.mxu0
    %v2499 = vadd.f32 0.0, %v2498
    %2500 = vmatmul.f32.gmra.mxu0 %v2386
    %v2501 = vpop.f32.mrf.mxu0
    %v2502 = vadd.f32 0.0, %v2501
    %2503 = vmatmul.f32.gmra.mxu0 %v2387
    %v2504 = vpop.f32.mrf.mxu0
    %v2505 = vadd.f32 0.0, %v2504
    %2506 = vmatmul.f32.gmra.mxu0 %v2388
    %v2507 = vpop.f32.mrf.mxu0
    %v2508 = vadd.f32 0.0, %v2507
    %2509 = vmatmul.f32.gmra.mxu0 %v2389
    %v2510 = vpop.f32.mrf.mxu0
    %v2511 = vadd.f32 0.0, %v2510
    %2512 = vmatmul.f32.gmra.mxu0 %v2390
    %v2513 = vpop.f32.mrf.mxu0
    %v2514 = vadd.f32 0.0, %v2513
    %2515 = vmatmul.f32.gmra.mxu0 %v2391
    %v2516 = vpop.f32.mrf.mxu0
    %v2517 = vadd.f32 0.0, %v2516
    %2518 = vmatmul.f32.gmra.mxu0 %v2392
    %v2519 = vpop.f32.mrf.mxu0
    %v2520 = vadd.f32 0.0, %v2519
    %2521 = vmatmul.f32.gmra.mxu0 %v2393
    %v2522 = vpop.f32.mrf.mxu0
    %v2523 = vadd.f32 0.0, %v2522
    %2524 = vmatmul.f32.gmra.mxu0 %v2394
    %v2525 = vpop.f32.mrf.mxu0
    %v2526 = vadd.f32 0.0, %v2525
    %2527 = vmatmul.f32.gmra.mxu0 %v2395
    %v2528 = vpop.f32.mrf.mxu0
    %v2529 = vadd.f32 0.0, %v2528
    %2530 = vmatmul.f32.gmra.mxu0 %v2396
    %v2531 = vpop.f32.mrf.mxu0
    %v2532 = vadd.f32 0.0, %v2531
    %2533 = vmatmul.f32.gmra.mxu0 %v2397
    %v2534 = vpop.f32.mrf.mxu0
    %v2535 = vadd.f32 0.0, %v2534
    %2536 = vmatmul.f32.gmra.mxu0 %v2398
    %v2537 = vpop.f32.mrf.mxu0
    %v2538 = vadd.f32 0.0, %v2537
    %2539 = vdwg.mxu0
    %v2540 = vadd.f32 %v2327, %v2433
    %v2541 = vadd.f32 %v2328, %v2436
    %v2542 = vadd.f32 %v2329, %v2439
    %v2543 = vadd.f32 %v2330, %v2442
    %v2544 = vadd.f32 %v2331, %v2445
    %v2545 = vadd.f32 %v2332, %v2448
    %v2546 = vadd.f32 %v2333, %v2451
    %v2547 = vadd.f32 %v2334, %v2454
    %v2548 = vadd.f32 %v2335, %v2457
    %v2549 = vadd.f32 %v2336, %v2460
    %v2550 = vadd.f32 %v2337, %v2463
    %v2551 = vadd.f32 %v2338, %v2466
    %v2552 = vadd.f32 %v2339, %v2469
    %v2553 = vadd.f32 %v2340, %v2472
    %v2554 = vadd.f32 %v2341, %v2475
    %v2555 = vadd.f32 %v2342, %v2478
    %v2556 = vadd.f32 %v2343, %v2481
    %v2557 = vadd.f32 %v2344, %v2484
    %v2558 = vadd.f32 %v2345, %v2487
    %v2559 = vadd.f32 %v2346, %v2490
    %v2560 = vadd.f32 %v2347, %v2493
    %v2561 = vadd.f32 %v2348, %v2496
    %v2562 = vadd.f32 %v2349, %v2499
    %v2563 = vadd.f32 %v2350, %v2502
    %v2564 = vadd.f32 %v2351, %v2505
    %v2565 = vadd.f32 %v2352, %v2508
    %v2566 = vadd.f32 %v2353, %v2511
    %v2567 = vadd.f32 %v2354, %v2514
    %v2568 = vadd.f32 %v2355, %v2517
    %v2569 = vadd.f32 %v2356, %v2520
    %v2570 = vadd.f32 %v2357, %v2523
    %v2571 = vadd.f32 %v2358, %v2526
    %v2572 = vadd.f32 %v2359, %v2529
    %v2573 = vadd.f32 %v2360, %v2532
    %v2574 = vadd.f32 %v2361, %v2535
    %v2575 = vadd.f32 %v2362, %v2538
    %v2576 = vld [vmem:[#allocation2 + $0xd8] sm:$0xff]
    %v2577 = vld [vmem:[#allocation2 + $0xf8] sm:$0xff]
    %v2578 = vld [vmem:[#allocation2 + $0x118] sm:$0xff]
    %v2579 = vld [vmem:[#allocation2 + $0x138] sm:$0xff]
    %v2580 = vld [vmem:[#allocation2 + $0x158] sm:$0xff]
    %v2581 = vld [vmem:[#allocation2 + $0x178] sm:$0xff]
    %v2582 = vld [vmem:[#allocation2 + $0x198] sm:$0xff]
    %v2583 = vld [vmem:[#allocation2 + $0x1b8] sm:$0xff]
    %v2584 = vld [vmem:[#allocation2 + $0x1d8] sm:$0xff]
    %v2585 = vld [vmem:[#allocation2 + $0x1f8] sm:$0xff]
    %v2586 = vld [vmem:[#allocation2 + $0x218] sm:$0xff]
    %v2587 = vld [vmem:[#allocation2 + $0x238] sm:$0xff]
    %v2588 = vld [vmem:[#allocation2 + $0x258] sm:$0xff]
    %v2589 = vld [vmem:[#allocation2 + $0x278] sm:$0xff]
    %v2590 = vld [vmem:[#allocation2 + $0x298] sm:$0xff]
    %v2591 = vld [vmem:[#allocation2 + $0x2b8] sm:$0xff]
    %v2592 = vld [vmem:[#allocation2 + $0x2d8] sm:$0xff]
    %v2593 = vld [vmem:[#allocation2 + $0x2f8] sm:$0xff]
    %v2594 = vld [vmem:[#allocation2 + $0x318] sm:$0xff]
    %v2595 = vld [vmem:[#allocation2 + $0x338] sm:$0xff]
    %v2596 = vld [vmem:[#allocation2 + $0x358] sm:$0xff]
    %v2597 = vld [vmem:[#allocation2 + $0x378] sm:$0xff]
    %v2598 = vld [vmem:[#allocation2 + $0x398] sm:$0xff]
    %v2599 = vld [vmem:[#allocation2 + $0x3b8] sm:$0xff]
    %v2600 = vld [vmem:[#allocation2 + $0x3d8] sm:$0xff]
    %v2601 = vld [vmem:[#allocation2 + $0x3f8] sm:$0xff]
    %v2602 = vld [vmem:[#allocation2 + $0x418] sm:$0xff]
    %v2603 = vld [vmem:[#allocation2 + $0x438] sm:$0xff]
    %v2604 = vld [vmem:[#allocation2 + $0x458] sm:$0xff]
    %v2605 = vld [vmem:[#allocation2 + $0x478] sm:$0xff]
    %v2606 = vld [vmem:[#allocation2 + $0x498] sm:$0xff]
    %v2607 = vld [vmem:[#allocation2 + $0x4b8] sm:$0xff]
    %v2608 = vld [vmem:[#allocation2 + $0x4d8] sm:$0xff]
    %v2609 = vld [vmem:[#allocation2 + $0x4f8] sm:$0xff]
    %v2610 = vld [vmem:[#allocation2 + $0x518] sm:$0xff]
    %v2611 = vld [vmem:[#allocation2 + $0x538] sm:$0xff]
    %v2612 = vld [vmem:[%s2 + $0x300] sm:$0xff]
    %v2613 = vld [vmem:[%s2 + $0x308] sm:$0xff]
    %v2614 = vld [vmem:[%s2 + $0x310] sm:$0xff]
    %v2615 = vld [vmem:[%s2 + $0x318] sm:$0xff]
    %v2616 = vld [vmem:[%s2 + $0x320] sm:$0xff]
    %v2617 = vld [vmem:[%s2 + $0x328] sm:$0xff]
    %v2618 = vld [vmem:[%s2 + $0x330] sm:$0xff]
    %v2619 = vld [vmem:[%s2 + $0x338] sm:$0xff]
    %v2620 = vld [vmem:[%s2 + $0x340] sm:$0xff]
    %v2621 = vld [vmem:[%s2 + $0x348] sm:$0xff]
    %v2622 = vld [vmem:[%s2 + $0x350] sm:$0xff]
    %v2623 = vld [vmem:[%s2 + $0x358] sm:$0xff]
    %v2624 = vld [vmem:[%s2 + $0x360] sm:$0xff]
    %v2625 = vld [vmem:[%s2 + $0x368] sm:$0xff]
    %v2626 = vld [vmem:[%s2 + $0x370] sm:$0xff]
    %v2627 = vld [vmem:[%s2 + $0x378] sm:$0xff]
    %2628 = vmatpush.msra.mxu0 %v2627
    %2629 = vmatpush.msra.mxu0 %v2626
    %2630 = vmatpush.msra.mxu0 %v2625
    %2631 = vmatpush.msra.mxu0 %v2624
    %2632 = vmatpush.msra.mxu0 %v2623
    %2633 = vmatpush.msra.mxu0 %v2622
    %2634 = vmatpush.msra.mxu0 %v2621
    %2635 = vmatpush.msra.mxu0 %v2620
    %2636 = vmatpush.msra.mxu0 %v2619
    %2637 = vmatpush.msra.mxu0 %v2618
    %2638 = vmatpush.msra.mxu0 %v2617
    %2639 = vmatpush.msra.mxu0 %v2616
    %2640 = vmatpush.msra.mxu0 %v2615
    %2641 = vmatpush.msra.mxu0 %v2614
    %2642 = vmatpush.msra.mxu0 %v2613
    %2643 = vmatpush.msra.mxu0 %v2612
    %2644 = vmatmul.f32.gmra.mxu0 %v2576
    %v2645 = vpop.f32.mrf.mxu0
    %v2646 = vadd.f32 0.0, %v2645
    %2647 = vmatmul.f32.gmra.mxu0 %v2577
    %v2648 = vpop.f32.mrf.mxu0
    %v2649 = vadd.f32 0.0, %v2648
    %2650 = vmatmul.f32.gmra.mxu0 %v2578
    %v2651 = vpop.f32.mrf.mxu0
    %v2652 = vadd.f32 0.0, %v2651
    %2653 = vmatmul.f32.gmra.mxu0 %v2579
    %v2654 = vpop.f32.mrf.mxu0
    %v2655 = vadd.f32 0.0, %v2654
    %2656 = vmatmul.f32.gmra.mxu0 %v2580
    %v2657 = vpop.f32.mrf.mxu0
    %v2658 = vadd.f32 0.0, %v2657
    %2659 = vmatmul.f32.gmra.mxu0 %v2581
    %v2660 = vpop.f32.mrf.mxu0
    %v2661 = vadd.f32 0.0, %v2660
    %2662 = vmatmul.f32.gmra.mxu0 %v2582
    %v2663 = vpop.f32.mrf.mxu0
    %v2664 = vadd.f32 0.0, %v2663
    %2665 = vmatmul.f32.gmra.mxu0 %v2583
    %v2666 = vpop.f32.mrf.mxu0
    %v2667 = vadd.f32 0.0, %v2666
    %2668 = vmatmul.f32.gmra.mxu0 %v2584
    %v2669 = vpop.f32.mrf.mxu0
    %v2670 = vadd.f32 0.0, %v2669
    %2671 = vmatmul.f32.gmra.mxu0 %v2585
    %v2672 = vpop.f32.mrf.mxu0
    %v2673 = vadd.f32 0.0, %v2672
    %2674 = vmatmul.f32.gmra.mxu0 %v2586
    %v2675 = vpop.f32.mrf.mxu0
    %v2676 = vadd.f32 0.0, %v2675
    %2677 = vmatmul.f32.gmra.mxu0 %v2587
    %v2678 = vpop.f32.mrf.mxu0
    %v2679 = vadd.f32 0.0, %v2678
    %2680 = vmatmul.f32.gmra.mxu0 %v2588
    %v2681 = vpop.f32.mrf.mxu0
    %v2682 = vadd.f32 0.0, %v2681
    %2683 = vmatmul.f32.gmra.mxu0 %v2589
    %v2684 = vpop.f32.mrf.mxu0
    %v2685 = vadd.f32 0.0, %v2684
    %2686 = vmatmul.f32.gmra.mxu0 %v2590
    %v2687 = vpop.f32.mrf.mxu0
    %v2688 = vadd.f32 0.0, %v2687
    %2689 = vmatmul.f32.gmra.mxu0 %v2591
    %v2690 = vpop.f32.mrf.mxu0
    %v2691 = vadd.f32 0.0, %v2690
    %2692 = vmatmul.f32.gmra.mxu0 %v2592
    %v2693 = vpop.f32.mrf.mxu0
    %v2694 = vadd.f32 0.0, %v2693
    %2695 = vmatmul.f32.gmra.mxu0 %v2593
    %v2696 = vpop.f32.mrf.mxu0
    %v2697 = vadd.f32 0.0, %v2696
    %2698 = vmatmul.f32.gmra.mxu0 %v2594
    %v2699 = vpop.f32.mrf.mxu0
    %v2700 = vadd.f32 0.0, %v2699
    %2701 = vmatmul.f32.gmra.mxu0 %v2595
    %v2702 = vpop.f32.mrf.mxu0
    %v2703 = vadd.f32 0.0, %v2702
    %2704 = vmatmul.f32.gmra.mxu0 %v2596
    %v2705 = vpop.f32.mrf.mxu0
    %v2706 = vadd.f32 0.0, %v2705
    %2707 = vmatmul.f32.gmra.mxu0 %v2597
    %v2708 = vpop.f32.mrf.mxu0
    %v2709 = vadd.f32 0.0, %v2708
    %2710 = vmatmul.f32.gmra.mxu0 %v2598
    %v2711 = vpop.f32.mrf.mxu0
    %v2712 = vadd.f32 0.0, %v2711
    %2713 = vmatmul.f32.gmra.mxu0 %v2599
    %v2714 = vpop.f32.mrf.mxu0
    %v2715 = vadd.f32 0.0, %v2714
    %2716 = vmatmul.f32.gmra.mxu0 %v2600
    %v2717 = vpop.f32.mrf.mxu0
    %v2718 = vadd.f32 0.0, %v2717
    %2719 = vmatmul.f32.gmra.mxu0 %v2601
    %v2720 = vpop.f32.mrf.mxu0
    %v2721 = vadd.f32 0.0, %v2720
    %2722 = vmatmul.f32.gmra.mxu0 %v2602
    %v2723 = vpop.f32.mrf.mxu0
    %v2724 = vadd.f32 0.0, %v2723
    %2725 = vmatmul.f32.gmra.mxu0 %v2603
    %v2726 = vpop.f32.mrf.mxu0
    %v2727 = vadd.f32 0.0, %v2726
    %2728 = vmatmul.f32.gmra.mxu0 %v2604
    %v2729 = vpop.f32.mrf.mxu0
    %v2730 = vadd.f32 0.0, %v2729
    %2731 = vmatmul.f32.gmra.mxu0 %v2605
    %v2732 = vpop.f32.mrf.mxu0
    %v2733 = vadd.f32 0.0, %v2732
    %2734 = vmatmul.f32.gmra.mxu0 %v2606
    %v2735 = vpop.f32.mrf.mxu0
    %v2736 = vadd.f32 0.0, %v2735
    %2737 = vmatmul.f32.gmra.mxu0 %v2607
    %v2738 = vpop.f32.mrf.mxu0
    %v2739 = vadd.f32 0.0, %v2738
    %2740 = vmatmul.f32.gmra.mxu0 %v2608
    %v2741 = vpop.f32.mrf.mxu0
    %v2742 = vadd.f32 0.0, %v2741
    %2743 = vmatmul.f32.gmra.mxu0 %v2609
    %v2744 = vpop.f32.mrf.mxu0
    %v2745 = vadd.f32 0.0, %v2744
    %2746 = vmatmul.f32.gmra.mxu0 %v2610
    %v2747 = vpop.f32.mrf.mxu0
    %v2748 = vadd.f32 0.0, %v2747
    %2749 = vmatmul.f32.gmra.mxu0 %v2611
    %v2750 = vpop.f32.mrf.mxu0
    %v2751 = vadd.f32 0.0, %v2750
    %2752 = vdwg.mxu0
    %v2753 = vadd.f32 %v2540, %v2646
    %v2754 = vadd.f32 %v2541, %v2649
    %v2755 = vadd.f32 %v2542, %v2652
    %v2756 = vadd.f32 %v2543, %v2655
    %v2757 = vadd.f32 %v2544, %v2658
    %v2758 = vadd.f32 %v2545, %v2661
    %v2759 = vadd.f32 %v2546, %v2664
    %v2760 = vadd.f32 %v2547, %v2667
    %v2761 = vadd.f32 %v2548, %v2670
    %v2762 = vadd.f32 %v2549, %v2673
    %v2763 = vadd.f32 %v2550, %v2676
    %v2764 = vadd.f32 %v2551, %v2679
    %v2765 = vadd.f32 %v2552, %v2682
    %v2766 = vadd.f32 %v2553, %v2685
    %v2767 = vadd.f32 %v2554, %v2688
    %v2768 = vadd.f32 %v2555, %v2691
    %v2769 = vadd.f32 %v2556, %v2694
    %v2770 = vadd.f32 %v2557, %v2697
    %v2771 = vadd.f32 %v2558, %v2700
    %v2772 = vadd.f32 %v2559, %v2703
    %v2773 = vadd.f32 %v2560, %v2706
    %v2774 = vadd.f32 %v2561, %v2709
    %v2775 = vadd.f32 %v2562, %v2712
    %v2776 = vadd.f32 %v2563, %v2715
    %v2777 = vadd.f32 %v2564, %v2718
    %v2778 = vadd.f32 %v2565, %v2721
    %v2779 = vadd.f32 %v2566, %v2724
    %v2780 = vadd.f32 %v2567, %v2727
    %v2781 = vadd.f32 %v2568, %v2730
    %v2782 = vadd.f32 %v2569, %v2733
    %v2783 = vadd.f32 %v2570, %v2736
    %v2784 = vadd.f32 %v2571, %v2739
    %v2785 = vadd.f32 %v2572, %v2742
    %v2786 = vadd.f32 %v2573, %v2745
    %v2787 = vadd.f32 %v2574, %v2748
    %v2788 = vadd.f32 %v2575, %v2751
    %v2789 = vld [vmem:[#allocation2 + $0xe0] sm:$0xff]
    %v2790 = vld [vmem:[#allocation2 + $0x100] sm:$0xff]
    %v2791 = vld [vmem:[#allocation2 + $0x120] sm:$0xff]
    %v2792 = vld [vmem:[#allocation2 + $0x140] sm:$0xff]
    %v2793 = vld [vmem:[#allocation2 + $0x160] sm:$0xff]
    %v2794 = vld [vmem:[#allocation2 + $0x180] sm:$0xff]
    %v2795 = vld [vmem:[#allocation2 + $0x1a0] sm:$0xff]
    %v2796 = vld [vmem:[#allocation2 + $0x1c0] sm:$0xff]
    %v2797 = vld [vmem:[#allocation2 + $0x1e0] sm:$0xff]
    %v2798 = vld [vmem:[#allocation2 + $0x200] sm:$0xff]
    %v2799 = vld [vmem:[#allocation2 + $0x220] sm:$0xff]
    %v2800 = vld [vmem:[#allocation2 + $0x240] sm:$0xff]
    %v2801 = vld [vmem:[#allocation2 + $0x260] sm:$0xff]
    %v2802 = vld [vmem:[#allocation2 + $0x280] sm:$0xff]
    %v2803 = vld [vmem:[#allocation2 + $0x2a0] sm:$0xff]
    %v2804 = vld [vmem:[#allocation2 + $0x2c0] sm:$0xff]
    %v2805 = vld [vmem:[#allocation2 + $0x2e0] sm:$0xff]
    %v2806 = vld [vmem:[#allocation2 + $0x300] sm:$0xff]
    %v2807 = vld [vmem:[#allocation2 + $0x320] sm:$0xff]
    %v2808 = vld [vmem:[#allocation2 + $0x340] sm:$0xff]
    %v2809 = vld [vmem:[#allocation2 + $0x360] sm:$0xff]
    %v2810 = vld [vmem:[#allocation2 + $0x380] sm:$0xff]
    %v2811 = vld [vmem:[#allocation2 + $0x3a0] sm:$0xff]
    %v2812 = vld [vmem:[#allocation2 + $0x3c0] sm:$0xff]
    %v2813 = vld [vmem:[#allocation2 + $0x3e0] sm:$0xff]
    %v2814 = vld [vmem:[#allocation2 + $0x400] sm:$0xff]
    %v2815 = vld [vmem:[#allocation2 + $0x420] sm:$0xff]
    %v2816 = vld [vmem:[#allocation2 + $0x440] sm:$0xff]
    %v2817 = vld [vmem:[#allocation2 + $0x460] sm:$0xff]
    %v2818 = vld [vmem:[#allocation2 + $0x480] sm:$0xff]
    %v2819 = vld [vmem:[#allocation2 + $0x4a0] sm:$0xff]
    %v2820 = vld [vmem:[#allocation2 + $0x4c0] sm:$0xff]
    %v2821 = vld [vmem:[#allocation2 + $0x4e0] sm:$0xff]
    %v2822 = vld [vmem:[#allocation2 + $0x500] sm:$0xff]
    %v2823 = vld [vmem:[#allocation2 + $0x520] sm:$0xff]
    %v2824 = vld [vmem:[#allocation2 + $0x540] sm:$0xff]
    %v2825 = vld [vmem:[%s2 + $0x380] sm:$0xff]
    %v2826 = vld [vmem:[%s2 + $0x388] sm:$0xff]
    %v2827 = vld [vmem:[%s2 + $0x390] sm:$0xff]
    %v2828 = vld [vmem:[%s2 + $0x398] sm:$0xff]
    %v2829 = vld [vmem:[%s2 + $0x3a0] sm:$0xff]
    %v2830 = vld [vmem:[%s2 + $0x3a8] sm:$0xff]
    %v2831 = vld [vmem:[%s2 + $0x3b0] sm:$0xff]
    %v2832 = vld [vmem:[%s2 + $0x3b8] sm:$0xff]
    %v2833 = vld [vmem:[%s2 + $0x3c0] sm:$0xff]
    %v2834 = vld [vmem:[%s2 + $0x3c8] sm:$0xff]
    %v2835 = vld [vmem:[%s2 + $0x3d0] sm:$0xff]
    %v2836 = vld [vmem:[%s2 + $0x3d8] sm:$0xff]
    %v2837 = vld [vmem:[%s2 + $0x3e0] sm:$0xff]
    %v2838 = vld [vmem:[%s2 + $0x3e8] sm:$0xff]
    %v2839 = vld [vmem:[%s2 + $0x3f0] sm:$0xff]
    %v2840 = vld [vmem:[%s2 + $0x3f8] sm:$0xff]
    %2841 = vmatpush.msra.mxu0 %v2840
    %2842 = vmatpush.msra.mxu0 %v2839
    %2843 = vmatpush.msra.mxu0 %v2838
    %2844 = vmatpush.msra.mxu0 %v2837
    %2845 = vmatpush.msra.mxu0 %v2836
    %2846 = vmatpush.msra.mxu0 %v2835
    %2847 = vmatpush.msra.mxu0 %v2834
    %2848 = vmatpush.msra.mxu0 %v2833
    %2849 = vmatpush.msra.mxu0 %v2832
    %2850 = vmatpush.msra.mxu0 %v2831
    %2851 = vmatpush.msra.mxu0 %v2830
    %2852 = vmatpush.msra.mxu0 %v2829
    %2853 = vmatpush.msra.mxu0 %v2828
    %2854 = vmatpush.msra.mxu0 %v2827
    %2855 = vmatpush.msra.mxu0 %v2826
    %2856 = vmatpush.msra.mxu0 %v2825
    %2857 = vmatmul.f32.gmra.mxu0 %v2789
    %v2858 = vpop.f32.mrf.mxu0
    %v2859 = vadd.f32 0.0, %v2858
    %2860 = vmatmul.f32.gmra.mxu0 %v2790
    %v2861 = vpop.f32.mrf.mxu0
    %v2862 = vadd.f32 0.0, %v2861
    %2863 = vmatmul.f32.gmra.mxu0 %v2791
    %v2864 = vpop.f32.mrf.mxu0
    %v2865 = vadd.f32 0.0, %v2864
    %2866 = vmatmul.f32.gmra.mxu0 %v2792
    %v2867 = vpop.f32.mrf.mxu0
    %v2868 = vadd.f32 0.0, %v2867
    %2869 = vmatmul.f32.gmra.mxu0 %v2793
    %v2870 = vpop.f32.mrf.mxu0
    %v2871 = vadd.f32 0.0, %v2870
    %2872 = vmatmul.f32.gmra.mxu0 %v2794
    %v2873 = vpop.f32.mrf.mxu0
    %v2874 = vadd.f32 0.0, %v2873
    %2875 = vmatmul.f32.gmra.mxu0 %v2795
    %v2876 = vpop.f32.mrf.mxu0
    %v2877 = vadd.f32 0.0, %v2876
    %2878 = vmatmul.f32.gmra.mxu0 %v2796
    %v2879 = vpop.f32.mrf.mxu0
    %v2880 = vadd.f32 0.0, %v2879
    %2881 = vmatmul.f32.gmra.mxu0 %v2797
    %v2882 = vpop.f32.mrf.mxu0
    %v2883 = vadd.f32 0.0, %v2882
    %2884 = vmatmul.f32.gmra.mxu0 %v2798
    %v2885 = vpop.f32.mrf.mxu0
    %v2886 = vadd.f32 0.0, %v2885
    %2887 = vmatmul.f32.gmra.mxu0 %v2799
    %v2888 = vpop.f32.mrf.mxu0
    %v2889 = vadd.f32 0.0, %v2888
    %2890 = vmatmul.f32.gmra.mxu0 %v2800
    %v2891 = vpop.f32.mrf.mxu0
    %v2892 = vadd.f32 0.0, %v2891
    %2893 = vmatmul.f32.gmra.mxu0 %v2801
    %v2894 = vpop.f32.mrf.mxu0
    %v2895 = vadd.f32 0.0, %v2894
    %2896 = vmatmul.f32.gmra.mxu0 %v2802
    %v2897 = vpop.f32.mrf.mxu0
    %v2898 = vadd.f32 0.0, %v2897
    %2899 = vmatmul.f32.gmra.mxu0 %v2803
    %v2900 = vpop.f32.mrf.mxu0
    %v2901 = vadd.f32 0.0, %v2900
    %2902 = vmatmul.f32.gmra.mxu0 %v2804
    %v2903 = vpop.f32.mrf.mxu0
    %v2904 = vadd.f32 0.0, %v2903
    %2905 = vmatmul.f32.gmra.mxu0 %v2805
    %v2906 = vpop.f32.mrf.mxu0
    %v2907 = vadd.f32 0.0, %v2906
    %2908 = vmatmul.f32.gmra.mxu0 %v2806
    %v2909 = vpop.f32.mrf.mxu0
    %v2910 = vadd.f32 0.0, %v2909
    %2911 = vmatmul.f32.gmra.mxu0 %v2807
    %v2912 = vpop.f32.mrf.mxu0
    %v2913 = vadd.f32 0.0, %v2912
    %2914 = vmatmul.f32.gmra.mxu0 %v2808
    %v2915 = vpop.f32.mrf.mxu0
    %v2916 = vadd.f32 0.0, %v2915
    %2917 = vmatmul.f32.gmra.mxu0 %v2809
    %v2918 = vpop.f32.mrf.mxu0
    %v2919 = vadd.f32 0.0, %v2918
    %2920 = vmatmul.f32.gmra.mxu0 %v2810
    %v2921 = vpop.f32.mrf.mxu0
    %v2922 = vadd.f32 0.0, %v2921
    %2923 = vmatmul.f32.gmra.mxu0 %v2811
    %v2924 = vpop.f32.mrf.mxu0
    %v2925 = vadd.f32 0.0, %v2924
    %2926 = vmatmul.f32.gmra.mxu0 %v2812
    %v2927 = vpop.f32.mrf.mxu0
    %v2928 = vadd.f32 0.0, %v2927
    %2929 = vmatmul.f32.gmra.mxu0 %v2813
    %v2930 = vpop.f32.mrf.mxu0
    %v2931 = vadd.f32 0.0, %v2930
    %2932 = vmatmul.f32.gmra.mxu0 %v2814
    %v2933 = vpop.f32.mrf.mxu0
    %v2934 = vadd.f32 0.0, %v2933
    %2935 = vmatmul.f32.gmra.mxu0 %v2815
    %v2936 = vpop.f32.mrf.mxu0
    %v2937 = vadd.f32 0.0, %v2936
    %2938 = vmatmul.f32.gmra.mxu0 %v2816
    %v2939 = vpop.f32.mrf.mxu0
    %v2940 = vadd.f32 0.0, %v2939
    %2941 = vmatmul.f32.gmra.mxu0 %v2817
    %v2942 = vpop.f32.mrf.mxu0
    %v2943 = vadd.f32 0.0, %v2942
    %2944 = vmatmul.f32.gmra.mxu0 %v2818
    %v2945 = vpop.f32.mrf.mxu0
    %v2946 = vadd.f32 0.0, %v2945
    %2947 = vmatmul.f32.gmra.mxu0 %v2819
    %v2948 = vpop.f32.mrf.mxu0
    %v2949 = vadd.f32 0.0, %v2948
    %2950 = vmatmul.f32.gmra.mxu0 %v2820
    %v2951 = vpop.f32.mrf.mxu0
    %v2952 = vadd.f32 0.0, %v2951
    %2953 = vmatmul.f32.gmra.mxu0 %v2821
    %v2954 = vpop.f32.mrf.mxu0
    %v2955 = vadd.f32 0.0, %v2954
    %2956 = vmatmul.f32.gmra.mxu0 %v2822
    %v2957 = vpop.f32.mrf.mxu0
    %v2958 = vadd.f32 0.0, %v2957
    %2959 = vmatmul.f32.gmra.mxu0 %v2823
    %v2960 = vpop.f32.mrf.mxu0
    %v2961 = vadd.f32 0.0, %v2960
    %2962 = vmatmul.f32.gmra.mxu0 %v2824
    %v2963 = vpop.f32.mrf.mxu0
    %v2964 = vadd.f32 0.0, %v2963
    %2965 = vdwg.mxu0
    %v2966 = vadd.f32 %v2753, %v2859
    %v2967 = vadd.f32 %v2754, %v2862
    %v2968 = vadd.f32 %v2755, %v2865
    %v2969 = vadd.f32 %v2756, %v2868
    %v2970 = vadd.f32 %v2757, %v2871
    %v2971 = vadd.f32 %v2758, %v2874
    %v2972 = vadd.f32 %v2759, %v2877
    %v2973 = vadd.f32 %v2760, %v2880
    %v2974 = vadd.f32 %v2761, %v2883
    %v2975 = vadd.f32 %v2762, %v2886
    %v2976 = vadd.f32 %v2763, %v2889
    %v2977 = vadd.f32 %v2764, %v2892
    %v2978 = vadd.f32 %v2765, %v2895
    %v2979 = vadd.f32 %v2766, %v2898
    %v2980 = vadd.f32 %v2767, %v2901
    %v2981 = vadd.f32 %v2768, %v2904
    %v2982 = vadd.f32 %v2769, %v2907
    %v2983 = vadd.f32 %v2770, %v2910
    %v2984 = vadd.f32 %v2771, %v2913
    %v2985 = vadd.f32 %v2772, %v2916
    %v2986 = vadd.f32 %v2773, %v2919
    %v2987 = vadd.f32 %v2774, %v2922
    %v2988 = vadd.f32 %v2775, %v2925
    %v2989 = vadd.f32 %v2776, %v2928
    %v2990 = vadd.f32 %v2777, %v2931
    %v2991 = vadd.f32 %v2778, %v2934
    %v2992 = vadd.f32 %v2779, %v2937
    %v2993 = vadd.f32 %v2780, %v2940
    %v2994 = vadd.f32 %v2781, %v2943
    %v2995 = vadd.f32 %v2782, %v2946
    %v2996 = vadd.f32 %v2783, %v2949
    %v2997 = vadd.f32 %v2784, %v2952
    %v2998 = vadd.f32 %v2785, %v2955
    %v2999 = vadd.f32 %v2786, %v2958
    %v3000 = vadd.f32 %v2787, %v2961
    %v3001 = vadd.f32 %v2788, %v2964
    %v3002 = vld [vmem:[#allocation2 + $0xe8] sm:$0xff]
    %v3003 = vld [vmem:[#allocation2 + $0x108] sm:$0xff]
    %v3004 = vld [vmem:[#allocation2 + $0x128] sm:$0xff]
    %v3005 = vld [vmem:[#allocation2 + $0x148] sm:$0xff]
    %v3006 = vld [vmem:[#allocation2 + $0x168] sm:$0xff]
    %v3007 = vld [vmem:[#allocation2 + $0x188] sm:$0xff]
    %v3008 = vld [vmem:[#allocation2 + $0x1a8] sm:$0xff]
    %v3009 = vld [vmem:[#allocation2 + $0x1c8] sm:$0xff]
    %v3010 = vld [vmem:[#allocation2 + $0x1e8] sm:$0xff]
    %v3011 = vld [vmem:[#allocation2 + $0x208] sm:$0xff]
    %v3012 = vld [vmem:[#allocation2 + $0x228] sm:$0xff]
    %v3013 = vld [vmem:[#allocation2 + $0x248] sm:$0xff]
    %v3014 = vld [vmem:[#allocation2 + $0x268] sm:$0xff]
    %v3015 = vld [vmem:[#allocation2 + $0x288] sm:$0xff]
    %v3016 = vld [vmem:[#allocation2 + $0x2a8] sm:$0xff]
    %v3017 = vld [vmem:[#allocation2 + $0x2c8] sm:$0xff]
    %v3018 = vld [vmem:[#allocation2 + $0x2e8] sm:$0xff]
    %v3019 = vld [vmem:[#allocation2 + $0x308] sm:$0xff]
    %v3020 = vld [vmem:[#allocation2 + $0x328] sm:$0xff]
    %v3021 = vld [vmem:[#allocation2 + $0x348] sm:$0xff]
    %v3022 = vld [vmem:[#allocation2 + $0x368] sm:$0xff]
    %v3023 = vld [vmem:[#allocation2 + $0x388] sm:$0xff]
    %v3024 = vld [vmem:[#allocation2 + $0x3a8] sm:$0xff]
    %v3025 = vld [vmem:[#allocation2 + $0x3c8] sm:$0xff]
    %v3026 = vld [vmem:[#allocation2 + $0x3e8] sm:$0xff]
    %v3027 = vld [vmem:[#allocation2 + $0x408] sm:$0xff]
    %v3028 = vld [vmem:[#allocation2 + $0x428] sm:$0xff]
    %v3029 = vld [vmem:[#allocation2 + $0x448] sm:$0xff]
    %v3030 = vld [vmem:[#allocation2 + $0x468] sm:$0xff]
    %v3031 = vld [vmem:[#allocation2 + $0x488] sm:$0xff]
    %v3032 = vld [vmem:[#allocation2 + $0x4a8] sm:$0xff]
    %v3033 = vld [vmem:[#allocation2 + $0x4c8] sm:$0xff]
    %v3034 = vld [vmem:[#allocation2 + $0x4e8] sm:$0xff]
    %v3035 = vld [vmem:[#allocation2 + $0x508] sm:$0xff]
    %v3036 = vld [vmem:[#allocation2 + $0x528] sm:$0xff]
    %v3037 = vld [vmem:[#allocation2 + $0x548] sm:$0xff]
    %v3038 = vld [vmem:[%s2 + $0x400] sm:$0xff]
    %v3039 = vld [vmem:[%s2 + $0x408] sm:$0xff]
    %v3040 = vld [vmem:[%s2 + $0x410] sm:$0xff]
    %v3041 = vld [vmem:[%s2 + $0x418] sm:$0xff]
    %v3042 = vld [vmem:[%s2 + $0x420] sm:$0xff]
    %v3043 = vld [vmem:[%s2 + $0x428] sm:$0xff]
    %v3044 = vld [vmem:[%s2 + $0x430] sm:$0xff]
    %v3045 = vld [vmem:[%s2 + $0x438] sm:$0xff]
    %v3046 = vld [vmem:[%s2 + $0x440] sm:$0xff]
    %v3047 = vld [vmem:[%s2 + $0x448] sm:$0xff]
    %v3048 = vld [vmem:[%s2 + $0x450] sm:$0xff]
    %v3049 = vld [vmem:[%s2 + $0x458] sm:$0xff]
    %v3050 = vld [vmem:[%s2 + $0x460] sm:$0xff]
    %v3051 = vld [vmem:[%s2 + $0x468] sm:$0xff]
    %v3052 = vld [vmem:[%s2 + $0x470] sm:$0xff]
    %v3053 = vld [vmem:[%s2 + $0x478] sm:$0xff]
    %3054 = vmatpush.msra.mxu0 %v3053
    %3055 = vmatpush.msra.mxu0 %v3052
    %3056 = vmatpush.msra.mxu0 %v3051
    %3057 = vmatpush.msra.mxu0 %v3050
    %3058 = vmatpush.msra.mxu0 %v3049
    %3059 = vmatpush.msra.mxu0 %v3048
    %3060 = vmatpush.msra.mxu0 %v3047
    %3061 = vmatpush.msra.mxu0 %v3046
    %3062 = vmatpush.msra.mxu0 %v3045
    %3063 = vmatpush.msra.mxu0 %v3044
    %3064 = vmatpush.msra.mxu0 %v3043
    %3065 = vmatpush.msra.mxu0 %v3042
    %3066 = vmatpush.msra.mxu0 %v3041
    %3067 = vmatpush.msra.mxu0 %v3040
    %3068 = vmatpush.msra.mxu0 %v3039
    %3069 = vmatpush.msra.mxu0 %v3038
    %3070 = vmatmul.f32.gmra.mxu0 %v3002
    %v3071 = vpop.f32.mrf.mxu0
    %v3072 = vadd.f32 0.0, %v3071
    %3073 = vmatmul.f32.gmra.mxu0 %v3003
    %v3074 = vpop.f32.mrf.mxu0
    %v3075 = vadd.f32 0.0, %v3074
    %3076 = vmatmul.f32.gmra.mxu0 %v3004
    %v3077 = vpop.f32.mrf.mxu0
    %v3078 = vadd.f32 0.0, %v3077
    %3079 = vmatmul.f32.gmra.mxu0 %v3005
    %v3080 = vpop.f32.mrf.mxu0
    %v3081 = vadd.f32 0.0, %v3080
    %3082 = vmatmul.f32.gmra.mxu0 %v3006
    %v3083 = vpop.f32.mrf.mxu0
    %v3084 = vadd.f32 0.0, %v3083
    %3085 = vmatmul.f32.gmra.mxu0 %v3007
    %v3086 = vpop.f32.mrf.mxu0
    %v3087 = vadd.f32 0.0, %v3086
    %3088 = vmatmul.f32.gmra.mxu0 %v3008
    %v3089 = vpop.f32.mrf.mxu0
    %v3090 = vadd.f32 0.0, %v3089
    %3091 = vmatmul.f32.gmra.mxu0 %v3009
    %v3092 = vpop.f32.mrf.mxu0
    %v3093 = vadd.f32 0.0, %v3092
    %3094 = vmatmul.f32.gmra.mxu0 %v3010
    %v3095 = vpop.f32.mrf.mxu0
    %v3096 = vadd.f32 0.0, %v3095
    %3097 = vmatmul.f32.gmra.mxu0 %v3011
    %v3098 = vpop.f32.mrf.mxu0
    %v3099 = vadd.f32 0.0, %v3098
    %3100 = vmatmul.f32.gmra.mxu0 %v3012
    %v3101 = vpop.f32.mrf.mxu0
    %v3102 = vadd.f32 0.0, %v3101
    %3103 = vmatmul.f32.gmra.mxu0 %v3013
    %v3104 = vpop.f32.mrf.mxu0
    %v3105 = vadd.f32 0.0, %v3104
    %3106 = vmatmul.f32.gmra.mxu0 %v3014
    %v3107 = vpop.f32.mrf.mxu0
    %v3108 = vadd.f32 0.0, %v3107
    %3109 = vmatmul.f32.gmra.mxu0 %v3015
    %v3110 = vpop.f32.mrf.mxu0
    %v3111 = vadd.f32 0.0, %v3110
    %3112 = vmatmul.f32.gmra.mxu0 %v3016
    %v3113 = vpop.f32.mrf.mxu0
    %v3114 = vadd.f32 0.0, %v3113
    %3115 = vmatmul.f32.gmra.mxu0 %v3017
    %v3116 = vpop.f32.mrf.mxu0
    %v3117 = vadd.f32 0.0, %v3116
    %3118 = vmatmul.f32.gmra.mxu0 %v3018
    %v3119 = vpop.f32.mrf.mxu0
    %v3120 = vadd.f32 0.0, %v3119
    %3121 = vmatmul.f32.gmra.mxu0 %v3019
    %v3122 = vpop.f32.mrf.mxu0
    %v3123 = vadd.f32 0.0, %v3122
    %3124 = vmatmul.f32.gmra.mxu0 %v3020
    %v3125 = vpop.f32.mrf.mxu0
    %v3126 = vadd.f32 0.0, %v3125
    %3127 = vmatmul.f32.gmra.mxu0 %v3021
    %v3128 = vpop.f32.mrf.mxu0
    %v3129 = vadd.f32 0.0, %v3128
    %3130 = vmatmul.f32.gmra.mxu0 %v3022
    %v3131 = vpop.f32.mrf.mxu0
    %v3132 = vadd.f32 0.0, %v3131
    %3133 = vmatmul.f32.gmra.mxu0 %v3023
    %v3134 = vpop.f32.mrf.mxu0
    %v3135 = vadd.f32 0.0, %v3134
    %3136 = vmatmul.f32.gmra.mxu0 %v3024
    %v3137 = vpop.f32.mrf.mxu0
    %v3138 = vadd.f32 0.0, %v3137
    %3139 = vmatmul.f32.gmra.mxu0 %v3025
    %v3140 = vpop.f32.mrf.mxu0
    %v3141 = vadd.f32 0.0, %v3140
    %3142 = vmatmul.f32.gmra.mxu0 %v3026
    %v3143 = vpop.f32.mrf.mxu0
    %v3144 = vadd.f32 0.0, %v3143
    %3145 = vmatmul.f32.gmra.mxu0 %v3027
    %v3146 = vpop.f32.mrf.mxu0
    %v3147 = vadd.f32 0.0, %v3146
    %3148 = vmatmul.f32.gmra.mxu0 %v3028
    %v3149 = vpop.f32.mrf.mxu0
    %v3150 = vadd.f32 0.0, %v3149
    %3151 = vmatmul.f32.gmra.mxu0 %v3029
    %v3152 = vpop.f32.mrf.mxu0
    %v3153 = vadd.f32 0.0, %v3152
    %3154 = vmatmul.f32.gmra.mxu0 %v3030
    %v3155 = vpop.f32.mrf.mxu0
    %v3156 = vadd.f32 0.0, %v3155
    %3157 = vmatmul.f32.gmra.mxu0 %v3031
    %v3158 = vpop.f32.mrf.mxu0
    %v3159 = vadd.f32 0.0, %v3158
    %3160 = vmatmul.f32.gmra.mxu0 %v3032
    %v3161 = vpop.f32.mrf.mxu0
    %v3162 = vadd.f32 0.0, %v3161
    %3163 = vmatmul.f32.gmra.mxu0 %v3033
    %v3164 = vpop.f32.mrf.mxu0
    %v3165 = vadd.f32 0.0, %v3164
    %3166 = vmatmul.f32.gmra.mxu0 %v3034
    %v3167 = vpop.f32.mrf.mxu0
    %v3168 = vadd.f32 0.0, %v3167
    %3169 = vmatmul.f32.gmra.mxu0 %v3035
    %v3170 = vpop.f32.mrf.mxu0
    %v3171 = vadd.f32 0.0, %v3170
    %3172 = vmatmul.f32.gmra.mxu0 %v3036
    %v3173 = vpop.f32.mrf.mxu0
    %v3174 = vadd.f32 0.0, %v3173
    %3175 = vmatmul.f32.gmra.mxu0 %v3037
    %v3176 = vpop.f32.mrf.mxu0
    %v3177 = vadd.f32 0.0, %v3176
    %3178 = vdwg.mxu0
    %v3179 = vadd.f32 %v2966, %v3072
    %v3180 = vadd.f32 %v2967, %v3075
    %v3181 = vadd.f32 %v2968, %v3078
    %v3182 = vadd.f32 %v2969, %v3081
    %v3183 = vadd.f32 %v2970, %v3084
    %v3184 = vadd.f32 %v2971, %v3087
    %v3185 = vadd.f32 %v2972, %v3090
    %v3186 = vadd.f32 %v2973, %v3093
    %v3187 = vadd.f32 %v2974, %v3096
    %v3188 = vadd.f32 %v2975, %v3099
    %v3189 = vadd.f32 %v2976, %v3102
    %v3190 = vadd.f32 %v2977, %v3105
    %v3191 = vadd.f32 %v2978, %v3108
    %v3192 = vadd.f32 %v2979, %v3111
    %v3193 = vadd.f32 %v2980, %v3114
    %v3194 = vadd.f32 %v2981, %v3117
    %v3195 = vadd.f32 %v2982, %v3120
    %v3196 = vadd.f32 %v2983, %v3123
    %v3197 = vadd.f32 %v2984, %v3126
    %v3198 = vadd.f32 %v2985, %v3129
    %v3199 = vadd.f32 %v2986, %v3132
    %v3200 = vadd.f32 %v2987, %v3135
    %v3201 = vadd.f32 %v2988, %v3138
    %v3202 = vadd.f32 %v2989, %v3141
    %v3203 = vadd.f32 %v2990, %v3144
    %v3204 = vadd.f32 %v2991, %v3147
    %v3205 = vadd.f32 %v2992, %v3150
    %v3206 = vadd.f32 %v2993, %v3153
    %v3207 = vadd.f32 %v2994, %v3156
    %v3208 = vadd.f32 %v2995, %v3159
    %v3209 = vadd.f32 %v2996, %v3162
    %v3210 = vadd.f32 %v2997, %v3165
    %v3211 = vadd.f32 %v2998, %v3168
    %v3212 = vadd.f32 %v2999, %v3171
    %v3213 = vadd.f32 %v3000, %v3174
    %v3214 = vadd.f32 %v3001, %v3177
    %v3215 = vld [vmem:[#allocation2 + $0xf0] sm:$0xff]
    %v3216 = vld [vmem:[#allocation2 + $0x110] sm:$0xff]
    %v3217 = vld [vmem:[#allocation2 + $0x130] sm:$0xff]
    %v3218 = vld [vmem:[#allocation2 + $0x150] sm:$0xff]
    %v3219 = vld [vmem:[#allocation2 + $0x170] sm:$0xff]
    %v3220 = vld [vmem:[#allocation2 + $0x190] sm:$0xff]
    %v3221 = vld [vmem:[#allocation2 + $0x1b0] sm:$0xff]
    %v3222 = vld [vmem:[#allocation2 + $0x1d0] sm:$0xff]
    %v3223 = vld [vmem:[#allocation2 + $0x1f0] sm:$0xff]
    %v3224 = vld [vmem:[#allocation2 + $0x210] sm:$0xff]
    %v3225 = vld [vmem:[#allocation2 + $0x230] sm:$0xff]
    %v3226 = vld [vmem:[#allocation2 + $0x250] sm:$0xff]
    %v3227 = vld [vmem:[#allocation2 + $0x270] sm:$0xff]
    %v3228 = vld [vmem:[#allocation2 + $0x290] sm:$0xff]
    %v3229 = vld [vmem:[#allocation2 + $0x2b0] sm:$0xff]
    %v3230 = vld [vmem:[#allocation2 + $0x2d0] sm:$0xff]
    %v3231 = vld [vmem:[#allocation2 + $0x2f0] sm:$0xff]
    %v3232 = vld [vmem:[#allocation2 + $0x310] sm:$0xff]
    %v3233 = vld [vmem:[#allocation2 + $0x330] sm:$0xff]
    %v3234 = vld [vmem:[#allocation2 + $0x350] sm:$0xff]
    %v3235 = vld [vmem:[#allocation2 + $0x370] sm:$0xff]
    %v3236 = vld [vmem:[#allocation2 + $0x390] sm:$0xff]
    %v3237 = vld [vmem:[#allocation2 + $0x3b0] sm:$0xff]
    %v3238 = vld [vmem:[#allocation2 + $0x3d0] sm:$0xff]
    %v3239 = vld [vmem:[#allocation2 + $0x3f0] sm:$0xff]
    %v3240 = vld [vmem:[#allocation2 + $0x410] sm:$0xff]
    %v3241 = vld [vmem:[#allocation2 + $0x430] sm:$0xff]
    %v3242 = vld [vmem:[#allocation2 + $0x450] sm:$0xff]
    %v3243 = vld [vmem:[#allocation2 + $0x470] sm:$0xff]
    %v3244 = vld [vmem:[#allocation2 + $0x490] sm:$0xff]
    %v3245 = vld [vmem:[#allocation2 + $0x4b0] sm:$0xff]
    %v3246 = vld [vmem:[#allocation2 + $0x4d0] sm:$0xff]
    %v3247 = vld [vmem:[#allocation2 + $0x4f0] sm:$0xff]
    %v3248 = vld [vmem:[#allocation2 + $0x510] sm:$0xff]
    %v3249 = vld [vmem:[#allocation2 + $0x530] sm:$0xff]
    %v3250 = vld [vmem:[#allocation2 + $0x550] sm:$0xff]
    %v3251 = vld [vmem:[%s2 + $0x480] sm:$0xff]
    %v3252 = vld [vmem:[%s2 + $0x488] sm:$0xff]
    %v3253 = vld [vmem:[%s2 + $0x490] sm:$0xff]
    %v3254 = vld [vmem:[%s2 + $0x498] sm:$0xff]
    %v3255 = vld [vmem:[%s2 + $0x4a0] sm:$0xff]
    %v3256 = vld [vmem:[%s2 + $0x4a8] sm:$0xff]
    %v3257 = vld [vmem:[%s2 + $0x4b0] sm:$0xff]
    %v3258 = vld [vmem:[%s2 + $0x4b8] sm:$0xff]
    %v3259 = vld [vmem:[%s2 + $0x4c0] sm:$0xff]
    %v3260 = vld [vmem:[%s2 + $0x4c8] sm:$0xff]
    %v3261 = vld [vmem:[%s2 + $0x4d0] sm:$0xff]
    %v3262 = vld [vmem:[%s2 + $0x4d8] sm:$0xff]
    %v3263 = vld [vmem:[%s2 + $0x4e0] sm:$0xff]
    %v3264 = vld [vmem:[%s2 + $0x4e8] sm:$0xff]
    %v3265 = vld [vmem:[%s2 + $0x4f0] sm:$0xff]
    %v3266 = vld [vmem:[%s2 + $0x4f8] sm:$0xff]
    %3267 = vmatpush.msra.mxu0 %v3266
    %3268 = vmatpush.msra.mxu0 %v3265
    %3269 = vmatpush.msra.mxu0 %v3264
    %3270 = vmatpush.msra.mxu0 %v3263
    %3271 = vmatpush.msra.mxu0 %v3262
    %3272 = vmatpush.msra.mxu0 %v3261
    %3273 = vmatpush.msra.mxu0 %v3260
    %3274 = vmatpush.msra.mxu0 %v3259
    %3275 = vmatpush.msra.mxu0 %v3258
    %3276 = vmatpush.msra.mxu0 %v3257
    %3277 = vmatpush.msra.mxu0 %v3256
    %3278 = vmatpush.msra.mxu0 %v3255
    %3279 = vmatpush.msra.mxu0 %v3254
    %3280 = vmatpush.msra.mxu0 %v3253
    %3281 = vmatpush.msra.mxu0 %v3252
    %3282 = vmatpush.msra.mxu0 %v3251
    %3283 = vmatmul.f32.gmra.mxu0 %v3215
    %v3284 = vpop.f32.mrf.mxu0
    %v3285 = vadd.f32 0.0, %v3284
    %3286 = vmatmul.f32.gmra.mxu0 %v3216
    %v3287 = vpop.f32.mrf.mxu0
    %v3288 = vadd.f32 0.0, %v3287
    %3289 = vmatmul.f32.gmra.mxu0 %v3217
    %v3290 = vpop.f32.mrf.mxu0
    %v3291 = vadd.f32 0.0, %v3290
    %3292 = vmatmul.f32.gmra.mxu0 %v3218
    %v3293 = vpop.f32.mrf.mxu0
    %v3294 = vadd.f32 0.0, %v3293
    %3295 = vmatmul.f32.gmra.mxu0 %v3219
    %v3296 = vpop.f32.mrf.mxu0
    %v3297 = vadd.f32 0.0, %v3296
    %3298 = vmatmul.f32.gmra.mxu0 %v3220
    %v3299 = vpop.f32.mrf.mxu0
    %v3300 = vadd.f32 0.0, %v3299
    %3301 = vmatmul.f32.gmra.mxu0 %v3221
    %v3302 = vpop.f32.mrf.mxu0
    %v3303 = vadd.f32 0.0, %v3302
    %3304 = vmatmul.f32.gmra.mxu0 %v3222
    %v3305 = vpop.f32.mrf.mxu0
    %v3306 = vadd.f32 0.0, %v3305
    %3307 = vmatmul.f32.gmra.mxu0 %v3223
    %v3308 = vpop.f32.mrf.mxu0
    %v3309 = vadd.f32 0.0, %v3308
    %3310 = vmatmul.f32.gmra.mxu0 %v3224
    %v3311 = vpop.f32.mrf.mxu0
    %v3312 = vadd.f32 0.0, %v3311
    %3313 = vmatmul.f32.gmra.mxu0 %v3225
    %v3314 = vpop.f32.mrf.mxu0
    %v3315 = vadd.f32 0.0, %v3314
    %3316 = vmatmul.f32.gmra.mxu0 %v3226
    %v3317 = vpop.f32.mrf.mxu0
    %v3318 = vadd.f32 0.0, %v3317
    %3319 = vmatmul.f32.gmra.mxu0 %v3227
    %v3320 = vpop.f32.mrf.mxu0
    %v3321 = vadd.f32 0.0, %v3320
    %3322 = vmatmul.f32.gmra.mxu0 %v3228
    %v3323 = vpop.f32.mrf.mxu0
    %v3324 = vadd.f32 0.0, %v3323
    %3325 = vmatmul.f32.gmra.mxu0 %v3229
    %v3326 = vpop.f32.mrf.mxu0
    %v3327 = vadd.f32 0.0, %v3326
    %3328 = vmatmul.f32.gmra.mxu0 %v3230
    %v3329 = vpop.f32.mrf.mxu0
    %v3330 = vadd.f32 0.0, %v3329
    %3331 = vmatmul.f32.gmra.mxu0 %v3231
    %v3332 = vpop.f32.mrf.mxu0
    %v3333 = vadd.f32 0.0, %v3332
    %3334 = vmatmul.f32.gmra.mxu0 %v3232
    %v3335 = vpop.f32.mrf.mxu0
    %v3336 = vadd.f32 0.0, %v3335
    %3337 = vmatmul.f32.gmra.mxu0 %v3233
    %v3338 = vpop.f32.mrf.mxu0
    %v3339 = vadd.f32 0.0, %v3338
    %3340 = vmatmul.f32.gmra.mxu0 %v3234
    %v3341 = vpop.f32.mrf.mxu0
    %v3342 = vadd.f32 0.0, %v3341
    %3343 = vmatmul.f32.gmra.mxu0 %v3235
    %v3344 = vpop.f32.mrf.mxu0
    %v3345 = vadd.f32 0.0, %v3344
    %3346 = vmatmul.f32.gmra.mxu0 %v3236
    %v3347 = vpop.f32.mrf.mxu0
    %v3348 = vadd.f32 0.0, %v3347
    %3349 = vmatmul.f32.gmra.mxu0 %v3237
    %v3350 = vpop.f32.mrf.mxu0
    %v3351 = vadd.f32 0.0, %v3350
    %3352 = vmatmul.f32.gmra.mxu0 %v3238
    %v3353 = vpop.f32.mrf.mxu0
    %v3354 = vadd.f32 0.0, %v3353
    %3355 = vmatmul.f32.gmra.mxu0 %v3239
    %v3356 = vpop.f32.mrf.mxu0
    %v3357 = vadd.f32 0.0, %v3356
    %3358 = vmatmul.f32.gmra.mxu0 %v3240
    %v3359 = vpop.f32.mrf.mxu0
    %v3360 = vadd.f32 0.0, %v3359
    %3361 = vmatmul.f32.gmra.mxu0 %v3241
    %v3362 = vpop.f32.mrf.mxu0
    %v3363 = vadd.f32 0.0, %v3362
    %3364 = vmatmul.f32.gmra.mxu0 %v3242
    %v3365 = vpop.f32.mrf.mxu0
    %v3366 = vadd.f32 0.0, %v3365
    %3367 = vmatmul.f32.gmra.mxu0 %v3243
    %v3368 = vpop.f32.mrf.mxu0
    %v3369 = vadd.f32 0.0, %v3368
    %3370 = vmatmul.f32.gmra.mxu0 %v3244
    %v3371 = vpop.f32.mrf.mxu0
    %v3372 = vadd.f32 0.0, %v3371
    %3373 = vmatmul.f32.gmra.mxu0 %v3245
    %v3374 = vpop.f32.mrf.mxu0
    %v3375 = vadd.f32 0.0, %v3374
    %3376 = vmatmul.f32.gmra.mxu0 %v3246
    %v3377 = vpop.f32.mrf.mxu0
    %v3378 = vadd.f32 0.0, %v3377
    %3379 = vmatmul.f32.gmra.mxu0 %v3247
    %v3380 = vpop.f32.mrf.mxu0
    %v3381 = vadd.f32 0.0, %v3380
    %3382 = vmatmul.f32.gmra.mxu0 %v3248
    %v3383 = vpop.f32.mrf.mxu0
    %v3384 = vadd.f32 0.0, %v3383
    %3385 = vmatmul.f32.gmra.mxu0 %v3249
    %v3386 = vpop.f32.mrf.mxu0
    %v3387 = vadd.f32 0.0, %v3386
    %3388 = vmatmul.f32.gmra.mxu0 %v3250
    %v3389 = vpop.f32.mrf.mxu0
    %v3390 = vadd.f32 0.0, %v3389
    %3391 = vdwg.mxu0
    %v3392 = vadd.f32 %v3179, %v3285
    %v3393 = vadd.f32 %v3180, %v3288
    %v3394 = vadd.f32 %v3181, %v3291
    %v3395 = vadd.f32 %v3182, %v3294
    %v3396 = vadd.f32 %v3183, %v3297
    %v3397 = vadd.f32 %v3184, %v3300
    %v3398 = vadd.f32 %v3185, %v3303
    %v3399 = vadd.f32 %v3186, %v3306
    %v3400 = vadd.f32 %v3187, %v3309
    %v3401 = vadd.f32 %v3188, %v3312
    %v3402 = vadd.f32 %v3189, %v3315
    %v3403 = vadd.f32 %v3190, %v3318
    %v3404 = vadd.f32 %v3191, %v3321
    %v3405 = vadd.f32 %v3192, %v3324
    %v3406 = vadd.f32 %v3193, %v3327
    %v3407 = vadd.f32 %v3194, %v3330
    %v3408 = vadd.f32 %v3195, %v3333
    %v3409 = vadd.f32 %v3196, %v3336
    %v3410 = vadd.f32 %v3197, %v3339
    %v3411 = vadd.f32 %v3198, %v3342
    %v3412 = vadd.f32 %v3199, %v3345
    %v3413 = vadd.f32 %v3200, %v3348
    %v3414 = vadd.f32 %v3201, %v3351
    %v3415 = vadd.f32 %v3202, %v3354
    %v3416 = vadd.f32 %v3203, %v3357
    %v3417 = vadd.f32 %v3204, %v3360
    %v3418 = vadd.f32 %v3205, %v3363
    %v3419 = vadd.f32 %v3206, %v3366
    %v3420 = vadd.f32 %v3207, %v3369
    %v3421 = vadd.f32 %v3208, %v3372
    %v3422 = vadd.f32 %v3209, %v3375
    %v3423 = vadd.f32 %v3210, %v3378
    %v3424 = vadd.f32 %v3211, %v3381
    %v3425 = vadd.f32 %v3212, %v3384
    %v3426 = vadd.f32 %v3213, %v3387
    %v3427 = vadd.f32 %v3214, %v3390
    %v3428 = vld [vmem:[#allocation2 + $0x38] sm:$0xff]
    %v3429 = vld [vmem:[#allocation2 + $0x58] sm:$0xff]
    %v3430 = vld [vmem:[#allocation2 + $0x78] sm:$0xff]
    %v3431 = vld [vmem:[#allocation2 + $0x98] sm:$0xff]
    %v3432 = vld [vmem:[#allocation2 + $0xb8] sm:$0xff]
    %v3433 = vld [vmem:[#allocation2 + $0xd8] sm:$0xff]
    %v3434 = vld [vmem:[#allocation2 + $0xf8] sm:$0xff]
    %v3435 = vld [vmem:[#allocation2 + $0x118] sm:$0xff]
    %v3436 = vld [vmem:[#allocation2 + $0x138] sm:$0xff]
    %v3437 = vld [vmem:[#allocation2 + $0x158] sm:$0xff]
    %v3438 = vld [vmem:[#allocation2 + $0x178] sm:$0xff]
    %v3439 = vld [vmem:[#allocation2 + $0x198] sm:$0xff]
    %v3440 = vld [vmem:[#allocation2 + $0x1b8] sm:$0xff]
    %v3441 = vld [vmem:[#allocation2 + $0x1d8] sm:$0xff]
    %v3442 = vld [vmem:[#allocation2 + $0x1f8] sm:$0xff]
    %v3443 = vld [vmem:[#allocation2 + $0x218] sm:$0xff]
    %v3444 = vld [vmem:[#allocation2 + $0x238] sm:$0xff]
    %v3445 = vld [vmem:[#allocation2 + $0x258] sm:$0xff]
    %v3446 = vld [vmem:[#allocation2 + $0x278] sm:$0xff]
    %v3447 = vld [vmem:[#allocation2 + $0x298] sm:$0xff]
    %v3448 = vld [vmem:[#allocation2 + $0x2b8] sm:$0xff]
    %v3449 = vld [vmem:[#allocation2 + $0x2d8] sm:$0xff]
    %v3450 = vld [vmem:[#allocation2 + $0x2f8] sm:$0xff]
    %v3451 = vld [vmem:[#allocation2 + $0x318] sm:$0xff]
    %v3452 = vld [vmem:[#allocation2 + $0x338] sm:$0xff]
    %v3453 = vld [vmem:[#allocation2 + $0x358] sm:$0xff]
    %v3454 = vld [vmem:[#allocation2 + $0x378] sm:$0xff]
    %v3455 = vld [vmem:[#allocation2 + $0x398] sm:$0xff]
    %v3456 = vld [vmem:[#allocation2 + $0x3b8] sm:$0xff]
    %v3457 = vld [vmem:[#allocation2 + $0x3d8] sm:$0xff]
    %v3458 = vld [vmem:[#allocation2 + $0x3f8] sm:$0xff]
    %v3459 = vld [vmem:[#allocation2 + $0x418] sm:$0xff]
    %v3460 = vld [vmem:[#allocation2 + $0x438] sm:$0xff]
    %v3461 = vld [vmem:[#allocation2 + $0x458] sm:$0xff]
    %v3462 = vld [vmem:[#allocation2 + $0x478] sm:$0xff]
    %v3463 = vld [vmem:[#allocation2 + $0x498] sm:$0xff]
    %v3464 = vld [vmem:[%s2 + $0x500] sm:$0xff]
    %v3465 = vld [vmem:[%s2 + $0x508] sm:$0xff]
    %v3466 = vld [vmem:[%s2 + $0x510] sm:$0xff]
    %v3467 = vld [vmem:[%s2 + $0x518] sm:$0xff]
    %v3468 = vld [vmem:[%s2 + $0x520] sm:$0xff]
    %v3469 = vld [vmem:[%s2 + $0x528] sm:$0xff]
    %v3470 = vld [vmem:[%s2 + $0x530] sm:$0xff]
    %v3471 = vld [vmem:[%s2 + $0x538] sm:$0xff]
    %v3472 = vld [vmem:[%s2 + $0x540] sm:$0xff]
    %v3473 = vld [vmem:[%s2 + $0x548] sm:$0xff]
    %v3474 = vld [vmem:[%s2 + $0x550] sm:$0xff]
    %v3475 = vld [vmem:[%s2 + $0x558] sm:$0xff]
    %v3476 = vld [vmem:[%s2 + $0x560] sm:$0xff]
    %v3477 = vld [vmem:[%s2 + $0x568] sm:$0xff]
    %v3478 = vld [vmem:[%s2 + $0x570] sm:$0xff]
    %v3479 = vld [vmem:[%s2 + $0x578] sm:$0xff]
    %3480 = vmatpush.msra.mxu0 %v3479
    %3481 = vmatpush.msra.mxu0 %v3478
    %3482 = vmatpush.msra.mxu0 %v3477
    %3483 = vmatpush.msra.mxu0 %v3476
    %3484 = vmatpush.msra.mxu0 %v3475
    %3485 = vmatpush.msra.mxu0 %v3474
    %3486 = vmatpush.msra.mxu0 %v3473
    %3487 = vmatpush.msra.mxu0 %v3472
    %3488 = vmatpush.msra.mxu0 %v3471
    %3489 = vmatpush.msra.mxu0 %v3470
    %3490 = vmatpush.msra.mxu0 %v3469
    %3491 = vmatpush.msra.mxu0 %v3468
    %3492 = vmatpush.msra.mxu0 %v3467
    %3493 = vmatpush.msra.mxu0 %v3466
    %3494 = vmatpush.msra.mxu0 %v3465
    %3495 = vmatpush.msra.mxu0 %v3464
    %3496 = vmatmul.f32.gmra.mxu0 %v3428
    %v3497 = vpop.f32.mrf.mxu0
    %v3498 = vadd.f32 0.0, %v3497
    %3499 = vmatmul.f32.gmra.mxu0 %v3429
    %v3500 = vpop.f32.mrf.mxu0
    %v3501 = vadd.f32 0.0, %v3500
    %3502 = vmatmul.f32.gmra.mxu0 %v3430
    %v3503 = vpop.f32.mrf.mxu0
    %v3504 = vadd.f32 0.0, %v3503
    %3505 = vmatmul.f32.gmra.mxu0 %v3431
    %v3506 = vpop.f32.mrf.mxu0
    %v3507 = vadd.f32 0.0, %v3506
    %3508 = vmatmul.f32.gmra.mxu0 %v3432
    %v3509 = vpop.f32.mrf.mxu0
    %v3510 = vadd.f32 0.0, %v3509
    %3511 = vmatmul.f32.gmra.mxu0 %v3433
    %v3512 = vpop.f32.mrf.mxu0
    %v3513 = vadd.f32 0.0, %v3512
    %3514 = vmatmul.f32.gmra.mxu0 %v3434
    %v3515 = vpop.f32.mrf.mxu0
    %v3516 = vadd.f32 0.0, %v3515
    %3517 = vmatmul.f32.gmra.mxu0 %v3435
    %v3518 = vpop.f32.mrf.mxu0
    %v3519 = vadd.f32 0.0, %v3518
    %3520 = vmatmul.f32.gmra.mxu0 %v3436
    %v3521 = vpop.f32.mrf.mxu0
    %v3522 = vadd.f32 0.0, %v3521
    %3523 = vmatmul.f32.gmra.mxu0 %v3437
    %v3524 = vpop.f32.mrf.mxu0
    %v3525 = vadd.f32 0.0, %v3524
    %3526 = vmatmul.f32.gmra.mxu0 %v3438
    %v3527 = vpop.f32.mrf.mxu0
    %v3528 = vadd.f32 0.0, %v3527
    %3529 = vmatmul.f32.gmra.mxu0 %v3439
    %v3530 = vpop.f32.mrf.mxu0
    %v3531 = vadd.f32 0.0, %v3530
    %3532 = vmatmul.f32.gmra.mxu0 %v3440
    %v3533 = vpop.f32.mrf.mxu0
    %v3534 = vadd.f32 0.0, %v3533
    %3535 = vmatmul.f32.gmra.mxu0 %v3441
    %v3536 = vpop.f32.mrf.mxu0
    %v3537 = vadd.f32 0.0, %v3536
    %3538 = vmatmul.f32.gmra.mxu0 %v3442
    %v3539 = vpop.f32.mrf.mxu0
    %v3540 = vadd.f32 0.0, %v3539
    %3541 = vmatmul.f32.gmra.mxu0 %v3443
    %v3542 = vpop.f32.mrf.mxu0
    %v3543 = vadd.f32 0.0, %v3542
    %3544 = vmatmul.f32.gmra.mxu0 %v3444
    %v3545 = vpop.f32.mrf.mxu0
    %v3546 = vadd.f32 0.0, %v3545
    %3547 = vmatmul.f32.gmra.mxu0 %v3445
    %v3548 = vpop.f32.mrf.mxu0
    %v3549 = vadd.f32 0.0, %v3548
    %3550 = vmatmul.f32.gmra.mxu0 %v3446
    %v3551 = vpop.f32.mrf.mxu0
    %v3552 = vadd.f32 0.0, %v3551
    %3553 = vmatmul.f32.gmra.mxu0 %v3447
    %v3554 = vpop.f32.mrf.mxu0
    %v3555 = vadd.f32 0.0, %v3554
    %3556 = vmatmul.f32.gmra.mxu0 %v3448
    %v3557 = vpop.f32.mrf.mxu0
    %v3558 = vadd.f32 0.0, %v3557
    %3559 = vmatmul.f32.gmra.mxu0 %v3449
    %v3560 = vpop.f32.mrf.mxu0
    %v3561 = vadd.f32 0.0, %v3560
    %3562 = vmatmul.f32.gmra.mxu0 %v3450
    %v3563 = vpop.f32.mrf.mxu0
    %v3564 = vadd.f32 0.0, %v3563
    %3565 = vmatmul.f32.gmra.mxu0 %v3451
    %v3566 = vpop.f32.mrf.mxu0
    %v3567 = vadd.f32 0.0, %v3566
    %3568 = vmatmul.f32.gmra.mxu0 %v3452
    %v3569 = vpop.f32.mrf.mxu0
    %v3570 = vadd.f32 0.0, %v3569
    %3571 = vmatmul.f32.gmra.mxu0 %v3453
    %v3572 = vpop.f32.mrf.mxu0
    %v3573 = vadd.f32 0.0, %v3572
    %3574 = vmatmul.f32.gmra.mxu0 %v3454
    %v3575 = vpop.f32.mrf.mxu0
    %v3576 = vadd.f32 0.0, %v3575
    %3577 = vmatmul.f32.gmra.mxu0 %v3455
    %v3578 = vpop.f32.mrf.mxu0
    %v3579 = vadd.f32 0.0, %v3578
    %3580 = vmatmul.f32.gmra.mxu0 %v3456
    %v3581 = vpop.f32.mrf.mxu0
    %v3582 = vadd.f32 0.0, %v3581
    %3583 = vmatmul.f32.gmra.mxu0 %v3457
    %v3584 = vpop.f32.mrf.mxu0
    %v3585 = vadd.f32 0.0, %v3584
    %3586 = vmatmul.f32.gmra.mxu0 %v3458
    %v3587 = vpop.f32.mrf.mxu0
    %v3588 = vadd.f32 0.0, %v3587
    %3589 = vmatmul.f32.gmra.mxu0 %v3459
    %v3590 = vpop.f32.mrf.mxu0
    %v3591 = vadd.f32 0.0, %v3590
    %3592 = vmatmul.f32.gmra.mxu0 %v3460
    %v3593 = vpop.f32.mrf.mxu0
    %v3594 = vadd.f32 0.0, %v3593
    %3595 = vmatmul.f32.gmra.mxu0 %v3461
    %v3596 = vpop.f32.mrf.mxu0
    %v3597 = vadd.f32 0.0, %v3596
    %3598 = vmatmul.f32.gmra.mxu0 %v3462
    %v3599 = vpop.f32.mrf.mxu0
    %v3600 = vadd.f32 0.0, %v3599
    %3601 = vmatmul.f32.gmra.mxu0 %v3463
    %v3602 = vpop.f32.mrf.mxu0
    %v3603 = vadd.f32 0.0, %v3602
    %3604 = vdwg.mxu0
    %v3605 = vadd.f32 %v3392, %v3498
    %v3606 = vadd.f32 %v3393, %v3501
    %v3607 = vadd.f32 %v3394, %v3504
    %v3608 = vadd.f32 %v3395, %v3507
    %v3609 = vadd.f32 %v3396, %v3510
    %v3610 = vadd.f32 %v3397, %v3513
    %v3611 = vadd.f32 %v3398, %v3516
    %v3612 = vadd.f32 %v3399, %v3519
    %v3613 = vadd.f32 %v3400, %v3522
    %v3614 = vadd.f32 %v3401, %v3525
    %v3615 = vadd.f32 %v3402, %v3528
    %v3616 = vadd.f32 %v3403, %v3531
    %v3617 = vadd.f32 %v3404, %v3534
    %v3618 = vadd.f32 %v3405, %v3537
    %v3619 = vadd.f32 %v3406, %v3540
    %v3620 = vadd.f32 %v3407, %v3543
    %v3621 = vadd.f32 %v3408, %v3546
    %v3622 = vadd.f32 %v3409, %v3549
    %v3623 = vadd.f32 %v3410, %v3552
    %v3624 = vadd.f32 %v3411, %v3555
    %v3625 = vadd.f32 %v3412, %v3558
    %v3626 = vadd.f32 %v3413, %v3561
    %v3627 = vadd.f32 %v3414, %v3564
    %v3628 = vadd.f32 %v3415, %v3567
    %v3629 = vadd.f32 %v3416, %v3570
    %v3630 = vadd.f32 %v3417, %v3573
    %v3631 = vadd.f32 %v3418, %v3576
    %v3632 = vadd.f32 %v3419, %v3579
    %v3633 = vadd.f32 %v3420, %v3582
    %v3634 = vadd.f32 %v3421, %v3585
    %v3635 = vadd.f32 %v3422, %v3588
    %v3636 = vadd.f32 %v3423, %v3591
    %v3637 = vadd.f32 %v3424, %v3594
    %v3638 = vadd.f32 %v3425, %v3597
    %v3639 = vadd.f32 %v3426, %v3600
    %v3640 = vadd.f32 %v3427, %v3603
    %v3641 = vld [vmem:[#allocation2 + $0x40] sm:$0xff]
    %v3642 = vld [vmem:[#allocation2 + $0x60] sm:$0xff]
    %v3643 = vld [vmem:[#allocation2 + $0x80] sm:$0xff]
    %v3644 = vld [vmem:[#allocation2 + $0xa0] sm:$0xff]
    %v3645 = vld [vmem:[#allocation2 + $0xc0] sm:$0xff]
    %v3646 = vld [vmem:[#allocation2 + $0xe0] sm:$0xff]
    %v3647 = vld [vmem:[#allocation2 + $0x100] sm:$0xff]
    %v3648 = vld [vmem:[#allocation2 + $0x120] sm:$0xff]
    %v3649 = vld [vmem:[#allocation2 + $0x140] sm:$0xff]
    %v3650 = vld [vmem:[#allocation2 + $0x160] sm:$0xff]
    %v3651 = vld [vmem:[#allocation2 + $0x180] sm:$0xff]
    %v3652 = vld [vmem:[#allocation2 + $0x1a0] sm:$0xff]
    %v3653 = vld [vmem:[#allocation2 + $0x1c0] sm:$0xff]
    %v3654 = vld [vmem:[#allocation2 + $0x1e0] sm:$0xff]
    %v3655 = vld [vmem:[#allocation2 + $0x200] sm:$0xff]
    %v3656 = vld [vmem:[#allocation2 + $0x220] sm:$0xff]
    %v3657 = vld [vmem:[#allocation2 + $0x240] sm:$0xff]
    %v3658 = vld [vmem:[#allocation2 + $0x260] sm:$0xff]
    %v3659 = vld [vmem:[#allocation2 + $0x280] sm:$0xff]
    %v3660 = vld [vmem:[#allocation2 + $0x2a0] sm:$0xff]
    %v3661 = vld [vmem:[#allocation2 + $0x2c0] sm:$0xff]
    %v3662 = vld [vmem:[#allocation2 + $0x2e0] sm:$0xff]
    %v3663 = vld [vmem:[#allocation2 + $0x300] sm:$0xff]
    %v3664 = vld [vmem:[#allocation2 + $0x320] sm:$0xff]
    %v3665 = vld [vmem:[#allocation2 + $0x340] sm:$0xff]
    %v3666 = vld [vmem:[#allocation2 + $0x360] sm:$0xff]
    %v3667 = vld [vmem:[#allocation2 + $0x380] sm:$0xff]
    %v3668 = vld [vmem:[#allocation2 + $0x3a0] sm:$0xff]
    %v3669 = vld [vmem:[#allocation2 + $0x3c0] sm:$0xff]
    %v3670 = vld [vmem:[#allocation2 + $0x3e0] sm:$0xff]
    %v3671 = vld [vmem:[#allocation2 + $0x400] sm:$0xff]
    %v3672 = vld [vmem:[#allocation2 + $0x420] sm:$0xff]
    %v3673 = vld [vmem:[#allocation2 + $0x440] sm:$0xff]
    %v3674 = vld [vmem:[#allocation2 + $0x460] sm:$0xff]
    %v3675 = vld [vmem:[#allocation2 + $0x480] sm:$0xff]
    %v3676 = vld [vmem:[#allocation2 + $0x4a0] sm:$0xff]
    %v3677 = vld [vmem:[%s2 + $0x580] sm:$0xff]
    %v3678 = vld [vmem:[%s2 + $0x588] sm:$0xff]
    %v3679 = vld [vmem:[%s2 + $0x590] sm:$0xff]
    %v3680 = vld [vmem:[%s2 + $0x598] sm:$0xff]
    %v3681 = vld [vmem:[%s2 + $0x5a0] sm:$0xff]
    %v3682 = vld [vmem:[%s2 + $0x5a8] sm:$0xff]
    %v3683 = vld [vmem:[%s2 + $0x5b0] sm:$0xff]
    %v3684 = vld [vmem:[%s2 + $0x5b8] sm:$0xff]
    %v3685 = vld [vmem:[%s2 + $0x5c0] sm:$0xff]
    %v3686 = vld [vmem:[%s2 + $0x5c8] sm:$0xff]
    %v3687 = vld [vmem:[%s2 + $0x5d0] sm:$0xff]
    %v3688 = vld [vmem:[%s2 + $0x5d8] sm:$0xff]
    %v3689 = vld [vmem:[%s2 + $0x5e0] sm:$0xff]
    %v3690 = vld [vmem:[%s2 + $0x5e8] sm:$0xff]
    %v3691 = vld [vmem:[%s2 + $0x5f0] sm:$0xff]
    %v3692 = vld [vmem:[%s2 + $0x5f8] sm:$0xff]
    %3693 = vmatpush.msra.mxu0 %v3692
    %3694 = vmatpush.msra.mxu0 %v3691
    %3695 = vmatpush.msra.mxu0 %v3690
    %3696 = vmatpush.msra.mxu0 %v3689
    %3697 = vmatpush.msra.mxu0 %v3688
    %3698 = vmatpush.msra.mxu0 %v3687
    %3699 = vmatpush.msra.mxu0 %v3686
    %3700 = vmatpush.msra.mxu0 %v3685
    %3701 = vmatpush.msra.mxu0 %v3684
    %3702 = vmatpush.msra.mxu0 %v3683
    %3703 = vmatpush.msra.mxu0 %v3682
    %3704 = vmatpush.msra.mxu0 %v3681
    %3705 = vmatpush.msra.mxu0 %v3680
    %3706 = vmatpush.msra.mxu0 %v3679
    %3707 = vmatpush.msra.mxu0 %v3678
    %3708 = vmatpush.msra.mxu0 %v3677
    %3709 = vmatmul.f32.gmra.mxu0 %v3641
    %v3710 = vpop.f32.mrf.mxu0
    %v3711 = vadd.f32 0.0, %v3710
    %3712 = vmatmul.f32.gmra.mxu0 %v3642
    %v3713 = vpop.f32.mrf.mxu0
    %v3714 = vadd.f32 0.0, %v3713
    %3715 = vmatmul.f32.gmra.mxu0 %v3643
    %v3716 = vpop.f32.mrf.mxu0
    %v3717 = vadd.f32 0.0, %v3716
    %3718 = vmatmul.f32.gmra.mxu0 %v3644
    %v3719 = vpop.f32.mrf.mxu0
    %v3720 = vadd.f32 0.0, %v3719
    %3721 = vmatmul.f32.gmra.mxu0 %v3645
    %v3722 = vpop.f32.mrf.mxu0
    %v3723 = vadd.f32 0.0, %v3722
    %3724 = vmatmul.f32.gmra.mxu0 %v3646
    %v3725 = vpop.f32.mrf.mxu0
    %v3726 = vadd.f32 0.0, %v3725
    %3727 = vmatmul.f32.gmra.mxu0 %v3647
    %v3728 = vpop.f32.mrf.mxu0
    %v3729 = vadd.f32 0.0, %v3728
    %3730 = vmatmul.f32.gmra.mxu0 %v3648
    %v3731 = vpop.f32.mrf.mxu0
    %v3732 = vadd.f32 0.0, %v3731
    %3733 = vmatmul.f32.gmra.mxu0 %v3649
    %v3734 = vpop.f32.mrf.mxu0
    %v3735 = vadd.f32 0.0, %v3734
    %3736 = vmatmul.f32.gmra.mxu0 %v3650
    %v3737 = vpop.f32.mrf.mxu0
    %v3738 = vadd.f32 0.0, %v3737
    %3739 = vmatmul.f32.gmra.mxu0 %v3651
    %v3740 = vpop.f32.mrf.mxu0
    %v3741 = vadd.f32 0.0, %v3740
    %3742 = vmatmul.f32.gmra.mxu0 %v3652
    %v3743 = vpop.f32.mrf.mxu0
    %v3744 = vadd.f32 0.0, %v3743
    %3745 = vmatmul.f32.gmra.mxu0 %v3653
    %v3746 = vpop.f32.mrf.mxu0
    %v3747 = vadd.f32 0.0, %v3746
    %3748 = vmatmul.f32.gmra.mxu0 %v3654
    %v3749 = vpop.f32.mrf.mxu0
    %v3750 = vadd.f32 0.0, %v3749
    %3751 = vmatmul.f32.gmra.mxu0 %v3655
    %v3752 = vpop.f32.mrf.mxu0
    %v3753 = vadd.f32 0.0, %v3752
    %3754 = vmatmul.f32.gmra.mxu0 %v3656
    %v3755 = vpop.f32.mrf.mxu0
    %v3756 = vadd.f32 0.0, %v3755
    %3757 = vmatmul.f32.gmra.mxu0 %v3657
    %v3758 = vpop.f32.mrf.mxu0
    %v3759 = vadd.f32 0.0, %v3758
    %3760 = vmatmul.f32.gmra.mxu0 %v3658
    %v3761 = vpop.f32.mrf.mxu0
    %v3762 = vadd.f32 0.0, %v3761
    %3763 = vmatmul.f32.gmra.mxu0 %v3659
    %v3764 = vpop.f32.mrf.mxu0
    %v3765 = vadd.f32 0.0, %v3764
    %3766 = vmatmul.f32.gmra.mxu0 %v3660
    %v3767 = vpop.f32.mrf.mxu0
    %v3768 = vadd.f32 0.0, %v3767
    %3769 = vmatmul.f32.gmra.mxu0 %v3661
    %v3770 = vpop.f32.mrf.mxu0
    %v3771 = vadd.f32 0.0, %v3770
    %3772 = vmatmul.f32.gmra.mxu0 %v3662
    %v3773 = vpop.f32.mrf.mxu0
    %v3774 = vadd.f32 0.0, %v3773
    %3775 = vmatmul.f32.gmra.mxu0 %v3663
    %v3776 = vpop.f32.mrf.mxu0
    %v3777 = vadd.f32 0.0, %v3776
    %3778 = vmatmul.f32.gmra.mxu0 %v3664
    %v3779 = vpop.f32.mrf.mxu0
    %v3780 = vadd.f32 0.0, %v3779
    %3781 = vmatmul.f32.gmra.mxu0 %v3665
    %v3782 = vpop.f32.mrf.mxu0
    %v3783 = vadd.f32 0.0, %v3782
    %3784 = vmatmul.f32.gmra.mxu0 %v3666
    %v3785 = vpop.f32.mrf.mxu0
    %v3786 = vadd.f32 0.0, %v3785
    %3787 = vmatmul.f32.gmra.mxu0 %v3667
    %v3788 = vpop.f32.mrf.mxu0
    %v3789 = vadd.f32 0.0, %v3788
    %3790 = vmatmul.f32.gmra.mxu0 %v3668
    %v3791 = vpop.f32.mrf.mxu0
    %v3792 = vadd.f32 0.0, %v3791
    %3793 = vmatmul.f32.gmra.mxu0 %v3669
    %v3794 = vpop.f32.mrf.mxu0
    %v3795 = vadd.f32 0.0, %v3794
    %3796 = vmatmul.f32.gmra.mxu0 %v3670
    %v3797 = vpop.f32.mrf.mxu0
    %v3798 = vadd.f32 0.0, %v3797
    %3799 = vmatmul.f32.gmra.mxu0 %v3671
    %v3800 = vpop.f32.mrf.mxu0
    %v3801 = vadd.f32 0.0, %v3800
    %3802 = vmatmul.f32.gmra.mxu0 %v3672
    %v3803 = vpop.f32.mrf.mxu0
    %v3804 = vadd.f32 0.0, %v3803
    %3805 = vmatmul.f32.gmra.mxu0 %v3673
    %v3806 = vpop.f32.mrf.mxu0
    %v3807 = vadd.f32 0.0, %v3806
    %3808 = vmatmul.f32.gmra.mxu0 %v3674
    %v3809 = vpop.f32.mrf.mxu0
    %v3810 = vadd.f32 0.0, %v3809
    %3811 = vmatmul.f32.gmra.mxu0 %v3675
    %v3812 = vpop.f32.mrf.mxu0
    %v3813 = vadd.f32 0.0, %v3812
    %3814 = vmatmul.f32.gmra.mxu0 %v3676
    %v3815 = vpop.f32.mrf.mxu0
    %v3816 = vadd.f32 0.0, %v3815
    %3817 = vdwg.mxu0
    %v3818 = vadd.f32 %v3605, %v3711
    %v3819 = vadd.f32 %v3606, %v3714
    %v3820 = vadd.f32 %v3607, %v3717
    %v3821 = vadd.f32 %v3608, %v3720
    %v3822 = vadd.f32 %v3609, %v3723
    %v3823 = vadd.f32 %v3610, %v3726
    %v3824 = vadd.f32 %v3611, %v3729
    %v3825 = vadd.f32 %v3612, %v3732
    %v3826 = vadd.f32 %v3613, %v3735
    %v3827 = vadd.f32 %v3614, %v3738
    %v3828 = vadd.f32 %v3615, %v3741
    %v3829 = vadd.f32 %v3616, %v3744
    %v3830 = vadd.f32 %v3617, %v3747
    %v3831 = vadd.f32 %v3618, %v3750
    %v3832 = vadd.f32 %v3619, %v3753
    %v3833 = vadd.f32 %v3620, %v3756
    %v3834 = vadd.f32 %v3621, %v3759
    %v3835 = vadd.f32 %v3622, %v3762
    %v3836 = vadd.f32 %v3623, %v3765
    %v3837 = vadd.f32 %v3624, %v3768
    %v3838 = vadd.f32 %v3625, %v3771
    %v3839 = vadd.f32 %v3626, %v3774
    %v3840 = vadd.f32 %v3627, %v3777
    %v3841 = vadd.f32 %v3628, %v3780
    %v3842 = vadd.f32 %v3629, %v3783
    %v3843 = vadd.f32 %v3630, %v3786
    %v3844 = vadd.f32 %v3631, %v3789
    %v3845 = vadd.f32 %v3632, %v3792
    %v3846 = vadd.f32 %v3633, %v3795
    %v3847 = vadd.f32 %v3634, %v3798
    %v3848 = vadd.f32 %v3635, %v3801
    %v3849 = vadd.f32 %v3636, %v3804
    %v3850 = vadd.f32 %v3637, %v3807
    %v3851 = vadd.f32 %v3638, %v3810
    %v3852 = vadd.f32 %v3639, %v3813
    %v3853 = vadd.f32 %v3640, %v3816
    %v3854 = vld [vmem:[#allocation2 + $0xf8] sm:$0xff]
    %v3855 = vld [vmem:[#allocation2 + $0x118] sm:$0xff]
    %v3856 = vld [vmem:[#allocation2 + $0x138] sm:$0xff]
    %v3857 = vld [vmem:[#allocation2 + $0x158] sm:$0xff]
    %v3858 = vld [vmem:[#allocation2 + $0x178] sm:$0xff]
    %v3859 = vld [vmem:[#allocation2 + $0x198] sm:$0xff]
    %v3860 = vld [vmem:[#allocation2 + $0x1b8] sm:$0xff]
    %v3861 = vld [vmem:[#allocation2 + $0x1d8] sm:$0xff]
    %v3862 = vld [vmem:[#allocation2 + $0x1f8] sm:$0xff]
    %v3863 = vld [vmem:[#allocation2 + $0x218] sm:$0xff]
    %v3864 = vld [vmem:[#allocation2 + $0x238] sm:$0xff]
    %v3865 = vld [vmem:[#allocation2 + $0x258] sm:$0xff]
    %v3866 = vld [vmem:[#allocation2 + $0x278] sm:$0xff]
    %v3867 = vld [vmem:[#allocation2 + $0x298] sm:$0xff]
    %v3868 = vld [vmem:[#allocation2 + $0x2b8] sm:$0xff]
    %v3869 = vld [vmem:[#allocation2 + $0x2d8] sm:$0xff]
    %v3870 = vld [vmem:[#allocation2 + $0x2f8] sm:$0xff]
    %v3871 = vld [vmem:[#allocation2 + $0x318] sm:$0xff]
    %v3872 = vld [vmem:[#allocation2 + $0x338] sm:$0xff]
    %v3873 = vld [vmem:[#allocation2 + $0x358] sm:$0xff]
    %v3874 = vld [vmem:[#allocation2 + $0x378] sm:$0xff]
    %v3875 = vld [vmem:[#allocation2 + $0x398] sm:$0xff]
    %v3876 = vld [vmem:[#allocation2 + $0x3b8] sm:$0xff]
    %v3877 = vld [vmem:[#allocation2 + $0x3d8] sm:$0xff]
    %v3878 = vld [vmem:[#allocation2 + $0x3f8] sm:$0xff]
    %v3879 = vld [vmem:[#allocation2 + $0x418] sm:$0xff]
    %v3880 = vld [vmem:[#allocation2 + $0x438] sm:$0xff]
    %v3881 = vld [vmem:[#allocation2 + $0x458] sm:$0xff]
    %v3882 = vld [vmem:[#allocation2 + $0x478] sm:$0xff]
    %v3883 = vld [vmem:[#allocation2 + $0x498] sm:$0xff]
    %v3884 = vld [vmem:[#allocation2 + $0x4b8] sm:$0xff]
    %v3885 = vld [vmem:[#allocation2 + $0x4d8] sm:$0xff]
    %v3886 = vld [vmem:[#allocation2 + $0x4f8] sm:$0xff]
    %v3887 = vld [vmem:[#allocation2 + $0x518] sm:$0xff]
    %v3888 = vld [vmem:[#allocation2 + $0x538] sm:$0xff]
    %v3889 = vld [vmem:[#allocation2 + $0x558] sm:$0xff]
    %v3890 = vld [vmem:[%s2 + $0x600] sm:$0xff]
    %v3891 = vld [vmem:[%s2 + $0x608] sm:$0xff]
    %v3892 = vld [vmem:[%s2 + $0x610] sm:$0xff]
    %v3893 = vld [vmem:[%s2 + $0x618] sm:$0xff]
    %v3894 = vld [vmem:[%s2 + $0x620] sm:$0xff]
    %v3895 = vld [vmem:[%s2 + $0x628] sm:$0xff]
    %v3896 = vld [vmem:[%s2 + $0x630] sm:$0xff]
    %v3897 = vld [vmem:[%s2 + $0x638] sm:$0xff]
    %v3898 = vld [vmem:[%s2 + $0x640] sm:$0xff]
    %v3899 = vld [vmem:[%s2 + $0x648] sm:$0xff]
    %v3900 = vld [vmem:[%s2 + $0x650] sm:$0xff]
    %v3901 = vld [vmem:[%s2 + $0x658] sm:$0xff]
    %v3902 = vld [vmem:[%s2 + $0x660] sm:$0xff]
    %v3903 = vld [vmem:[%s2 + $0x668] sm:$0xff]
    %v3904 = vld [vmem:[%s2 + $0x670] sm:$0xff]
    %v3905 = vld [vmem:[%s2 + $0x678] sm:$0xff]
    %3906 = vmatpush.msra.mxu0 %v3905
    %3907 = vmatpush.msra.mxu0 %v3904
    %3908 = vmatpush.msra.mxu0 %v3903
    %3909 = vmatpush.msra.mxu0 %v3902
    %3910 = vmatpush.msra.mxu0 %v3901
    %3911 = vmatpush.msra.mxu0 %v3900
    %3912 = vmatpush.msra.mxu0 %v3899
    %3913 = vmatpush.msra.mxu0 %v3898
    %3914 = vmatpush.msra.mxu0 %v3897
    %3915 = vmatpush.msra.mxu0 %v3896
    %3916 = vmatpush.msra.mxu0 %v3895
    %3917 = vmatpush.msra.mxu0 %v3894
    %3918 = vmatpush.msra.mxu0 %v3893
    %3919 = vmatpush.msra.mxu0 %v3892
    %3920 = vmatpush.msra.mxu0 %v3891
    %3921 = vmatpush.msra.mxu0 %v3890
    %3922 = vmatmul.f32.gmra.mxu0 %v3854
    %v3923 = vpop.f32.mrf.mxu0
    %v3924 = vadd.f32 0.0, %v3923
    %3925 = vmatmul.f32.gmra.mxu0 %v3855
    %v3926 = vpop.f32.mrf.mxu0
    %v3927 = vadd.f32 0.0, %v3926
    %3928 = vmatmul.f32.gmra.mxu0 %v3856
    %v3929 = vpop.f32.mrf.mxu0
    %v3930 = vadd.f32 0.0, %v3929
    %3931 = vmatmul.f32.gmra.mxu0 %v3857
    %v3932 = vpop.f32.mrf.mxu0
    %v3933 = vadd.f32 0.0, %v3932
    %3934 = vmatmul.f32.gmra.mxu0 %v3858
    %v3935 = vpop.f32.mrf.mxu0
    %v3936 = vadd.f32 0.0, %v3935
    %3937 = vmatmul.f32.gmra.mxu0 %v3859
    %v3938 = vpop.f32.mrf.mxu0
    %v3939 = vadd.f32 0.0, %v3938
    %3940 = vmatmul.f32.gmra.mxu0 %v3860
    %v3941 = vpop.f32.mrf.mxu0
    %v3942 = vadd.f32 0.0, %v3941
    %3943 = vmatmul.f32.gmra.mxu0 %v3861
    %v3944 = vpop.f32.mrf.mxu0
    %v3945 = vadd.f32 0.0, %v3944
    %3946 = vmatmul.f32.gmra.mxu0 %v3862
    %v3947 = vpop.f32.mrf.mxu0
    %v3948 = vadd.f32 0.0, %v3947
    %3949 = vmatmul.f32.gmra.mxu0 %v3863
    %v3950 = vpop.f32.mrf.mxu0
    %v3951 = vadd.f32 0.0, %v3950
    %3952 = vmatmul.f32.gmra.mxu0 %v3864
    %v3953 = vpop.f32.mrf.mxu0
    %v3954 = vadd.f32 0.0, %v3953
    %3955 = vmatmul.f32.gmra.mxu0 %v3865
    %v3956 = vpop.f32.mrf.mxu0
    %v3957 = vadd.f32 0.0, %v3956
    %3958 = vmatmul.f32.gmra.mxu0 %v3866
    %v3959 = vpop.f32.mrf.mxu0
    %v3960 = vadd.f32 0.0, %v3959
    %3961 = vmatmul.f32.gmra.mxu0 %v3867
    %v3962 = vpop.f32.mrf.mxu0
    %v3963 = vadd.f32 0.0, %v3962
    %3964 = vmatmul.f32.gmra.mxu0 %v3868
    %v3965 = vpop.f32.mrf.mxu0
    %v3966 = vadd.f32 0.0, %v3965
    %3967 = vmatmul.f32.gmra.mxu0 %v3869
    %v3968 = vpop.f32.mrf.mxu0
    %v3969 = vadd.f32 0.0, %v3968
    %3970 = vmatmul.f32.gmra.mxu0 %v3870
    %v3971 = vpop.f32.mrf.mxu0
    %v3972 = vadd.f32 0.0, %v3971
    %3973 = vmatmul.f32.gmra.mxu0 %v3871
    %v3974 = vpop.f32.mrf.mxu0
    %v3975 = vadd.f32 0.0, %v3974
    %3976 = vmatmul.f32.gmra.mxu0 %v3872
    %v3977 = vpop.f32.mrf.mxu0
    %v3978 = vadd.f32 0.0, %v3977
    %3979 = vmatmul.f32.gmra.mxu0 %v3873
    %v3980 = vpop.f32.mrf.mxu0
    %v3981 = vadd.f32 0.0, %v3980
    %3982 = vmatmul.f32.gmra.mxu0 %v3874
    %v3983 = vpop.f32.mrf.mxu0
    %v3984 = vadd.f32 0.0, %v3983
    %3985 = vmatmul.f32.gmra.mxu0 %v3875
    %v3986 = vpop.f32.mrf.mxu0
    %v3987 = vadd.f32 0.0, %v3986
    %3988 = vmatmul.f32.gmra.mxu0 %v3876
    %v3989 = vpop.f32.mrf.mxu0
    %v3990 = vadd.f32 0.0, %v3989
    %3991 = vmatmul.f32.gmra.mxu0 %v3877
    %v3992 = vpop.f32.mrf.mxu0
    %v3993 = vadd.f32 0.0, %v3992
    %3994 = vmatmul.f32.gmra.mxu0 %v3878
    %v3995 = vpop.f32.mrf.mxu0
    %v3996 = vadd.f32 0.0, %v3995
    %3997 = vmatmul.f32.gmra.mxu0 %v3879
    %v3998 = vpop.f32.mrf.mxu0
    %v3999 = vadd.f32 0.0, %v3998
    %4000 = vmatmul.f32.gmra.mxu0 %v3880
    %v4001 = vpop.f32.mrf.mxu0
    %v4002 = vadd.f32 0.0, %v4001
    %4003 = vmatmul.f32.gmra.mxu0 %v3881
    %v4004 = vpop.f32.mrf.mxu0
    %v4005 = vadd.f32 0.0, %v4004
    %4006 = vmatmul.f32.gmra.mxu0 %v3882
    %v4007 = vpop.f32.mrf.mxu0
    %v4008 = vadd.f32 0.0, %v4007
    %4009 = vmatmul.f32.gmra.mxu0 %v3883
    %v4010 = vpop.f32.mrf.mxu0
    %v4011 = vadd.f32 0.0, %v4010
    %4012 = vmatmul.f32.gmra.mxu0 %v3884
    %v4013 = vpop.f32.mrf.mxu0
    %v4014 = vadd.f32 0.0, %v4013
    %4015 = vmatmul.f32.gmra.mxu0 %v3885
    %v4016 = vpop.f32.mrf.mxu0
    %v4017 = vadd.f32 0.0, %v4016
    %4018 = vmatmul.f32.gmra.mxu0 %v3886
    %v4019 = vpop.f32.mrf.mxu0
    %v4020 = vadd.f32 0.0, %v4019
    %4021 = vmatmul.f32.gmra.mxu0 %v3887
    %v4022 = vpop.f32.mrf.mxu0
    %v4023 = vadd.f32 0.0, %v4022
    %4024 = vmatmul.f32.gmra.mxu0 %v3888
    %v4025 = vpop.f32.mrf.mxu0
    %v4026 = vadd.f32 0.0, %v4025
    %4027 = vmatmul.f32.gmra.mxu0 %v3889
    %v4028 = vpop.f32.mrf.mxu0
    %v4029 = vadd.f32 0.0, %v4028
    %4030 = vdwg.mxu0
    %v4031 = vadd.f32 %v3818, %v3924
    %v4032 = vadd.f32 %v3819, %v3927
    %v4033 = vadd.f32 %v3820, %v3930
    %v4034 = vadd.f32 %v3821, %v3933
    %v4035 = vadd.f32 %v3822, %v3936
    %v4036 = vadd.f32 %v3823, %v3939
    %v4037 = vadd.f32 %v3824, %v3942
    %v4038 = vadd.f32 %v3825, %v3945
    %v4039 = vadd.f32 %v3826, %v3948
    %v4040 = vadd.f32 %v3827, %v3951
    %v4041 = vadd.f32 %v3828, %v3954
    %v4042 = vadd.f32 %v3829, %v3957
    %v4043 = vadd.f32 %v3830, %v3960
    %v4044 = vadd.f32 %v3831, %v3963
    %v4045 = vadd.f32 %v3832, %v3966
    %v4046 = vadd.f32 %v3833, %v3969
    %v4047 = vadd.f32 %v3834, %v3972
    %v4048 = vadd.f32 %v3835, %v3975
    %v4049 = vadd.f32 %v3836, %v3978
    %v4050 = vadd.f32 %v3837, %v3981
    %v4051 = vadd.f32 %v3838, %v3984
    %v4052 = vadd.f32 %v3839, %v3987
    %v4053 = vadd.f32 %v3840, %v3990
    %v4054 = vadd.f32 %v3841, %v3993
    %v4055 = vadd.f32 %v3842, %v3996
    %v4056 = vadd.f32 %v3843, %v3999
    %v4057 = vadd.f32 %v3844, %v4002
    %v4058 = vadd.f32 %v3845, %v4005
    %v4059 = vadd.f32 %v3846, %v4008
    %v4060 = vadd.f32 %v3847, %v4011
    %v4061 = vadd.f32 %v3848, %v4014
    %v4062 = vadd.f32 %v3849, %v4017
    %v4063 = vadd.f32 %v3850, %v4020
    %v4064 = vadd.f32 %v3851, %v4023
    %v4065 = vadd.f32 %v3852, %v4026
    %v4066 = vadd.f32 %v3853, %v4029
    %v4067 = vld [vmem:[#allocation2 + $0x100] sm:$0xff]
    %v4068 = vld [vmem:[#allocation2 + $0x120] sm:$0xff]
    %v4069 = vld [vmem:[#allocation2 + $0x140] sm:$0xff]
    %v4070 = vld [vmem:[#allocation2 + $0x160] sm:$0xff]
    %v4071 = vld [vmem:[#allocation2 + $0x180] sm:$0xff]
    %v4072 = vld [vmem:[#allocation2 + $0x1a0] sm:$0xff]
    %v4073 = vld [vmem:[#allocation2 + $0x1c0] sm:$0xff]
    %v4074 = vld [vmem:[#allocation2 + $0x1e0] sm:$0xff]
    %v4075 = vld [vmem:[#allocation2 + $0x200] sm:$0xff]
    %v4076 = vld [vmem:[#allocation2 + $0x220] sm:$0xff]
    %v4077 = vld [vmem:[#allocation2 + $0x240] sm:$0xff]
    %v4078 = vld [vmem:[#allocation2 + $0x260] sm:$0xff]
    %v4079 = vld [vmem:[#allocation2 + $0x280] sm:$0xff]
    %v4080 = vld [vmem:[#allocation2 + $0x2a0] sm:$0xff]
    %v4081 = vld [vmem:[#allocation2 + $0x2c0] sm:$0xff]
    %v4082 = vld [vmem:[#allocation2 + $0x2e0] sm:$0xff]
    %v4083 = vld [vmem:[#allocation2 + $0x300] sm:$0xff]
    %v4084 = vld [vmem:[#allocation2 + $0x320] sm:$0xff]
    %v4085 = vld [vmem:[#allocation2 + $0x340] sm:$0xff]
    %v4086 = vld [vmem:[#allocation2 + $0x360] sm:$0xff]
    %v4087 = vld [vmem:[#allocation2 + $0x380] sm:$0xff]
    %v4088 = vld [vmem:[#allocation2 + $0x3a0] sm:$0xff]
    %v4089 = vld [vmem:[#allocation2 + $0x3c0] sm:$0xff]
    %v4090 = vld [vmem:[#allocation2 + $0x3e0] sm:$0xff]
    %v4091 = vld [vmem:[#allocation2 + $0x400] sm:$0xff]
    %v4092 = vld [vmem:[#allocation2 + $0x420] sm:$0xff]
    %v4093 = vld [vmem:[#allocation2 + $0x440] sm:$0xff]
    %v4094 = vld [vmem:[#allocation2 + $0x460] sm:$0xff]
    %v4095 = vld [vmem:[#allocation2 + $0x480] sm:$0xff]
    %v4096 = vld [vmem:[#allocation2 + $0x4a0] sm:$0xff]
    %v4097 = vld [vmem:[#allocation2 + $0x4c0] sm:$0xff]
    %v4098 = vld [vmem:[#allocation2 + $0x4e0] sm:$0xff]
    %v4099 = vld [vmem:[#allocation2 + $0x500] sm:$0xff]
    %v4100 = vld [vmem:[#allocation2 + $0x520] sm:$0xff]
    %v4101 = vld [vmem:[#allocation2 + $0x540] sm:$0xff]
    %v4102 = vld [vmem:[#allocation2 + $0x560] sm:$0xff]
    %v4103 = vld [vmem:[%s2 + $0x680] sm:$0xff]
    %v4104 = vld [vmem:[%s2 + $0x688] sm:$0xff]
    %v4105 = vld [vmem:[%s2 + $0x690] sm:$0xff]
    %v4106 = vld [vmem:[%s2 + $0x698] sm:$0xff]
    %v4107 = vld [vmem:[%s2 + $0x6a0] sm:$0xff]
    %v4108 = vld [vmem:[%s2 + $0x6a8] sm:$0xff]
    %v4109 = vld [vmem:[%s2 + $0x6b0] sm:$0xff]
    %v4110 = vld [vmem:[%s2 + $0x6b8] sm:$0xff]
    %v4111 = vld [vmem:[%s2 + $0x6c0] sm:$0xff]
    %v4112 = vld [vmem:[%s2 + $0x6c8] sm:$0xff]
    %v4113 = vld [vmem:[%s2 + $0x6d0] sm:$0xff]
    %v4114 = vld [vmem:[%s2 + $0x6d8] sm:$0xff]
    %v4115 = vld [vmem:[%s2 + $0x6e0] sm:$0xff]
    %v4116 = vld [vmem:[%s2 + $0x6e8] sm:$0xff]
    %v4117 = vld [vmem:[%s2 + $0x6f0] sm:$0xff]
    %v4118 = vld [vmem:[%s2 + $0x6f8] sm:$0xff]
    %4119 = vmatpush.msra.mxu0 %v4118
    %4120 = vmatpush.msra.mxu0 %v4117
    %4121 = vmatpush.msra.mxu0 %v4116
    %4122 = vmatpush.msra.mxu0 %v4115
    %4123 = vmatpush.msra.mxu0 %v4114
    %4124 = vmatpush.msra.mxu0 %v4113
    %4125 = vmatpush.msra.mxu0 %v4112
    %4126 = vmatpush.msra.mxu0 %v4111
    %4127 = vmatpush.msra.mxu0 %v4110
    %4128 = vmatpush.msra.mxu0 %v4109
    %4129 = vmatpush.msra.mxu0 %v4108
    %4130 = vmatpush.msra.mxu0 %v4107
    %4131 = vmatpush.msra.mxu0 %v4106
    %4132 = vmatpush.msra.mxu0 %v4105
    %4133 = vmatpush.msra.mxu0 %v4104
    %4134 = vmatpush.msra.mxu0 %v4103
    %4135 = vmatmul.f32.gmra.mxu0 %v4067
    %v4136 = vpop.f32.mrf.mxu0
    %v4137 = vadd.f32 0.0, %v4136
    %4138 = vmatmul.f32.gmra.mxu0 %v4068
    %v4139 = vpop.f32.mrf.mxu0
    %v4140 = vadd.f32 0.0, %v4139
    %4141 = vmatmul.f32.gmra.mxu0 %v4069
    %v4142 = vpop.f32.mrf.mxu0
    %v4143 = vadd.f32 0.0, %v4142
    %4144 = vmatmul.f32.gmra.mxu0 %v4070
    %v4145 = vpop.f32.mrf.mxu0
    %v4146 = vadd.f32 0.0, %v4145
    %4147 = vmatmul.f32.gmra.mxu0 %v4071
    %v4148 = vpop.f32.mrf.mxu0
    %v4149 = vadd.f32 0.0, %v4148
    %4150 = vmatmul.f32.gmra.mxu0 %v4072
    %v4151 = vpop.f32.mrf.mxu0
    %v4152 = vadd.f32 0.0, %v4151
    %4153 = vmatmul.f32.gmra.mxu0 %v4073
    %v4154 = vpop.f32.mrf.mxu0
    %v4155 = vadd.f32 0.0, %v4154
    %4156 = vmatmul.f32.gmra.mxu0 %v4074
    %v4157 = vpop.f32.mrf.mxu0
    %v4158 = vadd.f32 0.0, %v4157
    %4159 = vmatmul.f32.gmra.mxu0 %v4075
    %v4160 = vpop.f32.mrf.mxu0
    %v4161 = vadd.f32 0.0, %v4160
    %4162 = vmatmul.f32.gmra.mxu0 %v4076
    %v4163 = vpop.f32.mrf.mxu0
    %v4164 = vadd.f32 0.0, %v4163
    %4165 = vmatmul.f32.gmra.mxu0 %v4077
    %v4166 = vpop.f32.mrf.mxu0
    %v4167 = vadd.f32 0.0, %v4166
    %4168 = vmatmul.f32.gmra.mxu0 %v4078
    %v4169 = vpop.f32.mrf.mxu0
    %v4170 = vadd.f32 0.0, %v4169
    %4171 = vmatmul.f32.gmra.mxu0 %v4079
    %v4172 = vpop.f32.mrf.mxu0
    %v4173 = vadd.f32 0.0, %v4172
    %4174 = vmatmul.f32.gmra.mxu0 %v4080
    %v4175 = vpop.f32.mrf.mxu0
    %v4176 = vadd.f32 0.0, %v4175
    %4177 = vmatmul.f32.gmra.mxu0 %v4081
    %v4178 = vpop.f32.mrf.mxu0
    %v4179 = vadd.f32 0.0, %v4178
    %4180 = vmatmul.f32.gmra.mxu0 %v4082
    %v4181 = vpop.f32.mrf.mxu0
    %v4182 = vadd.f32 0.0, %v4181
    %4183 = vmatmul.f32.gmra.mxu0 %v4083
    %v4184 = vpop.f32.mrf.mxu0
    %v4185 = vadd.f32 0.0, %v4184
    %4186 = vmatmul.f32.gmra.mxu0 %v4084
    %v4187 = vpop.f32.mrf.mxu0
    %v4188 = vadd.f32 0.0, %v4187
    %4189 = vmatmul.f32.gmra.mxu0 %v4085
    %v4190 = vpop.f32.mrf.mxu0
    %v4191 = vadd.f32 0.0, %v4190
    %4192 = vmatmul.f32.gmra.mxu0 %v4086
    %v4193 = vpop.f32.mrf.mxu0
    %v4194 = vadd.f32 0.0, %v4193
    %4195 = vmatmul.f32.gmra.mxu0 %v4087
    %v4196 = vpop.f32.mrf.mxu0
    %v4197 = vadd.f32 0.0, %v4196
    %4198 = vmatmul.f32.gmra.mxu0 %v4088
    %v4199 = vpop.f32.mrf.mxu0
    %v4200 = vadd.f32 0.0, %v4199
    %4201 = vmatmul.f32.gmra.mxu0 %v4089
    %v4202 = vpop.f32.mrf.mxu0
    %v4203 = vadd.f32 0.0, %v4202
    %4204 = vmatmul.f32.gmra.mxu0 %v4090
    %v4205 = vpop.f32.mrf.mxu0
    %v4206 = vadd.f32 0.0, %v4205
    %4207 = vmatmul.f32.gmra.mxu0 %v4091
    %v4208 = vpop.f32.mrf.mxu0
    %v4209 = vadd.f32 0.0, %v4208
    %4210 = vmatmul.f32.gmra.mxu0 %v4092
    %v4211 = vpop.f32.mrf.mxu0
    %v4212 = vadd.f32 0.0, %v4211
    %4213 = vmatmul.f32.gmra.mxu0 %v4093
    %v4214 = vpop.f32.mrf.mxu0
    %v4215 = vadd.f32 0.0, %v4214
    %4216 = vmatmul.f32.gmra.mxu0 %v4094
    %v4217 = vpop.f32.mrf.mxu0
    %v4218 = vadd.f32 0.0, %v4217
    %4219 = vmatmul.f32.gmra.mxu0 %v4095
    %v4220 = vpop.f32.mrf.mxu0
    %v4221 = vadd.f32 0.0, %v4220
    %4222 = vmatmul.f32.gmra.mxu0 %v4096
    %v4223 = vpop.f32.mrf.mxu0
    %v4224 = vadd.f32 0.0, %v4223
    %4225 = vmatmul.f32.gmra.mxu0 %v4097
    %v4226 = vpop.f32.mrf.mxu0
    %v4227 = vadd.f32 0.0, %v4226
    %4228 = vmatmul.f32.gmra.mxu0 %v4098
    %v4229 = vpop.f32.mrf.mxu0
    %v4230 = vadd.f32 0.0, %v4229
    %4231 = vmatmul.f32.gmra.mxu0 %v4099
    %v4232 = vpop.f32.mrf.mxu0
    %v4233 = vadd.f32 0.0, %v4232
    %4234 = vmatmul.f32.gmra.mxu0 %v4100
    %v4235 = vpop.f32.mrf.mxu0
    %v4236 = vadd.f32 0.0, %v4235
    %4237 = vmatmul.f32.gmra.mxu0 %v4101
    %v4238 = vpop.f32.mrf.mxu0
    %v4239 = vadd.f32 0.0, %v4238
    %4240 = vmatmul.f32.gmra.mxu0 %v4102
    %v4241 = vpop.f32.mrf.mxu0
    %v4242 = vadd.f32 0.0, %v4241
    %4243 = vdwg.mxu0
    %v4244 = vadd.f32 %v4031, %v4137
    %v4245 = vadd.f32 %v4032, %v4140
    %v4246 = vadd.f32 %v4033, %v4143
    %v4247 = vadd.f32 %v4034, %v4146
    %v4248 = vadd.f32 %v4035, %v4149
    %v4249 = vadd.f32 %v4036, %v4152
    %v4250 = vadd.f32 %v4037, %v4155
    %v4251 = vadd.f32 %v4038, %v4158
    %v4252 = vadd.f32 %v4039, %v4161
    %v4253 = vadd.f32 %v4040, %v4164
    %v4254 = vadd.f32 %v4041, %v4167
    %v4255 = vadd.f32 %v4042, %v4170
    %v4256 = vadd.f32 %v4043, %v4173
    %v4257 = vadd.f32 %v4044, %v4176
    %v4258 = vadd.f32 %v4045, %v4179
    %v4259 = vadd.f32 %v4046, %v4182
    %v4260 = vadd.f32 %v4047, %v4185
    %v4261 = vadd.f32 %v4048, %v4188
    %v4262 = vadd.f32 %v4049, %v4191
    %v4263 = vadd.f32 %v4050, %v4194
    %v4264 = vadd.f32 %v4051, %v4197
    %v4265 = vadd.f32 %v4052, %v4200
    %v4266 = vadd.f32 %v4053, %v4203
    %v4267 = vadd.f32 %v4054, %v4206
    %v4268 = vadd.f32 %v4055, %v4209
    %v4269 = vadd.f32 %v4056, %v4212
    %v4270 = vadd.f32 %v4057, %v4215
    %v4271 = vadd.f32 %v4058, %v4218
    %v4272 = vadd.f32 %v4059, %v4221
    %v4273 = vadd.f32 %v4060, %v4224
    %v4274 = vadd.f32 %v4061, %v4227
    %v4275 = vadd.f32 %v4062, %v4230
    %v4276 = vadd.f32 %v4063, %v4233
    %v4277 = vadd.f32 %v4064, %v4236
    %v4278 = vadd.f32 %v4065, %v4239
    %v4279 = vadd.f32 %v4066, %v4242
    %v4280 = vld [vmem:[%s2 + $0x700] sm:$0xff]
    %v4281 = vld [vmem:[%s2 + $0x708] sm:$0xff]
    %v4282 = vld [vmem:[%s2 + $0x710] sm:$0xff]
    %v4283 = vld [vmem:[%s2 + $0x718] sm:$0xff]
    %v4284 = vld [vmem:[%s2 + $0x720] sm:$0xff]
    %v4285 = vld [vmem:[%s2 + $0x728] sm:$0xff]
    %v4286 = vld [vmem:[%s2 + $0x730] sm:$0xff]
    %v4287 = vld [vmem:[%s2 + $0x738] sm:$0xff]
    %v4288 = vld [vmem:[%s2 + $0x740] sm:$0xff]
    %v4289 = vld [vmem:[%s2 + $0x748] sm:$0xff]
    %v4290 = vld [vmem:[%s2 + $0x750] sm:$0xff]
    %v4291 = vld [vmem:[%s2 + $0x758] sm:$0xff]
    %v4292 = vld [vmem:[%s2 + $0x760] sm:$0xff]
    %v4293 = vld [vmem:[%s2 + $0x768] sm:$0xff]
    %v4294 = vld [vmem:[%s2 + $0x770] sm:$0xff]
    %v4295 = vld [vmem:[%s2 + $0x778] sm:$0xff]
    %4296 = vmatpush.msra.mxu0 %v4295
    %4297 = vmatpush.msra.mxu0 %v4294
    %4298 = vmatpush.msra.mxu0 %v4293
    %4299 = vmatpush.msra.mxu0 %v4292
    %4300 = vmatpush.msra.mxu0 %v4291
    %4301 = vmatpush.msra.mxu0 %v4290
    %4302 = vmatpush.msra.mxu0 %v4289
    %4303 = vmatpush.msra.mxu0 %v4288
    %4304 = vmatpush.msra.mxu0 %v4287
    %4305 = vmatpush.msra.mxu0 %v4286
    %4306 = vmatpush.msra.mxu0 %v4285
    %4307 = vmatpush.msra.mxu0 %v4284
    %4308 = vmatpush.msra.mxu0 %v4283
    %4309 = vmatpush.msra.mxu0 %v4282
    %4310 = vmatpush.msra.mxu0 %v4281
    %4311 = vmatpush.msra.mxu0 %v4280
    %4312 = vmatmul.f32.gmra.mxu0 %v2363
    %v4313 = vpop.f32.mrf.mxu0
    %v4314 = vadd.f32 0.0, %v4313
    %4315 = vmatmul.f32.gmra.mxu0 %v2364
    %v4316 = vpop.f32.mrf.mxu0
    %v4317 = vadd.f32 0.0, %v4316
    %4318 = vmatmul.f32.gmra.mxu0 %v2365
    %v4319 = vpop.f32.mrf.mxu0
    %v4320 = vadd.f32 0.0, %v4319
    %4321 = vmatmul.f32.gmra.mxu0 %v2366
    %v4322 = vpop.f32.mrf.mxu0
    %v4323 = vadd.f32 0.0, %v4322
    %4324 = vmatmul.f32.gmra.mxu0 %v2367
    %v4325 = vpop.f32.mrf.mxu0
    %v4326 = vadd.f32 0.0, %v4325
    %4327 = vmatmul.f32.gmra.mxu0 %v2368
    %v4328 = vpop.f32.mrf.mxu0
    %v4329 = vadd.f32 0.0, %v4328
    %4330 = vmatmul.f32.gmra.mxu0 %v2369
    %v4331 = vpop.f32.mrf.mxu0
    %v4332 = vadd.f32 0.0, %v4331
    %4333 = vmatmul.f32.gmra.mxu0 %v2370
    %v4334 = vpop.f32.mrf.mxu0
    %v4335 = vadd.f32 0.0, %v4334
    %4336 = vmatmul.f32.gmra.mxu0 %v2371
    %v4337 = vpop.f32.mrf.mxu0
    %v4338 = vadd.f32 0.0, %v4337
    %4339 = vmatmul.f32.gmra.mxu0 %v2372
    %v4340 = vpop.f32.mrf.mxu0
    %v4341 = vadd.f32 0.0, %v4340
    %4342 = vmatmul.f32.gmra.mxu0 %v2373
    %v4343 = vpop.f32.mrf.mxu0
    %v4344 = vadd.f32 0.0, %v4343
    %4345 = vmatmul.f32.gmra.mxu0 %v2374
    %v4346 = vpop.f32.mrf.mxu0
    %v4347 = vadd.f32 0.0, %v4346
    %4348 = vmatmul.f32.gmra.mxu0 %v2375
    %v4349 = vpop.f32.mrf.mxu0
    %v4350 = vadd.f32 0.0, %v4349
    %4351 = vmatmul.f32.gmra.mxu0 %v2376
    %v4352 = vpop.f32.mrf.mxu0
    %v4353 = vadd.f32 0.0, %v4352
    %4354 = vmatmul.f32.gmra.mxu0 %v2377
    %v4355 = vpop.f32.mrf.mxu0
    %v4356 = vadd.f32 0.0, %v4355
    %4357 = vmatmul.f32.gmra.mxu0 %v2378
    %v4358 = vpop.f32.mrf.mxu0
    %v4359 = vadd.f32 0.0, %v4358
    %4360 = vmatmul.f32.gmra.mxu0 %v2379
    %v4361 = vpop.f32.mrf.mxu0
    %v4362 = vadd.f32 0.0, %v4361
    %4363 = vmatmul.f32.gmra.mxu0 %v2380
    %v4364 = vpop.f32.mrf.mxu0
    %v4365 = vadd.f32 0.0, %v4364
    %4366 = vmatmul.f32.gmra.mxu0 %v2381
    %v4367 = vpop.f32.mrf.mxu0
    %v4368 = vadd.f32 0.0, %v4367
    %4369 = vmatmul.f32.gmra.mxu0 %v2382
    %v4370 = vpop.f32.mrf.mxu0
    %v4371 = vadd.f32 0.0, %v4370
    %4372 = vmatmul.f32.gmra.mxu0 %v2383
    %v4373 = vpop.f32.mrf.mxu0
    %v4374 = vadd.f32 0.0, %v4373
    %4375 = vmatmul.f32.gmra.mxu0 %v2384
    %v4376 = vpop.f32.mrf.mxu0
    %v4377 = vadd.f32 0.0, %v4376
    %4378 = vmatmul.f32.gmra.mxu0 %v2385
    %v4379 = vpop.f32.mrf.mxu0
    %v4380 = vadd.f32 0.0, %v4379
    %4381 = vmatmul.f32.gmra.mxu0 %v2386
    %v4382 = vpop.f32.mrf.mxu0
    %v4383 = vadd.f32 0.0, %v4382
    %4384 = vmatmul.f32.gmra.mxu0 %v2387
    %v4385 = vpop.f32.mrf.mxu0
    %v4386 = vadd.f32 0.0, %v4385
    %4387 = vmatmul.f32.gmra.mxu0 %v2388
    %v4388 = vpop.f32.mrf.mxu0
    %v4389 = vadd.f32 0.0, %v4388
    %4390 = vmatmul.f32.gmra.mxu0 %v2389
    %v4391 = vpop.f32.mrf.mxu0
    %v4392 = vadd.f32 0.0, %v4391
    %4393 = vmatmul.f32.gmra.mxu0 %v2390
    %v4394 = vpop.f32.mrf.mxu0
    %v4395 = vadd.f32 0.0, %v4394
    %4396 = vmatmul.f32.gmra.mxu0 %v2391
    %v4397 = vpop.f32.mrf.mxu0
    %v4398 = vadd.f32 0.0, %v4397
    %4399 = vmatmul.f32.gmra.mxu0 %v2392
    %v4400 = vpop.f32.mrf.mxu0
    %v4401 = vadd.f32 0.0, %v4400
    %4402 = vmatmul.f32.gmra.mxu0 %v2393
    %v4403 = vpop.f32.mrf.mxu0
    %v4404 = vadd.f32 0.0, %v4403
    %4405 = vmatmul.f32.gmra.mxu0 %v2394
    %v4406 = vpop.f32.mrf.mxu0
    %v4407 = vadd.f32 0.0, %v4406
    %4408 = vmatmul.f32.gmra.mxu0 %v2395
    %v4409 = vpop.f32.mrf.mxu0
    %v4410 = vadd.f32 0.0, %v4409
    %4411 = vmatmul.f32.gmra.mxu0 %v2396
    %v4412 = vpop.f32.mrf.mxu0
    %v4413 = vadd.f32 0.0, %v4412
    %4414 = vmatmul.f32.gmra.mxu0 %v2397
    %v4415 = vpop.f32.mrf.mxu0
    %v4416 = vadd.f32 0.0, %v4415
    %4417 = vmatmul.f32.gmra.mxu0 %v2398
    %v4418 = vpop.f32.mrf.mxu0
    %v4419 = vadd.f32 0.0, %v4418
    %4420 = vdwg.mxu0
    %v4421 = vadd.f32 %v4244, %v4314
    %v4422 = vadd.f32 %v4245, %v4317
    %v4423 = vadd.f32 %v4246, %v4320
    %v4424 = vadd.f32 %v4247, %v4323
    %v4425 = vadd.f32 %v4248, %v4326
    %v4426 = vadd.f32 %v4249, %v4329
    %v4427 = vadd.f32 %v4250, %v4332
    %v4428 = vadd.f32 %v4251, %v4335
    %v4429 = vadd.f32 %v4252, %v4338
    %v4430 = vadd.f32 %v4253, %v4341
    %v4431 = vadd.f32 %v4254, %v4344
    %v4432 = vadd.f32 %v4255, %v4347
    %v4433 = vadd.f32 %v4256, %v4350
    %v4434 = vadd.f32 %v4257, %v4353
    %v4435 = vadd.f32 %v4258, %v4356
    %v4436 = vadd.f32 %v4259, %v4359
    %v4437 = vadd.f32 %v4260, %v4362
    %v4438 = vadd.f32 %v4261, %v4365
    %v4439 = vadd.f32 %v4262, %v4368
    %v4440 = vadd.f32 %v4263, %v4371
    %v4441 = vadd.f32 %v4264, %v4374
    %v4442 = vadd.f32 %v4265, %v4377
    %v4443 = vadd.f32 %v4266, %v4380
    %v4444 = vadd.f32 %v4267, %v4383
    %v4445 = vadd.f32 %v4268, %v4386
    %v4446 = vadd.f32 %v4269, %v4389
    %v4447 = vadd.f32 %v4270, %v4392
    %v4448 = vadd.f32 %v4271, %v4395
    %v4449 = vadd.f32 %v4272, %v4398
    %v4450 = vadd.f32 %v4273, %v4401
    %v4451 = vadd.f32 %v4274, %v4404
    %v4452 = vadd.f32 %v4275, %v4407
    %v4453 = vadd.f32 %v4276, %v4410
    %v4454 = vadd.f32 %v4277, %v4413
    %v4455 = vadd.f32 %v4278, %v4416
    %v4456 = vadd.f32 %v4279, %v4419
    %v4457 = vld [vmem:[%s2 + $0x780] sm:$0xff]
    %v4458 = vld [vmem:[%s2 + $0x788] sm:$0xff]
    %v4459 = vld [vmem:[%s2 + $0x790] sm:$0xff]
    %v4460 = vld [vmem:[%s2 + $0x798] sm:$0xff]
    %v4461 = vld [vmem:[%s2 + $0x7a0] sm:$0xff]
    %v4462 = vld [vmem:[%s2 + $0x7a8] sm:$0xff]
    %v4463 = vld [vmem:[%s2 + $0x7b0] sm:$0xff]
    %v4464 = vld [vmem:[%s2 + $0x7b8] sm:$0xff]
    %v4465 = vld [vmem:[%s2 + $0x7c0] sm:$0xff]
    %v4466 = vld [vmem:[%s2 + $0x7c8] sm:$0xff]
    %v4467 = vld [vmem:[%s2 + $0x7d0] sm:$0xff]
    %v4468 = vld [vmem:[%s2 + $0x7d8] sm:$0xff]
    %v4469 = vld [vmem:[%s2 + $0x7e0] sm:$0xff]
    %v4470 = vld [vmem:[%s2 + $0x7e8] sm:$0xff]
    %v4471 = vld [vmem:[%s2 + $0x7f0] sm:$0xff]
    %v4472 = vld [vmem:[%s2 + $0x7f8] sm:$0xff]
    %4473 = vmatpush.msra.mxu0 %v4472
    %4474 = vmatpush.msra.mxu0 %v4471
    %4475 = vmatpush.msra.mxu0 %v4470
    %4476 = vmatpush.msra.mxu0 %v4469
    %4477 = vmatpush.msra.mxu0 %v4468
    %4478 = vmatpush.msra.mxu0 %v4467
    %4479 = vmatpush.msra.mxu0 %v4466
    %4480 = vmatpush.msra.mxu0 %v4465
    %4481 = vmatpush.msra.mxu0 %v4464
    %4482 = vmatpush.msra.mxu0 %v4463
    %4483 = vmatpush.msra.mxu0 %v4462
    %4484 = vmatpush.msra.mxu0 %v4461
    %4485 = vmatpush.msra.mxu0 %v4460
    %4486 = vmatpush.msra.mxu0 %v4459
    %4487 = vmatpush.msra.mxu0 %v4458
    %4488 = vmatpush.msra.mxu0 %v4457
    %4489 = vmatmul.f32.gmra.mxu0 %v2576
    %v4490 = vpop.f32.mrf.mxu0
    %v4491 = vadd.f32 0.0, %v4490
    %4492 = vmatmul.f32.gmra.mxu0 %v2577
    %v4493 = vpop.f32.mrf.mxu0
    %v4494 = vadd.f32 0.0, %v4493
    %4495 = vmatmul.f32.gmra.mxu0 %v2578
    %v4496 = vpop.f32.mrf.mxu0
    %v4497 = vadd.f32 0.0, %v4496
    %4498 = vmatmul.f32.gmra.mxu0 %v2579
    %v4499 = vpop.f32.mrf.mxu0
    %v4500 = vadd.f32 0.0, %v4499
    %4501 = vmatmul.f32.gmra.mxu0 %v2580
    %v4502 = vpop.f32.mrf.mxu0
    %v4503 = vadd.f32 0.0, %v4502
    %4504 = vmatmul.f32.gmra.mxu0 %v2581
    %v4505 = vpop.f32.mrf.mxu0
    %v4506 = vadd.f32 0.0, %v4505
    %4507 = vmatmul.f32.gmra.mxu0 %v2582
    %v4508 = vpop.f32.mrf.mxu0
    %v4509 = vadd.f32 0.0, %v4508
    %4510 = vmatmul.f32.gmra.mxu0 %v2583
    %v4511 = vpop.f32.mrf.mxu0
    %v4512 = vadd.f32 0.0, %v4511
    %4513 = vmatmul.f32.gmra.mxu0 %v2584
    %v4514 = vpop.f32.mrf.mxu0
    %v4515 = vadd.f32 0.0, %v4514
    %4516 = vmatmul.f32.gmra.mxu0 %v2585
    %v4517 = vpop.f32.mrf.mxu0
    %v4518 = vadd.f32 0.0, %v4517
    %4519 = vmatmul.f32.gmra.mxu0 %v2586
    %v4520 = vpop.f32.mrf.mxu0
    %v4521 = vadd.f32 0.0, %v4520
    %4522 = vmatmul.f32.gmra.mxu0 %v2587
    %v4523 = vpop.f32.mrf.mxu0
    %v4524 = vadd.f32 0.0, %v4523
    %4525 = vmatmul.f32.gmra.mxu0 %v2588
    %v4526 = vpop.f32.mrf.mxu0
    %v4527 = vadd.f32 0.0, %v4526
    %4528 = vmatmul.f32.gmra.mxu0 %v2589
    %v4529 = vpop.f32.mrf.mxu0
    %v4530 = vadd.f32 0.0, %v4529
    %4531 = vmatmul.f32.gmra.mxu0 %v2590
    %v4532 = vpop.f32.mrf.mxu0
    %v4533 = vadd.f32 0.0, %v4532
    %4534 = vmatmul.f32.gmra.mxu0 %v2591
    %v4535 = vpop.f32.mrf.mxu0
    %v4536 = vadd.f32 0.0, %v4535
    %4537 = vmatmul.f32.gmra.mxu0 %v2592
    %v4538 = vpop.f32.mrf.mxu0
    %v4539 = vadd.f32 0.0, %v4538
    %4540 = vmatmul.f32.gmra.mxu0 %v2593
    %v4541 = vpop.f32.mrf.mxu0
    %v4542 = vadd.f32 0.0, %v4541
    %4543 = vmatmul.f32.gmra.mxu0 %v2594
    %v4544 = vpop.f32.mrf.mxu0
    %v4545 = vadd.f32 0.0, %v4544
    %4546 = vmatmul.f32.gmra.mxu0 %v2595
    %v4547 = vpop.f32.mrf.mxu0
    %v4548 = vadd.f32 0.0, %v4547
    %4549 = vmatmul.f32.gmra.mxu0 %v2596
    %v4550 = vpop.f32.mrf.mxu0
    %v4551 = vadd.f32 0.0, %v4550
    %4552 = vmatmul.f32.gmra.mxu0 %v2597
    %v4553 = vpop.f32.mrf.mxu0
    %v4554 = vadd.f32 0.0, %v4553
    %4555 = vmatmul.f32.gmra.mxu0 %v2598
    %v4556 = vpop.f32.mrf.mxu0
    %v4557 = vadd.f32 0.0, %v4556
    %4558 = vmatmul.f32.gmra.mxu0 %v2599
    %v4559 = vpop.f32.mrf.mxu0
    %v4560 = vadd.f32 0.0, %v4559
    %4561 = vmatmul.f32.gmra.mxu0 %v2600
    %v4562 = vpop.f32.mrf.mxu0
    %v4563 = vadd.f32 0.0, %v4562
    %4564 = vmatmul.f32.gmra.mxu0 %v2601
    %v4565 = vpop.f32.mrf.mxu0
    %v4566 = vadd.f32 0.0, %v4565
    %4567 = vmatmul.f32.gmra.mxu0 %v2602
    %v4568 = vpop.f32.mrf.mxu0
    %v4569 = vadd.f32 0.0, %v4568
    %4570 = vmatmul.f32.gmra.mxu0 %v2603
    %v4571 = vpop.f32.mrf.mxu0
    %v4572 = vadd.f32 0.0, %v4571
    %4573 = vmatmul.f32.gmra.mxu0 %v2604
    %v4574 = vpop.f32.mrf.mxu0
    %v4575 = vadd.f32 0.0, %v4574
    %4576 = vmatmul.f32.gmra.mxu0 %v2605
    %v4577 = vpop.f32.mrf.mxu0
    %v4578 = vadd.f32 0.0, %v4577
    %4579 = vmatmul.f32.gmra.mxu0 %v2606
    %v4580 = vpop.f32.mrf.mxu0
    %v4581 = vadd.f32 0.0, %v4580
    %4582 = vmatmul.f32.gmra.mxu0 %v2607
    %v4583 = vpop.f32.mrf.mxu0
    %v4584 = vadd.f32 0.0, %v4583
    %4585 = vmatmul.f32.gmra.mxu0 %v2608
    %v4586 = vpop.f32.mrf.mxu0
    %v4587 = vadd.f32 0.0, %v4586
    %4588 = vmatmul.f32.gmra.mxu0 %v2609
    %v4589 = vpop.f32.mrf.mxu0
    %v4590 = vadd.f32 0.0, %v4589
    %4591 = vmatmul.f32.gmra.mxu0 %v2610
    %v4592 = vpop.f32.mrf.mxu0
    %v4593 = vadd.f32 0.0, %v4592
    %4594 = vmatmul.f32.gmra.mxu0 %v2611
    %v4595 = vpop.f32.mrf.mxu0
    %v4596 = vadd.f32 0.0, %v4595
    %4597 = vdwg.mxu0
    %v4598 = vadd.f32 %v4421, %v4491
    %v4599 = vadd.f32 %v4422, %v4494
    %v4600 = vadd.f32 %v4423, %v4497
    %v4601 = vadd.f32 %v4424, %v4500
    %v4602 = vadd.f32 %v4425, %v4503
    %v4603 = vadd.f32 %v4426, %v4506
    %v4604 = vadd.f32 %v4427, %v4509
    %v4605 = vadd.f32 %v4428, %v4512
    %v4606 = vadd.f32 %v4429, %v4515
    %v4607 = vadd.f32 %v4430, %v4518
    %v4608 = vadd.f32 %v4431, %v4521
    %v4609 = vadd.f32 %v4432, %v4524
    %v4610 = vadd.f32 %v4433, %v4527
    %v4611 = vadd.f32 %v4434, %v4530
    %v4612 = vadd.f32 %v4435, %v4533
    %v4613 = vadd.f32 %v4436, %v4536
    %v4614 = vadd.f32 %v4437, %v4539
    %v4615 = vadd.f32 %v4438, %v4542
    %v4616 = vadd.f32 %v4439, %v4545
    %v4617 = vadd.f32 %v4440, %v4548
    %v4618 = vadd.f32 %v4441, %v4551
    %v4619 = vadd.f32 %v4442, %v4554
    %v4620 = vadd.f32 %v4443, %v4557
    %v4621 = vadd.f32 %v4444, %v4560
    %v4622 = vadd.f32 %v4445, %v4563
    %v4623 = vadd.f32 %v4446, %v4566
    %v4624 = vadd.f32 %v4447, %v4569
    %v4625 = vadd.f32 %v4448, %v4572
    %v4626 = vadd.f32 %v4449, %v4575
    %v4627 = vadd.f32 %v4450, %v4578
    %v4628 = vadd.f32 %v4451, %v4581
    %v4629 = vadd.f32 %v4452, %v4584
    %v4630 = vadd.f32 %v4453, %v4587
    %v4631 = vadd.f32 %v4454, %v4590
    %v4632 = vadd.f32 %v4455, %v4593
    %v4633 = vadd.f32 %v4456, %v4596
    %v4634 = vld [vmem:[%s2 + $0x800] sm:$0xff]
    %v4635 = vld [vmem:[%s2 + $0x808] sm:$0xff]
    %v4636 = vld [vmem:[%s2 + $0x810] sm:$0xff]
    %v4637 = vld [vmem:[%s2 + $0x818] sm:$0xff]
    %v4638 = vld [vmem:[%s2 + $0x820] sm:$0xff]
    %v4639 = vld [vmem:[%s2 + $0x828] sm:$0xff]
    %v4640 = vld [vmem:[%s2 + $0x830] sm:$0xff]
    %v4641 = vld [vmem:[%s2 + $0x838] sm:$0xff]
    %v4642 = vld [vmem:[%s2 + $0x840] sm:$0xff]
    %v4643 = vld [vmem:[%s2 + $0x848] sm:$0xff]
    %v4644 = vld [vmem:[%s2 + $0x850] sm:$0xff]
    %v4645 = vld [vmem:[%s2 + $0x858] sm:$0xff]
    %v4646 = vld [vmem:[%s2 + $0x860] sm:$0xff]
    %v4647 = vld [vmem:[%s2 + $0x868] sm:$0xff]
    %v4648 = vld [vmem:[%s2 + $0x870] sm:$0xff]
    %v4649 = vld [vmem:[%s2 + $0x878] sm:$0xff]
    %4650 = vmatpush.msra.mxu0 %v4649
    %4651 = vmatpush.msra.mxu0 %v4648
    %4652 = vmatpush.msra.mxu0 %v4647
    %4653 = vmatpush.msra.mxu0 %v4646
    %4654 = vmatpush.msra.mxu0 %v4645
    %4655 = vmatpush.msra.mxu0 %v4644
    %4656 = vmatpush.msra.mxu0 %v4643
    %4657 = vmatpush.msra.mxu0 %v4642
    %4658 = vmatpush.msra.mxu0 %v4641
    %4659 = vmatpush.msra.mxu0 %v4640
    %4660 = vmatpush.msra.mxu0 %v4639
    %4661 = vmatpush.msra.mxu0 %v4638
    %4662 = vmatpush.msra.mxu0 %v4637
    %4663 = vmatpush.msra.mxu0 %v4636
    %4664 = vmatpush.msra.mxu0 %v4635
    %4665 = vmatpush.msra.mxu0 %v4634
    %4666 = vmatmul.f32.gmra.mxu0 %v2789
    %v4667 = vpop.f32.mrf.mxu0
    %v4668 = vadd.f32 0.0, %v4667
    %4669 = vmatmul.f32.gmra.mxu0 %v2790
    %v4670 = vpop.f32.mrf.mxu0
    %v4671 = vadd.f32 0.0, %v4670
    %4672 = vmatmul.f32.gmra.mxu0 %v2791
    %v4673 = vpop.f32.mrf.mxu0
    %v4674 = vadd.f32 0.0, %v4673
    %4675 = vmatmul.f32.gmra.mxu0 %v2792
    %v4676 = vpop.f32.mrf.mxu0
    %v4677 = vadd.f32 0.0, %v4676
    %4678 = vmatmul.f32.gmra.mxu0 %v2793
    %v4679 = vpop.f32.mrf.mxu0
    %v4680 = vadd.f32 0.0, %v4679
    %4681 = vmatmul.f32.gmra.mxu0 %v2794
    %v4682 = vpop.f32.mrf.mxu0
    %v4683 = vadd.f32 0.0, %v4682
    %4684 = vmatmul.f32.gmra.mxu0 %v2795
    %v4685 = vpop.f32.mrf.mxu0
    %v4686 = vadd.f32 0.0, %v4685
    %4687 = vmatmul.f32.gmra.mxu0 %v2796
    %v4688 = vpop.f32.mrf.mxu0
    %v4689 = vadd.f32 0.0, %v4688
    %4690 = vmatmul.f32.gmra.mxu0 %v2797
    %v4691 = vpop.f32.mrf.mxu0
    %v4692 = vadd.f32 0.0, %v4691
    %4693 = vmatmul.f32.gmra.mxu0 %v2798
    %v4694 = vpop.f32.mrf.mxu0
    %v4695 = vadd.f32 0.0, %v4694
    %4696 = vmatmul.f32.gmra.mxu0 %v2799
    %v4697 = vpop.f32.mrf.mxu0
    %v4698 = vadd.f32 0.0, %v4697
    %4699 = vmatmul.f32.gmra.mxu0 %v2800
    %v4700 = vpop.f32.mrf.mxu0
    %v4701 = vadd.f32 0.0, %v4700
    %4702 = vmatmul.f32.gmra.mxu0 %v2801
    %v4703 = vpop.f32.mrf.mxu0
    %v4704 = vadd.f32 0.0, %v4703
    %4705 = vmatmul.f32.gmra.mxu0 %v2802
    %v4706 = vpop.f32.mrf.mxu0
    %v4707 = vadd.f32 0.0, %v4706
    %4708 = vmatmul.f32.gmra.mxu0 %v2803
    %v4709 = vpop.f32.mrf.mxu0
    %v4710 = vadd.f32 0.0, %v4709
    %4711 = vmatmul.f32.gmra.mxu0 %v2804
    %v4712 = vpop.f32.mrf.mxu0
    %v4713 = vadd.f32 0.0, %v4712
    %4714 = vmatmul.f32.gmra.mxu0 %v2805
    %v4715 = vpop.f32.mrf.mxu0
    %v4716 = vadd.f32 0.0, %v4715
    %4717 = vmatmul.f32.gmra.mxu0 %v2806
    %v4718 = vpop.f32.mrf.mxu0
    %v4719 = vadd.f32 0.0, %v4718
    %4720 = vmatmul.f32.gmra.mxu0 %v2807
    %v4721 = vpop.f32.mrf.mxu0
    %v4722 = vadd.f32 0.0, %v4721
    %4723 = vmatmul.f32.gmra.mxu0 %v2808
    %v4724 = vpop.f32.mrf.mxu0
    %v4725 = vadd.f32 0.0, %v4724
    %4726 = vmatmul.f32.gmra.mxu0 %v2809
    %v4727 = vpop.f32.mrf.mxu0
    %v4728 = vadd.f32 0.0, %v4727
    %4729 = vmatmul.f32.gmra.mxu0 %v2810
    %v4730 = vpop.f32.mrf.mxu0
    %v4731 = vadd.f32 0.0, %v4730
    %4732 = vmatmul.f32.gmra.mxu0 %v2811
    %v4733 = vpop.f32.mrf.mxu0
    %v4734 = vadd.f32 0.0, %v4733
    %4735 = vmatmul.f32.gmra.mxu0 %v2812
    %v4736 = vpop.f32.mrf.mxu0
    %v4737 = vadd.f32 0.0, %v4736
    %4738 = vmatmul.f32.gmra.mxu0 %v2813
    %v4739 = vpop.f32.mrf.mxu0
    %v4740 = vadd.f32 0.0, %v4739
    %4741 = vmatmul.f32.gmra.mxu0 %v2814
    %v4742 = vpop.f32.mrf.mxu0
    %v4743 = vadd.f32 0.0, %v4742
    %4744 = vmatmul.f32.gmra.mxu0 %v2815
    %v4745 = vpop.f32.mrf.mxu0
    %v4746 = vadd.f32 0.0, %v4745
    %4747 = vmatmul.f32.gmra.mxu0 %v2816
    %v4748 = vpop.f32.mrf.mxu0
    %v4749 = vadd.f32 0.0, %v4748
    %4750 = vmatmul.f32.gmra.mxu0 %v2817
    %v4751 = vpop.f32.mrf.mxu0
    %v4752 = vadd.f32 0.0, %v4751
    %4753 = vmatmul.f32.gmra.mxu0 %v2818
    %v4754 = vpop.f32.mrf.mxu0
    %v4755 = vadd.f32 0.0, %v4754
    %4756 = vmatmul.f32.gmra.mxu0 %v2819
    %v4757 = vpop.f32.mrf.mxu0
    %v4758 = vadd.f32 0.0, %v4757
    %4759 = vmatmul.f32.gmra.mxu0 %v2820
    %v4760 = vpop.f32.mrf.mxu0
    %v4761 = vadd.f32 0.0, %v4760
    %4762 = vmatmul.f32.gmra.mxu0 %v2821
    %v4763 = vpop.f32.mrf.mxu0
    %v4764 = vadd.f32 0.0, %v4763
    %4765 = vmatmul.f32.gmra.mxu0 %v2822
    %v4766 = vpop.f32.mrf.mxu0
    %v4767 = vadd.f32 0.0, %v4766
    %4768 = vmatmul.f32.gmra.mxu0 %v2823
    %v4769 = vpop.f32.mrf.mxu0
    %v4770 = vadd.f32 0.0, %v4769
    %4771 = vmatmul.f32.gmra.mxu0 %v2824
    %v4772 = vpop.f32.mrf.mxu0
    %v4773 = vadd.f32 0.0, %v4772
    %4774 = vdwg.mxu0
    %v4775 = vadd.f32 %v4598, %v4668
    %v4776 = vadd.f32 %v4599, %v4671
    %v4777 = vadd.f32 %v4600, %v4674
    %v4778 = vadd.f32 %v4601, %v4677
    %v4779 = vadd.f32 %v4602, %v4680
    %v4780 = vadd.f32 %v4603, %v4683
    %v4781 = vadd.f32 %v4604, %v4686
    %v4782 = vadd.f32 %v4605, %v4689
    %v4783 = vadd.f32 %v4606, %v4692
    %v4784 = vadd.f32 %v4607, %v4695
    %v4785 = vadd.f32 %v4608, %v4698
    %v4786 = vadd.f32 %v4609, %v4701
    %v4787 = vadd.f32 %v4610, %v4704
    %v4788 = vadd.f32 %v4611, %v4707
    %v4789 = vadd.f32 %v4612, %v4710
    %v4790 = vadd.f32 %v4613, %v4713
    %v4791 = vadd.f32 %v4614, %v4716
    %v4792 = vadd.f32 %v4615, %v4719
    %v4793 = vadd.f32 %v4616, %v4722
    %v4794 = vadd.f32 %v4617, %v4725
    %v4795 = vadd.f32 %v4618, %v4728
    %v4796 = vadd.f32 %v4619, %v4731
    %v4797 = vadd.f32 %v4620, %v4734
    %v4798 = vadd.f32 %v4621, %v4737
    %v4799 = vadd.f32 %v4622, %v4740
    %v4800 = vadd.f32 %v4623, %v4743
    %v4801 = vadd.f32 %v4624, %v4746
    %v4802 = vadd.f32 %v4625, %v4749
    %v4803 = vadd.f32 %v4626, %v4752
    %v4804 = vadd.f32 %v4627, %v4755
    %v4805 = vadd.f32 %v4628, %v4758
    %v4806 = vadd.f32 %v4629, %v4761
    %v4807 = vadd.f32 %v4630, %v4764
    %v4808 = vadd.f32 %v4631, %v4767
    %v4809 = vadd.f32 %v4632, %v4770
    %v4810 = vadd.f32 %v4633, %v4773
    %v4811 = vld [vmem:[%s2 + $0x880] sm:$0xff]
    %v4812 = vld [vmem:[%s2 + $0x888] sm:$0xff]
    %v4813 = vld [vmem:[%s2 + $0x890] sm:$0xff]
    %v4814 = vld [vmem:[%s2 + $0x898] sm:$0xff]
    %v4815 = vld [vmem:[%s2 + $0x8a0] sm:$0xff]
    %v4816 = vld [vmem:[%s2 + $0x8a8] sm:$0xff]
    %v4817 = vld [vmem:[%s2 + $0x8b0] sm:$0xff]
    %v4818 = vld [vmem:[%s2 + $0x8b8] sm:$0xff]
    %v4819 = vld [vmem:[%s2 + $0x8c0] sm:$0xff]
    %v4820 = vld [vmem:[%s2 + $0x8c8] sm:$0xff]
    %v4821 = vld [vmem:[%s2 + $0x8d0] sm:$0xff]
    %v4822 = vld [vmem:[%s2 + $0x8d8] sm:$0xff]
    %v4823 = vld [vmem:[%s2 + $0x8e0] sm:$0xff]
    %v4824 = vld [vmem:[%s2 + $0x8e8] sm:$0xff]
    %v4825 = vld [vmem:[%s2 + $0x8f0] sm:$0xff]
    %v4826 = vld [vmem:[%s2 + $0x8f8] sm:$0xff]
    %4827 = vmatpush.msra.mxu0 %v4826
    %4828 = vmatpush.msra.mxu0 %v4825
    %4829 = vmatpush.msra.mxu0 %v4824
    %4830 = vmatpush.msra.mxu0 %v4823
    %4831 = vmatpush.msra.mxu0 %v4822
    %4832 = vmatpush.msra.mxu0 %v4821
    %4833 = vmatpush.msra.mxu0 %v4820
    %4834 = vmatpush.msra.mxu0 %v4819
    %4835 = vmatpush.msra.mxu0 %v4818
    %4836 = vmatpush.msra.mxu0 %v4817
    %4837 = vmatpush.msra.mxu0 %v4816
    %4838 = vmatpush.msra.mxu0 %v4815
    %4839 = vmatpush.msra.mxu0 %v4814
    %4840 = vmatpush.msra.mxu0 %v4813
    %4841 = vmatpush.msra.mxu0 %v4812
    %4842 = vmatpush.msra.mxu0 %v4811
    %4843 = vmatmul.f32.gmra.mxu0 %v3002
    %v4844 = vpop.f32.mrf.mxu0
    %v4845 = vadd.f32 0.0, %v4844
    %4846 = vmatmul.f32.gmra.mxu0 %v3003
    %v4847 = vpop.f32.mrf.mxu0
    %v4848 = vadd.f32 0.0, %v4847
    %4849 = vmatmul.f32.gmra.mxu0 %v3004
    %v4850 = vpop.f32.mrf.mxu0
    %v4851 = vadd.f32 0.0, %v4850
    %4852 = vmatmul.f32.gmra.mxu0 %v3005
    %v4853 = vpop.f32.mrf.mxu0
    %v4854 = vadd.f32 0.0, %v4853
    %4855 = vmatmul.f32.gmra.mxu0 %v3006
    %v4856 = vpop.f32.mrf.mxu0
    %v4857 = vadd.f32 0.0, %v4856
    %4858 = vmatmul.f32.gmra.mxu0 %v3007
    %v4859 = vpop.f32.mrf.mxu0
    %v4860 = vadd.f32 0.0, %v4859
    %4861 = vmatmul.f32.gmra.mxu0 %v3008
    %v4862 = vpop.f32.mrf.mxu0
    %v4863 = vadd.f32 0.0, %v4862
    %4864 = vmatmul.f32.gmra.mxu0 %v3009
    %v4865 = vpop.f32.mrf.mxu0
    %v4866 = vadd.f32 0.0, %v4865
    %4867 = vmatmul.f32.gmra.mxu0 %v3010
    %v4868 = vpop.f32.mrf.mxu0
    %v4869 = vadd.f32 0.0, %v4868
    %4870 = vmatmul.f32.gmra.mxu0 %v3011
    %v4871 = vpop.f32.mrf.mxu0
    %v4872 = vadd.f32 0.0, %v4871
    %4873 = vmatmul.f32.gmra.mxu0 %v3012
    %v4874 = vpop.f32.mrf.mxu0
    %v4875 = vadd.f32 0.0, %v4874
    %4876 = vmatmul.f32.gmra.mxu0 %v3013
    %v4877 = vpop.f32.mrf.mxu0
    %v4878 = vadd.f32 0.0, %v4877
    %4879 = vmatmul.f32.gmra.mxu0 %v3014
    %v4880 = vpop.f32.mrf.mxu0
    %v4881 = vadd.f32 0.0, %v4880
    %4882 = vmatmul.f32.gmra.mxu0 %v3015
    %v4883 = vpop.f32.mrf.mxu0
    %v4884 = vadd.f32 0.0, %v4883
    %4885 = vmatmul.f32.gmra.mxu0 %v3016
    %v4886 = vpop.f32.mrf.mxu0
    %v4887 = vadd.f32 0.0, %v4886
    %4888 = vmatmul.f32.gmra.mxu0 %v3017
    %v4889 = vpop.f32.mrf.mxu0
    %v4890 = vadd.f32 0.0, %v4889
    %4891 = vmatmul.f32.gmra.mxu0 %v3018
    %v4892 = vpop.f32.mrf.mxu0
    %v4893 = vadd.f32 0.0, %v4892
    %4894 = vmatmul.f32.gmra.mxu0 %v3019
    %v4895 = vpop.f32.mrf.mxu0
    %v4896 = vadd.f32 0.0, %v4895
    %4897 = vmatmul.f32.gmra.mxu0 %v3020
    %v4898 = vpop.f32.mrf.mxu0
    %v4899 = vadd.f32 0.0, %v4898
    %4900 = vmatmul.f32.gmra.mxu0 %v3021
    %v4901 = vpop.f32.mrf.mxu0
    %v4902 = vadd.f32 0.0, %v4901
    %4903 = vmatmul.f32.gmra.mxu0 %v3022
    %v4904 = vpop.f32.mrf.mxu0
    %v4905 = vadd.f32 0.0, %v4904
    %4906 = vmatmul.f32.gmra.mxu0 %v3023
    %v4907 = vpop.f32.mrf.mxu0
    %v4908 = vadd.f32 0.0, %v4907
    %4909 = vmatmul.f32.gmra.mxu0 %v3024
    %v4910 = vpop.f32.mrf.mxu0
    %v4911 = vadd.f32 0.0, %v4910
    %4912 = vmatmul.f32.gmra.mxu0 %v3025
    %v4913 = vpop.f32.mrf.mxu0
    %v4914 = vadd.f32 0.0, %v4913
    %4915 = vmatmul.f32.gmra.mxu0 %v3026
    %v4916 = vpop.f32.mrf.mxu0
    %v4917 = vadd.f32 0.0, %v4916
    %4918 = vmatmul.f32.gmra.mxu0 %v3027
    %v4919 = vpop.f32.mrf.mxu0
    %v4920 = vadd.f32 0.0, %v4919
    %4921 = vmatmul.f32.gmra.mxu0 %v3028
    %v4922 = vpop.f32.mrf.mxu0
    %v4923 = vadd.f32 0.0, %v4922
    %4924 = vmatmul.f32.gmra.mxu0 %v3029
    %v4925 = vpop.f32.mrf.mxu0
    %v4926 = vadd.f32 0.0, %v4925
    %4927 = vmatmul.f32.gmra.mxu0 %v3030
    %v4928 = vpop.f32.mrf.mxu0
    %v4929 = vadd.f32 0.0, %v4928
    %4930 = vmatmul.f32.gmra.mxu0 %v3031
    %v4931 = vpop.f32.mrf.mxu0
    %v4932 = vadd.f32 0.0, %v4931
    %4933 = vmatmul.f32.gmra.mxu0 %v3032
    %v4934 = vpop.f32.mrf.mxu0
    %v4935 = vadd.f32 0.0, %v4934
    %4936 = vmatmul.f32.gmra.mxu0 %v3033
    %v4937 = vpop.f32.mrf.mxu0
    %v4938 = vadd.f32 0.0, %v4937
    %4939 = vmatmul.f32.gmra.mxu0 %v3034
    %v4940 = vpop.f32.mrf.mxu0
    %v4941 = vadd.f32 0.0, %v4940
    %4942 = vmatmul.f32.gmra.mxu0 %v3035
    %v4943 = vpop.f32.mrf.mxu0
    %v4944 = vadd.f32 0.0, %v4943
    %4945 = vmatmul.f32.gmra.mxu0 %v3036
    %v4946 = vpop.f32.mrf.mxu0
    %v4947 = vadd.f32 0.0, %v4946
    %4948 = vmatmul.f32.gmra.mxu0 %v3037
    %v4949 = vpop.f32.mrf.mxu0
    %v4950 = vadd.f32 0.0, %v4949
    %4951 = vdwg.mxu0
    %v4952 = vadd.f32 %v4775, %v4845
    %v4953 = vadd.f32 %v4776, %v4848
    %v4954 = vadd.f32 %v4777, %v4851
    %v4955 = vadd.f32 %v4778, %v4854
    %v4956 = vadd.f32 %v4779, %v4857
    %v4957 = vadd.f32 %v4780, %v4860
    %v4958 = vadd.f32 %v4781, %v4863
    %v4959 = vadd.f32 %v4782, %v4866
    %v4960 = vadd.f32 %v4783, %v4869
    %v4961 = vadd.f32 %v4784, %v4872
    %v4962 = vadd.f32 %v4785, %v4875
    %v4963 = vadd.f32 %v4786, %v4878
    %v4964 = vadd.f32 %v4787, %v4881
    %v4965 = vadd.f32 %v4788, %v4884
    %v4966 = vadd.f32 %v4789, %v4887
    %v4967 = vadd.f32 %v4790, %v4890
    %v4968 = vadd.f32 %v4791, %v4893
    %v4969 = vadd.f32 %v4792, %v4896
    %v4970 = vadd.f32 %v4793, %v4899
    %v4971 = vadd.f32 %v4794, %v4902
    %v4972 = vadd.f32 %v4795, %v4905
    %v4973 = vadd.f32 %v4796, %v4908
    %v4974 = vadd.f32 %v4797, %v4911
    %v4975 = vadd.f32 %v4798, %v4914
    %v4976 = vadd.f32 %v4799, %v4917
    %v4977 = vadd.f32 %v4800, %v4920
    %v4978 = vadd.f32 %v4801, %v4923
    %v4979 = vadd.f32 %v4802, %v4926
    %v4980 = vadd.f32 %v4803, %v4929
    %v4981 = vadd.f32 %v4804, %v4932
    %v4982 = vadd.f32 %v4805, %v4935
    %v4983 = vadd.f32 %v4806, %v4938
    %v4984 = vadd.f32 %v4807, %v4941
    %v4985 = vadd.f32 %v4808, %v4944
    %v4986 = vadd.f32 %v4809, %v4947
    %v4987 = vadd.f32 %v4810, %v4950
    %v4988 = vld [vmem:[%s2 + $0x900] sm:$0xff]
    %v4989 = vld [vmem:[%s2 + $0x908] sm:$0xff]
    %v4990 = vld [vmem:[%s2 + $0x910] sm:$0xff]
    %v4991 = vld [vmem:[%s2 + $0x918] sm:$0xff]
    %v4992 = vld [vmem:[%s2 + $0x920] sm:$0xff]
    %v4993 = vld [vmem:[%s2 + $0x928] sm:$0xff]
    %v4994 = vld [vmem:[%s2 + $0x930] sm:$0xff]
    %v4995 = vld [vmem:[%s2 + $0x938] sm:$0xff]
    %v4996 = vld [vmem:[%s2 + $0x940] sm:$0xff]
    %v4997 = vld [vmem:[%s2 + $0x948] sm:$0xff]
    %v4998 = vld [vmem:[%s2 + $0x950] sm:$0xff]
    %v4999 = vld [vmem:[%s2 + $0x958] sm:$0xff]
    %v5000 = vld [vmem:[%s2 + $0x960] sm:$0xff]
    %v5001 = vld [vmem:[%s2 + $0x968] sm:$0xff]
    %v5002 = vld [vmem:[%s2 + $0x970] sm:$0xff]
    %v5003 = vld [vmem:[%s2 + $0x978] sm:$0xff]
    %5004 = vmatpush.msra.mxu0 %v5003
    %5005 = vmatpush.msra.mxu0 %v5002
    %5006 = vmatpush.msra.mxu0 %v5001
    %5007 = vmatpush.msra.mxu0 %v5000
    %5008 = vmatpush.msra.mxu0 %v4999
    %5009 = vmatpush.msra.mxu0 %v4998
    %5010 = vmatpush.msra.mxu0 %v4997
    %5011 = vmatpush.msra.mxu0 %v4996
    %5012 = vmatpush.msra.mxu0 %v4995
    %5013 = vmatpush.msra.mxu0 %v4994
    %5014 = vmatpush.msra.mxu0 %v4993
    %5015 = vmatpush.msra.mxu0 %v4992
    %5016 = vmatpush.msra.mxu0 %v4991
    %5017 = vmatpush.msra.mxu0 %v4990
    %5018 = vmatpush.msra.mxu0 %v4989
    %5019 = vmatpush.msra.mxu0 %v4988
    %5020 = vmatmul.f32.gmra.mxu0 %v3215
    %v5021 = vpop.f32.mrf.mxu0
    %v5022 = vadd.f32 0.0, %v5021
    %5023 = vmatmul.f32.gmra.mxu0 %v3216
    %v5024 = vpop.f32.mrf.mxu0
    %v5025 = vadd.f32 0.0, %v5024
    %5026 = vmatmul.f32.gmra.mxu0 %v3217
    %v5027 = vpop.f32.mrf.mxu0
    %v5028 = vadd.f32 0.0, %v5027
    %5029 = vmatmul.f32.gmra.mxu0 %v3218
    %v5030 = vpop.f32.mrf.mxu0
    %v5031 = vadd.f32 0.0, %v5030
    %5032 = vmatmul.f32.gmra.mxu0 %v3219
    %v5033 = vpop.f32.mrf.mxu0
    %v5034 = vadd.f32 0.0, %v5033
    %5035 = vmatmul.f32.gmra.mxu0 %v3220
    %v5036 = vpop.f32.mrf.mxu0
    %v5037 = vadd.f32 0.0, %v5036
    %5038 = vmatmul.f32.gmra.mxu0 %v3221
    %v5039 = vpop.f32.mrf.mxu0
    %v5040 = vadd.f32 0.0, %v5039
    %5041 = vmatmul.f32.gmra.mxu0 %v3222
    %v5042 = vpop.f32.mrf.mxu0
    %v5043 = vadd.f32 0.0, %v5042
    %5044 = vmatmul.f32.gmra.mxu0 %v3223
    %v5045 = vpop.f32.mrf.mxu0
    %v5046 = vadd.f32 0.0, %v5045
    %5047 = vmatmul.f32.gmra.mxu0 %v3224
    %v5048 = vpop.f32.mrf.mxu0
    %v5049 = vadd.f32 0.0, %v5048
    %5050 = vmatmul.f32.gmra.mxu0 %v3225
    %v5051 = vpop.f32.mrf.mxu0
    %v5052 = vadd.f32 0.0, %v5051
    %5053 = vmatmul.f32.gmra.mxu0 %v3226
    %v5054 = vpop.f32.mrf.mxu0
    %v5055 = vadd.f32 0.0, %v5054
    %5056 = vmatmul.f32.gmra.mxu0 %v3227
    %v5057 = vpop.f32.mrf.mxu0
    %v5058 = vadd.f32 0.0, %v5057
    %5059 = vmatmul.f32.gmra.mxu0 %v3228
    %v5060 = vpop.f32.mrf.mxu0
    %v5061 = vadd.f32 0.0, %v5060
    %5062 = vmatmul.f32.gmra.mxu0 %v3229
    %v5063 = vpop.f32.mrf.mxu0
    %v5064 = vadd.f32 0.0, %v5063
    %5065 = vmatmul.f32.gmra.mxu0 %v3230
    %v5066 = vpop.f32.mrf.mxu0
    %v5067 = vadd.f32 0.0, %v5066
    %5068 = vmatmul.f32.gmra.mxu0 %v3231
    %v5069 = vpop.f32.mrf.mxu0
    %v5070 = vadd.f32 0.0, %v5069
    %5071 = vmatmul.f32.gmra.mxu0 %v3232
    %v5072 = vpop.f32.mrf.mxu0
    %v5073 = vadd.f32 0.0, %v5072
    %5074 = vmatmul.f32.gmra.mxu0 %v3233
    %v5075 = vpop.f32.mrf.mxu0
    %v5076 = vadd.f32 0.0, %v5075
    %5077 = vmatmul.f32.gmra.mxu0 %v3234
    %v5078 = vpop.f32.mrf.mxu0
    %v5079 = vadd.f32 0.0, %v5078
    %5080 = vmatmul.f32.gmra.mxu0 %v3235
    %v5081 = vpop.f32.mrf.mxu0
    %v5082 = vadd.f32 0.0, %v5081
    %5083 = vmatmul.f32.gmra.mxu0 %v3236
    %v5084 = vpop.f32.mrf.mxu0
    %v5085 = vadd.f32 0.0, %v5084
    %5086 = vmatmul.f32.gmra.mxu0 %v3237
    %v5087 = vpop.f32.mrf.mxu0
    %v5088 = vadd.f32 0.0, %v5087
    %5089 = vmatmul.f32.gmra.mxu0 %v3238
    %v5090 = vpop.f32.mrf.mxu0
    %v5091 = vadd.f32 0.0, %v5090
    %5092 = vmatmul.f32.gmra.mxu0 %v3239
    %v5093 = vpop.f32.mrf.mxu0
    %v5094 = vadd.f32 0.0, %v5093
    %5095 = vmatmul.f32.gmra.mxu0 %v3240
    %v5096 = vpop.f32.mrf.mxu0
    %v5097 = vadd.f32 0.0, %v5096
    %5098 = vmatmul.f32.gmra.mxu0 %v3241
    %v5099 = vpop.f32.mrf.mxu0
    %v5100 = vadd.f32 0.0, %v5099
    %5101 = vmatmul.f32.gmra.mxu0 %v3242
    %v5102 = vpop.f32.mrf.mxu0
    %v5103 = vadd.f32 0.0, %v5102
    %5104 = vmatmul.f32.gmra.mxu0 %v3243
    %v5105 = vpop.f32.mrf.mxu0
    %v5106 = vadd.f32 0.0, %v5105
    %5107 = vmatmul.f32.gmra.mxu0 %v3244
    %v5108 = vpop.f32.mrf.mxu0
    %v5109 = vadd.f32 0.0, %v5108
    %5110 = vmatmul.f32.gmra.mxu0 %v3245
    %v5111 = vpop.f32.mrf.mxu0
    %v5112 = vadd.f32 0.0, %v5111
    %5113 = vmatmul.f32.gmra.mxu0 %v3246
    %v5114 = vpop.f32.mrf.mxu0
    %v5115 = vadd.f32 0.0, %v5114
    %5116 = vmatmul.f32.gmra.mxu0 %v3247
    %v5117 = vpop.f32.mrf.mxu0
    %v5118 = vadd.f32 0.0, %v5117
    %5119 = vmatmul.f32.gmra.mxu0 %v3248
    %v5120 = vpop.f32.mrf.mxu0
    %v5121 = vadd.f32 0.0, %v5120
    %5122 = vmatmul.f32.gmra.mxu0 %v3249
    %v5123 = vpop.f32.mrf.mxu0
    %v5124 = vadd.f32 0.0, %v5123
    %5125 = vmatmul.f32.gmra.mxu0 %v3250
    %v5126 = vpop.f32.mrf.mxu0
    %v5127 = vadd.f32 0.0, %v5126
    %5128 = vdwg.mxu0
    %v5129 = vadd.f32 %v4952, %v5022
    %v5130 = vadd.f32 %v4953, %v5025
    %v5131 = vadd.f32 %v4954, %v5028
    %v5132 = vadd.f32 %v4955, %v5031
    %v5133 = vadd.f32 %v4956, %v5034
    %v5134 = vadd.f32 %v4957, %v5037
    %v5135 = vadd.f32 %v4958, %v5040
    %v5136 = vadd.f32 %v4959, %v5043
    %v5137 = vadd.f32 %v4960, %v5046
    %v5138 = vadd.f32 %v4961, %v5049
    %v5139 = vadd.f32 %v4962, %v5052
    %v5140 = vadd.f32 %v4963, %v5055
    %v5141 = vadd.f32 %v4964, %v5058
    %v5142 = vadd.f32 %v4965, %v5061
    %v5143 = vadd.f32 %v4966, %v5064
    %v5144 = vadd.f32 %v4967, %v5067
    %v5145 = vadd.f32 %v4968, %v5070
    %v5146 = vadd.f32 %v4969, %v5073
    %v5147 = vadd.f32 %v4970, %v5076
    %v5148 = vadd.f32 %v4971, %v5079
    %v5149 = vadd.f32 %v4972, %v5082
    %v5150 = vadd.f32 %v4973, %v5085
    %v5151 = vadd.f32 %v4974, %v5088
    %v5152 = vadd.f32 %v4975, %v5091
    %v5153 = vadd.f32 %v4976, %v5094
    %v5154 = vadd.f32 %v4977, %v5097
    %v5155 = vadd.f32 %v4978, %v5100
    %v5156 = vadd.f32 %v4979, %v5103
    %v5157 = vadd.f32 %v4980, %v5106
    %v5158 = vadd.f32 %v4981, %v5109
    %v5159 = vadd.f32 %v4982, %v5112
    %v5160 = vadd.f32 %v4983, %v5115
    %v5161 = vadd.f32 %v4984, %v5118
    %v5162 = vadd.f32 %v4985, %v5121
    %v5163 = vadd.f32 %v4986, %v5124
    %v5164 = vadd.f32 %v4987, %v5127
    %v5165 = vld [vmem:[#allocation2 + $0x190] sm:$0xff]
    %v5166 = vld [vmem:[#allocation2 + $0x1b0] sm:$0xff]
    %v5167 = vld [vmem:[#allocation2 + $0x1d0] sm:$0xff]
    %v5168 = vld [vmem:[#allocation2 + $0x1f0] sm:$0xff]
    %v5169 = vld [vmem:[#allocation2 + $0x210] sm:$0xff]
    %v5170 = vld [vmem:[#allocation2 + $0x230] sm:$0xff]
    %v5171 = vld [vmem:[#allocation2 + $0x250] sm:$0xff]
    %v5172 = vld [vmem:[#allocation2 + $0x270] sm:$0xff]
    %v5173 = vld [vmem:[#allocation2 + $0x290] sm:$0xff]
    %v5174 = vld [vmem:[#allocation2 + $0x2b0] sm:$0xff]
    %v5175 = vld [vmem:[#allocation2 + $0x2d0] sm:$0xff]
    %v5176 = vld [vmem:[#allocation2 + $0x2f0] sm:$0xff]
    %v5177 = vld [vmem:[#allocation2 + $0x310] sm:$0xff]
    %v5178 = vld [vmem:[#allocation2 + $0x330] sm:$0xff]
    %v5179 = vld [vmem:[#allocation2 + $0x350] sm:$0xff]
    %v5180 = vld [vmem:[#allocation2 + $0x370] sm:$0xff]
    %v5181 = vld [vmem:[#allocation2 + $0x390] sm:$0xff]
    %v5182 = vld [vmem:[#allocation2 + $0x3b0] sm:$0xff]
    %v5183 = vld [vmem:[#allocation2 + $0x3d0] sm:$0xff]
    %v5184 = vld [vmem:[#allocation2 + $0x3f0] sm:$0xff]
    %v5185 = vld [vmem:[#allocation2 + $0x410] sm:$0xff]
    %v5186 = vld [vmem:[#allocation2 + $0x430] sm:$0xff]
    %v5187 = vld [vmem:[#allocation2 + $0x450] sm:$0xff]
    %v5188 = vld [vmem:[#allocation2 + $0x470] sm:$0xff]
    %v5189 = vld [vmem:[#allocation2 + $0x490] sm:$0xff]
    %v5190 = vld [vmem:[#allocation2 + $0x4b0] sm:$0xff]
    %v5191 = vld [vmem:[#allocation2 + $0x4d0] sm:$0xff]
    %v5192 = vld [vmem:[#allocation2 + $0x4f0] sm:$0xff]
    %v5193 = vld [vmem:[#allocation2 + $0x510] sm:$0xff]
    %v5194 = vld [vmem:[#allocation2 + $0x530] sm:$0xff]
    %v5195 = vld [vmem:[#allocation2 + $0x550] sm:$0xff]
    %v5196 = vld [vmem:[#allocation2 + $0x570] sm:$0xff]
    %v5197 = vld [vmem:[#allocation2 + $0x590] sm:$0xff]
    %v5198 = vld [vmem:[#allocation2 + $0x5b0] sm:$0xff]
    %v5199 = vld [vmem:[#allocation2 + $0x5d0] sm:$0xff]
    %v5200 = vld [vmem:[#allocation2 + $0x5f0] sm:$0xff]
    %v5201 = vld [vmem:[%s2 + $0x980] sm:$0xff]
    %v5202 = vld [vmem:[%s2 + $0x988] sm:$0xff]
    %v5203 = vld [vmem:[%s2 + $0x990] sm:$0xff]
    %v5204 = vld [vmem:[%s2 + $0x998] sm:$0xff]
    %v5205 = vld [vmem:[%s2 + $0x9a0] sm:$0xff]
    %v5206 = vld [vmem:[%s2 + $0x9a8] sm:$0xff]
    %v5207 = vld [vmem:[%s2 + $0x9b0] sm:$0xff]
    %v5208 = vld [vmem:[%s2 + $0x9b8] sm:$0xff]
    %v5209 = vld [vmem:[%s2 + $0x9c0] sm:$0xff]
    %v5210 = vld [vmem:[%s2 + $0x9c8] sm:$0xff]
    %v5211 = vld [vmem:[%s2 + $0x9d0] sm:$0xff]
    %v5212 = vld [vmem:[%s2 + $0x9d8] sm:$0xff]
    %v5213 = vld [vmem:[%s2 + $0x9e0] sm:$0xff]
    %v5214 = vld [vmem:[%s2 + $0x9e8] sm:$0xff]
    %v5215 = vld [vmem:[%s2 + $0x9f0] sm:$0xff]
    %v5216 = vld [vmem:[%s2 + $0x9f8] sm:$0xff]
    %5217 = vmatpush.msra.mxu0 %v5216
    %5218 = vmatpush.msra.mxu0 %v5215
    %5219 = vmatpush.msra.mxu0 %v5214
    %5220 = vmatpush.msra.mxu0 %v5213
    %5221 = vmatpush.msra.mxu0 %v5212
    %5222 = vmatpush.msra.mxu0 %v5211
    %5223 = vmatpush.msra.mxu0 %v5210
    %5224 = vmatpush.msra.mxu0 %v5209
    %5225 = vmatpush.msra.mxu0 %v5208
    %5226 = vmatpush.msra.mxu0 %v5207
    %5227 = vmatpush.msra.mxu0 %v5206
    %5228 = vmatpush.msra.mxu0 %v5205
    %5229 = vmatpush.msra.mxu0 %v5204
    %5230 = vmatpush.msra.mxu0 %v5203
    %5231 = vmatpush.msra.mxu0 %v5202
    %5232 = vmatpush.msra.mxu0 %v5201
    %5233 = vmatmul.f32.gmra.mxu0 %v5165
    %v5234 = vpop.f32.mrf.mxu0
    %v5235 = vadd.f32 0.0, %v5234
    %5236 = vmatmul.f32.gmra.mxu0 %v5166
    %v5237 = vpop.f32.mrf.mxu0
    %v5238 = vadd.f32 0.0, %v5237
    %5239 = vmatmul.f32.gmra.mxu0 %v5167
    %v5240 = vpop.f32.mrf.mxu0
    %v5241 = vadd.f32 0.0, %v5240
    %5242 = vmatmul.f32.gmra.mxu0 %v5168
    %v5243 = vpop.f32.mrf.mxu0
    %v5244 = vadd.f32 0.0, %v5243
    %5245 = vmatmul.f32.gmra.mxu0 %v5169
    %v5246 = vpop.f32.mrf.mxu0
    %v5247 = vadd.f32 0.0, %v5246
    %5248 = vmatmul.f32.gmra.mxu0 %v5170
    %v5249 = vpop.f32.mrf.mxu0
    %v5250 = vadd.f32 0.0, %v5249
    %5251 = vmatmul.f32.gmra.mxu0 %v5171
    %v5252 = vpop.f32.mrf.mxu0
    %v5253 = vadd.f32 0.0, %v5252
    %5254 = vmatmul.f32.gmra.mxu0 %v5172
    %v5255 = vpop.f32.mrf.mxu0
    %v5256 = vadd.f32 0.0, %v5255
    %5257 = vmatmul.f32.gmra.mxu0 %v5173
    %v5258 = vpop.f32.mrf.mxu0
    %v5259 = vadd.f32 0.0, %v5258
    %5260 = vmatmul.f32.gmra.mxu0 %v5174
    %v5261 = vpop.f32.mrf.mxu0
    %v5262 = vadd.f32 0.0, %v5261
    %5263 = vmatmul.f32.gmra.mxu0 %v5175
    %v5264 = vpop.f32.mrf.mxu0
    %v5265 = vadd.f32 0.0, %v5264
    %5266 = vmatmul.f32.gmra.mxu0 %v5176
    %v5267 = vpop.f32.mrf.mxu0
    %v5268 = vadd.f32 0.0, %v5267
    %5269 = vmatmul.f32.gmra.mxu0 %v5177
    %v5270 = vpop.f32.mrf.mxu0
    %v5271 = vadd.f32 0.0, %v5270
    %5272 = vmatmul.f32.gmra.mxu0 %v5178
    %v5273 = vpop.f32.mrf.mxu0
    %v5274 = vadd.f32 0.0, %v5273
    %5275 = vmatmul.f32.gmra.mxu0 %v5179
    %v5276 = vpop.f32.mrf.mxu0
    %v5277 = vadd.f32 0.0, %v5276
    %5278 = vmatmul.f32.gmra.mxu0 %v5180
    %v5279 = vpop.f32.mrf.mxu0
    %v5280 = vadd.f32 0.0, %v5279
    %5281 = vmatmul.f32.gmra.mxu0 %v5181
    %v5282 = vpop.f32.mrf.mxu0
    %v5283 = vadd.f32 0.0, %v5282
    %5284 = vmatmul.f32.gmra.mxu0 %v5182
    %v5285 = vpop.f32.mrf.mxu0
    %v5286 = vadd.f32 0.0, %v5285
    %5287 = vmatmul.f32.gmra.mxu0 %v5183
    %v5288 = vpop.f32.mrf.mxu0
    %v5289 = vadd.f32 0.0, %v5288
    %5290 = vmatmul.f32.gmra.mxu0 %v5184
    %v5291 = vpop.f32.mrf.mxu0
    %v5292 = vadd.f32 0.0, %v5291
    %5293 = vmatmul.f32.gmra.mxu0 %v5185
    %v5294 = vpop.f32.mrf.mxu0
    %v5295 = vadd.f32 0.0, %v5294
    %5296 = vmatmul.f32.gmra.mxu0 %v5186
    %v5297 = vpop.f32.mrf.mxu0
    %v5298 = vadd.f32 0.0, %v5297
    %5299 = vmatmul.f32.gmra.mxu0 %v5187
    %v5300 = vpop.f32.mrf.mxu0
    %v5301 = vadd.f32 0.0, %v5300
    %5302 = vmatmul.f32.gmra.mxu0 %v5188
    %v5303 = vpop.f32.mrf.mxu0
    %v5304 = vadd.f32 0.0, %v5303
    %5305 = vmatmul.f32.gmra.mxu0 %v5189
    %v5306 = vpop.f32.mrf.mxu0
    %v5307 = vadd.f32 0.0, %v5306
    %5308 = vmatmul.f32.gmra.mxu0 %v5190
    %v5309 = vpop.f32.mrf.mxu0
    %v5310 = vadd.f32 0.0, %v5309
    %5311 = vmatmul.f32.gmra.mxu0 %v5191
    %v5312 = vpop.f32.mrf.mxu0
    %v5313 = vadd.f32 0.0, %v5312
    %5314 = vmatmul.f32.gmra.mxu0 %v5192
    %v5315 = vpop.f32.mrf.mxu0
    %v5316 = vadd.f32 0.0, %v5315
    %5317 = vmatmul.f32.gmra.mxu0 %v5193
    %v5318 = vpop.f32.mrf.mxu0
    %v5319 = vadd.f32 0.0, %v5318
    %5320 = vmatmul.f32.gmra.mxu0 %v5194
    %v5321 = vpop.f32.mrf.mxu0
    %v5322 = vadd.f32 0.0, %v5321
    %5323 = vmatmul.f32.gmra.mxu0 %v5195
    %v5324 = vpop.f32.mrf.mxu0
    %v5325 = vadd.f32 0.0, %v5324
    %5326 = vmatmul.f32.gmra.mxu0 %v5196
    %v5327 = vpop.f32.mrf.mxu0
    %v5328 = vadd.f32 0.0, %v5327
    %5329 = vmatmul.f32.gmra.mxu0 %v5197
    %v5330 = vpop.f32.mrf.mxu0
    %v5331 = vadd.f32 0.0, %v5330
    %5332 = vmatmul.f32.gmra.mxu0 %v5198
    %v5333 = vpop.f32.mrf.mxu0
    %v5334 = vadd.f32 0.0, %v5333
    %5335 = vmatmul.f32.gmra.mxu0 %v5199
    %v5336 = vpop.f32.mrf.mxu0
    %v5337 = vadd.f32 0.0, %v5336
    %5338 = vmatmul.f32.gmra.mxu0 %v5200
    %v5339 = vpop.f32.mrf.mxu0
    %v5340 = vadd.f32 0.0, %v5339
    %5341 = vdwg.mxu0
    %v5342 = vadd.f32 %v5129, %v5235
    %v5343 = vadd.f32 %v5130, %v5238
    %v5344 = vadd.f32 %v5131, %v5241
    %v5345 = vadd.f32 %v5132, %v5244
    %v5346 = vadd.f32 %v5133, %v5247
    %v5347 = vadd.f32 %v5134, %v5250
    %v5348 = vadd.f32 %v5135, %v5253
    %v5349 = vadd.f32 %v5136, %v5256
    %v5350 = vadd.f32 %v5137, %v5259
    %v5351 = vadd.f32 %v5138, %v5262
    %v5352 = vadd.f32 %v5139, %v5265
    %v5353 = vadd.f32 %v5140, %v5268
    %v5354 = vadd.f32 %v5141, %v5271
    %v5355 = vadd.f32 %v5142, %v5274
    %v5356 = vadd.f32 %v5143, %v5277
    %v5357 = vadd.f32 %v5144, %v5280
    %v5358 = vadd.f32 %v5145, %v5283
    %v5359 = vadd.f32 %v5146, %v5286
    %v5360 = vadd.f32 %v5147, %v5289
    %v5361 = vadd.f32 %v5148, %v5292
    %v5362 = vadd.f32 %v5149, %v5295
    %v5363 = vadd.f32 %v5150, %v5298
    %v5364 = vadd.f32 %v5151, %v5301
    %v5365 = vadd.f32 %v5152, %v5304
    %v5366 = vadd.f32 %v5153, %v5307
    %v5367 = vadd.f32 %v5154, %v5310
    %v5368 = vadd.f32 %v5155, %v5313
    %v5369 = vadd.f32 %v5156, %v5316
    %v5370 = vadd.f32 %v5157, %v5319
    %v5371 = vadd.f32 %v5158, %v5322
    %v5372 = vadd.f32 %v5159, %v5325
    %v5373 = vadd.f32 %v5160, %v5328
    %v5374 = vadd.f32 %v5161, %v5331
    %v5375 = vadd.f32 %v5162, %v5334
    %v5376 = vadd.f32 %v5163, %v5337
    %v5377 = vadd.f32 %v5164, %v5340
    %v5378 = vld [vmem:[#allocation2 + $0x198] sm:$0xff]
    %v5379 = vld [vmem:[#allocation2 + $0x1b8] sm:$0xff]
    %v5380 = vld [vmem:[#allocation2 + $0x1d8] sm:$0xff]
    %v5381 = vld [vmem:[#allocation2 + $0x1f8] sm:$0xff]
    %v5382 = vld [vmem:[#allocation2 + $0x218] sm:$0xff]
    %v5383 = vld [vmem:[#allocation2 + $0x238] sm:$0xff]
    %v5384 = vld [vmem:[#allocation2 + $0x258] sm:$0xff]
    %v5385 = vld [vmem:[#allocation2 + $0x278] sm:$0xff]
    %v5386 = vld [vmem:[#allocation2 + $0x298] sm:$0xff]
    %v5387 = vld [vmem:[#allocation2 + $0x2b8] sm:$0xff]
    %v5388 = vld [vmem:[#allocation2 + $0x2d8] sm:$0xff]
    %v5389 = vld [vmem:[#allocation2 + $0x2f8] sm:$0xff]
    %v5390 = vld [vmem:[#allocation2 + $0x318] sm:$0xff]
    %v5391 = vld [vmem:[#allocation2 + $0x338] sm:$0xff]
    %v5392 = vld [vmem:[#allocation2 + $0x358] sm:$0xff]
    %v5393 = vld [vmem:[#allocation2 + $0x378] sm:$0xff]
    %v5394 = vld [vmem:[#allocation2 + $0x398] sm:$0xff]
    %v5395 = vld [vmem:[#allocation2 + $0x3b8] sm:$0xff]
    %v5396 = vld [vmem:[#allocation2 + $0x3d8] sm:$0xff]
    %v5397 = vld [vmem:[#allocation2 + $0x3f8] sm:$0xff]
    %v5398 = vld [vmem:[#allocation2 + $0x418] sm:$0xff]
    %v5399 = vld [vmem:[#allocation2 + $0x438] sm:$0xff]
    %v5400 = vld [vmem:[#allocation2 + $0x458] sm:$0xff]
    %v5401 = vld [vmem:[#allocation2 + $0x478] sm:$0xff]
    %v5402 = vld [vmem:[#allocation2 + $0x498] sm:$0xff]
    %v5403 = vld [vmem:[#allocation2 + $0x4b8] sm:$0xff]
    %v5404 = vld [vmem:[#allocation2 + $0x4d8] sm:$0xff]
    %v5405 = vld [vmem:[#allocation2 + $0x4f8] sm:$0xff]
    %v5406 = vld [vmem:[#allocation2 + $0x518] sm:$0xff]
    %v5407 = vld [vmem:[#allocation2 + $0x538] sm:$0xff]
    %v5408 = vld [vmem:[#allocation2 + $0x558] sm:$0xff]
    %v5409 = vld [vmem:[#allocation2 + $0x578] sm:$0xff]
    %v5410 = vld [vmem:[#allocation2 + $0x598] sm:$0xff]
    %v5411 = vld [vmem:[#allocation2 + $0x5b8] sm:$0xff]
    %v5412 = vld [vmem:[#allocation2 + $0x5d8] sm:$0xff]
    %v5413 = vld [vmem:[#allocation2 + $0x5f8] sm:$0xff]
    %v5414 = vld [vmem:[%s2 + $0xa00] sm:$0xff]
    %v5415 = vld [vmem:[%s2 + $0xa08] sm:$0xff]
    %v5416 = vld [vmem:[%s2 + $0xa10] sm:$0xff]
    %v5417 = vld [vmem:[%s2 + $0xa18] sm:$0xff]
    %v5418 = vld [vmem:[%s2 + $0xa20] sm:$0xff]
    %v5419 = vld [vmem:[%s2 + $0xa28] sm:$0xff]
    %v5420 = vld [vmem:[%s2 + $0xa30] sm:$0xff]
    %v5421 = vld [vmem:[%s2 + $0xa38] sm:$0xff]
    %v5422 = vld [vmem:[%s2 + $0xa40] sm:$0xff]
    %v5423 = vld [vmem:[%s2 + $0xa48] sm:$0xff]
    %v5424 = vld [vmem:[%s2 + $0xa50] sm:$0xff]
    %v5425 = vld [vmem:[%s2 + $0xa58] sm:$0xff]
    %v5426 = vld [vmem:[%s2 + $0xa60] sm:$0xff]
    %v5427 = vld [vmem:[%s2 + $0xa68] sm:$0xff]
    %v5428 = vld [vmem:[%s2 + $0xa70] sm:$0xff]
    %v5429 = vld [vmem:[%s2 + $0xa78] sm:$0xff]
    %5430 = vmatpush.msra.mxu0 %v5429
    %5431 = vmatpush.msra.mxu0 %v5428
    %5432 = vmatpush.msra.mxu0 %v5427
    %5433 = vmatpush.msra.mxu0 %v5426
    %5434 = vmatpush.msra.mxu0 %v5425
    %5435 = vmatpush.msra.mxu0 %v5424
    %5436 = vmatpush.msra.mxu0 %v5423
    %5437 = vmatpush.msra.mxu0 %v5422
    %5438 = vmatpush.msra.mxu0 %v5421
    %5439 = vmatpush.msra.mxu0 %v5420
    %5440 = vmatpush.msra.mxu0 %v5419
    %5441 = vmatpush.msra.mxu0 %v5418
    %5442 = vmatpush.msra.mxu0 %v5417
    %5443 = vmatpush.msra.mxu0 %v5416
    %5444 = vmatpush.msra.mxu0 %v5415
    %5445 = vmatpush.msra.mxu0 %v5414
    %5446 = vmatmul.f32.gmra.mxu0 %v5378
    %v5447 = vpop.f32.mrf.mxu0
    %v5448 = vadd.f32 0.0, %v5447
    %5449 = vmatmul.f32.gmra.mxu0 %v5379
    %v5450 = vpop.f32.mrf.mxu0
    %v5451 = vadd.f32 0.0, %v5450
    %5452 = vmatmul.f32.gmra.mxu0 %v5380
    %v5453 = vpop.f32.mrf.mxu0
    %v5454 = vadd.f32 0.0, %v5453
    %5455 = vmatmul.f32.gmra.mxu0 %v5381
    %v5456 = vpop.f32.mrf.mxu0
    %v5457 = vadd.f32 0.0, %v5456
    %5458 = vmatmul.f32.gmra.mxu0 %v5382
    %v5459 = vpop.f32.mrf.mxu0
    %v5460 = vadd.f32 0.0, %v5459
    %5461 = vmatmul.f32.gmra.mxu0 %v5383
    %v5462 = vpop.f32.mrf.mxu0
    %v5463 = vadd.f32 0.0, %v5462
    %5464 = vmatmul.f32.gmra.mxu0 %v5384
    %v5465 = vpop.f32.mrf.mxu0
    %v5466 = vadd.f32 0.0, %v5465
    %5467 = vmatmul.f32.gmra.mxu0 %v5385
    %v5468 = vpop.f32.mrf.mxu0
    %v5469 = vadd.f32 0.0, %v5468
    %5470 = vmatmul.f32.gmra.mxu0 %v5386
    %v5471 = vpop.f32.mrf.mxu0
    %v5472 = vadd.f32 0.0, %v5471
    %5473 = vmatmul.f32.gmra.mxu0 %v5387
    %v5474 = vpop.f32.mrf.mxu0
    %v5475 = vadd.f32 0.0, %v5474
    %5476 = vmatmul.f32.gmra.mxu0 %v5388
    %v5477 = vpop.f32.mrf.mxu0
    %v5478 = vadd.f32 0.0, %v5477
    %5479 = vmatmul.f32.gmra.mxu0 %v5389
    %v5480 = vpop.f32.mrf.mxu0
    %v5481 = vadd.f32 0.0, %v5480
    %5482 = vmatmul.f32.gmra.mxu0 %v5390
    %v5483 = vpop.f32.mrf.mxu0
    %v5484 = vadd.f32 0.0, %v5483
    %5485 = vmatmul.f32.gmra.mxu0 %v5391
    %v5486 = vpop.f32.mrf.mxu0
    %v5487 = vadd.f32 0.0, %v5486
    %5488 = vmatmul.f32.gmra.mxu0 %v5392
    %v5489 = vpop.f32.mrf.mxu0
    %v5490 = vadd.f32 0.0, %v5489
    %5491 = vmatmul.f32.gmra.mxu0 %v5393
    %v5492 = vpop.f32.mrf.mxu0
    %v5493 = vadd.f32 0.0, %v5492
    %5494 = vmatmul.f32.gmra.mxu0 %v5394
    %v5495 = vpop.f32.mrf.mxu0
    %v5496 = vadd.f32 0.0, %v5495
    %5497 = vmatmul.f32.gmra.mxu0 %v5395
    %v5498 = vpop.f32.mrf.mxu0
    %v5499 = vadd.f32 0.0, %v5498
    %5500 = vmatmul.f32.gmra.mxu0 %v5396
    %v5501 = vpop.f32.mrf.mxu0
    %v5502 = vadd.f32 0.0, %v5501
    %5503 = vmatmul.f32.gmra.mxu0 %v5397
    %v5504 = vpop.f32.mrf.mxu0
    %v5505 = vadd.f32 0.0, %v5504
    %5506 = vmatmul.f32.gmra.mxu0 %v5398
    %v5507 = vpop.f32.mrf.mxu0
    %v5508 = vadd.f32 0.0, %v5507
    %5509 = vmatmul.f32.gmra.mxu0 %v5399
    %v5510 = vpop.f32.mrf.mxu0
    %v5511 = vadd.f32 0.0, %v5510
    %5512 = vmatmul.f32.gmra.mxu0 %v5400
    %v5513 = vpop.f32.mrf.mxu0
    %v5514 = vadd.f32 0.0, %v5513
    %5515 = vmatmul.f32.gmra.mxu0 %v5401
    %v5516 = vpop.f32.mrf.mxu0
    %v5517 = vadd.f32 0.0, %v5516
    %5518 = vmatmul.f32.gmra.mxu0 %v5402
    %v5519 = vpop.f32.mrf.mxu0
    %v5520 = vadd.f32 0.0, %v5519
    %5521 = vmatmul.f32.gmra.mxu0 %v5403
    %v5522 = vpop.f32.mrf.mxu0
    %v5523 = vadd.f32 0.0, %v5522
    %5524 = vmatmul.f32.gmra.mxu0 %v5404
    %v5525 = vpop.f32.mrf.mxu0
    %v5526 = vadd.f32 0.0, %v5525
    %5527 = vmatmul.f32.gmra.mxu0 %v5405
    %v5528 = vpop.f32.mrf.mxu0
    %v5529 = vadd.f32 0.0, %v5528
    %5530 = vmatmul.f32.gmra.mxu0 %v5406
    %v5531 = vpop.f32.mrf.mxu0
    %v5532 = vadd.f32 0.0, %v5531
    %5533 = vmatmul.f32.gmra.mxu0 %v5407
    %v5534 = vpop.f32.mrf.mxu0
    %v5535 = vadd.f32 0.0, %v5534
    %5536 = vmatmul.f32.gmra.mxu0 %v5408
    %v5537 = vpop.f32.mrf.mxu0
    %v5538 = vadd.f32 0.0, %v5537
    %5539 = vmatmul.f32.gmra.mxu0 %v5409
    %v5540 = vpop.f32.mrf.mxu0
    %v5541 = vadd.f32 0.0, %v5540
    %5542 = vmatmul.f32.gmra.mxu0 %v5410
    %v5543 = vpop.f32.mrf.mxu0
    %v5544 = vadd.f32 0.0, %v5543
    %5545 = vmatmul.f32.gmra.mxu0 %v5411
    %v5546 = vpop.f32.mrf.mxu0
    %v5547 = vadd.f32 0.0, %v5546
    %5548 = vmatmul.f32.gmra.mxu0 %v5412
    %v5549 = vpop.f32.mrf.mxu0
    %v5550 = vadd.f32 0.0, %v5549
    %5551 = vmatmul.f32.gmra.mxu0 %v5413
    %v5552 = vpop.f32.mrf.mxu0
    %v5553 = vadd.f32 0.0, %v5552
    %5554 = vdwg.mxu0
    %v5555 = vadd.f32 %v5342, %v5448
    %v5556 = vadd.f32 %v5343, %v5451
    %v5557 = vadd.f32 %v5344, %v5454
    %v5558 = vadd.f32 %v5345, %v5457
    %v5559 = vadd.f32 %v5346, %v5460
    %v5560 = vadd.f32 %v5347, %v5463
    %v5561 = vadd.f32 %v5348, %v5466
    %v5562 = vadd.f32 %v5349, %v5469
    %v5563 = vadd.f32 %v5350, %v5472
    %v5564 = vadd.f32 %v5351, %v5475
    %v5565 = vadd.f32 %v5352, %v5478
    %v5566 = vadd.f32 %v5353, %v5481
    %v5567 = vadd.f32 %v5354, %v5484
    %v5568 = vadd.f32 %v5355, %v5487
    %v5569 = vadd.f32 %v5356, %v5490
    %v5570 = vadd.f32 %v5357, %v5493
    %v5571 = vadd.f32 %v5358, %v5496
    %v5572 = vadd.f32 %v5359, %v5499
    %v5573 = vadd.f32 %v5360, %v5502
    %v5574 = vadd.f32 %v5361, %v5505
    %v5575 = vadd.f32 %v5362, %v5508
    %v5576 = vadd.f32 %v5363, %v5511
    %v5577 = vadd.f32 %v5364, %v5514
    %v5578 = vadd.f32 %v5365, %v5517
    %v5579 = vadd.f32 %v5366, %v5520
    %v5580 = vadd.f32 %v5367, %v5523
    %v5581 = vadd.f32 %v5368, %v5526
    %v5582 = vadd.f32 %v5369, %v5529
    %v5583 = vadd.f32 %v5370, %v5532
    %v5584 = vadd.f32 %v5371, %v5535
    %v5585 = vadd.f32 %v5372, %v5538
    %v5586 = vadd.f32 %v5373, %v5541
    %v5587 = vadd.f32 %v5374, %v5544
    %v5588 = vadd.f32 %v5375, %v5547
    %v5589 = vadd.f32 %v5376, %v5550
    %v5590 = vadd.f32 %v5377, %v5553
    %v5591 = vld [vmem:[#allocation2 + $0x1a0] sm:$0xff]
    %v5592 = vld [vmem:[#allocation2 + $0x1c0] sm:$0xff]
    %v5593 = vld [vmem:[#allocation2 + $0x1e0] sm:$0xff]
    %v5594 = vld [vmem:[#allocation2 + $0x200] sm:$0xff]
    %v5595 = vld [vmem:[#allocation2 + $0x220] sm:$0xff]
    %v5596 = vld [vmem:[#allocation2 + $0x240] sm:$0xff]
    %v5597 = vld [vmem:[#allocation2 + $0x260] sm:$0xff]
    %v5598 = vld [vmem:[#allocation2 + $0x280] sm:$0xff]
    %v5599 = vld [vmem:[#allocation2 + $0x2a0] sm:$0xff]
    %v5600 = vld [vmem:[#allocation2 + $0x2c0] sm:$0xff]
    %v5601 = vld [vmem:[#allocation2 + $0x2e0] sm:$0xff]
    %v5602 = vld [vmem:[#allocation2 + $0x300] sm:$0xff]
    %v5603 = vld [vmem:[#allocation2 + $0x320] sm:$0xff]
    %v5604 = vld [vmem:[#allocation2 + $0x340] sm:$0xff]
    %v5605 = vld [vmem:[#allocation2 + $0x360] sm:$0xff]
    %v5606 = vld [vmem:[#allocation2 + $0x380] sm:$0xff]
    %v5607 = vld [vmem:[#allocation2 + $0x3a0] sm:$0xff]
    %v5608 = vld [vmem:[#allocation2 + $0x3c0] sm:$0xff]
    %v5609 = vld [vmem:[#allocation2 + $0x3e0] sm:$0xff]
    %v5610 = vld [vmem:[#allocation2 + $0x400] sm:$0xff]
    %v5611 = vld [vmem:[#allocation2 + $0x420] sm:$0xff]
    %v5612 = vld [vmem:[#allocation2 + $0x440] sm:$0xff]
    %v5613 = vld [vmem:[#allocation2 + $0x460] sm:$0xff]
    %v5614 = vld [vmem:[#allocation2 + $0x480] sm:$0xff]
    %v5615 = vld [vmem:[#allocation2 + $0x4a0] sm:$0xff]
    %v5616 = vld [vmem:[#allocation2 + $0x4c0] sm:$0xff]
    %v5617 = vld [vmem:[#allocation2 + $0x4e0] sm:$0xff]
    %v5618 = vld [vmem:[#allocation2 + $0x500] sm:$0xff]
    %v5619 = vld [vmem:[#allocation2 + $0x520] sm:$0xff]
    %v5620 = vld [vmem:[#allocation2 + $0x540] sm:$0xff]
    %v5621 = vld [vmem:[#allocation2 + $0x560] sm:$0xff]
    %v5622 = vld [vmem:[#allocation2 + $0x580] sm:$0xff]
    %v5623 = vld [vmem:[#allocation2 + $0x5a0] sm:$0xff]
    %v5624 = vld [vmem:[#allocation2 + $0x5c0] sm:$0xff]
    %v5625 = vld [vmem:[#allocation2 + $0x5e0] sm:$0xff]
    %v5626 = vld [vmem:[#allocation2 + $0x600] sm:$0xff]
    %v5627 = vld [vmem:[%s2 + $0xa80] sm:$0xff]
    %v5628 = vld [vmem:[%s2 + $0xa88] sm:$0xff]
    %v5629 = vld [vmem:[%s2 + $0xa90] sm:$0xff]
    %v5630 = vld [vmem:[%s2 + $0xa98] sm:$0xff]
    %v5631 = vld [vmem:[%s2 + $0xaa0] sm:$0xff]
    %v5632 = vld [vmem:[%s2 + $0xaa8] sm:$0xff]
    %v5633 = vld [vmem:[%s2 + $0xab0] sm:$0xff]
    %v5634 = vld [vmem:[%s2 + $0xab8] sm:$0xff]
    %v5635 = vld [vmem:[%s2 + $0xac0] sm:$0xff]
    %v5636 = vld [vmem:[%s2 + $0xac8] sm:$0xff]
    %v5637 = vld [vmem:[%s2 + $0xad0] sm:$0xff]
    %v5638 = vld [vmem:[%s2 + $0xad8] sm:$0xff]
    %v5639 = vld [vmem:[%s2 + $0xae0] sm:$0xff]
    %v5640 = vld [vmem:[%s2 + $0xae8] sm:$0xff]
    %v5641 = vld [vmem:[%s2 + $0xaf0] sm:$0xff]
    %v5642 = vld [vmem:[%s2 + $0xaf8] sm:$0xff]
    %5643 = vmatpush.msra.mxu0 %v5642
    %5644 = vmatpush.msra.mxu0 %v5641
    %5645 = vmatpush.msra.mxu0 %v5640
    %5646 = vmatpush.msra.mxu0 %v5639
    %5647 = vmatpush.msra.mxu0 %v5638
    %5648 = vmatpush.msra.mxu0 %v5637
    %5649 = vmatpush.msra.mxu0 %v5636
    %5650 = vmatpush.msra.mxu0 %v5635
    %5651 = vmatpush.msra.mxu0 %v5634
    %5652 = vmatpush.msra.mxu0 %v5633
    %5653 = vmatpush.msra.mxu0 %v5632
    %5654 = vmatpush.msra.mxu0 %v5631
    %5655 = vmatpush.msra.mxu0 %v5630
    %5656 = vmatpush.msra.mxu0 %v5629
    %5657 = vmatpush.msra.mxu0 %v5628
    %5658 = vmatpush.msra.mxu0 %v5627
    %5659 = vmatmul.f32.gmra.mxu0 %v5591
    %v5660 = vpop.f32.mrf.mxu0
    %v5661 = vadd.f32 0.0, %v5660
    %5662 = vmatmul.f32.gmra.mxu0 %v5592
    %v5663 = vpop.f32.mrf.mxu0
    %v5664 = vadd.f32 0.0, %v5663
    %5665 = vmatmul.f32.gmra.mxu0 %v5593
    %v5666 = vpop.f32.mrf.mxu0
    %v5667 = vadd.f32 0.0, %v5666
    %5668 = vmatmul.f32.gmra.mxu0 %v5594
    %v5669 = vpop.f32.mrf.mxu0
    %v5670 = vadd.f32 0.0, %v5669
    %5671 = vmatmul.f32.gmra.mxu0 %v5595
    %v5672 = vpop.f32.mrf.mxu0
    %v5673 = vadd.f32 0.0, %v5672
    %5674 = vmatmul.f32.gmra.mxu0 %v5596
    %v5675 = vpop.f32.mrf.mxu0
    %v5676 = vadd.f32 0.0, %v5675
    %5677 = vmatmul.f32.gmra.mxu0 %v5597
    %v5678 = vpop.f32.mrf.mxu0
    %v5679 = vadd.f32 0.0, %v5678
    %5680 = vmatmul.f32.gmra.mxu0 %v5598
    %v5681 = vpop.f32.mrf.mxu0
    %v5682 = vadd.f32 0.0, %v5681
    %5683 = vmatmul.f32.gmra.mxu0 %v5599
    %v5684 = vpop.f32.mrf.mxu0
    %v5685 = vadd.f32 0.0, %v5684
    %5686 = vmatmul.f32.gmra.mxu0 %v5600
    %v5687 = vpop.f32.mrf.mxu0
    %v5688 = vadd.f32 0.0, %v5687
    %5689 = vmatmul.f32.gmra.mxu0 %v5601
    %v5690 = vpop.f32.mrf.mxu0
    %v5691 = vadd.f32 0.0, %v5690
    %5692 = vmatmul.f32.gmra.mxu0 %v5602
    %v5693 = vpop.f32.mrf.mxu0
    %v5694 = vadd.f32 0.0, %v5693
    %5695 = vmatmul.f32.gmra.mxu0 %v5603
    %v5696 = vpop.f32.mrf.mxu0
    %v5697 = vadd.f32 0.0, %v5696
    %5698 = vmatmul.f32.gmra.mxu0 %v5604
    %v5699 = vpop.f32.mrf.mxu0
    %v5700 = vadd.f32 0.0, %v5699
    %5701 = vmatmul.f32.gmra.mxu0 %v5605
    %v5702 = vpop.f32.mrf.mxu0
    %v5703 = vadd.f32 0.0, %v5702
    %5704 = vmatmul.f32.gmra.mxu0 %v5606
    %v5705 = vpop.f32.mrf.mxu0
    %v5706 = vadd.f32 0.0, %v5705
    %5707 = vmatmul.f32.gmra.mxu0 %v5607
    %v5708 = vpop.f32.mrf.mxu0
    %v5709 = vadd.f32 0.0, %v5708
    %5710 = vmatmul.f32.gmra.mxu0 %v5608
    %v5711 = vpop.f32.mrf.mxu0
    %v5712 = vadd.f32 0.0, %v5711
    %5713 = vmatmul.f32.gmra.mxu0 %v5609
    %v5714 = vpop.f32.mrf.mxu0
    %v5715 = vadd.f32 0.0, %v5714
    %5716 = vmatmul.f32.gmra.mxu0 %v5610
    %v5717 = vpop.f32.mrf.mxu0
    %v5718 = vadd.f32 0.0, %v5717
    %5719 = vmatmul.f32.gmra.mxu0 %v5611
    %v5720 = vpop.f32.mrf.mxu0
    %v5721 = vadd.f32 0.0, %v5720
    %5722 = vmatmul.f32.gmra.mxu0 %v5612
    %v5723 = vpop.f32.mrf.mxu0
    %v5724 = vadd.f32 0.0, %v5723
    %5725 = vmatmul.f32.gmra.mxu0 %v5613
    %v5726 = vpop.f32.mrf.mxu0
    %v5727 = vadd.f32 0.0, %v5726
    %5728 = vmatmul.f32.gmra.mxu0 %v5614
    %v5729 = vpop.f32.mrf.mxu0
    %v5730 = vadd.f32 0.0, %v5729
    %5731 = vmatmul.f32.gmra.mxu0 %v5615
    %v5732 = vpop.f32.mrf.mxu0
    %v5733 = vadd.f32 0.0, %v5732
    %5734 = vmatmul.f32.gmra.mxu0 %v5616
    %v5735 = vpop.f32.mrf.mxu0
    %v5736 = vadd.f32 0.0, %v5735
    %5737 = vmatmul.f32.gmra.mxu0 %v5617
    %v5738 = vpop.f32.mrf.mxu0
    %v5739 = vadd.f32 0.0, %v5738
    %5740 = vmatmul.f32.gmra.mxu0 %v5618
    %v5741 = vpop.f32.mrf.mxu0
    %v5742 = vadd.f32 0.0, %v5741
    %5743 = vmatmul.f32.gmra.mxu0 %v5619
    %v5744 = vpop.f32.mrf.mxu0
    %v5745 = vadd.f32 0.0, %v5744
    %5746 = vmatmul.f32.gmra.mxu0 %v5620
    %v5747 = vpop.f32.mrf.mxu0
    %v5748 = vadd.f32 0.0, %v5747
    %5749 = vmatmul.f32.gmra.mxu0 %v5621
    %v5750 = vpop.f32.mrf.mxu0
    %v5751 = vadd.f32 0.0, %v5750
    %5752 = vmatmul.f32.gmra.mxu0 %v5622
    %v5753 = vpop.f32.mrf.mxu0
    %v5754 = vadd.f32 0.0, %v5753
    %5755 = vmatmul.f32.gmra.mxu0 %v5623
    %v5756 = vpop.f32.mrf.mxu0
    %v5757 = vadd.f32 0.0, %v5756
    %5758 = vmatmul.f32.gmra.mxu0 %v5624
    %v5759 = vpop.f32.mrf.mxu0
    %v5760 = vadd.f32 0.0, %v5759
    %5761 = vmatmul.f32.gmra.mxu0 %v5625
    %v5762 = vpop.f32.mrf.mxu0
    %v5763 = vadd.f32 0.0, %v5762
    %5764 = vmatmul.f32.gmra.mxu0 %v5626
    %v5765 = vpop.f32.mrf.mxu0
    %v5766 = vadd.f32 0.0, %v5765
    %5767 = vdwg.mxu0
    %v5768 = vadd.f32 %v5555, %v5661
    %v5769 = vadd.f32 %v5556, %v5664
    %v5770 = vadd.f32 %v5557, %v5667
    %v5771 = vadd.f32 %v5558, %v5670
    %v5772 = vadd.f32 %v5559, %v5673
    %v5773 = vadd.f32 %v5560, %v5676
    %v5774 = vadd.f32 %v5561, %v5679
    %v5775 = vadd.f32 %v5562, %v5682
    %v5776 = vadd.f32 %v5563, %v5685
    %v5777 = vadd.f32 %v5564, %v5688
    %v5778 = vadd.f32 %v5565, %v5691
    %v5779 = vadd.f32 %v5566, %v5694
    %v5780 = vadd.f32 %v5567, %v5697
    %v5781 = vadd.f32 %v5568, %v5700
    %v5782 = vadd.f32 %v5569, %v5703
    %v5783 = vadd.f32 %v5570, %v5706
    %v5784 = vadd.f32 %v5571, %v5709
    %v5785 = vadd.f32 %v5572, %v5712
    %v5786 = vadd.f32 %v5573, %v5715
    %v5787 = vadd.f32 %v5574, %v5718
    %v5788 = vadd.f32 %v5575, %v5721
    %v5789 = vadd.f32 %v5576, %v5724
    %v5790 = vadd.f32 %v5577, %v5727
    %v5791 = vadd.f32 %v5578, %v5730
    %v5792 = vadd.f32 %v5579, %v5733
    %v5793 = vadd.f32 %v5580, %v5736
    %v5794 = vadd.f32 %v5581, %v5739
    %v5795 = vadd.f32 %v5582, %v5742
    %v5796 = vadd.f32 %v5583, %v5745
    %v5797 = vadd.f32 %v5584, %v5748
    %v5798 = vadd.f32 %v5585, %v5751
    %v5799 = vadd.f32 %v5586, %v5754
    %v5800 = vadd.f32 %v5587, %v5757
    %v5801 = vadd.f32 %v5588, %v5760
    %v5802 = vadd.f32 %v5589, %v5763
    %v5803 = vadd.f32 %v5590, %v5766
    %v5804 = vld [vmem:[#allocation2 + $0x1a8] sm:$0xff]
    %v5805 = vld [vmem:[#allocation2 + $0x1c8] sm:$0xff]
    %v5806 = vld [vmem:[#allocation2 + $0x1e8] sm:$0xff]
    %v5807 = vld [vmem:[#allocation2 + $0x208] sm:$0xff]
    %v5808 = vld [vmem:[#allocation2 + $0x228] sm:$0xff]
    %v5809 = vld [vmem:[#allocation2 + $0x248] sm:$0xff]
    %v5810 = vld [vmem:[#allocation2 + $0x268] sm:$0xff]
    %v5811 = vld [vmem:[#allocation2 + $0x288] sm:$0xff]
    %v5812 = vld [vmem:[#allocation2 + $0x2a8] sm:$0xff]
    %v5813 = vld [vmem:[#allocation2 + $0x2c8] sm:$0xff]
    %v5814 = vld [vmem:[#allocation2 + $0x2e8] sm:$0xff]
    %v5815 = vld [vmem:[#allocation2 + $0x308] sm:$0xff]
    %v5816 = vld [vmem:[#allocation2 + $0x328] sm:$0xff]
    %v5817 = vld [vmem:[#allocation2 + $0x348] sm:$0xff]
    %v5818 = vld [vmem:[#allocation2 + $0x368] sm:$0xff]
    %v5819 = vld [vmem:[#allocation2 + $0x388] sm:$0xff]
    %v5820 = vld [vmem:[#allocation2 + $0x3a8] sm:$0xff]
    %v5821 = vld [vmem:[#allocation2 + $0x3c8] sm:$0xff]
    %v5822 = vld [vmem:[#allocation2 + $0x3e8] sm:$0xff]
    %v5823 = vld [vmem:[#allocation2 + $0x408] sm:$0xff]
    %v5824 = vld [vmem:[#allocation2 + $0x428] sm:$0xff]
    %v5825 = vld [vmem:[#allocation2 + $0x448] sm:$0xff]
    %v5826 = vld [vmem:[#allocation2 + $0x468] sm:$0xff]
    %v5827 = vld [vmem:[#allocation2 + $0x488] sm:$0xff]
    %v5828 = vld [vmem:[#allocation2 + $0x4a8] sm:$0xff]
    %v5829 = vld [vmem:[#allocation2 + $0x4c8] sm:$0xff]
    %v5830 = vld [vmem:[#allocation2 + $0x4e8] sm:$0xff]
    %v5831 = vld [vmem:[#allocation2 + $0x508] sm:$0xff]
    %v5832 = vld [vmem:[#allocation2 + $0x528] sm:$0xff]
    %v5833 = vld [vmem:[#allocation2 + $0x548] sm:$0xff]
    %v5834 = vld [vmem:[#allocation2 + $0x568] sm:$0xff]
    %v5835 = vld [vmem:[#allocation2 + $0x588] sm:$0xff]
    %v5836 = vld [vmem:[#allocation2 + $0x5a8] sm:$0xff]
    %v5837 = vld [vmem:[#allocation2 + $0x5c8] sm:$0xff]
    %v5838 = vld [vmem:[#allocation2 + $0x5e8] sm:$0xff]
    %v5839 = vld [vmem:[#allocation2 + $0x608] sm:$0xff]
    %v5840 = vld [vmem:[%s2 + $0xb00] sm:$0xff]
    %v5841 = vld [vmem:[%s2 + $0xb08] sm:$0xff]
    %v5842 = vld [vmem:[%s2 + $0xb10] sm:$0xff]
    %v5843 = vld [vmem:[%s2 + $0xb18] sm:$0xff]
    %v5844 = vld [vmem:[%s2 + $0xb20] sm:$0xff]
    %v5845 = vld [vmem:[%s2 + $0xb28] sm:$0xff]
    %v5846 = vld [vmem:[%s2 + $0xb30] sm:$0xff]
    %v5847 = vld [vmem:[%s2 + $0xb38] sm:$0xff]
    %v5848 = vld [vmem:[%s2 + $0xb40] sm:$0xff]
    %v5849 = vld [vmem:[%s2 + $0xb48] sm:$0xff]
    %v5850 = vld [vmem:[%s2 + $0xb50] sm:$0xff]
    %v5851 = vld [vmem:[%s2 + $0xb58] sm:$0xff]
    %v5852 = vld [vmem:[%s2 + $0xb60] sm:$0xff]
    %v5853 = vld [vmem:[%s2 + $0xb68] sm:$0xff]
    %v5854 = vld [vmem:[%s2 + $0xb70] sm:$0xff]
    %v5855 = vld [vmem:[%s2 + $0xb78] sm:$0xff]
    %5856 = vmatpush.msra.mxu0 %v5855
    %5857 = vmatpush.msra.mxu0 %v5854
    %5858 = vmatpush.msra.mxu0 %v5853
    %5859 = vmatpush.msra.mxu0 %v5852
    %5860 = vmatpush.msra.mxu0 %v5851
    %5861 = vmatpush.msra.mxu0 %v5850
    %5862 = vmatpush.msra.mxu0 %v5849
    %5863 = vmatpush.msra.mxu0 %v5848
    %5864 = vmatpush.msra.mxu0 %v5847
    %5865 = vmatpush.msra.mxu0 %v5846
    %5866 = vmatpush.msra.mxu0 %v5845
    %5867 = vmatpush.msra.mxu0 %v5844
    %5868 = vmatpush.msra.mxu0 %v5843
    %5869 = vmatpush.msra.mxu0 %v5842
    %5870 = vmatpush.msra.mxu0 %v5841
    %5871 = vmatpush.msra.mxu0 %v5840
    %5872 = vmatmul.f32.gmra.mxu0 %v5804
    %v5873 = vpop.f32.mrf.mxu0
    %v5874 = vadd.f32 0.0, %v5873
    %5875 = vmatmul.f32.gmra.mxu0 %v5805
    %v5876 = vpop.f32.mrf.mxu0
    %v5877 = vadd.f32 0.0, %v5876
    %5878 = vmatmul.f32.gmra.mxu0 %v5806
    %v5879 = vpop.f32.mrf.mxu0
    %v5880 = vadd.f32 0.0, %v5879
    %5881 = vmatmul.f32.gmra.mxu0 %v5807
    %v5882 = vpop.f32.mrf.mxu0
    %v5883 = vadd.f32 0.0, %v5882
    %5884 = vmatmul.f32.gmra.mxu0 %v5808
    %v5885 = vpop.f32.mrf.mxu0
    %v5886 = vadd.f32 0.0, %v5885
    %5887 = vmatmul.f32.gmra.mxu0 %v5809
    %v5888 = vpop.f32.mrf.mxu0
    %v5889 = vadd.f32 0.0, %v5888
    %5890 = vmatmul.f32.gmra.mxu0 %v5810
    %v5891 = vpop.f32.mrf.mxu0
    %v5892 = vadd.f32 0.0, %v5891
    %5893 = vmatmul.f32.gmra.mxu0 %v5811
    %v5894 = vpop.f32.mrf.mxu0
    %v5895 = vadd.f32 0.0, %v5894
    %5896 = vmatmul.f32.gmra.mxu0 %v5812
    %v5897 = vpop.f32.mrf.mxu0
    %v5898 = vadd.f32 0.0, %v5897
    %5899 = vmatmul.f32.gmra.mxu0 %v5813
    %v5900 = vpop.f32.mrf.mxu0
    %v5901 = vadd.f32 0.0, %v5900
    %5902 = vmatmul.f32.gmra.mxu0 %v5814
    %v5903 = vpop.f32.mrf.mxu0
    %v5904 = vadd.f32 0.0, %v5903
    %5905 = vmatmul.f32.gmra.mxu0 %v5815
    %v5906 = vpop.f32.mrf.mxu0
    %v5907 = vadd.f32 0.0, %v5906
    %5908 = vmatmul.f32.gmra.mxu0 %v5816
    %v5909 = vpop.f32.mrf.mxu0
    %v5910 = vadd.f32 0.0, %v5909
    %5911 = vmatmul.f32.gmra.mxu0 %v5817
    %v5912 = vpop.f32.mrf.mxu0
    %v5913 = vadd.f32 0.0, %v5912
    %5914 = vmatmul.f32.gmra.mxu0 %v5818
    %v5915 = vpop.f32.mrf.mxu0
    %v5916 = vadd.f32 0.0, %v5915
    %5917 = vmatmul.f32.gmra.mxu0 %v5819
    %v5918 = vpop.f32.mrf.mxu0
    %v5919 = vadd.f32 0.0, %v5918
    %5920 = vmatmul.f32.gmra.mxu0 %v5820
    %v5921 = vpop.f32.mrf.mxu0
    %v5922 = vadd.f32 0.0, %v5921
    %5923 = vmatmul.f32.gmra.mxu0 %v5821
    %v5924 = vpop.f32.mrf.mxu0
    %v5925 = vadd.f32 0.0, %v5924
    %5926 = vmatmul.f32.gmra.mxu0 %v5822
    %v5927 = vpop.f32.mrf.mxu0
    %v5928 = vadd.f32 0.0, %v5927
    %5929 = vmatmul.f32.gmra.mxu0 %v5823
    %v5930 = vpop.f32.mrf.mxu0
    %v5931 = vadd.f32 0.0, %v5930
    %5932 = vmatmul.f32.gmra.mxu0 %v5824
    %v5933 = vpop.f32.mrf.mxu0
    %v5934 = vadd.f32 0.0, %v5933
    %5935 = vmatmul.f32.gmra.mxu0 %v5825
    %v5936 = vpop.f32.mrf.mxu0
    %v5937 = vadd.f32 0.0, %v5936
    %5938 = vmatmul.f32.gmra.mxu0 %v5826
    %v5939 = vpop.f32.mrf.mxu0
    %v5940 = vadd.f32 0.0, %v5939
    %5941 = vmatmul.f32.gmra.mxu0 %v5827
    %v5942 = vpop.f32.mrf.mxu0
    %v5943 = vadd.f32 0.0, %v5942
    %5944 = vmatmul.f32.gmra.mxu0 %v5828
    %v5945 = vpop.f32.mrf.mxu0
    %v5946 = vadd.f32 0.0, %v5945
    %5947 = vmatmul.f32.gmra.mxu0 %v5829
    %v5948 = vpop.f32.mrf.mxu0
    %v5949 = vadd.f32 0.0, %v5948
    %5950 = vmatmul.f32.gmra.mxu0 %v5830
    %v5951 = vpop.f32.mrf.mxu0
    %v5952 = vadd.f32 0.0, %v5951
    %5953 = vmatmul.f32.gmra.mxu0 %v5831
    %v5954 = vpop.f32.mrf.mxu0
    %v5955 = vadd.f32 0.0, %v5954
    %5956 = vmatmul.f32.gmra.mxu0 %v5832
    %v5957 = vpop.f32.mrf.mxu0
    %v5958 = vadd.f32 0.0, %v5957
    %5959 = vmatmul.f32.gmra.mxu0 %v5833
    %v5960 = vpop.f32.mrf.mxu0
    %v5961 = vadd.f32 0.0, %v5960
    %5962 = vmatmul.f32.gmra.mxu0 %v5834
    %v5963 = vpop.f32.mrf.mxu0
    %v5964 = vadd.f32 0.0, %v5963
    %5965 = vmatmul.f32.gmra.mxu0 %v5835
    %v5966 = vpop.f32.mrf.mxu0
    %v5967 = vadd.f32 0.0, %v5966
    %5968 = vmatmul.f32.gmra.mxu0 %v5836
    %v5969 = vpop.f32.mrf.mxu0
    %v5970 = vadd.f32 0.0, %v5969
    %5971 = vmatmul.f32.gmra.mxu0 %v5837
    %v5972 = vpop.f32.mrf.mxu0
    %v5973 = vadd.f32 0.0, %v5972
    %5974 = vmatmul.f32.gmra.mxu0 %v5838
    %v5975 = vpop.f32.mrf.mxu0
    %v5976 = vadd.f32 0.0, %v5975
    %5977 = vmatmul.f32.gmra.mxu0 %v5839
    %v5978 = vpop.f32.mrf.mxu0
    %v5979 = vadd.f32 0.0, %v5978
    %5980 = vdwg.mxu0
    %v5981 = vadd.f32 %v5768, %v5874
    %v5982 = vadd.f32 %v5769, %v5877
    %v5983 = vadd.f32 %v5770, %v5880
    %v5984 = vadd.f32 %v5771, %v5883
    %v5985 = vadd.f32 %v5772, %v5886
    %v5986 = vadd.f32 %v5773, %v5889
    %v5987 = vadd.f32 %v5774, %v5892
    %v5988 = vadd.f32 %v5775, %v5895
    %v5989 = vadd.f32 %v5776, %v5898
    %v5990 = vadd.f32 %v5777, %v5901
    %v5991 = vadd.f32 %v5778, %v5904
    %v5992 = vadd.f32 %v5779, %v5907
    %v5993 = vadd.f32 %v5780, %v5910
    %v5994 = vadd.f32 %v5781, %v5913
    %v5995 = vadd.f32 %v5782, %v5916
    %v5996 = vadd.f32 %v5783, %v5919
    %v5997 = vadd.f32 %v5784, %v5922
    %v5998 = vadd.f32 %v5785, %v5925
    %v5999 = vadd.f32 %v5786, %v5928
    %v6000 = vadd.f32 %v5787, %v5931
    %v6001 = vadd.f32 %v5788, %v5934
    %v6002 = vadd.f32 %v5789, %v5937
    %v6003 = vadd.f32 %v5790, %v5940
    %v6004 = vadd.f32 %v5791, %v5943
    %v6005 = vadd.f32 %v5792, %v5946
    %v6006 = vadd.f32 %v5793, %v5949
    %v6007 = vadd.f32 %v5794, %v5952
    %v6008 = vadd.f32 %v5795, %v5955
    %v6009 = vadd.f32 %v5796, %v5958
    %v6010 = vadd.f32 %v5797, %v5961
    %v6011 = vadd.f32 %v5798, %v5964
    %v6012 = vadd.f32 %v5799, %v5967
    %v6013 = vadd.f32 %v5800, %v5970
    %v6014 = vadd.f32 %v5801, %v5973
    %v6015 = vadd.f32 %v5802, %v5976
    %v6016 = vadd.f32 %v5803, %v5979
    %v6017 = vld [vmem:[#allocation2 + $0x1b0] sm:$0xff]
    %v6018 = vld [vmem:[#allocation2 + $0x1d0] sm:$0xff]
    %v6019 = vld [vmem:[#allocation2 + $0x1f0] sm:$0xff]
    %v6020 = vld [vmem:[#allocation2 + $0x210] sm:$0xff]
    %v6021 = vld [vmem:[#allocation2 + $0x230] sm:$0xff]
    %v6022 = vld [vmem:[#allocation2 + $0x250] sm:$0xff]
    %v6023 = vld [vmem:[#allocation2 + $0x270] sm:$0xff]
    %v6024 = vld [vmem:[#allocation2 + $0x290] sm:$0xff]
    %v6025 = vld [vmem:[#allocation2 + $0x2b0] sm:$0xff]
    %v6026 = vld [vmem:[#allocation2 + $0x2d0] sm:$0xff]
    %v6027 = vld [vmem:[#allocation2 + $0x2f0] sm:$0xff]
    %v6028 = vld [vmem:[#allocation2 + $0x310] sm:$0xff]
    %v6029 = vld [vmem:[#allocation2 + $0x330] sm:$0xff]
    %v6030 = vld [vmem:[#allocation2 + $0x350] sm:$0xff]
    %v6031 = vld [vmem:[#allocation2 + $0x370] sm:$0xff]
    %v6032 = vld [vmem:[#allocation2 + $0x390] sm:$0xff]
    %v6033 = vld [vmem:[#allocation2 + $0x3b0] sm:$0xff]
    %v6034 = vld [vmem:[#allocation2 + $0x3d0] sm:$0xff]
    %v6035 = vld [vmem:[#allocation2 + $0x3f0] sm:$0xff]
    %v6036 = vld [vmem:[#allocation2 + $0x410] sm:$0xff]
    %v6037 = vld [vmem:[#allocation2 + $0x430] sm:$0xff]
    %v6038 = vld [vmem:[#allocation2 + $0x450] sm:$0xff]
    %v6039 = vld [vmem:[#allocation2 + $0x470] sm:$0xff]
    %v6040 = vld [vmem:[#allocation2 + $0x490] sm:$0xff]
    %v6041 = vld [vmem:[#allocation2 + $0x4b0] sm:$0xff]
    %v6042 = vld [vmem:[#allocation2 + $0x4d0] sm:$0xff]
    %v6043 = vld [vmem:[#allocation2 + $0x4f0] sm:$0xff]
    %v6044 = vld [vmem:[#allocation2 + $0x510] sm:$0xff]
    %v6045 = vld [vmem:[#allocation2 + $0x530] sm:$0xff]
    %v6046 = vld [vmem:[#allocation2 + $0x550] sm:$0xff]
    %v6047 = vld [vmem:[#allocation2 + $0x570] sm:$0xff]
    %v6048 = vld [vmem:[#allocation2 + $0x590] sm:$0xff]
    %v6049 = vld [vmem:[#allocation2 + $0x5b0] sm:$0xff]
    %v6050 = vld [vmem:[#allocation2 + $0x5d0] sm:$0xff]
    %v6051 = vld [vmem:[#allocation2 + $0x5f0] sm:$0xff]
    %v6052 = vld [vmem:[#allocation2 + $0x610] sm:$0xff]
    %v6053 = vld [vmem:[%s2 + $0xb80] sm:$0xff]
    %v6054 = vld [vmem:[%s2 + $0xb88] sm:$0xff]
    %v6055 = vld [vmem:[%s2 + $0xb90] sm:$0xff]
    %v6056 = vld [vmem:[%s2 + $0xb98] sm:$0xff]
    %v6057 = vld [vmem:[%s2 + $0xba0] sm:$0xff]
    %v6058 = vld [vmem:[%s2 + $0xba8] sm:$0xff]
    %v6059 = vld [vmem:[%s2 + $0xbb0] sm:$0xff]
    %v6060 = vld [vmem:[%s2 + $0xbb8] sm:$0xff]
    %v6061 = vld [vmem:[%s2 + $0xbc0] sm:$0xff]
    %v6062 = vld [vmem:[%s2 + $0xbc8] sm:$0xff]
    %v6063 = vld [vmem:[%s2 + $0xbd0] sm:$0xff]
    %v6064 = vld [vmem:[%s2 + $0xbd8] sm:$0xff]
    %v6065 = vld [vmem:[%s2 + $0xbe0] sm:$0xff]
    %v6066 = vld [vmem:[%s2 + $0xbe8] sm:$0xff]
    %v6067 = vld [vmem:[%s2 + $0xbf0] sm:$0xff]
    %v6068 = vld [vmem:[%s2 + $0xbf8] sm:$0xff]
    %6069 = vmatpush.msra.mxu0 %v6068
    %6070 = vmatpush.msra.mxu0 %v6067
    %6071 = vmatpush.msra.mxu0 %v6066
    %6072 = vmatpush.msra.mxu0 %v6065
    %6073 = vmatpush.msra.mxu0 %v6064
    %6074 = vmatpush.msra.mxu0 %v6063
    %6075 = vmatpush.msra.mxu0 %v6062
    %6076 = vmatpush.msra.mxu0 %v6061
    %6077 = vmatpush.msra.mxu0 %v6060
    %6078 = vmatpush.msra.mxu0 %v6059
    %6079 = vmatpush.msra.mxu0 %v6058
    %6080 = vmatpush.msra.mxu0 %v6057
    %6081 = vmatpush.msra.mxu0 %v6056
    %6082 = vmatpush.msra.mxu0 %v6055
    %6083 = vmatpush.msra.mxu0 %v6054
    %6084 = vmatpush.msra.mxu0 %v6053
    %6085 = vmatmul.f32.gmra.mxu0 %v6017
    %v6086 = vpop.f32.mrf.mxu0
    %v6087 = vadd.f32 0.0, %v6086
    %6088 = vmatmul.f32.gmra.mxu0 %v6018
    %v6089 = vpop.f32.mrf.mxu0
    %v6090 = vadd.f32 0.0, %v6089
    %6091 = vmatmul.f32.gmra.mxu0 %v6019
    %v6092 = vpop.f32.mrf.mxu0
    %v6093 = vadd.f32 0.0, %v6092
    %6094 = vmatmul.f32.gmra.mxu0 %v6020
    %v6095 = vpop.f32.mrf.mxu0
    %v6096 = vadd.f32 0.0, %v6095
    %6097 = vmatmul.f32.gmra.mxu0 %v6021
    %v6098 = vpop.f32.mrf.mxu0
    %v6099 = vadd.f32 0.0, %v6098
    %6100 = vmatmul.f32.gmra.mxu0 %v6022
    %v6101 = vpop.f32.mrf.mxu0
    %v6102 = vadd.f32 0.0, %v6101
    %6103 = vmatmul.f32.gmra.mxu0 %v6023
    %v6104 = vpop.f32.mrf.mxu0
    %v6105 = vadd.f32 0.0, %v6104
    %6106 = vmatmul.f32.gmra.mxu0 %v6024
    %v6107 = vpop.f32.mrf.mxu0
    %v6108 = vadd.f32 0.0, %v6107
    %6109 = vmatmul.f32.gmra.mxu0 %v6025
    %v6110 = vpop.f32.mrf.mxu0
    %v6111 = vadd.f32 0.0, %v6110
    %6112 = vmatmul.f32.gmra.mxu0 %v6026
    %v6113 = vpop.f32.mrf.mxu0
    %v6114 = vadd.f32 0.0, %v6113
    %6115 = vmatmul.f32.gmra.mxu0 %v6027
    %v6116 = vpop.f32.mrf.mxu0
    %v6117 = vadd.f32 0.0, %v6116
    %6118 = vmatmul.f32.gmra.mxu0 %v6028
    %v6119 = vpop.f32.mrf.mxu0
    %v6120 = vadd.f32 0.0, %v6119
    %6121 = vmatmul.f32.gmra.mxu0 %v6029
    %v6122 = vpop.f32.mrf.mxu0
    %v6123 = vadd.f32 0.0, %v6122
    %6124 = vmatmul.f32.gmra.mxu0 %v6030
    %v6125 = vpop.f32.mrf.mxu0
    %v6126 = vadd.f32 0.0, %v6125
    %6127 = vmatmul.f32.gmra.mxu0 %v6031
    %v6128 = vpop.f32.mrf.mxu0
    %v6129 = vadd.f32 0.0, %v6128
    %6130 = vmatmul.f32.gmra.mxu0 %v6032
    %v6131 = vpop.f32.mrf.mxu0
    %v6132 = vadd.f32 0.0, %v6131
    %6133 = vmatmul.f32.gmra.mxu0 %v6033
    %v6134 = vpop.f32.mrf.mxu0
    %v6135 = vadd.f32 0.0, %v6134
    %6136 = vmatmul.f32.gmra.mxu0 %v6034
    %v6137 = vpop.f32.mrf.mxu0
    %v6138 = vadd.f32 0.0, %v6137
    %6139 = vmatmul.f32.gmra.mxu0 %v6035
    %v6140 = vpop.f32.mrf.mxu0
    %v6141 = vadd.f32 0.0, %v6140
    %6142 = vmatmul.f32.gmra.mxu0 %v6036
    %v6143 = vpop.f32.mrf.mxu0
    %v6144 = vadd.f32 0.0, %v6143
    %6145 = vmatmul.f32.gmra.mxu0 %v6037
    %v6146 = vpop.f32.mrf.mxu0
    %v6147 = vadd.f32 0.0, %v6146
    %6148 = vmatmul.f32.gmra.mxu0 %v6038
    %v6149 = vpop.f32.mrf.mxu0
    %v6150 = vadd.f32 0.0, %v6149
    %6151 = vmatmul.f32.gmra.mxu0 %v6039
    %v6152 = vpop.f32.mrf.mxu0
    %v6153 = vadd.f32 0.0, %v6152
    %6154 = vmatmul.f32.gmra.mxu0 %v6040
    %v6155 = vpop.f32.mrf.mxu0
    %v6156 = vadd.f32 0.0, %v6155
    %6157 = vmatmul.f32.gmra.mxu0 %v6041
    %v6158 = vpop.f32.mrf.mxu0
    %v6159 = vadd.f32 0.0, %v6158
    %6160 = vmatmul.f32.gmra.mxu0 %v6042
    %v6161 = vpop.f32.mrf.mxu0
    %v6162 = vadd.f32 0.0, %v6161
    %6163 = vmatmul.f32.gmra.mxu0 %v6043
    %v6164 = vpop.f32.mrf.mxu0
    %v6165 = vadd.f32 0.0, %v6164
    %6166 = vmatmul.f32.gmra.mxu0 %v6044
    %v6167 = vpop.f32.mrf.mxu0
    %v6168 = vadd.f32 0.0, %v6167
    %6169 = vmatmul.f32.gmra.mxu0 %v6045
    %v6170 = vpop.f32.mrf.mxu0
    %v6171 = vadd.f32 0.0, %v6170
    %6172 = vmatmul.f32.gmra.mxu0 %v6046
    %v6173 = vpop.f32.mrf.mxu0
    %v6174 = vadd.f32 0.0, %v6173
    %6175 = vmatmul.f32.gmra.mxu0 %v6047
    %v6176 = vpop.f32.mrf.mxu0
    %v6177 = vadd.f32 0.0, %v6176
    %6178 = vmatmul.f32.gmra.mxu0 %v6048
    %v6179 = vpop.f32.mrf.mxu0
    %v6180 = vadd.f32 0.0, %v6179
    %6181 = vmatmul.f32.gmra.mxu0 %v6049
    %v6182 = vpop.f32.mrf.mxu0
    %v6183 = vadd.f32 0.0, %v6182
    %6184 = vmatmul.f32.gmra.mxu0 %v6050
    %v6185 = vpop.f32.mrf.mxu0
    %v6186 = vadd.f32 0.0, %v6185
    %6187 = vmatmul.f32.gmra.mxu0 %v6051
    %v6188 = vpop.f32.mrf.mxu0
    %v6189 = vadd.f32 0.0, %v6188
    %6190 = vmatmul.f32.gmra.mxu0 %v6052
    %v6191 = vpop.f32.mrf.mxu0
    %v6192 = vadd.f32 0.0, %v6191
    %6193 = vdwg.mxu0
    %v6194 = vadd.f32 %v5981, %v6087
    %v6195 = vadd.f32 %v5982, %v6090
    %v6196 = vadd.f32 %v5983, %v6093
    %v6197 = vadd.f32 %v5984, %v6096
    %v6198 = vadd.f32 %v5985, %v6099
    %v6199 = vadd.f32 %v5986, %v6102
    %v6200 = vadd.f32 %v5987, %v6105
    %v6201 = vadd.f32 %v5988, %v6108
    %v6202 = vadd.f32 %v5989, %v6111
    %v6203 = vadd.f32 %v5990, %v6114
    %v6204 = vadd.f32 %v5991, %v6117
    %v6205 = vadd.f32 %v5992, %v6120
    %v6206 = vadd.f32 %v5993, %v6123
    %v6207 = vadd.f32 %v5994, %v6126
    %v6208 = vadd.f32 %v5995, %v6129
    %v6209 = vadd.f32 %v5996, %v6132
    %v6210 = vadd.f32 %v5997, %v6135
    %v6211 = vadd.f32 %v5998, %v6138
    %v6212 = vadd.f32 %v5999, %v6141
    %v6213 = vadd.f32 %v6000, %v6144
    %v6214 = vadd.f32 %v6001, %v6147
    %v6215 = vadd.f32 %v6002, %v6150
    %v6216 = vadd.f32 %v6003, %v6153
    %v6217 = vadd.f32 %v6004, %v6156
    %v6218 = vadd.f32 %v6005, %v6159
    %v6219 = vadd.f32 %v6006, %v6162
    %v6220 = vadd.f32 %v6007, %v6165
    %v6221 = vadd.f32 %v6008, %v6168
    %v6222 = vadd.f32 %v6009, %v6171
    %v6223 = vadd.f32 %v6010, %v6174
    %v6224 = vadd.f32 %v6011, %v6177
    %v6225 = vadd.f32 %v6012, %v6180
    %v6226 = vadd.f32 %v6013, %v6183
    %v6227 = vadd.f32 %v6014, %v6186
    %v6228 = vadd.f32 %v6015, %v6189
    %v6229 = vadd.f32 %v6016, %v6192
    %v6230 = vld [vmem:[%s2 + $0xc00] sm:$0xff]
    %v6231 = vld [vmem:[%s2 + $0xc08] sm:$0xff]
    %v6232 = vld [vmem:[%s2 + $0xc10] sm:$0xff]
    %v6233 = vld [vmem:[%s2 + $0xc18] sm:$0xff]
    %v6234 = vld [vmem:[%s2 + $0xc20] sm:$0xff]
    %v6235 = vld [vmem:[%s2 + $0xc28] sm:$0xff]
    %v6236 = vld [vmem:[%s2 + $0xc30] sm:$0xff]
    %v6237 = vld [vmem:[%s2 + $0xc38] sm:$0xff]
    %v6238 = vld [vmem:[%s2 + $0xc40] sm:$0xff]
    %v6239 = vld [vmem:[%s2 + $0xc48] sm:$0xff]
    %v6240 = vld [vmem:[%s2 + $0xc50] sm:$0xff]
    %v6241 = vld [vmem:[%s2 + $0xc58] sm:$0xff]
    %v6242 = vld [vmem:[%s2 + $0xc60] sm:$0xff]
    %v6243 = vld [vmem:[%s2 + $0xc68] sm:$0xff]
    %v6244 = vld [vmem:[%s2 + $0xc70] sm:$0xff]
    %v6245 = vld [vmem:[%s2 + $0xc78] sm:$0xff]
    %6246 = vmatpush.msra.mxu0 %v6245
    %6247 = vmatpush.msra.mxu0 %v6244
    %6248 = vmatpush.msra.mxu0 %v6243
    %6249 = vmatpush.msra.mxu0 %v6242
    %6250 = vmatpush.msra.mxu0 %v6241
    %6251 = vmatpush.msra.mxu0 %v6240
    %6252 = vmatpush.msra.mxu0 %v6239
    %6253 = vmatpush.msra.mxu0 %v6238
    %6254 = vmatpush.msra.mxu0 %v6237
    %6255 = vmatpush.msra.mxu0 %v6236
    %6256 = vmatpush.msra.mxu0 %v6235
    %6257 = vmatpush.msra.mxu0 %v6234
    %6258 = vmatpush.msra.mxu0 %v6233
    %6259 = vmatpush.msra.mxu0 %v6232
    %6260 = vmatpush.msra.mxu0 %v6231
    %6261 = vmatpush.msra.mxu0 %v6230
    %6262 = vmatmul.f32.gmra.mxu0 %v3854
    %v6263 = vpop.f32.mrf.mxu0
    %v6264 = vadd.f32 0.0, %v6263
    %6265 = vmatmul.f32.gmra.mxu0 %v3855
    %v6266 = vpop.f32.mrf.mxu0
    %v6267 = vadd.f32 0.0, %v6266
    %6268 = vmatmul.f32.gmra.mxu0 %v3856
    %v6269 = vpop.f32.mrf.mxu0
    %v6270 = vadd.f32 0.0, %v6269
    %6271 = vmatmul.f32.gmra.mxu0 %v3857
    %v6272 = vpop.f32.mrf.mxu0
    %v6273 = vadd.f32 0.0, %v6272
    %6274 = vmatmul.f32.gmra.mxu0 %v3858
    %v6275 = vpop.f32.mrf.mxu0
    %v6276 = vadd.f32 0.0, %v6275
    %6277 = vmatmul.f32.gmra.mxu0 %v3859
    %v6278 = vpop.f32.mrf.mxu0
    %v6279 = vadd.f32 0.0, %v6278
    %6280 = vmatmul.f32.gmra.mxu0 %v3860
    %v6281 = vpop.f32.mrf.mxu0
    %v6282 = vadd.f32 0.0, %v6281
    %6283 = vmatmul.f32.gmra.mxu0 %v3861
    %v6284 = vpop.f32.mrf.mxu0
    %v6285 = vadd.f32 0.0, %v6284
    %6286 = vmatmul.f32.gmra.mxu0 %v3862
    %v6287 = vpop.f32.mrf.mxu0
    %v6288 = vadd.f32 0.0, %v6287
    %6289 = vmatmul.f32.gmra.mxu0 %v3863
    %v6290 = vpop.f32.mrf.mxu0
    %v6291 = vadd.f32 0.0, %v6290
    %6292 = vmatmul.f32.gmra.mxu0 %v3864
    %v6293 = vpop.f32.mrf.mxu0
    %v6294 = vadd.f32 0.0, %v6293
    %6295 = vmatmul.f32.gmra.mxu0 %v3865
    %v6296 = vpop.f32.mrf.mxu0
    %v6297 = vadd.f32 0.0, %v6296
    %6298 = vmatmul.f32.gmra.mxu0 %v3866
    %v6299 = vpop.f32.mrf.mxu0
    %v6300 = vadd.f32 0.0, %v6299
    %6301 = vmatmul.f32.gmra.mxu0 %v3867
    %v6302 = vpop.f32.mrf.mxu0
    %v6303 = vadd.f32 0.0, %v6302
    %6304 = vmatmul.f32.gmra.mxu0 %v3868
    %v6305 = vpop.f32.mrf.mxu0
    %v6306 = vadd.f32 0.0, %v6305
    %6307 = vmatmul.f32.gmra.mxu0 %v3869
    %v6308 = vpop.f32.mrf.mxu0
    %v6309 = vadd.f32 0.0, %v6308
    %6310 = vmatmul.f32.gmra.mxu0 %v3870
    %v6311 = vpop.f32.mrf.mxu0
    %v6312 = vadd.f32 0.0, %v6311
    %6313 = vmatmul.f32.gmra.mxu0 %v3871
    %v6314 = vpop.f32.mrf.mxu0
    %v6315 = vadd.f32 0.0, %v6314
    %6316 = vmatmul.f32.gmra.mxu0 %v3872
    %v6317 = vpop.f32.mrf.mxu0
    %v6318 = vadd.f32 0.0, %v6317
    %6319 = vmatmul.f32.gmra.mxu0 %v3873
    %v6320 = vpop.f32.mrf.mxu0
    %v6321 = vadd.f32 0.0, %v6320
    %6322 = vmatmul.f32.gmra.mxu0 %v3874
    %v6323 = vpop.f32.mrf.mxu0
    %v6324 = vadd.f32 0.0, %v6323
    %6325 = vmatmul.f32.gmra.mxu0 %v3875
    %v6326 = vpop.f32.mrf.mxu0
    %v6327 = vadd.f32 0.0, %v6326
    %6328 = vmatmul.f32.gmra.mxu0 %v3876
    %v6329 = vpop.f32.mrf.mxu0
    %v6330 = vadd.f32 0.0, %v6329
    %6331 = vmatmul.f32.gmra.mxu0 %v3877
    %v6332 = vpop.f32.mrf.mxu0
    %v6333 = vadd.f32 0.0, %v6332
    %6334 = vmatmul.f32.gmra.mxu0 %v3878
    %v6335 = vpop.f32.mrf.mxu0
    %v6336 = vadd.f32 0.0, %v6335
    %6337 = vmatmul.f32.gmra.mxu0 %v3879
    %v6338 = vpop.f32.mrf.mxu0
    %v6339 = vadd.f32 0.0, %v6338
    %6340 = vmatmul.f32.gmra.mxu0 %v3880
    %v6341 = vpop.f32.mrf.mxu0
    %v6342 = vadd.f32 0.0, %v6341
    %6343 = vmatmul.f32.gmra.mxu0 %v3881
    %v6344 = vpop.f32.mrf.mxu0
    %v6345 = vadd.f32 0.0, %v6344
    %6346 = vmatmul.f32.gmra.mxu0 %v3882
    %v6347 = vpop.f32.mrf.mxu0
    %v6348 = vadd.f32 0.0, %v6347
    %6349 = vmatmul.f32.gmra.mxu0 %v3883
    %v6350 = vpop.f32.mrf.mxu0
    %v6351 = vadd.f32 0.0, %v6350
    %6352 = vmatmul.f32.gmra.mxu0 %v3884
    %v6353 = vpop.f32.mrf.mxu0
    %v6354 = vadd.f32 0.0, %v6353
    %6355 = vmatmul.f32.gmra.mxu0 %v3885
    %v6356 = vpop.f32.mrf.mxu0
    %v6357 = vadd.f32 0.0, %v6356
    %6358 = vmatmul.f32.gmra.mxu0 %v3886
    %v6359 = vpop.f32.mrf.mxu0
    %v6360 = vadd.f32 0.0, %v6359
    %6361 = vmatmul.f32.gmra.mxu0 %v3887
    %v6362 = vpop.f32.mrf.mxu0
    %v6363 = vadd.f32 0.0, %v6362
    %6364 = vmatmul.f32.gmra.mxu0 %v3888
    %v6365 = vpop.f32.mrf.mxu0
    %v6366 = vadd.f32 0.0, %v6365
    %6367 = vmatmul.f32.gmra.mxu0 %v3889
    %v6368 = vpop.f32.mrf.mxu0
    %v6369 = vadd.f32 0.0, %v6368
    %6370 = vdwg.mxu0
    %v6371 = vadd.f32 %v6194, %v6264
    %v6372 = vadd.f32 %v6195, %v6267
    %v6373 = vadd.f32 %v6196, %v6270
    %v6374 = vadd.f32 %v6197, %v6273
    %v6375 = vadd.f32 %v6198, %v6276
    %v6376 = vadd.f32 %v6199, %v6279
    %v6377 = vadd.f32 %v6200, %v6282
    %v6378 = vadd.f32 %v6201, %v6285
    %v6379 = vadd.f32 %v6202, %v6288
    %v6380 = vadd.f32 %v6203, %v6291
    %v6381 = vadd.f32 %v6204, %v6294
    %v6382 = vadd.f32 %v6205, %v6297
    %v6383 = vadd.f32 %v6206, %v6300
    %v6384 = vadd.f32 %v6207, %v6303
    %v6385 = vadd.f32 %v6208, %v6306
    %v6386 = vadd.f32 %v6209, %v6309
    %v6387 = vadd.f32 %v6210, %v6312
    %v6388 = vadd.f32 %v6211, %v6315
    %v6389 = vadd.f32 %v6212, %v6318
    %v6390 = vadd.f32 %v6213, %v6321
    %v6391 = vadd.f32 %v6214, %v6324
    %v6392 = vadd.f32 %v6215, %v6327
    %v6393 = vadd.f32 %v6216, %v6330
    %v6394 = vadd.f32 %v6217, %v6333
    %v6395 = vadd.f32 %v6218, %v6336
    %v6396 = vadd.f32 %v6219, %v6339
    %v6397 = vadd.f32 %v6220, %v6342
    %v6398 = vadd.f32 %v6221, %v6345
    %v6399 = vadd.f32 %v6222, %v6348
    %v6400 = vadd.f32 %v6223, %v6351
    %v6401 = vadd.f32 %v6224, %v6354
    %v6402 = vadd.f32 %v6225, %v6357
    %v6403 = vadd.f32 %v6226, %v6360
    %v6404 = vadd.f32 %v6227, %v6363
    %v6405 = vadd.f32 %v6228, %v6366
    %v6406 = vadd.f32 %v6229, %v6369
    %v6407 = vld [vmem:[%s2 + $0xc80] sm:$0xff]
    %v6408 = vld [vmem:[%s2 + $0xc88] sm:$0xff]
    %v6409 = vld [vmem:[%s2 + $0xc90] sm:$0xff]
    %v6410 = vld [vmem:[%s2 + $0xc98] sm:$0xff]
    %v6411 = vld [vmem:[%s2 + $0xca0] sm:$0xff]
    %v6412 = vld [vmem:[%s2 + $0xca8] sm:$0xff]
    %v6413 = vld [vmem:[%s2 + $0xcb0] sm:$0xff]
    %v6414 = vld [vmem:[%s2 + $0xcb8] sm:$0xff]
    %v6415 = vld [vmem:[%s2 + $0xcc0] sm:$0xff]
    %v6416 = vld [vmem:[%s2 + $0xcc8] sm:$0xff]
    %v6417 = vld [vmem:[%s2 + $0xcd0] sm:$0xff]
    %v6418 = vld [vmem:[%s2 + $0xcd8] sm:$0xff]
    %v6419 = vld [vmem:[%s2 + $0xce0] sm:$0xff]
    %v6420 = vld [vmem:[%s2 + $0xce8] sm:$0xff]
    %v6421 = vld [vmem:[%s2 + $0xcf0] sm:$0xff]
    %v6422 = vld [vmem:[%s2 + $0xcf8] sm:$0xff]
    %6423 = vmatpush.msra.mxu0 %v6422
    %6424 = vmatpush.msra.mxu0 %v6421
    %6425 = vmatpush.msra.mxu0 %v6420
    %6426 = vmatpush.msra.mxu0 %v6419
    %6427 = vmatpush.msra.mxu0 %v6418
    %6428 = vmatpush.msra.mxu0 %v6417
    %6429 = vmatpush.msra.mxu0 %v6416
    %6430 = vmatpush.msra.mxu0 %v6415
    %6431 = vmatpush.msra.mxu0 %v6414
    %6432 = vmatpush.msra.mxu0 %v6413
    %6433 = vmatpush.msra.mxu0 %v6412
    %6434 = vmatpush.msra.mxu0 %v6411
    %6435 = vmatpush.msra.mxu0 %v6410
    %6436 = vmatpush.msra.mxu0 %v6409
    %6437 = vmatpush.msra.mxu0 %v6408
    %6438 = vmatpush.msra.mxu0 %v6407
    %6439 = vmatmul.f32.gmra.mxu0 %v4067
    %v6440 = vpop.f32.mrf.mxu0
    %v6441 = vadd.f32 0.0, %v6440
    %6442 = vmatmul.f32.gmra.mxu0 %v4068
    %v6443 = vpop.f32.mrf.mxu0
    %v6444 = vadd.f32 0.0, %v6443
    %6445 = vmatmul.f32.gmra.mxu0 %v4069
    %v6446 = vpop.f32.mrf.mxu0
    %v6447 = vadd.f32 0.0, %v6446
    %6448 = vmatmul.f32.gmra.mxu0 %v4070
    %v6449 = vpop.f32.mrf.mxu0
    %v6450 = vadd.f32 0.0, %v6449
    %6451 = vmatmul.f32.gmra.mxu0 %v4071
    %v6452 = vpop.f32.mrf.mxu0
    %v6453 = vadd.f32 0.0, %v6452
    %6454 = vmatmul.f32.gmra.mxu0 %v4072
    %v6455 = vpop.f32.mrf.mxu0
    %v6456 = vadd.f32 0.0, %v6455
    %6457 = vmatmul.f32.gmra.mxu0 %v4073
    %v6458 = vpop.f32.mrf.mxu0
    %v6459 = vadd.f32 0.0, %v6458
    %6460 = vmatmul.f32.gmra.mxu0 %v4074
    %v6461 = vpop.f32.mrf.mxu0
    %v6462 = vadd.f32 0.0, %v6461
    %6463 = vmatmul.f32.gmra.mxu0 %v4075
    %v6464 = vpop.f32.mrf.mxu0
    %v6465 = vadd.f32 0.0, %v6464
    %6466 = vmatmul.f32.gmra.mxu0 %v4076
    %v6467 = vpop.f32.mrf.mxu0
    %v6468 = vadd.f32 0.0, %v6467
    %6469 = vmatmul.f32.gmra.mxu0 %v4077
    %v6470 = vpop.f32.mrf.mxu0
    %v6471 = vadd.f32 0.0, %v6470
    %6472 = vmatmul.f32.gmra.mxu0 %v4078
    %v6473 = vpop.f32.mrf.mxu0
    %v6474 = vadd.f32 0.0, %v6473
    %6475 = vmatmul.f32.gmra.mxu0 %v4079
    %v6476 = vpop.f32.mrf.mxu0
    %v6477 = vadd.f32 0.0, %v6476
    %6478 = vmatmul.f32.gmra.mxu0 %v4080
    %v6479 = vpop.f32.mrf.mxu0
    %v6480 = vadd.f32 0.0, %v6479
    %6481 = vmatmul.f32.gmra.mxu0 %v4081
    %v6482 = vpop.f32.mrf.mxu0
    %v6483 = vadd.f32 0.0, %v6482
    %6484 = vmatmul.f32.gmra.mxu0 %v4082
    %v6485 = vpop.f32.mrf.mxu0
    %v6486 = vadd.f32 0.0, %v6485
    %6487 = vmatmul.f32.gmra.mxu0 %v4083
    %v6488 = vpop.f32.mrf.mxu0
    %v6489 = vadd.f32 0.0, %v6488
    %6490 = vmatmul.f32.gmra.mxu0 %v4084
    %v6491 = vpop.f32.mrf.mxu0
    %v6492 = vadd.f32 0.0, %v6491
    %6493 = vmatmul.f32.gmra.mxu0 %v4085
    %v6494 = vpop.f32.mrf.mxu0
    %v6495 = vadd.f32 0.0, %v6494
    %6496 = vmatmul.f32.gmra.mxu0 %v4086
    %v6497 = vpop.f32.mrf.mxu0
    %v6498 = vadd.f32 0.0, %v6497
    %6499 = vmatmul.f32.gmra.mxu0 %v4087
    %v6500 = vpop.f32.mrf.mxu0
    %v6501 = vadd.f32 0.0, %v6500
    %6502 = vmatmul.f32.gmra.mxu0 %v4088
    %v6503 = vpop.f32.mrf.mxu0
    %v6504 = vadd.f32 0.0, %v6503
    %6505 = vmatmul.f32.gmra.mxu0 %v4089
    %v6506 = vpop.f32.mrf.mxu0
    %v6507 = vadd.f32 0.0, %v6506
    %6508 = vmatmul.f32.gmra.mxu0 %v4090
    %v6509 = vpop.f32.mrf.mxu0
    %v6510 = vadd.f32 0.0, %v6509
    %6511 = vmatmul.f32.gmra.mxu0 %v4091
    %v6512 = vpop.f32.mrf.mxu0
    %v6513 = vadd.f32 0.0, %v6512
    %6514 = vmatmul.f32.gmra.mxu0 %v4092
    %v6515 = vpop.f32.mrf.mxu0
    %v6516 = vadd.f32 0.0, %v6515
    %6517 = vmatmul.f32.gmra.mxu0 %v4093
    %v6518 = vpop.f32.mrf.mxu0
    %v6519 = vadd.f32 0.0, %v6518
    %6520 = vmatmul.f32.gmra.mxu0 %v4094
    %v6521 = vpop.f32.mrf.mxu0
    %v6522 = vadd.f32 0.0, %v6521
    %6523 = vmatmul.f32.gmra.mxu0 %v4095
    %v6524 = vpop.f32.mrf.mxu0
    %v6525 = vadd.f32 0.0, %v6524
    %6526 = vmatmul.f32.gmra.mxu0 %v4096
    %v6527 = vpop.f32.mrf.mxu0
    %v6528 = vadd.f32 0.0, %v6527
    %6529 = vmatmul.f32.gmra.mxu0 %v4097
    %v6530 = vpop.f32.mrf.mxu0
    %v6531 = vadd.f32 0.0, %v6530
    %6532 = vmatmul.f32.gmra.mxu0 %v4098
    %v6533 = vpop.f32.mrf.mxu0
    %v6534 = vadd.f32 0.0, %v6533
    %6535 = vmatmul.f32.gmra.mxu0 %v4099
    %v6536 = vpop.f32.mrf.mxu0
    %v6537 = vadd.f32 0.0, %v6536
    %6538 = vmatmul.f32.gmra.mxu0 %v4100
    %v6539 = vpop.f32.mrf.mxu0
    %v6540 = vadd.f32 0.0, %v6539
    %6541 = vmatmul.f32.gmra.mxu0 %v4101
    %v6542 = vpop.f32.mrf.mxu0
    %v6543 = vadd.f32 0.0, %v6542
    %6544 = vmatmul.f32.gmra.mxu0 %v4102
    %v6545 = vpop.f32.mrf.mxu0
    %v6546 = vadd.f32 0.0, %v6545
    %6547 = vdwg.mxu0
    %v6548 = vadd.f32 %v6371, %v6441
    %v6549 = vadd.f32 %v6372, %v6444
    %v6550 = vadd.f32 %v6373, %v6447
    %v6551 = vadd.f32 %v6374, %v6450
    %v6552 = vadd.f32 %v6375, %v6453
    %v6553 = vadd.f32 %v6376, %v6456
    %v6554 = vadd.f32 %v6377, %v6459
    %v6555 = vadd.f32 %v6378, %v6462
    %v6556 = vadd.f32 %v6379, %v6465
    %v6557 = vadd.f32 %v6380, %v6468
    %v6558 = vadd.f32 %v6381, %v6471
    %v6559 = vadd.f32 %v6382, %v6474
    %v6560 = vadd.f32 %v6383, %v6477
    %v6561 = vadd.f32 %v6384, %v6480
    %v6562 = vadd.f32 %v6385, %v6483
    %v6563 = vadd.f32 %v6386, %v6486
    %v6564 = vadd.f32 %v6387, %v6489
    %v6565 = vadd.f32 %v6388, %v6492
    %v6566 = vadd.f32 %v6389, %v6495
    %v6567 = vadd.f32 %v6390, %v6498
    %v6568 = vadd.f32 %v6391, %v6501
    %v6569 = vadd.f32 %v6392, %v6504
    %v6570 = vadd.f32 %v6393, %v6507
    %v6571 = vadd.f32 %v6394, %v6510
    %v6572 = vadd.f32 %v6395, %v6513
    %v6573 = vadd.f32 %v6396, %v6516
    %v6574 = vadd.f32 %v6397, %v6519
    %v6575 = vadd.f32 %v6398, %v6522
    %v6576 = vadd.f32 %v6399, %v6525
    %v6577 = vadd.f32 %v6400, %v6528
    %v6578 = vadd.f32 %v6401, %v6531
    %v6579 = vadd.f32 %v6402, %v6534
    %v6580 = vadd.f32 %v6403, %v6537
    %v6581 = vadd.f32 %v6404, %v6540
    %v6582 = vadd.f32 %v6405, %v6543
    %v6583 = vadd.f32 %v6406, %v6546
    %v6584 = vld [vmem:[#allocation2 + $0x1b8] sm:$0xff]
    %v6585 = vld [vmem:[#allocation2 + $0x1d8] sm:$0xff]
    %v6586 = vld [vmem:[#allocation2 + $0x1f8] sm:$0xff]
    %v6587 = vld [vmem:[#allocation2 + $0x218] sm:$0xff]
    %v6588 = vld [vmem:[#allocation2 + $0x238] sm:$0xff]
    %v6589 = vld [vmem:[#allocation2 + $0x258] sm:$0xff]
    %v6590 = vld [vmem:[#allocation2 + $0x278] sm:$0xff]
    %v6591 = vld [vmem:[#allocation2 + $0x298] sm:$0xff]
    %v6592 = vld [vmem:[#allocation2 + $0x2b8] sm:$0xff]
    %v6593 = vld [vmem:[#allocation2 + $0x2d8] sm:$0xff]
    %v6594 = vld [vmem:[#allocation2 + $0x2f8] sm:$0xff]
    %v6595 = vld [vmem:[#allocation2 + $0x318] sm:$0xff]
    %v6596 = vld [vmem:[#allocation2 + $0x338] sm:$0xff]
    %v6597 = vld [vmem:[#allocation2 + $0x358] sm:$0xff]
    %v6598 = vld [vmem:[#allocation2 + $0x378] sm:$0xff]
    %v6599 = vld [vmem:[#allocation2 + $0x398] sm:$0xff]
    %v6600 = vld [vmem:[#allocation2 + $0x3b8] sm:$0xff]
    %v6601 = vld [vmem:[#allocation2 + $0x3d8] sm:$0xff]
    %v6602 = vld [vmem:[#allocation2 + $0x3f8] sm:$0xff]
    %v6603 = vld [vmem:[#allocation2 + $0x418] sm:$0xff]
    %v6604 = vld [vmem:[#allocation2 + $0x438] sm:$0xff]
    %v6605 = vld [vmem:[#allocation2 + $0x458] sm:$0xff]
    %v6606 = vld [vmem:[#allocation2 + $0x478] sm:$0xff]
    %v6607 = vld [vmem:[#allocation2 + $0x498] sm:$0xff]
    %v6608 = vld [vmem:[#allocation2 + $0x4b8] sm:$0xff]
    %v6609 = vld [vmem:[#allocation2 + $0x4d8] sm:$0xff]
    %v6610 = vld [vmem:[#allocation2 + $0x4f8] sm:$0xff]
    %v6611 = vld [vmem:[#allocation2 + $0x518] sm:$0xff]
    %v6612 = vld [vmem:[#allocation2 + $0x538] sm:$0xff]
    %v6613 = vld [vmem:[#allocation2 + $0x558] sm:$0xff]
    %v6614 = vld [vmem:[#allocation2 + $0x578] sm:$0xff]
    %v6615 = vld [vmem:[#allocation2 + $0x598] sm:$0xff]
    %v6616 = vld [vmem:[#allocation2 + $0x5b8] sm:$0xff]
    %v6617 = vld [vmem:[#allocation2 + $0x5d8] sm:$0xff]
    %v6618 = vld [vmem:[#allocation2 + $0x5f8] sm:$0xff]
    %v6619 = vld [vmem:[#allocation2 + $0x618] sm:$0xff]
    %v6620 = vld [vmem:[%s2 + $0xd00] sm:$0xff]
    %v6621 = vld [vmem:[%s2 + $0xd08] sm:$0xff]
    %v6622 = vld [vmem:[%s2 + $0xd10] sm:$0xff]
    %v6623 = vld [vmem:[%s2 + $0xd18] sm:$0xff]
    %v6624 = vld [vmem:[%s2 + $0xd20] sm:$0xff]
    %v6625 = vld [vmem:[%s2 + $0xd28] sm:$0xff]
    %v6626 = vld [vmem:[%s2 + $0xd30] sm:$0xff]
    %v6627 = vld [vmem:[%s2 + $0xd38] sm:$0xff]
    %v6628 = vld [vmem:[%s2 + $0xd40] sm:$0xff]
    %v6629 = vld [vmem:[%s2 + $0xd48] sm:$0xff]
    %v6630 = vld [vmem:[%s2 + $0xd50] sm:$0xff]
    %v6631 = vld [vmem:[%s2 + $0xd58] sm:$0xff]
    %v6632 = vld [vmem:[%s2 + $0xd60] sm:$0xff]
    %v6633 = vld [vmem:[%s2 + $0xd68] sm:$0xff]
    %v6634 = vld [vmem:[%s2 + $0xd70] sm:$0xff]
    %v6635 = vld [vmem:[%s2 + $0xd78] sm:$0xff]
    %6636 = vmatpush.msra.mxu0 %v6635
    %6637 = vmatpush.msra.mxu0 %v6634
    %6638 = vmatpush.msra.mxu0 %v6633
    %6639 = vmatpush.msra.mxu0 %v6632
    %6640 = vmatpush.msra.mxu0 %v6631
    %6641 = vmatpush.msra.mxu0 %v6630
    %6642 = vmatpush.msra.mxu0 %v6629
    %6643 = vmatpush.msra.mxu0 %v6628
    %6644 = vmatpush.msra.mxu0 %v6627
    %6645 = vmatpush.msra.mxu0 %v6626
    %6646 = vmatpush.msra.mxu0 %v6625
    %6647 = vmatpush.msra.mxu0 %v6624
    %6648 = vmatpush.msra.mxu0 %v6623
    %6649 = vmatpush.msra.mxu0 %v6622
    %6650 = vmatpush.msra.mxu0 %v6621
    %6651 = vmatpush.msra.mxu0 %v6620
    %6652 = vmatmul.f32.gmra.mxu0 %v6584
    %v6653 = vpop.f32.mrf.mxu0
    %v6654 = vadd.f32 0.0, %v6653
    %6655 = vmatmul.f32.gmra.mxu0 %v6585
    %v6656 = vpop.f32.mrf.mxu0
    %v6657 = vadd.f32 0.0, %v6656
    %6658 = vmatmul.f32.gmra.mxu0 %v6586
    %v6659 = vpop.f32.mrf.mxu0
    %v6660 = vadd.f32 0.0, %v6659
    %6661 = vmatmul.f32.gmra.mxu0 %v6587
    %v6662 = vpop.f32.mrf.mxu0
    %v6663 = vadd.f32 0.0, %v6662
    %6664 = vmatmul.f32.gmra.mxu0 %v6588
    %v6665 = vpop.f32.mrf.mxu0
    %v6666 = vadd.f32 0.0, %v6665
    %6667 = vmatmul.f32.gmra.mxu0 %v6589
    %v6668 = vpop.f32.mrf.mxu0
    %v6669 = vadd.f32 0.0, %v6668
    %6670 = vmatmul.f32.gmra.mxu0 %v6590
    %v6671 = vpop.f32.mrf.mxu0
    %v6672 = vadd.f32 0.0, %v6671
    %6673 = vmatmul.f32.gmra.mxu0 %v6591
    %v6674 = vpop.f32.mrf.mxu0
    %v6675 = vadd.f32 0.0, %v6674
    %6676 = vmatmul.f32.gmra.mxu0 %v6592
    %v6677 = vpop.f32.mrf.mxu0
    %v6678 = vadd.f32 0.0, %v6677
    %6679 = vmatmul.f32.gmra.mxu0 %v6593
    %v6680 = vpop.f32.mrf.mxu0
    %v6681 = vadd.f32 0.0, %v6680
    %6682 = vmatmul.f32.gmra.mxu0 %v6594
    %v6683 = vpop.f32.mrf.mxu0
    %v6684 = vadd.f32 0.0, %v6683
    %6685 = vmatmul.f32.gmra.mxu0 %v6595
    %v6686 = vpop.f32.mrf.mxu0
    %v6687 = vadd.f32 0.0, %v6686
    %6688 = vmatmul.f32.gmra.mxu0 %v6596
    %v6689 = vpop.f32.mrf.mxu0
    %v6690 = vadd.f32 0.0, %v6689
    %6691 = vmatmul.f32.gmra.mxu0 %v6597
    %v6692 = vpop.f32.mrf.mxu0
    %v6693 = vadd.f32 0.0, %v6692
    %6694 = vmatmul.f32.gmra.mxu0 %v6598
    %v6695 = vpop.f32.mrf.mxu0
    %v6696 = vadd.f32 0.0, %v6695
    %6697 = vmatmul.f32.gmra.mxu0 %v6599
    %v6698 = vpop.f32.mrf.mxu0
    %v6699 = vadd.f32 0.0, %v6698
    %6700 = vmatmul.f32.gmra.mxu0 %v6600
    %v6701 = vpop.f32.mrf.mxu0
    %v6702 = vadd.f32 0.0, %v6701
    %6703 = vmatmul.f32.gmra.mxu0 %v6601
    %v6704 = vpop.f32.mrf.mxu0
    %v6705 = vadd.f32 0.0, %v6704
    %6706 = vmatmul.f32.gmra.mxu0 %v6602
    %v6707 = vpop.f32.mrf.mxu0
    %v6708 = vadd.f32 0.0, %v6707
    %6709 = vmatmul.f32.gmra.mxu0 %v6603
    %v6710 = vpop.f32.mrf.mxu0
    %v6711 = vadd.f32 0.0, %v6710
    %6712 = vmatmul.f32.gmra.mxu0 %v6604
    %v6713 = vpop.f32.mrf.mxu0
    %v6714 = vadd.f32 0.0, %v6713
    %6715 = vmatmul.f32.gmra.mxu0 %v6605
    %v6716 = vpop.f32.mrf.mxu0
    %v6717 = vadd.f32 0.0, %v6716
    %6718 = vmatmul.f32.gmra.mxu0 %v6606
    %v6719 = vpop.f32.mrf.mxu0
    %v6720 = vadd.f32 0.0, %v6719
    %6721 = vmatmul.f32.gmra.mxu0 %v6607
    %v6722 = vpop.f32.mrf.mxu0
    %v6723 = vadd.f32 0.0, %v6722
    %6724 = vmatmul.f32.gmra.mxu0 %v6608
    %v6725 = vpop.f32.mrf.mxu0
    %v6726 = vadd.f32 0.0, %v6725
    %6727 = vmatmul.f32.gmra.mxu0 %v6609
    %v6728 = vpop.f32.mrf.mxu0
    %v6729 = vadd.f32 0.0, %v6728
    %6730 = vmatmul.f32.gmra.mxu0 %v6610
    %v6731 = vpop.f32.mrf.mxu0
    %v6732 = vadd.f32 0.0, %v6731
    %6733 = vmatmul.f32.gmra.mxu0 %v6611
    %v6734 = vpop.f32.mrf.mxu0
    %v6735 = vadd.f32 0.0, %v6734
    %6736 = vmatmul.f32.gmra.mxu0 %v6612
    %v6737 = vpop.f32.mrf.mxu0
    %v6738 = vadd.f32 0.0, %v6737
    %6739 = vmatmul.f32.gmra.mxu0 %v6613
    %v6740 = vpop.f32.mrf.mxu0
    %v6741 = vadd.f32 0.0, %v6740
    %6742 = vmatmul.f32.gmra.mxu0 %v6614
    %v6743 = vpop.f32.mrf.mxu0
    %v6744 = vadd.f32 0.0, %v6743
    %6745 = vmatmul.f32.gmra.mxu0 %v6615
    %v6746 = vpop.f32.mrf.mxu0
    %v6747 = vadd.f32 0.0, %v6746
    %6748 = vmatmul.f32.gmra.mxu0 %v6616
    %v6749 = vpop.f32.mrf.mxu0
    %v6750 = vadd.f32 0.0, %v6749
    %6751 = vmatmul.f32.gmra.mxu0 %v6617
    %v6752 = vpop.f32.mrf.mxu0
    %v6753 = vadd.f32 0.0, %v6752
    %6754 = vmatmul.f32.gmra.mxu0 %v6618
    %v6755 = vpop.f32.mrf.mxu0
    %v6756 = vadd.f32 0.0, %v6755
    %6757 = vmatmul.f32.gmra.mxu0 %v6619
    %v6758 = vpop.f32.mrf.mxu0
    %v6759 = vadd.f32 0.0, %v6758
    %6760 = vdwg.mxu0
    %v6761 = vadd.f32 %v6548, %v6654
    %v6762 = vadd.f32 %v6549, %v6657
    %v6763 = vadd.f32 %v6550, %v6660
    %v6764 = vadd.f32 %v6551, %v6663
    %v6765 = vadd.f32 %v6552, %v6666
    %v6766 = vadd.f32 %v6553, %v6669
    %v6767 = vadd.f32 %v6554, %v6672
    %v6768 = vadd.f32 %v6555, %v6675
    %v6769 = vadd.f32 %v6556, %v6678
    %v6770 = vadd.f32 %v6557, %v6681
    %v6771 = vadd.f32 %v6558, %v6684
    %v6772 = vadd.f32 %v6559, %v6687
    %v6773 = vadd.f32 %v6560, %v6690
    %v6774 = vadd.f32 %v6561, %v6693
    %v6775 = vadd.f32 %v6562, %v6696
    %v6776 = vadd.f32 %v6563, %v6699
    %v6777 = vadd.f32 %v6564, %v6702
    %v6778 = vadd.f32 %v6565, %v6705
    %v6779 = vadd.f32 %v6566, %v6708
    %v6780 = vadd.f32 %v6567, %v6711
    %v6781 = vadd.f32 %v6568, %v6714
    %v6782 = vadd.f32 %v6569, %v6717
    %v6783 = vadd.f32 %v6570, %v6720
    %v6784 = vadd.f32 %v6571, %v6723
    %v6785 = vadd.f32 %v6572, %v6726
    %v6786 = vadd.f32 %v6573, %v6729
    %v6787 = vadd.f32 %v6574, %v6732
    %v6788 = vadd.f32 %v6575, %v6735
    %v6789 = vadd.f32 %v6576, %v6738
    %v6790 = vadd.f32 %v6577, %v6741
    %v6791 = vadd.f32 %v6578, %v6744
    %v6792 = vadd.f32 %v6579, %v6747
    %v6793 = vadd.f32 %v6580, %v6750
    %v6794 = vadd.f32 %v6581, %v6753
    %v6795 = vadd.f32 %v6582, %v6756
    %v6796 = vadd.f32 %v6583, %v6759
    %v6797 = vld [vmem:[#allocation2 + $0x1c0] sm:$0xff]
    %v6798 = vld [vmem:[#allocation2 + $0x1e0] sm:$0xff]
    %v6799 = vld [vmem:[#allocation2 + $0x200] sm:$0xff]
    %v6800 = vld [vmem:[#allocation2 + $0x220] sm:$0xff]
    %v6801 = vld [vmem:[#allocation2 + $0x240] sm:$0xff]
    %v6802 = vld [vmem:[#allocation2 + $0x260] sm:$0xff]
    %v6803 = vld [vmem:[#allocation2 + $0x280] sm:$0xff]
    %v6804 = vld [vmem:[#allocation2 + $0x2a0] sm:$0xff]
    %v6805 = vld [vmem:[#allocation2 + $0x2c0] sm:$0xff]
    %v6806 = vld [vmem:[#allocation2 + $0x2e0] sm:$0xff]
    %v6807 = vld [vmem:[#allocation2 + $0x300] sm:$0xff]
    %v6808 = vld [vmem:[#allocation2 + $0x320] sm:$0xff]
    %v6809 = vld [vmem:[#allocation2 + $0x340] sm:$0xff]
    %v6810 = vld [vmem:[#allocation2 + $0x360] sm:$0xff]
    %v6811 = vld [vmem:[#allocation2 + $0x380] sm:$0xff]
    %v6812 = vld [vmem:[#allocation2 + $0x3a0] sm:$0xff]
    %v6813 = vld [vmem:[#allocation2 + $0x3c0] sm:$0xff]
    %v6814 = vld [vmem:[#allocation2 + $0x3e0] sm:$0xff]
    %v6815 = vld [vmem:[#allocation2 + $0x400] sm:$0xff]
    %v6816 = vld [vmem:[#allocation2 + $0x420] sm:$0xff]
    %v6817 = vld [vmem:[#allocation2 + $0x440] sm:$0xff]
    %v6818 = vld [vmem:[#allocation2 + $0x460] sm:$0xff]
    %v6819 = vld [vmem:[#allocation2 + $0x480] sm:$0xff]
    %v6820 = vld [vmem:[#allocation2 + $0x4a0] sm:$0xff]
    %v6821 = vld [vmem:[#allocation2 + $0x4c0] sm:$0xff]
    %v6822 = vld [vmem:[#allocation2 + $0x4e0] sm:$0xff]
    %v6823 = vld [vmem:[#allocation2 + $0x500] sm:$0xff]
    %v6824 = vld [vmem:[#allocation2 + $0x520] sm:$0xff]
    %v6825 = vld [vmem:[#allocation2 + $0x540] sm:$0xff]
    %v6826 = vld [vmem:[#allocation2 + $0x560] sm:$0xff]
    %v6827 = vld [vmem:[#allocation2 + $0x580] sm:$0xff]
    %v6828 = vld [vmem:[#allocation2 + $0x5a0] sm:$0xff]
    %v6829 = vld [vmem:[#allocation2 + $0x5c0] sm:$0xff]
    %v6830 = vld [vmem:[#allocation2 + $0x5e0] sm:$0xff]
    %v6831 = vld [vmem:[#allocation2 + $0x600] sm:$0xff]
    %v6832 = vld [vmem:[#allocation2 + $0x620] sm:$0xff]
    %v6833 = vld [vmem:[%s2 + $0xd80] sm:$0xff]
    %v6834 = vld [vmem:[%s2 + $0xd88] sm:$0xff]
    %v6835 = vld [vmem:[%s2 + $0xd90] sm:$0xff]
    %v6836 = vld [vmem:[%s2 + $0xd98] sm:$0xff]
    %v6837 = vld [vmem:[%s2 + $0xda0] sm:$0xff]
    %v6838 = vld [vmem:[%s2 + $0xda8] sm:$0xff]
    %v6839 = vld [vmem:[%s2 + $0xdb0] sm:$0xff]
    %v6840 = vld [vmem:[%s2 + $0xdb8] sm:$0xff]
    %v6841 = vld [vmem:[%s2 + $0xdc0] sm:$0xff]
    %v6842 = vld [vmem:[%s2 + $0xdc8] sm:$0xff]
    %v6843 = vld [vmem:[%s2 + $0xdd0] sm:$0xff]
    %v6844 = vld [vmem:[%s2 + $0xdd8] sm:$0xff]
    %v6845 = vld [vmem:[%s2 + $0xde0] sm:$0xff]
    %v6846 = vld [vmem:[%s2 + $0xde8] sm:$0xff]
    %v6847 = vld [vmem:[%s2 + $0xdf0] sm:$0xff]
    %v6848 = vld [vmem:[%s2 + $0xdf8] sm:$0xff]
    %6849 = vmatpush.msra.mxu0 %v6848
    %6850 = vmatpush.msra.mxu0 %v6847
    %6851 = vmatpush.msra.mxu0 %v6846
    %6852 = vmatpush.msra.mxu0 %v6845
    %6853 = vmatpush.msra.mxu0 %v6844
    %6854 = vmatpush.msra.mxu0 %v6843
    %6855 = vmatpush.msra.mxu0 %v6842
    %6856 = vmatpush.msra.mxu0 %v6841
    %6857 = vmatpush.msra.mxu0 %v6840
    %6858 = vmatpush.msra.mxu0 %v6839
    %6859 = vmatpush.msra.mxu0 %v6838
    %6860 = vmatpush.msra.mxu0 %v6837
    %6861 = vmatpush.msra.mxu0 %v6836
    %6862 = vmatpush.msra.mxu0 %v6835
    %6863 = vmatpush.msra.mxu0 %v6834
    %6864 = vmatpush.msra.mxu0 %v6833
    %6865 = vmatmul.f32.gmra.mxu0 %v6797
    %v6866 = vpop.f32.mrf.mxu0
    %v6867 = vadd.f32 0.0, %v6866
    %6868 = vmatmul.f32.gmra.mxu0 %v6798
    %v6869 = vpop.f32.mrf.mxu0
    %v6870 = vadd.f32 0.0, %v6869
    %6871 = vmatmul.f32.gmra.mxu0 %v6799
    %v6872 = vpop.f32.mrf.mxu0
    %v6873 = vadd.f32 0.0, %v6872
    %6874 = vmatmul.f32.gmra.mxu0 %v6800
    %v6875 = vpop.f32.mrf.mxu0
    %v6876 = vadd.f32 0.0, %v6875
    %6877 = vmatmul.f32.gmra.mxu0 %v6801
    %v6878 = vpop.f32.mrf.mxu0
    %v6879 = vadd.f32 0.0, %v6878
    %6880 = vmatmul.f32.gmra.mxu0 %v6802
    %v6881 = vpop.f32.mrf.mxu0
    %v6882 = vadd.f32 0.0, %v6881
    %6883 = vmatmul.f32.gmra.mxu0 %v6803
    %v6884 = vpop.f32.mrf.mxu0
    %v6885 = vadd.f32 0.0, %v6884
    %6886 = vmatmul.f32.gmra.mxu0 %v6804
    %v6887 = vpop.f32.mrf.mxu0
    %v6888 = vadd.f32 0.0, %v6887
    %6889 = vmatmul.f32.gmra.mxu0 %v6805
    %v6890 = vpop.f32.mrf.mxu0
    %v6891 = vadd.f32 0.0, %v6890
    %6892 = vmatmul.f32.gmra.mxu0 %v6806
    %v6893 = vpop.f32.mrf.mxu0
    %v6894 = vadd.f32 0.0, %v6893
    %6895 = vmatmul.f32.gmra.mxu0 %v6807
    %v6896 = vpop.f32.mrf.mxu0
    %v6897 = vadd.f32 0.0, %v6896
    %6898 = vmatmul.f32.gmra.mxu0 %v6808
    %v6899 = vpop.f32.mrf.mxu0
    %v6900 = vadd.f32 0.0, %v6899
    %6901 = vmatmul.f32.gmra.mxu0 %v6809
    %v6902 = vpop.f32.mrf.mxu0
    %v6903 = vadd.f32 0.0, %v6902
    %6904 = vmatmul.f32.gmra.mxu0 %v6810
    %v6905 = vpop.f32.mrf.mxu0
    %v6906 = vadd.f32 0.0, %v6905
    %6907 = vmatmul.f32.gmra.mxu0 %v6811
    %v6908 = vpop.f32.mrf.mxu0
    %v6909 = vadd.f32 0.0, %v6908
    %6910 = vmatmul.f32.gmra.mxu0 %v6812
    %v6911 = vpop.f32.mrf.mxu0
    %v6912 = vadd.f32 0.0, %v6911
    %6913 = vmatmul.f32.gmra.mxu0 %v6813
    %v6914 = vpop.f32.mrf.mxu0
    %v6915 = vadd.f32 0.0, %v6914
    %6916 = vmatmul.f32.gmra.mxu0 %v6814
    %v6917 = vpop.f32.mrf.mxu0
    %v6918 = vadd.f32 0.0, %v6917
    %6919 = vmatmul.f32.gmra.mxu0 %v6815
    %v6920 = vpop.f32.mrf.mxu0
    %v6921 = vadd.f32 0.0, %v6920
    %6922 = vmatmul.f32.gmra.mxu0 %v6816
    %v6923 = vpop.f32.mrf.mxu0
    %v6924 = vadd.f32 0.0, %v6923
    %6925 = vmatmul.f32.gmra.mxu0 %v6817
    %v6926 = vpop.f32.mrf.mxu0
    %v6927 = vadd.f32 0.0, %v6926
    %6928 = vmatmul.f32.gmra.mxu0 %v6818
    %v6929 = vpop.f32.mrf.mxu0
    %v6930 = vadd.f32 0.0, %v6929
    %6931 = vmatmul.f32.gmra.mxu0 %v6819
    %v6932 = vpop.f32.mrf.mxu0
    %v6933 = vadd.f32 0.0, %v6932
    %6934 = vmatmul.f32.gmra.mxu0 %v6820
    %v6935 = vpop.f32.mrf.mxu0
    %v6936 = vadd.f32 0.0, %v6935
    %6937 = vmatmul.f32.gmra.mxu0 %v6821
    %v6938 = vpop.f32.mrf.mxu0
    %v6939 = vadd.f32 0.0, %v6938
    %6940 = vmatmul.f32.gmra.mxu0 %v6822
    %v6941 = vpop.f32.mrf.mxu0
    %v6942 = vadd.f32 0.0, %v6941
    %6943 = vmatmul.f32.gmra.mxu0 %v6823
    %v6944 = vpop.f32.mrf.mxu0
    %v6945 = vadd.f32 0.0, %v6944
    %6946 = vmatmul.f32.gmra.mxu0 %v6824
    %v6947 = vpop.f32.mrf.mxu0
    %v6948 = vadd.f32 0.0, %v6947
    %6949 = vmatmul.f32.gmra.mxu0 %v6825
    %v6950 = vpop.f32.mrf.mxu0
    %v6951 = vadd.f32 0.0, %v6950
    %6952 = vmatmul.f32.gmra.mxu0 %v6826
    %v6953 = vpop.f32.mrf.mxu0
    %v6954 = vadd.f32 0.0, %v6953
    %6955 = vmatmul.f32.gmra.mxu0 %v6827
    %v6956 = vpop.f32.mrf.mxu0
    %v6957 = vadd.f32 0.0, %v6956
    %6958 = vmatmul.f32.gmra.mxu0 %v6828
    %v6959 = vpop.f32.mrf.mxu0
    %v6960 = vadd.f32 0.0, %v6959
    %6961 = vmatmul.f32.gmra.mxu0 %v6829
    %v6962 = vpop.f32.mrf.mxu0
    %v6963 = vadd.f32 0.0, %v6962
    %6964 = vmatmul.f32.gmra.mxu0 %v6830
    %v6965 = vpop.f32.mrf.mxu0
    %v6966 = vadd.f32 0.0, %v6965
    %6967 = vmatmul.f32.gmra.mxu0 %v6831
    %v6968 = vpop.f32.mrf.mxu0
    %v6969 = vadd.f32 0.0, %v6968
    %6970 = vmatmul.f32.gmra.mxu0 %v6832
    %v6971 = vpop.f32.mrf.mxu0
    %v6972 = vadd.f32 0.0, %v6971
    %6973 = vdwg.mxu0
    %v6974 = vadd.f32 %v6761, %v6867
    %v6975 = vadd.f32 %v6762, %v6870
    %v6976 = vadd.f32 %v6763, %v6873
    %v6977 = vadd.f32 %v6764, %v6876
    %v6978 = vadd.f32 %v6765, %v6879
    %v6979 = vadd.f32 %v6766, %v6882
    %v6980 = vadd.f32 %v6767, %v6885
    %v6981 = vadd.f32 %v6768, %v6888
    %v6982 = vadd.f32 %v6769, %v6891
    %v6983 = vadd.f32 %v6770, %v6894
    %v6984 = vadd.f32 %v6771, %v6897
    %v6985 = vadd.f32 %v6772, %v6900
    %v6986 = vadd.f32 %v6773, %v6903
    %v6987 = vadd.f32 %v6774, %v6906
    %v6988 = vadd.f32 %v6775, %v6909
    %v6989 = vadd.f32 %v6776, %v6912
    %v6990 = vadd.f32 %v6777, %v6915
    %v6991 = vadd.f32 %v6778, %v6918
    %v6992 = vadd.f32 %v6779, %v6921
    %v6993 = vadd.f32 %v6780, %v6924
    %v6994 = vadd.f32 %v6781, %v6927
    %v6995 = vadd.f32 %v6782, %v6930
    %v6996 = vadd.f32 %v6783, %v6933
    %v6997 = vadd.f32 %v6784, %v6936
    %v6998 = vadd.f32 %v6785, %v6939
    %v6999 = vadd.f32 %v6786, %v6942
    %v7000 = vadd.f32 %v6787, %v6945
    %v7001 = vadd.f32 %v6788, %v6948
    %v7002 = vadd.f32 %v6789, %v6951
    %v7003 = vadd.f32 %v6790, %v6954
    %v7004 = vadd.f32 %v6791, %v6957
    %v7005 = vadd.f32 %v6792, %v6960
    %v7006 = vadd.f32 %v6793, %v6963
    %v7007 = vadd.f32 %v6794, %v6966
    %v7008 = vadd.f32 %v6795, %v6969
    %v7009 = vadd.f32 %v6796, %v6972
    %v7010 = vld [vmem:[#allocation7 + $0x218] sm:$0x1]
    %v7011 = vperm.slane %v7010, 0
    %v7012 = vadd.f32 %v6974, %v7011
    %v7013 = vadd.f32 %v6975, %v7011
    %v7014 = vadd.f32 %v6976, %v7011
    %v7015 = vadd.f32 %v6977, %v7011
    %v7016 = vadd.f32 %v6978, %v7011
    %v7017 = vadd.f32 %v6979, %v7011
    %v7018 = vadd.f32 %v6980, %v7011
    %v7019 = vadd.f32 %v6981, %v7011
    %v7020 = vadd.f32 %v6982, %v7011
    %v7021 = vadd.f32 %v6983, %v7011
    %v7022 = vadd.f32 %v6984, %v7011
    %v7023 = vadd.f32 %v6985, %v7011
    %v7024 = vadd.f32 %v6986, %v7011
    %v7025 = vadd.f32 %v6987, %v7011
    %v7026 = vadd.f32 %v6988, %v7011
    %v7027 = vadd.f32 %v6989, %v7011
    %v7028 = vadd.f32 %v6990, %v7011
    %v7029 = vadd.f32 %v6991, %v7011
    %v7030 = vadd.f32 %v6992, %v7011
    %v7031 = vadd.f32 %v6993, %v7011
    %v7032 = vadd.f32 %v6994, %v7011
    %v7033 = vadd.f32 %v6995, %v7011
    %v7034 = vadd.f32 %v6996, %v7011
    %v7035 = vadd.f32 %v6997, %v7011
    %v7036 = vadd.f32 %v6998, %v7011
    %v7037 = vadd.f32 %v6999, %v7011
    %v7038 = vadd.f32 %v7000, %v7011
    %v7039 = vadd.f32 %v7001, %v7011
    %v7040 = vadd.f32 %v7002, %v7011
    %v7041 = vadd.f32 %v7003, %v7011
    %v7042 = vadd.f32 %v7004, %v7011
    %v7043 = vadd.f32 %v7005, %v7011
    %v7044 = vadd.f32 %v7006, %v7011
    %v7045 = vadd.f32 %v7007, %v7011
    %v7046 = vadd.f32 %v7008, %v7011
    %v7047 = vadd.f32 %v7009, %v7011
    %v7048 = vmax.f32 %v7012, 0.0
    %v7049 = vmax.f32 %v7013, 0.0
    %v7050 = vmax.f32 %v7014, 0.0
    %v7051 = vmax.f32 %v7015, 0.0
    %v7052 = vmax.f32 %v7016, 0.0
    %v7053 = vmax.f32 %v7017, 0.0
    %v7054 = vmax.f32 %v7018, 0.0
    %v7055 = vmax.f32 %v7019, 0.0
    %v7056 = vmax.f32 %v7020, 0.0
    %v7057 = vmax.f32 %v7021, 0.0
    %v7058 = vmax.f32 %v7022, 0.0
    %v7059 = vmax.f32 %v7023, 0.0
    %v7060 = vmax.f32 %v7024, 0.0
    %v7061 = vmax.f32 %v7025, 0.0
    %v7062 = vmax.f32 %v7026, 0.0
    %v7063 = vmax.f32 %v7027, 0.0
    %v7064 = vmax.f32 %v7028, 0.0
    %v7065 = vmax.f32 %v7029, 0.0
    %v7066 = vmax.f32 %v7030, 0.0
    %v7067 = vmax.f32 %v7031, 0.0
    %v7068 = vmax.f32 %v7032, 0.0
    %v7069 = vmax.f32 %v7033, 0.0
    %v7070 = vmax.f32 %v7034, 0.0
    %v7071 = vmax.f32 %v7035, 0.0
    %v7072 = vmax.f32 %v7036, 0.0
    %v7073 = vmax.f32 %v7037, 0.0
    %v7074 = vmax.f32 %v7038, 0.0
    %v7075 = vmax.f32 %v7039, 0.0
    %v7076 = vmax.f32 %v7040, 0.0
    %v7077 = vmax.f32 %v7041, 0.0
    %v7078 = vmax.f32 %v7042, 0.0
    %v7079 = vmax.f32 %v7043, 0.0
    %v7080 = vmax.f32 %v7044, 0.0
    %v7081 = vmax.f32 %v7045, 0.0
    %v7082 = vmax.f32 %v7046, 0.0
    %v7083 = vmax.f32 %v7047, 0.0
    %7085 = vset.pattern.permute.xlu0 16
    %7086 = vperm.xlu0 %7085, %v1334
    %v7087 = vpop.permute.xlu0 %7086
    %7090 = vset.pattern.permute.xlu0 16
    %7091 = vperm.xlu0 %7090, %v1335
    %v7092 = vpop.permute.xlu0 %7091
    %7095 = vset.pattern.permute.xlu0 16
    %7096 = vperm.xlu0 %7095, %v1336
    %v7097 = vpop.permute.xlu0 %7096
    %7100 = vset.pattern.permute.xlu0 16
    %7101 = vperm.xlu0 %7100, %v1337
    %v7102 = vpop.permute.xlu0 %7101
    %7105 = vset.pattern.permute.xlu0 16
    %7106 = vperm.xlu0 %7105, %v1338
    %v7107 = vpop.permute.xlu0 %7106
    %7110 = vset.pattern.permute.xlu0 16
    %7111 = vperm.xlu0 %7110, %v1339
    %v7112 = vpop.permute.xlu0 %7111
    %7115 = vset.pattern.permute.xlu0 16
    %7116 = vperm.xlu0 %7115, %v1340
    %v7117 = vpop.permute.xlu0 %7116
    %7120 = vset.pattern.permute.xlu0 16
    %7121 = vperm.xlu0 %7120, %v1341
    %v7122 = vpop.permute.xlu0 %7121
    %7125 = vset.pattern.permute.xlu0 16
    %7126 = vperm.xlu0 %7125, %v1342
    %v7127 = vpop.permute.xlu0 %7126
    %7130 = vset.pattern.permute.xlu0 16
    %7131 = vperm.xlu0 %7130, %v1343
    %v7132 = vpop.permute.xlu0 %7131
    %7135 = vset.pattern.permute.xlu0 16
    %7136 = vperm.xlu0 %7135, %v1344
    %v7137 = vpop.permute.xlu0 %7136
    %7140 = vset.pattern.permute.xlu0 16
    %7141 = vperm.xlu0 %7140, %v1345
    %v7142 = vpop.permute.xlu0 %7141
    %7145 = vset.pattern.permute.xlu0 16
    %7146 = vperm.xlu0 %7145, %v1346
    %v7147 = vpop.permute.xlu0 %7146
    %7150 = vset.pattern.permute.xlu0 16
    %7151 = vperm.xlu0 %7150, %v1347
    %v7152 = vpop.permute.xlu0 %7151
    %7155 = vset.pattern.permute.xlu0 16
    %7156 = vperm.xlu0 %7155, %v1348
    %v7157 = vpop.permute.xlu0 %7156
    %7160 = vset.pattern.permute.xlu0 16
    %7161 = vperm.xlu0 %7160, %v1349
    %v7162 = vpop.permute.xlu0 %7161
    %7165 = vset.pattern.permute.xlu0 16
    %7166 = vperm.xlu0 %7165, %v1350
    %v7167 = vpop.permute.xlu0 %7166
    %7170 = vset.pattern.permute.xlu0 16
    %7171 = vperm.xlu0 %7170, %v1351
    %v7172 = vpop.permute.xlu0 %7171
    %7175 = vset.pattern.permute.xlu0 16
    %7176 = vperm.xlu0 %7175, %v1352
    %v7177 = vpop.permute.xlu0 %7176
    %7180 = vset.pattern.permute.xlu0 16
    %7181 = vperm.xlu0 %7180, %v1353
    %v7182 = vpop.permute.xlu0 %7181
    %7185 = vset.pattern.permute.xlu0 16
    %7186 = vperm.xlu0 %7185, %v1354
    %v7187 = vpop.permute.xlu0 %7186
    %7190 = vset.pattern.permute.xlu0 16
    %7191 = vperm.xlu0 %7190, %v1355
    %v7192 = vpop.permute.xlu0 %7191
    %7195 = vset.pattern.permute.xlu0 16
    %7196 = vperm.xlu0 %7195, %v1356
    %v7197 = vpop.permute.xlu0 %7196
    %7200 = vset.pattern.permute.xlu0 16
    %7201 = vperm.xlu0 %7200, %v1357
    %v7202 = vpop.permute.xlu0 %7201
    %7205 = vset.pattern.permute.xlu0 16
    %7206 = vperm.xlu0 %7205, %v1358
    %v7207 = vpop.permute.xlu0 %7206
    %7210 = vset.pattern.permute.xlu0 16
    %7211 = vperm.xlu0 %7210, %v1359
    %v7212 = vpop.permute.xlu0 %7211
    %7215 = vset.pattern.permute.xlu0 16
    %7216 = vperm.xlu0 %7215, %v1360
    %v7217 = vpop.permute.xlu0 %7216
    %7220 = vset.pattern.permute.xlu0 16
    %7221 = vperm.xlu0 %7220, %v1361
    %v7222 = vpop.permute.xlu0 %7221
    %7225 = vset.pattern.permute.xlu0 16
    %7226 = vperm.xlu0 %7225, %v1362
    %v7227 = vpop.permute.xlu0 %7226
    %7230 = vset.pattern.permute.xlu0 16
    %7231 = vperm.xlu0 %7230, %v1363
    %v7232 = vpop.permute.xlu0 %7231
    %7235 = vset.pattern.permute.xlu0 16
    %7236 = vperm.xlu0 %7235, %v1364
    %v7237 = vpop.permute.xlu0 %7236
    %7240 = vset.pattern.permute.xlu0 16
    %7241 = vperm.xlu0 %7240, %v1365
    %v7242 = vpop.permute.xlu0 %7241
    %7245 = vset.pattern.permute.xlu0 16
    %7246 = vperm.xlu0 %7245, %v1366
    %v7247 = vpop.permute.xlu0 %7246
    %7250 = vset.pattern.permute.xlu0 16
    %7251 = vperm.xlu0 %7250, %v1367
    %v7252 = vpop.permute.xlu0 %7251
    %7255 = vset.pattern.permute.xlu0 16
    %7256 = vperm.xlu0 %7255, %v1368
    %v7257 = vpop.permute.xlu0 %7256
    %7260 = vset.pattern.permute.xlu0 16
    %7261 = vperm.xlu0 %7260, %v1369
    %v7262 = vpop.permute.xlu0 %7261
    %v7264 = vmul.f32 %v7048, %v7087
    %v7265 = vmul.f32 %v7049, %v7092
    %v7266 = vmul.f32 %v7050, %v7097
    %v7267 = vmul.f32 %v7051, %v7102
    %v7268 = vmul.f32 %v7052, %v7107
    %v7269 = vmul.f32 %v7053, %v7112
    %v7270 = vmul.f32 %v7054, %v7117
    %v7271 = vmul.f32 %v7055, %v7122
    %v7272 = vmul.f32 %v7056, %v7127
    %v7273 = vmul.f32 %v7057, %v7132
    %v7274 = vmul.f32 %v7058, %v7137
    %v7275 = vmul.f32 %v7059, %v7142
    %v7276 = vmul.f32 %v7060, %v7147
    %v7277 = vmul.f32 %v7061, %v7152
    %v7278 = vmul.f32 %v7062, %v7157
    %v7279 = vmul.f32 %v7063, %v7162
    %v7280 = vmul.f32 %v7064, %v7167
    %v7281 = vmul.f32 %v7065, %v7172
    %v7282 = vmul.f32 %v7066, %v7177
    %v7283 = vmul.f32 %v7067, %v7182
    %v7284 = vmul.f32 %v7068, %v7187
    %v7285 = vmul.f32 %v7069, %v7192
    %v7286 = vmul.f32 %v7070, %v7197
    %v7287 = vmul.f32 %v7071, %v7202
    %v7288 = vmul.f32 %v7072, %v7207
    %v7289 = vmul.f32 %v7073, %v7212
    %v7290 = vmul.f32 %v7074, %v7217
    %v7291 = vmul.f32 %v7075, %v7222
    %v7292 = vmul.f32 %v7076, %v7227
    %v7293 = vmul.f32 %v7077, %v7232
    %v7294 = vmul.f32 %v7078, %v7237
    %v7295 = vmul.f32 %v7079, %v7242
    %v7296 = vmul.f32 %v7080, %v7247
    %v7297 = vmul.f32 %v7081, %v7252
    %v7298 = vmul.f32 %v7082, %v7257
    %v7299 = vmul.f32 %v7083, %v7262
    %vm7300 = vcmask 523264
    %7301 = vst.msk [vmem:[#allocation3 + $0x38] sm:$0xff] %vm7300, %v7264
    %7302 = vst.msk [vmem:[#allocation3 + $0x40] sm:$0xff] %vm7300, %v7265
    %7303 = vst.msk [vmem:[#allocation3 + $0x48] sm:$0xff] %vm7300, %v7266
    %7304 = vst.msk [vmem:[#allocation3 + $0x50] sm:$0xff] %vm7300, %v7267
    %7305 = vst.msk [vmem:[#allocation3 + $0x58] sm:$0xff] %vm7300, %v7268
    %7306 = vst.msk [vmem:[#allocation3 + $0x60] sm:$0xff] %vm7300, %v7269
    %7307 = vst.msk [vmem:[#allocation3 + $0x68] sm:$0xff] %vm7300, %v7270
    %7308 = vst.msk [vmem:[#allocation3 + $0x70] sm:$0xff] %vm7300, %v7271
    %7309 = vst.msk [vmem:[#allocation3 + $0x78] sm:$0xff] %vm7300, %v7272
    %7310 = vst.msk [vmem:[#allocation3 + $0x80] sm:$0xff] %vm7300, %v7273
    %7311 = vst.msk [vmem:[#allocation3 + $0x88] sm:$0xff] %vm7300, %v7274
    %7312 = vst.msk [vmem:[#allocation3 + $0x90] sm:$0xff] %vm7300, %v7275
    %7313 = vst.msk [vmem:[#allocation3 + $0x98] sm:$0xff] %vm7300, %v7276
    %7314 = vst.msk [vmem:[#allocation3 + $0xa0] sm:$0xff] %vm7300, %v7277
    %7315 = vst.msk [vmem:[#allocation3 + $0xa8] sm:$0xff] %vm7300, %v7278
    %7316 = vst.msk [vmem:[#allocation3 + $0xb0] sm:$0xff] %vm7300, %v7279
    %7317 = vst.msk [vmem:[#allocation3 + $0xb8] sm:$0xff] %vm7300, %v7280
    %7318 = vst.msk [vmem:[#allocation3 + $0xc0] sm:$0xff] %vm7300, %v7281
    %7319 = vst.msk [vmem:[#allocation3 + $0xc8] sm:$0xff] %vm7300, %v7282
    %7320 = vst.msk [vmem:[#allocation3 + $0xd0] sm:$0xff] %vm7300, %v7283
    %7321 = vst.msk [vmem:[#allocation3 + $0xd8] sm:$0xff] %vm7300, %v7284
    %7322 = vst.msk [vmem:[#allocation3 + $0xe0] sm:$0xff] %vm7300, %v7285
    %7323 = vst.msk [vmem:[#allocation3 + $0xe8] sm:$0xff] %vm7300, %v7286
    %7324 = vst.msk [vmem:[#allocation3 + $0xf0] sm:$0xff] %vm7300, %v7287
    %7325 = vst.msk [vmem:[#allocation3 + $0xf8] sm:$0xff] %vm7300, %v7288
    %7326 = vst.msk [vmem:[#allocation3 + $0x100] sm:$0xff] %vm7300, %v7289
    %7327 = vst.msk [vmem:[#allocation3 + $0x108] sm:$0xff] %vm7300, %v7290
    %7328 = vst.msk [vmem:[#allocation3 + $0x110] sm:$0xff] %vm7300, %v7291
    %7329 = vst.msk [vmem:[#allocation3 + $0x118] sm:$0xff] %vm7300, %v7292
    %7330 = vst.msk [vmem:[#allocation3 + $0x120] sm:$0xff] %vm7300, %v7293
    %7331 = vst.msk [vmem:[#allocation3 + $0x128] sm:$0xff] %vm7300, %v7294
    %7332 = vst.msk [vmem:[#allocation3 + $0x130] sm:$0xff] %vm7300, %v7295
    %7333 = vst.msk [vmem:[#allocation3 + $0x138] sm:$0xff] %vm7300, %v7296
    %7334 = vst.msk [vmem:[#allocation3 + $0x140] sm:$0xff] %vm7300, %v7297
    %7335 = vst.msk [vmem:[#allocation3 + $0x148] sm:$0xff] %vm7300, %v7298
    %7336 = vst.msk [vmem:[#allocation3 + $0x150] sm:$0xff] %vm7300, %v7299
    %7337 = vst.msk [vmem:[#allocation3] sm:$0xff] %vm7300, 0.0
    %7338 = vst.msk [vmem:[#allocation3 + $0x8] sm:$0xff] %vm7300, 0.0
    %7339 = vst.msk [vmem:[#allocation3 + $0x10] sm:$0xff] %vm7300, 0.0
    %7340 = vst.msk [vmem:[#allocation3 + $0x18] sm:$0xff] %vm7300, 0.0
    %7341 = vst.msk [vmem:[#allocation3 + $0x20] sm:$0xff] %vm7300, 0.0
    %7342 = vst.msk [vmem:[#allocation3 + $0x28] sm:$0xff] %vm7300, 0.0
    %7343 = vst.msk [vmem:[#allocation3 + $0x30] sm:$0xff] %vm7300, 0.0
    %7344 = vst.msk [vmem:[#allocation3 + $0x158] sm:$0xff] %vm7300, 0.0
    %7345 = vst.msk [vmem:[#allocation3 + $0x160] sm:$0xff] %vm7300, 0.0
    %7346 = vst.msk [vmem:[#allocation3 + $0x168] sm:$0xff] %vm7300, 0.0
    %7347 = vst.msk [vmem:[#allocation3 + $0x170] sm:$0xff] %vm7300, 0.0
    %7348 = vst.msk [vmem:[#allocation3 + $0x178] sm:$0xff] %vm7300, 0.0
    %7349 = vst.msk [vmem:[#allocation3 + $0x180] sm:$0xff] %vm7300, 0.0
    %7350 = vst.msk [vmem:[#allocation3 + $0x188] sm:$0xff] %vm7300, 0.0
    %v7351 = vld [vmem:[#allocation3] sm:$0xff]
    %v7352 = vld [vmem:[#allocation3 + $0x8] sm:$0xff]
    %v7353 = vld [vmem:[#allocation3 + $0x10] sm:$0xff]
    %v7354 = vld [vmem:[#allocation3 + $0x18] sm:$0xff]
    %v7355 = vld [vmem:[#allocation3 + $0x20] sm:$0xff]
    %v7356 = vld [vmem:[#allocation3 + $0x28] sm:$0xff]
    %v7357 = vld [vmem:[#allocation3 + $0x30] sm:$0xff]
    %v7358 = vld [vmem:[#allocation3 + $0x38] sm:$0xff]
    %v7359 = vld [vmem:[#allocation3 + $0x40] sm:$0xff]
    %v7360 = vld [vmem:[#allocation3 + $0x48] sm:$0xff]
    %v7361 = vld [vmem:[#allocation3 + $0x50] sm:$0xff]
    %v7362 = vld [vmem:[#allocation3 + $0x58] sm:$0xff]
    %v7363 = vld [vmem:[#allocation3 + $0x60] sm:$0xff]
    %v7364 = vld [vmem:[#allocation3 + $0x68] sm:$0xff]
    %v7365 = vld [vmem:[#allocation3 + $0x70] sm:$0xff]
    %v7366 = vld [vmem:[#allocation3 + $0x78] sm:$0xff]
    %v7367 = vld [vmem:[#allocation3 + $0x80] sm:$0xff]
    %v7368 = vld [vmem:[#allocation3 + $0x88] sm:$0xff]
    %v7369 = vld [vmem:[#allocation3 + $0x90] sm:$0xff]
    %v7370 = vld [vmem:[#allocation3 + $0x98] sm:$0xff]
    %v7371 = vld [vmem:[#allocation3 + $0xa0] sm:$0xff]
    %v7372 = vld [vmem:[#allocation3 + $0xa8] sm:$0xff]
    %v7373 = vld [vmem:[#allocation3 + $0xb0] sm:$0xff]
    %v7374 = vld [vmem:[#allocation3 + $0xb8] sm:$0xff]
    %v7375 = vld [vmem:[#allocation3 + $0xc0] sm:$0xff]
    %v7376 = vld [vmem:[#allocation3 + $0xc8] sm:$0xff]
    %v7377 = vld [vmem:[#allocation3 + $0xd0] sm:$0xff]
    %v7378 = vld [vmem:[#allocation3 + $0xd8] sm:$0xff]
    %v7379 = vld [vmem:[#allocation3 + $0xe0] sm:$0xff]
    %v7380 = vld [vmem:[#allocation3 + $0xe8] sm:$0xff]
    %v7381 = vld [vmem:[#allocation3 + $0xf0] sm:$0xff]
    %v7382 = vld [vmem:[#allocation3 + $0xf8] sm:$0xff]
    %v7383 = vld [vmem:[#allocation3 + $0x100] sm:$0xff]
    %v7384 = vld [vmem:[#allocation3 + $0x108] sm:$0xff]
    %v7385 = vld [vmem:[#allocation3 + $0x110] sm:$0xff]
    %v7386 = vld [vmem:[#allocation3 + $0x118] sm:$0xff]
    %v7387 = vld [vmem:[#allocation7] sm:$0xff]
    %v7388 = vld [vmem:[#allocation7 + $0x8] sm:$0xff]
    %v7389 = vld [vmem:[#allocation7 + $0x10] sm:$0xff]
    %v7390 = vld [vmem:[#allocation7 + $0x18] sm:$0xff]
    %v7391 = vld [vmem:[#allocation7 + $0x20] sm:$0xff]
    %v7392 = vld [vmem:[#allocation7 + $0x28] sm:$0xff]
    %v7393 = vld [vmem:[#allocation7 + $0x30] sm:$0xff]
    %v7394 = vld [vmem:[#allocation7 + $0x38] sm:$0xff]
    %v7395 = vld [vmem:[#allocation3 + $0x120] sm:$0xff]
    %v7396 = vld [vmem:[#allocation7 + $0x40] sm:$0xff]
    %v7397 = vld [vmem:[#allocation7 + $0x48] sm:$0xff]
    %v7398 = vld [vmem:[#allocation7 + $0x50] sm:$0xff]
    %v7399 = vld [vmem:[#allocation7 + $0x58] sm:$0xff]
    %v7400 = vld [vmem:[#allocation7 + $0x60] sm:$0xff]
    %v7401 = vld [vmem:[#allocation7 + $0x68] sm:$0xff]
    %v7402 = vld [vmem:[#allocation7 + $0x70] sm:$0xff]
    %v7403 = vld [vmem:[#allocation7 + $0x78] sm:$0xff]
    %v7405 = vsel %vm7300, %v7352, 0
    %v7408 = vsel %vm7300, %v7353, 0
    %v7411 = vsel %vm7300, %v7354, 0
    %v7414 = vsel %vm7300, %v7355, 0
    %v7417 = vsel %vm7300, %v7356, 0
    %v7420 = vsel %vm7300, %v7357, 0
    %v7423 = vsel %vm7300, %v7358, 0
    %v7426 = vsel %vm7300, %v7359, 0
    %v7429 = vsel %vm7300, %v7360, 0
    %v7432 = vsel %vm7300, %v7361, 0
    %v7435 = vsel %vm7300, %v7362, 0
    %v7438 = vsel %vm7300, %v7363, 0
    %v7441 = vsel %vm7300, %v7364, 0
    %v7444 = vsel %vm7300, %v7365, 0
    %v7447 = vsel %vm7300, %v7366, 0
    %v7450 = vsel %vm7300, %v7367, 0
    %v7453 = vsel %vm7300, %v7368, 0
    %v7456 = vsel %vm7300, %v7369, 0
    %v7459 = vsel %vm7300, %v7370, 0
    %v7462 = vsel %vm7300, %v7371, 0
    %v7465 = vsel %vm7300, %v7372, 0
    %v7468 = vsel %vm7300, %v7373, 0
    %v7471 = vsel %vm7300, %v7374, 0
    %v7474 = vsel %vm7300, %v7375, 0
    %v7477 = vsel %vm7300, %v7376, 0
    %v7480 = vsel %vm7300, %v7377, 0
    %v7483 = vsel %vm7300, %v7378, 0
    %v7486 = vsel %vm7300, %v7379, 0
    %v7489 = vsel %vm7300, %v7380, 0
    %v7492 = vsel %vm7300, %v7381, 0
    %v7495 = vsel %vm7300, %v7382, 0
    %v7498 = vsel %vm7300, %v7383, 0
    %v7501 = vsel %vm7300, %v7384, 0
    %v7504 = vsel %vm7300, %v7385, 0
    %v7507 = vsel %vm7300, %v7386, 0
    %v7510 = vsel %vm7300, %v7395, 0
    %7512 = vmatpush.msra.mxu0 0.0
    %7513 = vmatpush.msra.mxu0 0.0
    %7514 = vmatpush.msra.mxu0 0.0
    %7515 = vmatpush.msra.mxu0 0.0
    %7516 = vmatpush.msra.mxu0 0.0
    %7517 = vmatpush.msra.mxu0 0.0
    %7518 = vmatpush.msra.mxu0 0.0
    %7519 = vmatpush.msra.mxu0 0.0
    %7520 = vmatpush.msra.mxu0 %v7403
    %7521 = vmatpush.msra.mxu0 %v7402
    %7522 = vmatpush.msra.mxu0 %v7401
    %7523 = vmatpush.msra.mxu0 %v7400
    %7524 = vmatpush.msra.mxu0 %v7399
    %7525 = vmatpush.msra.mxu0 %v7398
    %7526 = vmatpush.msra.mxu0 %v7397
    %7527 = vmatpush.msra.mxu0 %v7396
    %7528 = vmatmul.f32.gmra.mxu0 %v7405
    %v7529 = vpop.f32.mrf.mxu0
    %7530 = vmatmul.f32.gmra.mxu0 %v7408
    %v7531 = vpop.f32.mrf.mxu0
    %7532 = vmatmul.f32.gmra.mxu0 %v7411
    %v7533 = vpop.f32.mrf.mxu0
    %7534 = vmatmul.f32.gmra.mxu0 %v7414
    %v7535 = vpop.f32.mrf.mxu0
    %7536 = vmatmul.f32.gmra.mxu0 %v7417
    %v7537 = vpop.f32.mrf.mxu0
    %7538 = vmatmul.f32.gmra.mxu0 %v7420
    %v7539 = vpop.f32.mrf.mxu0
    %7540 = vmatmul.f32.gmra.mxu0 %v7423
    %v7541 = vpop.f32.mrf.mxu0
    %7542 = vmatmul.f32.gmra.mxu0 %v7426
    %v7543 = vpop.f32.mrf.mxu0
    %v7544 = vadd.f32 0.0, %v7543
    %7545 = vmatmul.f32.gmra.mxu0 %v7429
    %v7546 = vpop.f32.mrf.mxu0
    %v7547 = vadd.f32 0.0, %v7546
    %7548 = vmatmul.f32.gmra.mxu0 %v7432
    %v7549 = vpop.f32.mrf.mxu0
    %v7550 = vadd.f32 0.0, %v7549
    %7551 = vmatmul.f32.gmra.mxu0 %v7435
    %v7552 = vpop.f32.mrf.mxu0
    %v7553 = vadd.f32 0.0, %v7552
    %7554 = vmatmul.f32.gmra.mxu0 %v7438
    %v7555 = vpop.f32.mrf.mxu0
    %7556 = vmatmul.f32.gmra.mxu0 %v7441
    %v7557 = vpop.f32.mrf.mxu0
    %7558 = vmatmul.f32.gmra.mxu0 %v7444
    %v7559 = vpop.f32.mrf.mxu0
    %v7560 = vadd.f32 0.0, %v7559
    %7561 = vmatmul.f32.gmra.mxu0 %v7447
    %v7562 = vpop.f32.mrf.mxu0
    %v7563 = vadd.f32 0.0, %v7562
    %7564 = vmatmul.f32.gmra.mxu0 %v7450
    %v7565 = vpop.f32.mrf.mxu0
    %v7566 = vadd.f32 0.0, %v7565
    %7567 = vmatmul.f32.gmra.mxu0 %v7453
    %v7568 = vpop.f32.mrf.mxu0
    %v7569 = vadd.f32 0.0, %v7568
    %7570 = vmatmul.f32.gmra.mxu0 %v7456
    %v7571 = vpop.f32.mrf.mxu0
    %7572 = vmatmul.f32.gmra.mxu0 %v7459
    %v7573 = vpop.f32.mrf.mxu0
    %7574 = vmatmul.f32.gmra.mxu0 %v7462
    %v7575 = vpop.f32.mrf.mxu0
    %v7576 = vadd.f32 0.0, %v7575
    %7577 = vmatmul.f32.gmra.mxu0 %v7465
    %v7578 = vpop.f32.mrf.mxu0
    %v7579 = vadd.f32 0.0, %v7578
    %7580 = vmatmul.f32.gmra.mxu0 %v7468
    %v7581 = vpop.f32.mrf.mxu0
    %v7582 = vadd.f32 0.0, %v7581
    %7583 = vmatmul.f32.gmra.mxu0 %v7471
    %v7584 = vpop.f32.mrf.mxu0
    %v7585 = vadd.f32 0.0, %v7584
    %7586 = vmatmul.f32.gmra.mxu0 %v7474
    %v7587 = vpop.f32.mrf.mxu0
    %7588 = vmatmul.f32.gmra.mxu0 %v7477
    %v7589 = vpop.f32.mrf.mxu0
    %7590 = vmatmul.f32.gmra.mxu0 %v7480
    %v7591 = vpop.f32.mrf.mxu0
    %v7592 = vadd.f32 0.0, %v7591
    %7593 = vmatmul.f32.gmra.mxu0 %v7483
    %v7594 = vpop.f32.mrf.mxu0
    %v7595 = vadd.f32 0.0, %v7594
    %7596 = vmatmul.f32.gmra.mxu0 %v7486
    %v7597 = vpop.f32.mrf.mxu0
    %v7598 = vadd.f32 0.0, %v7597
    %7599 = vmatmul.f32.gmra.mxu0 %v7489
    %v7600 = vpop.f32.mrf.mxu0
    %v7601 = vadd.f32 0.0, %v7600
    %7602 = vmatmul.f32.gmra.mxu0 %v7492
    %v7603 = vpop.f32.mrf.mxu0
    %7604 = vmatmul.f32.gmra.mxu0 %v7495
    %v7605 = vpop.f32.mrf.mxu0
    %7606 = vmatmul.f32.gmra.mxu0 %v7498
    %v7607 = vpop.f32.mrf.mxu0
    %7608 = vmatmul.f32.gmra.mxu0 %v7501
    %v7609 = vpop.f32.mrf.mxu0
    %7610 = vmatmul.f32.gmra.mxu0 %v7504
    %v7611 = vpop.f32.mrf.mxu0
    %7612 = vmatmul.f32.gmra.mxu0 %v7507
    %v7613 = vpop.f32.mrf.mxu0
    %7614 = vmatmul.f32.gmra.mxu0 %v7510
    %v7615 = vpop.f32.mrf.mxu0
    %7616 = vdwg.mxu0
    %v7618 = vsel %vm7300, %v7351, 0
    %7620 = vmatpush.msra.mxu0 0.0
    %7621 = vmatpush.msra.mxu0 0.0
    %7622 = vmatpush.msra.mxu0 0.0
    %7623 = vmatpush.msra.mxu0 0.0
    %7624 = vmatpush.msra.mxu0 0.0
    %7625 = vmatpush.msra.mxu0 0.0
    %7626 = vmatpush.msra.mxu0 0.0
    %7627 = vmatpush.msra.mxu0 0.0
    %7628 = vmatpush.msra.mxu0 %v7394
    %7629 = vmatpush.msra.mxu0 %v7393
    %7630 = vmatpush.msra.mxu0 %v7392
    %7631 = vmatpush.msra.mxu0 %v7391
    %7632 = vmatpush.msra.mxu0 %v7390
    %7633 = vmatpush.msra.mxu0 %v7389
    %7634 = vmatpush.msra.mxu0 %v7388
    %7635 = vmatpush.msra.mxu0 %v7387
    %7636 = vmatmul.f32.gmra.mxu0 %v7618
    %v7637 = vpop.f32.mrf.mxu0
    %7638 = vmatmul.f32.gmra.mxu0 %v7405
    %v7639 = vpop.f32.mrf.mxu0
    %7640 = vmatmul.f32.gmra.mxu0 %v7408
    %v7641 = vpop.f32.mrf.mxu0
    %7642 = vmatmul.f32.gmra.mxu0 %v7411
    %v7643 = vpop.f32.mrf.mxu0
    %7644 = vmatmul.f32.gmra.mxu0 %v7414
    %v7645 = vpop.f32.mrf.mxu0
    %7646 = vmatmul.f32.gmra.mxu0 %v7417
    %v7647 = vpop.f32.mrf.mxu0
    %7648 = vmatmul.f32.gmra.mxu0 %v7420
    %v7649 = vpop.f32.mrf.mxu0
    %7650 = vmatmul.f32.gmra.mxu0 %v7423
    %v7651 = vpop.f32.mrf.mxu0
    %v7652 = vadd.f32 %v7544, %v7651
    %7653 = vmatmul.f32.gmra.mxu0 %v7426
    %v7654 = vpop.f32.mrf.mxu0
    %v7655 = vadd.f32 %v7547, %v7654
    %7656 = vmatmul.f32.gmra.mxu0 %v7429
    %v7657 = vpop.f32.mrf.mxu0
    %v7658 = vadd.f32 %v7550, %v7657
    %7659 = vmatmul.f32.gmra.mxu0 %v7432
    %v7660 = vpop.f32.mrf.mxu0
    %v7661 = vadd.f32 %v7553, %v7660
    %7662 = vmatmul.f32.gmra.mxu0 %v7435
    %v7663 = vpop.f32.mrf.mxu0
    %7664 = vmatmul.f32.gmra.mxu0 %v7438
    %v7665 = vpop.f32.mrf.mxu0
    %7666 = vmatmul.f32.gmra.mxu0 %v7441
    %v7667 = vpop.f32.mrf.mxu0
    %v7668 = vadd.f32 %v7560, %v7667
    %7669 = vmatmul.f32.gmra.mxu0 %v7444
    %v7670 = vpop.f32.mrf.mxu0
    %v7671 = vadd.f32 %v7563, %v7670
    %7672 = vmatmul.f32.gmra.mxu0 %v7447
    %v7673 = vpop.f32.mrf.mxu0
    %v7674 = vadd.f32 %v7566, %v7673
    %7675 = vmatmul.f32.gmra.mxu0 %v7450
    %v7676 = vpop.f32.mrf.mxu0
    %v7677 = vadd.f32 %v7569, %v7676
    %7678 = vmatmul.f32.gmra.mxu0 %v7453
    %v7679 = vpop.f32.mrf.mxu0
    %7680 = vmatmul.f32.gmra.mxu0 %v7456
    %v7681 = vpop.f32.mrf.mxu0
    %7682 = vmatmul.f32.gmra.mxu0 %v7459
    %v7683 = vpop.f32.mrf.mxu0
    %v7684 = vadd.f32 %v7576, %v7683
    %7685 = vmatmul.f32.gmra.mxu0 %v7462
    %v7686 = vpop.f32.mrf.mxu0
    %v7687 = vadd.f32 %v7579, %v7686
    %7688 = vmatmul.f32.gmra.mxu0 %v7465
    %v7689 = vpop.f32.mrf.mxu0
    %v7690 = vadd.f32 %v7582, %v7689
    %7691 = vmatmul.f32.gmra.mxu0 %v7468
    %v7692 = vpop.f32.mrf.mxu0
    %v7693 = vadd.f32 %v7585, %v7692
    %7694 = vmatmul.f32.gmra.mxu0 %v7471
    %v7695 = vpop.f32.mrf.mxu0
    %7696 = vmatmul.f32.gmra.mxu0 %v7474
    %v7697 = vpop.f32.mrf.mxu0
    %7698 = vmatmul.f32.gmra.mxu0 %v7477
    %v7699 = vpop.f32.mrf.mxu0
    %v7700 = vadd.f32 %v7592, %v7699
    %7701 = vmatmul.f32.gmra.mxu0 %v7480
    %v7702 = vpop.f32.mrf.mxu0
    %v7703 = vadd.f32 %v7595, %v7702
    %7704 = vmatmul.f32.gmra.mxu0 %v7483
    %v7705 = vpop.f32.mrf.mxu0
    %v7706 = vadd.f32 %v7598, %v7705
    %7707 = vmatmul.f32.gmra.mxu0 %v7486
    %v7708 = vpop.f32.mrf.mxu0
    %v7709 = vadd.f32 %v7601, %v7708
    %7710 = vmatmul.f32.gmra.mxu0 %v7489
    %v7711 = vpop.f32.mrf.mxu0
    %7712 = vmatmul.f32.gmra.mxu0 %v7492
    %v7713 = vpop.f32.mrf.mxu0
    %7714 = vmatmul.f32.gmra.mxu0 %v7495
    %v7715 = vpop.f32.mrf.mxu0
    %7716 = vmatmul.f32.gmra.mxu0 %v7498
    %v7717 = vpop.f32.mrf.mxu0
    %7718 = vmatmul.f32.gmra.mxu0 %v7501
    %v7719 = vpop.f32.mrf.mxu0
    %7720 = vmatmul.f32.gmra.mxu0 %v7504
    %v7721 = vpop.f32.mrf.mxu0
    %7722 = vmatmul.f32.gmra.mxu0 %v7507
    %v7723 = vpop.f32.mrf.mxu0
    %7724 = vdwg.mxu0
    %v7725 = vld [vmem:[#allocation3 + $0x10] sm:$0xff]
    %v7726 = vld [vmem:[#allocation3 + $0x18] sm:$0xff]
    %v7727 = vld [vmem:[#allocation3 + $0x20] sm:$0xff]
    %v7728 = vld [vmem:[#allocation3 + $0x28] sm:$0xff]
    %v7729 = vld [vmem:[#allocation3 + $0x30] sm:$0xff]
    %v7730 = vld [vmem:[#allocation3 + $0x38] sm:$0xff]
    %v7731 = vld [vmem:[#allocation3 + $0x40] sm:$0xff]
    %v7732 = vld [vmem:[#allocation3 + $0x48] sm:$0xff]
    %v7733 = vld [vmem:[#allocation3 + $0x50] sm:$0xff]
    %v7734 = vld [vmem:[#allocation3 + $0x58] sm:$0xff]
    %v7735 = vld [vmem:[#allocation3 + $0x60] sm:$0xff]
    %v7736 = vld [vmem:[#allocation3 + $0x68] sm:$0xff]
    %v7737 = vld [vmem:[#allocation3 + $0x70] sm:$0xff]
    %v7738 = vld [vmem:[#allocation3 + $0x78] sm:$0xff]
    %v7739 = vld [vmem:[#allocation3 + $0x80] sm:$0xff]
    %v7740 = vld [vmem:[#allocation3 + $0x88] sm:$0xff]
    %v7741 = vld [vmem:[#allocation3 + $0x90] sm:$0xff]
    %v7742 = vld [vmem:[#allocation3 + $0x98] sm:$0xff]
    %v7743 = vld [vmem:[#allocation3 + $0xa0] sm:$0xff]
    %v7744 = vld [vmem:[#allocation3 + $0xa8] sm:$0xff]
    %v7745 = vld [vmem:[#allocation3 + $0xb0] sm:$0xff]
    %v7746 = vld [vmem:[#allocation3 + $0xb8] sm:$0xff]
    %v7747 = vld [vmem:[#allocation3 + $0xc0] sm:$0xff]
    %v7748 = vld [vmem:[#allocation3 + $0xc8] sm:$0xff]
    %v7749 = vld [vmem:[#allocation3 + $0xd0] sm:$0xff]
    %v7750 = vld [vmem:[#allocation3 + $0xd8] sm:$0xff]
    %v7751 = vld [vmem:[#allocation3 + $0xe0] sm:$0xff]
    %v7752 = vld [vmem:[#allocation3 + $0xe8] sm:$0xff]
    %v7753 = vld [vmem:[#allocation3 + $0xf0] sm:$0xff]
    %v7754 = vld [vmem:[#allocation3 + $0xf8] sm:$0xff]
    %v7755 = vld [vmem:[#allocation3 + $0x100] sm:$0xff]
    %v7756 = vld [vmem:[#allocation3 + $0x108] sm:$0xff]
    %v7757 = vld [vmem:[#allocation3 + $0x110] sm:$0xff]
    %v7758 = vld [vmem:[#allocation3 + $0x118] sm:$0xff]
    %v7759 = vld [vmem:[#allocation3 + $0x120] sm:$0xff]
    %v7760 = vld [vmem:[#allocation3 + $0x128] sm:$0xff]
    %v7761 = vld [vmem:[#allocation7 + $0x80] sm:$0xff]
    %v7762 = vld [vmem:[#allocation7 + $0x88] sm:$0xff]
    %vm7763 = vcmask 130048
    %v7765 = vsel %vm7763, %v7725, 0
    %v7768 = vsel %vm7763, %v7726, 0
    %v7771 = vsel %vm7763, %v7727, 0
    %v7774 = vsel %vm7763, %v7728, 0
    %v7777 = vsel %vm7763, %v7729, 0
    %v7780 = vsel %vm7763, %v7730, 0
    %v7783 = vsel %vm7763, %v7731, 0
    %v7786 = vsel %vm7763, %v7732, 0
    %v7789 = vsel %vm7763, %v7733, 0
    %v7792 = vsel %vm7763, %v7734, 0
    %v7795 = vsel %vm7763, %v7735, 0
    %v7798 = vsel %vm7763, %v7736, 0
    %v7801 = vsel %vm7763, %v7737, 0
    %v7804 = vsel %vm7763, %v7738, 0
    %v7807 = vsel %vm7763, %v7739, 0
    %v7810 = vsel %vm7763, %v7740, 0
    %v7813 = vsel %vm7763, %v7741, 0
    %v7816 = vsel %vm7763, %v7742, 0
    %v7819 = vsel %vm7763, %v7743, 0
    %v7822 = vsel %vm7763, %v7744, 0
    %v7825 = vsel %vm7763, %v7745, 0
    %v7828 = vsel %vm7763, %v7746, 0
    %v7831 = vsel %vm7763, %v7747, 0
    %v7834 = vsel %vm7763, %v7748, 0
    %v7837 = vsel %vm7763, %v7749, 0
    %v7840 = vsel %vm7763, %v7750, 0
    %v7843 = vsel %vm7763, %v7751, 0
    %v7846 = vsel %vm7763, %v7752, 0
    %v7849 = vsel %vm7763, %v7753, 0
    %v7852 = vsel %vm7763, %v7754, 0
    %v7855 = vsel %vm7763, %v7755, 0
    %v7858 = vsel %vm7763, %v7756, 0
    %v7861 = vsel %vm7763, %v7757, 0
    %v7864 = vsel %vm7763, %v7758, 0
    %v7867 = vsel %vm7763, %v7759, 0
    %v7870 = vsel %vm7763, %v7760, 0
    %7872 = vmatpush.msra.mxu0 0.0
    %7873 = vmatpush.msra.mxu0 0.0
    %7874 = vmatpush.msra.mxu0 0.0
    %7875 = vmatpush.msra.mxu0 0.0
    %7876 = vmatpush.msra.mxu0 0.0
    %7877 = vmatpush.msra.mxu0 0.0
    %7878 = vmatpush.msra.mxu0 0.0
    %7879 = vmatpush.msra.mxu0 0.0
    %7880 = vmatpush.msra.mxu0 0.0
    %7881 = vmatpush.msra.mxu0 0.0
    %7882 = vmatpush.msra.mxu0 0.0
    %7883 = vmatpush.msra.mxu0 0.0
    %7884 = vmatpush.msra.mxu0 0.0
    %7885 = vmatpush.msra.mxu0 0.0
    %7886 = vmatpush.msra.mxu0 %v7762
    %7887 = vmatpush.msra.mxu0 %v7761
    %7888 = vmatmul.f32.gmra.mxu0 %v7765
    %v7889 = vpop.f32.mrf.mxu0
    %7890 = vmatmul.f32.gmra.mxu0 %v7768
    %v7891 = vpop.f32.mrf.mxu0
    %7892 = vmatmul.f32.gmra.mxu0 %v7771
    %v7893 = vpop.f32.mrf.mxu0
    %7894 = vmatmul.f32.gmra.mxu0 %v7774
    %v7895 = vpop.f32.mrf.mxu0
    %7896 = vmatmul.f32.gmra.mxu0 %v7777
    %v7897 = vpop.f32.mrf.mxu0
    %7898 = vmatmul.f32.gmra.mxu0 %v7780
    %v7899 = vpop.f32.mrf.mxu0
    %7900 = vmatmul.f32.gmra.mxu0 %v7783
    %v7901 = vpop.f32.mrf.mxu0
    %7902 = vmatmul.f32.gmra.mxu0 %v7786
    %v7903 = vpop.f32.mrf.mxu0
    %v7904 = vadd.f32 0.0, %v7903
    %7905 = vmatmul.f32.gmra.mxu0 %v7789
    %v7906 = vpop.f32.mrf.mxu0
    %v7907 = vadd.f32 0.0, %v7906
    %7908 = vmatmul.f32.gmra.mxu0 %v7792
    %v7909 = vpop.f32.mrf.mxu0
    %v7910 = vadd.f32 0.0, %v7909
    %7911 = vmatmul.f32.gmra.mxu0 %v7795
    %v7912 = vpop.f32.mrf.mxu0
    %v7913 = vadd.f32 0.0, %v7912
    %7914 = vmatmul.f32.gmra.mxu0 %v7798
    %v7915 = vpop.f32.mrf.mxu0
    %7916 = vmatmul.f32.gmra.mxu0 %v7801
    %v7917 = vpop.f32.mrf.mxu0
    %7918 = vmatmul.f32.gmra.mxu0 %v7804
    %v7919 = vpop.f32.mrf.mxu0
    %v7920 = vadd.f32 0.0, %v7919
    %7921 = vmatmul.f32.gmra.mxu0 %v7807
    %v7922 = vpop.f32.mrf.mxu0
    %v7923 = vadd.f32 0.0, %v7922
    %7924 = vmatmul.f32.gmra.mxu0 %v7810
    %v7925 = vpop.f32.mrf.mxu0
    %v7926 = vadd.f32 0.0, %v7925
    %7927 = vmatmul.f32.gmra.mxu0 %v7813
    %v7928 = vpop.f32.mrf.mxu0
    %v7929 = vadd.f32 0.0, %v7928
    %7930 = vmatmul.f32.gmra.mxu0 %v7816
    %v7931 = vpop.f32.mrf.mxu0
    %7932 = vmatmul.f32.gmra.mxu0 %v7819
    %v7933 = vpop.f32.mrf.mxu0
    %7934 = vmatmul.f32.gmra.mxu0 %v7822
    %v7935 = vpop.f32.mrf.mxu0
    %v7936 = vadd.f32 0.0, %v7935
    %7937 = vmatmul.f32.gmra.mxu0 %v7825
    %v7938 = vpop.f32.mrf.mxu0
    %v7939 = vadd.f32 0.0, %v7938
    %7940 = vmatmul.f32.gmra.mxu0 %v7828
    %v7941 = vpop.f32.mrf.mxu0
    %v7942 = vadd.f32 0.0, %v7941
    %7943 = vmatmul.f32.gmra.mxu0 %v7831
    %v7944 = vpop.f32.mrf.mxu0
    %v7945 = vadd.f32 0.0, %v7944
    %7946 = vmatmul.f32.gmra.mxu0 %v7834
    %v7947 = vpop.f32.mrf.mxu0
    %7948 = vmatmul.f32.gmra.mxu0 %v7837
    %v7949 = vpop.f32.mrf.mxu0
    %7950 = vmatmul.f32.gmra.mxu0 %v7840
    %v7951 = vpop.f32.mrf.mxu0
    %v7952 = vadd.f32 0.0, %v7951
    %7953 = vmatmul.f32.gmra.mxu0 %v7843
    %v7954 = vpop.f32.mrf.mxu0
    %v7955 = vadd.f32 0.0, %v7954
    %7956 = vmatmul.f32.gmra.mxu0 %v7846
    %v7957 = vpop.f32.mrf.mxu0
    %v7958 = vadd.f32 0.0, %v7957
    %7959 = vmatmul.f32.gmra.mxu0 %v7849
    %v7960 = vpop.f32.mrf.mxu0
    %v7961 = vadd.f32 0.0, %v7960
    %7962 = vmatmul.f32.gmra.mxu0 %v7852
    %v7963 = vpop.f32.mrf.mxu0
    %7964 = vmatmul.f32.gmra.mxu0 %v7855
    %v7965 = vpop.f32.mrf.mxu0
    %7966 = vmatmul.f32.gmra.mxu0 %v7858
    %v7967 = vpop.f32.mrf.mxu0
    %7968 = vmatmul.f32.gmra.mxu0 %v7861
    %v7969 = vpop.f32.mrf.mxu0
    %7970 = vmatmul.f32.gmra.mxu0 %v7864
    %v7971 = vpop.f32.mrf.mxu0
    %7972 = vmatmul.f32.gmra.mxu0 %v7867
    %v7973 = vpop.f32.mrf.mxu0
    %7974 = vmatmul.f32.gmra.mxu0 %v7870
    %v7975 = vpop.f32.mrf.mxu0
    %7976 = vdwg.mxu0
    %v7977 = vadd.f32 %v7652, %v7904
    %v7978 = vadd.f32 %v7655, %v7907
    %v7979 = vadd.f32 %v7658, %v7910
    %v7980 = vadd.f32 %v7661, %v7913
    %v7981 = vadd.f32 %v7668, %v7920
    %v7982 = vadd.f32 %v7671, %v7923
    %v7983 = vadd.f32 %v7674, %v7926
    %v7984 = vadd.f32 %v7677, %v7929
    %v7985 = vadd.f32 %v7684, %v7936
    %v7986 = vadd.f32 %v7687, %v7939
    %v7987 = vadd.f32 %v7690, %v7942
    %v7988 = vadd.f32 %v7693, %v7945
    %v7989 = vadd.f32 %v7700, %v7952
    %v7990 = vadd.f32 %v7703, %v7955
    %v7991 = vadd.f32 %v7706, %v7958
    %v7992 = vadd.f32 %v7709, %v7961
    %v7993 = vld [vmem:[#allocation7 + $0x90] sm:$0xff]
    %v7994 = vld [vmem:[#allocation7 + $0x98] sm:$0xff]
    %7995 = vrot.lane.b32.xlu0 %v7725, 96
    %v7996 = vpop.permute.xlu0 %7995
    %7997 = vrot.lane.b32.xlu0 %v7726, 96
    %v7998 = vpop.permute.xlu0 %7997
    %7999 = vrot.lane.b32.xlu0 %v7727, 96
    %v8000 = vpop.permute.xlu0 %7999
    %8001 = vrot.lane.b32.xlu0 %v7728, 96
    %v8002 = vpop.permute.xlu0 %8001
    %8003 = vrot.lane.b32.xlu0 %v7729, 96
    %v8004 = vpop.permute.xlu0 %8003
    %8005 = vrot.lane.b32.xlu0 %v7730, 96
    %v8006 = vpop.permute.xlu0 %8005
    %8007 = vrot.lane.b32.xlu0 %v7731, 96
    %v8008 = vpop.permute.xlu0 %8007
    %8009 = vrot.lane.b32.xlu0 %v7732, 96
    %v8010 = vpop.permute.xlu0 %8009
    %8011 = vrot.lane.b32.xlu0 %v7733, 96
    %v8012 = vpop.permute.xlu0 %8011
    %8013 = vrot.lane.b32.xlu0 %v7734, 96
    %v8014 = vpop.permute.xlu0 %8013
    %8015 = vrot.lane.b32.xlu0 %v7735, 96
    %v8016 = vpop.permute.xlu0 %8015
    %8017 = vrot.lane.b32.xlu0 %v7736, 96
    %v8018 = vpop.permute.xlu0 %8017
    %8019 = vrot.lane.b32.xlu0 %v7737, 96
    %v8020 = vpop.permute.xlu0 %8019
    %8021 = vrot.lane.b32.xlu0 %v7738, 96
    %v8022 = vpop.permute.xlu0 %8021
    %8023 = vrot.lane.b32.xlu0 %v7739, 96
    %v8024 = vpop.permute.xlu0 %8023
    %8025 = vrot.lane.b32.xlu0 %v7740, 96
    %v8026 = vpop.permute.xlu0 %8025
    %8027 = vrot.lane.b32.xlu0 %v7741, 96
    %v8028 = vpop.permute.xlu0 %8027
    %8029 = vrot.lane.b32.xlu0 %v7742, 96
    %v8030 = vpop.permute.xlu0 %8029
    %8031 = vrot.lane.b32.xlu0 %v7743, 96
    %v8032 = vpop.permute.xlu0 %8031
    %8033 = vrot.lane.b32.xlu0 %v7744, 96
    %v8034 = vpop.permute.xlu0 %8033
    %8035 = vrot.lane.b32.xlu0 %v7745, 96
    %v8036 = vpop.permute.xlu0 %8035
    %8037 = vrot.lane.b32.xlu0 %v7746, 96
    %v8038 = vpop.permute.xlu0 %8037
    %8039 = vrot.lane.b32.xlu0 %v7747, 96
    %v8040 = vpop.permute.xlu0 %8039
    %8041 = vrot.lane.b32.xlu0 %v7748, 96
    %v8042 = vpop.permute.xlu0 %8041
    %8043 = vrot.lane.b32.xlu0 %v7749, 96
    %v8044 = vpop.permute.xlu0 %8043
    %8045 = vrot.lane.b32.xlu0 %v7750, 96
    %v8046 = vpop.permute.xlu0 %8045
    %8047 = vrot.lane.b32.xlu0 %v7751, 96
    %v8048 = vpop.permute.xlu0 %8047
    %8049 = vrot.lane.b32.xlu0 %v7752, 96
    %v8050 = vpop.permute.xlu0 %8049
    %8051 = vrot.lane.b32.xlu0 %v7753, 96
    %v8052 = vpop.permute.xlu0 %8051
    %8053 = vrot.lane.b32.xlu0 %v7754, 96
    %v8054 = vpop.permute.xlu0 %8053
    %8055 = vrot.lane.b32.xlu0 %v7755, 96
    %v8056 = vpop.permute.xlu0 %8055
    %8057 = vrot.lane.b32.xlu0 %v7756, 96
    %v8058 = vpop.permute.xlu0 %8057
    %8059 = vrot.lane.b32.xlu0 %v7757, 96
    %v8060 = vpop.permute.xlu0 %8059
    %8061 = vrot.lane.b32.xlu0 %v7758, 96
    %v8062 = vpop.permute.xlu0 %8061
    %8063 = vrot.lane.b32.xlu0 %v7759, 96
    %v8064 = vpop.permute.xlu0 %8063
    %8065 = vrot.lane.b32.xlu0 %v7760, 96
    %v8066 = vpop.permute.xlu0 %8065
    %v8067 = vsel %vm7763, %v7996, 0
    %v8069 = vsel %vm7763, %v7998, 0
    %v8071 = vsel %vm7763, %v8000, 0
    %v8073 = vsel %vm7763, %v8002, 0
    %v8075 = vsel %vm7763, %v8004, 0
    %v8077 = vsel %vm7763, %v8006, 0
    %v8079 = vsel %vm7763, %v8008, 0
    %v8081 = vsel %vm7763, %v8010, 0
    %v8083 = vsel %vm7763, %v8012, 0
    %v8085 = vsel %vm7763, %v8014, 0
    %v8087 = vsel %vm7763, %v8016, 0
    %v8089 = vsel %vm7763, %v8018, 0
    %v8091 = vsel %vm7763, %v8020, 0
    %v8093 = vsel %vm7763, %v8022, 0
    %v8095 = vsel %vm7763, %v8024, 0
    %v8097 = vsel %vm7763, %v8026, 0
    %v8099 = vsel %vm7763, %v8028, 0
    %v8101 = vsel %vm7763, %v8030, 0
    %v8103 = vsel %vm7763, %v8032, 0
    %v8105 = vsel %vm7763, %v8034, 0
    %v8107 = vsel %vm7763, %v8036, 0
    %v8109 = vsel %vm7763, %v8038, 0
    %v8111 = vsel %vm7763, %v8040, 0
    %v8113 = vsel %vm7763, %v8042, 0
    %v8115 = vsel %vm7763, %v8044, 0
    %v8117 = vsel %vm7763, %v8046, 0
    %v8119 = vsel %vm7763, %v8048, 0
    %v8121 = vsel %vm7763, %v8050, 0
    %v8123 = vsel %vm7763, %v8052, 0
    %v8125 = vsel %vm7763, %v8054, 0
    %v8127 = vsel %vm7763, %v8056, 0
    %v8129 = vsel %vm7763, %v8058, 0
    %v8131 = vsel %vm7763, %v8060, 0
    %v8133 = vsel %vm7763, %v8062, 0
    %v8135 = vsel %vm7763, %v8064, 0
    %v8137 = vsel %vm7763, %v8066, 0
    %8139 = vmatpush.msra.mxu0 0.0
    %8140 = vmatpush.msra.mxu0 0.0
    %8141 = vmatpush.msra.mxu0 0.0
    %8142 = vmatpush.msra.mxu0 0.0
    %8143 = vmatpush.msra.mxu0 0.0
    %8144 = vmatpush.msra.mxu0 0.0
    %8145 = vmatpush.msra.mxu0 0.0
    %8146 = vmatpush.msra.mxu0 0.0
    %8147 = vmatpush.msra.mxu0 0.0
    %8148 = vmatpush.msra.mxu0 0.0
    %8149 = vmatpush.msra.mxu0 0.0
    %8150 = vmatpush.msra.mxu0 0.0
    %8151 = vmatpush.msra.mxu0 0.0
    %8152 = vmatpush.msra.mxu0 0.0
    %8153 = vmatpush.msra.mxu0 %v7994
    %8154 = vmatpush.msra.mxu0 %v7993
    %8155 = vmatmul.f32.gmra.mxu0 %v8067
    %v8156 = vpop.f32.mrf.mxu0
    %8157 = vmatmul.f32.gmra.mxu0 %v8069
    %v8158 = vpop.f32.mrf.mxu0
    %8159 = vmatmul.f32.gmra.mxu0 %v8071
    %v8160 = vpop.f32.mrf.mxu0
    %8161 = vmatmul.f32.gmra.mxu0 %v8073
    %v8162 = vpop.f32.mrf.mxu0
    %8163 = vmatmul.f32.gmra.mxu0 %v8075
    %v8164 = vpop.f32.mrf.mxu0
    %8165 = vmatmul.f32.gmra.mxu0 %v8077
    %v8166 = vpop.f32.mrf.mxu0
    %8167 = vmatmul.f32.gmra.mxu0 %v8079
    %v8168 = vpop.f32.mrf.mxu0
    %8169 = vmatmul.f32.gmra.mxu0 %v8081
    %v8170 = vpop.f32.mrf.mxu0
    %v8171 = vadd.f32 0.0, %v8170
    %8172 = vmatmul.f32.gmra.mxu0 %v8083
    %v8173 = vpop.f32.mrf.mxu0
    %v8174 = vadd.f32 0.0, %v8173
    %8175 = vmatmul.f32.gmra.mxu0 %v8085
    %v8176 = vpop.f32.mrf.mxu0
    %v8177 = vadd.f32 0.0, %v8176
    %8178 = vmatmul.f32.gmra.mxu0 %v8087
    %v8179 = vpop.f32.mrf.mxu0
    %v8180 = vadd.f32 0.0, %v8179
    %8181 = vmatmul.f32.gmra.mxu0 %v8089
    %v8182 = vpop.f32.mrf.mxu0
    %8183 = vmatmul.f32.gmra.mxu0 %v8091
    %v8184 = vpop.f32.mrf.mxu0
    %8185 = vmatmul.f32.gmra.mxu0 %v8093
    %v8186 = vpop.f32.mrf.mxu0
    %v8187 = vadd.f32 0.0, %v8186
    %8188 = vmatmul.f32.gmra.mxu0 %v8095
    %v8189 = vpop.f32.mrf.mxu0
    %v8190 = vadd.f32 0.0, %v8189
    %8191 = vmatmul.f32.gmra.mxu0 %v8097
    %v8192 = vpop.f32.mrf.mxu0
    %v8193 = vadd.f32 0.0, %v8192
    %8194 = vmatmul.f32.gmra.mxu0 %v8099
    %v8195 = vpop.f32.mrf.mxu0
    %v8196 = vadd.f32 0.0, %v8195
    %8197 = vmatmul.f32.gmra.mxu0 %v8101
    %v8198 = vpop.f32.mrf.mxu0
    %8199 = vmatmul.f32.gmra.mxu0 %v8103
    %v8200 = vpop.f32.mrf.mxu0
    %8201 = vmatmul.f32.gmra.mxu0 %v8105
    %v8202 = vpop.f32.mrf.mxu0
    %v8203 = vadd.f32 0.0, %v8202
    %8204 = vmatmul.f32.gmra.mxu0 %v8107
    %v8205 = vpop.f32.mrf.mxu0
    %v8206 = vadd.f32 0.0, %v8205
    %8207 = vmatmul.f32.gmra.mxu0 %v8109
    %v8208 = vpop.f32.mrf.mxu0
    %v8209 = vadd.f32 0.0, %v8208
    %8210 = vmatmul.f32.gmra.mxu0 %v8111
    %v8211 = vpop.f32.mrf.mxu0
    %v8212 = vadd.f32 0.0, %v8211
    %8213 = vmatmul.f32.gmra.mxu0 %v8113
    %v8214 = vpop.f32.mrf.mxu0
    %8215 = vmatmul.f32.gmra.mxu0 %v8115
    %v8216 = vpop.f32.mrf.mxu0
    %8217 = vmatmul.f32.gmra.mxu0 %v8117
    %v8218 = vpop.f32.mrf.mxu0
    %v8219 = vadd.f32 0.0, %v8218
    %8220 = vmatmul.f32.gmra.mxu0 %v8119
    %v8221 = vpop.f32.mrf.mxu0
    %v8222 = vadd.f32 0.0, %v8221
    %8223 = vmatmul.f32.gmra.mxu0 %v8121
    %v8224 = vpop.f32.mrf.mxu0
    %v8225 = vadd.f32 0.0, %v8224
    %8226 = vmatmul.f32.gmra.mxu0 %v8123
    %v8227 = vpop.f32.mrf.mxu0
    %v8228 = vadd.f32 0.0, %v8227
    %8229 = vmatmul.f32.gmra.mxu0 %v8125
    %v8230 = vpop.f32.mrf.mxu0
    %8231 = vmatmul.f32.gmra.mxu0 %v8127
    %v8232 = vpop.f32.mrf.mxu0
    %8233 = vmatmul.f32.gmra.mxu0 %v8129
    %v8234 = vpop.f32.mrf.mxu0
    %8235 = vmatmul.f32.gmra.mxu0 %v8131
    %v8236 = vpop.f32.mrf.mxu0
    %8237 = vmatmul.f32.gmra.mxu0 %v8133
    %v8238 = vpop.f32.mrf.mxu0
    %8239 = vmatmul.f32.gmra.mxu0 %v8135
    %v8240 = vpop.f32.mrf.mxu0
    %8241 = vmatmul.f32.gmra.mxu0 %v8137
    %v8242 = vpop.f32.mrf.mxu0
    %8243 = vdwg.mxu0
    %v8244 = vadd.f32 %v7977, %v8171
    %v8245 = vadd.f32 %v7978, %v8174
    %v8246 = vadd.f32 %v7979, %v8177
    %v8247 = vadd.f32 %v7980, %v8180
    %v8248 = vadd.f32 %v7981, %v8187
    %v8249 = vadd.f32 %v7982, %v8190
    %v8250 = vadd.f32 %v7983, %v8193
    %v8251 = vadd.f32 %v7984, %v8196
    %v8252 = vadd.f32 %v7985, %v8203
    %v8253 = vadd.f32 %v7986, %v8206
    %v8254 = vadd.f32 %v7987, %v8209
    %v8255 = vadd.f32 %v7988, %v8212
    %v8256 = vadd.f32 %v7989, %v8219
    %v8257 = vadd.f32 %v7990, %v8222
    %v8258 = vadd.f32 %v7991, %v8225
    %v8259 = vadd.f32 %v7992, %v8228
    %v8260 = vld [vmem:[#allocation3 + $0x30] sm:$0xff]
    %v8261 = vld [vmem:[#allocation3 + $0x38] sm:$0xff]
    %v8262 = vld [vmem:[#allocation3 + $0x40] sm:$0xff]
    %v8263 = vld [vmem:[#allocation3 + $0x48] sm:$0xff]
    %v8264 = vld [vmem:[#allocation3 + $0x50] sm:$0xff]
    %v8265 = vld [vmem:[#allocation3 + $0x58] sm:$0xff]
    %v8266 = vld [vmem:[#allocation3 + $0x60] sm:$0xff]
    %v8267 = vld [vmem:[#allocation3 + $0x68] sm:$0xff]
    %v8268 = vld [vmem:[#allocation3 + $0x70] sm:$0xff]
    %v8269 = vld [vmem:[#allocation3 + $0x78] sm:$0xff]
    %v8270 = vld [vmem:[#allocation3 + $0x80] sm:$0xff]
    %v8271 = vld [vmem:[#allocation3 + $0x88] sm:$0xff]
    %v8272 = vld [vmem:[#allocation3 + $0x90] sm:$0xff]
    %v8273 = vld [vmem:[#allocation3 + $0x98] sm:$0xff]
    %v8274 = vld [vmem:[#allocation3 + $0xa0] sm:$0xff]
    %v8275 = vld [vmem:[#allocation3 + $0xa8] sm:$0xff]
    %v8276 = vld [vmem:[#allocation3 + $0xb0] sm:$0xff]
    %v8277 = vld [vmem:[#allocation3 + $0xb8] sm:$0xff]
    %v8278 = vld [vmem:[#allocation3 + $0xc0] sm:$0xff]
    %v8279 = vld [vmem:[#allocation3 + $0xc8] sm:$0xff]
    %v8280 = vld [vmem:[#allocation3 + $0xd0] sm:$0xff]
    %v8281 = vld [vmem:[#allocation3 + $0xd8] sm:$0xff]
    %v8282 = vld [vmem:[#allocation3 + $0xe0] sm:$0xff]
    %v8283 = vld [vmem:[#allocation3 + $0xe8] sm:$0xff]
    %v8284 = vld [vmem:[#allocation3 + $0xf0] sm:$0xff]
    %v8285 = vld [vmem:[#allocation3 + $0xf8] sm:$0xff]
    %v8286 = vld [vmem:[#allocation3 + $0x100] sm:$0xff]
    %v8287 = vld [vmem:[#allocation3 + $0x108] sm:$0xff]
    %v8288 = vld [vmem:[#allocation3 + $0x110] sm:$0xff]
    %v8289 = vld [vmem:[#allocation3 + $0x118] sm:$0xff]
    %v8290 = vld [vmem:[#allocation3 + $0x120] sm:$0xff]
    %v8291 = vld [vmem:[#allocation3 + $0x128] sm:$0xff]
    %v8292 = vld [vmem:[#allocation3 + $0x130] sm:$0xff]
    %v8293 = vld [vmem:[#allocation3 + $0x138] sm:$0xff]
    %v8294 = vld [vmem:[#allocation3 + $0x140] sm:$0xff]
    %v8295 = vld [vmem:[#allocation3 + $0x148] sm:$0xff]
    %v8296 = vld [vmem:[#allocation7 + $0xa0] sm:$0xff]
    %v8297 = vld [vmem:[#allocation7 + $0xa8] sm:$0xff]
    %v8298 = vld [vmem:[#allocation7 + $0xb0] sm:$0xff]
    %v8299 = vld [vmem:[#allocation7 + $0xb8] sm:$0xff]
    %v8300 = vld [vmem:[#allocation7 + $0xc0] sm:$0xff]
    %v8301 = vld [vmem:[#allocation7 + $0xc8] sm:$0xff]
    %v8302 = vld [vmem:[#allocation7 + $0xd0] sm:$0xff]
    %v8303 = vld [vmem:[#allocation7 + $0xd8] sm:$0xff]
    %v8305 = vsel %vm7300, %v8260, 0
    %v8308 = vsel %vm7300, %v8261, 0
    %v8311 = vsel %vm7300, %v8262, 0
    %v8314 = vsel %vm7300, %v8263, 0
    %v8317 = vsel %vm7300, %v8264, 0
    %v8320 = vsel %vm7300, %v8265, 0
    %v8323 = vsel %vm7300, %v8266, 0
    %v8326 = vsel %vm7300, %v8267, 0
    %v8329 = vsel %vm7300, %v8268, 0
    %v8332 = vsel %vm7300, %v8269, 0
    %v8335 = vsel %vm7300, %v8270, 0
    %v8338 = vsel %vm7300, %v8271, 0
    %v8341 = vsel %vm7300, %v8272, 0
    %v8344 = vsel %vm7300, %v8273, 0
    %v8347 = vsel %vm7300, %v8274, 0
    %v8350 = vsel %vm7300, %v8275, 0
    %v8353 = vsel %vm7300, %v8276, 0
    %v8356 = vsel %vm7300, %v8277, 0
    %v8359 = vsel %vm7300, %v8278, 0
    %v8362 = vsel %vm7300, %v8279, 0
    %v8365 = vsel %vm7300, %v8280, 0
    %v8368 = vsel %vm7300, %v8281, 0
    %v8371 = vsel %vm7300, %v8282, 0
    %v8374 = vsel %vm7300, %v8283, 0
    %v8377 = vsel %vm7300, %v8284, 0
    %v8380 = vsel %vm7300, %v8285, 0
    %v8383 = vsel %vm7300, %v8286, 0
    %v8386 = vsel %vm7300, %v8287, 0
    %v8389 = vsel %vm7300, %v8288, 0
    %v8392 = vsel %vm7300, %v8289, 0
    %v8395 = vsel %vm7300, %v8290, 0
    %v8398 = vsel %vm7300, %v8291, 0
    %v8401 = vsel %vm7300, %v8292, 0
    %v8404 = vsel %vm7300, %v8293, 0
    %v8407 = vsel %vm7300, %v8294, 0
    %v8410 = vsel %vm7300, %v8295, 0
    %8412 = vmatpush.msra.mxu0 0.0
    %8413 = vmatpush.msra.mxu0 0.0
    %8414 = vmatpush.msra.mxu0 0.0
    %8415 = vmatpush.msra.mxu0 0.0
    %8416 = vmatpush.msra.mxu0 0.0
    %8417 = vmatpush.msra.mxu0 0.0
    %8418 = vmatpush.msra.mxu0 0.0
    %8419 = vmatpush.msra.mxu0 0.0
    %8420 = vmatpush.msra.mxu0 %v8303
    %8421 = vmatpush.msra.mxu0 %v8302
    %8422 = vmatpush.msra.mxu0 %v8301
    %8423 = vmatpush.msra.mxu0 %v8300
    %8424 = vmatpush.msra.mxu0 %v8299
    %8425 = vmatpush.msra.mxu0 %v8298
    %8426 = vmatpush.msra.mxu0 %v8297
    %8427 = vmatpush.msra.mxu0 %v8296
    %8428 = vmatmul.f32.gmra.mxu0 %v8305
    %v8429 = vpop.f32.mrf.mxu0
    %8430 = vmatmul.f32.gmra.mxu0 %v8308
    %v8431 = vpop.f32.mrf.mxu0
    %8432 = vmatmul.f32.gmra.mxu0 %v8311
    %v8433 = vpop.f32.mrf.mxu0
    %8434 = vmatmul.f32.gmra.mxu0 %v8314
    %v8435 = vpop.f32.mrf.mxu0
    %8436 = vmatmul.f32.gmra.mxu0 %v8317
    %v8437 = vpop.f32.mrf.mxu0
    %8438 = vmatmul.f32.gmra.mxu0 %v8320
    %v8439 = vpop.f32.mrf.mxu0
    %8440 = vmatmul.f32.gmra.mxu0 %v8323
    %v8441 = vpop.f32.mrf.mxu0
    %8442 = vmatmul.f32.gmra.mxu0 %v8326
    %v8443 = vpop.f32.mrf.mxu0
    %v8444 = vadd.f32 0.0, %v8443
    %8445 = vmatmul.f32.gmra.mxu0 %v8329
    %v8446 = vpop.f32.mrf.mxu0
    %v8447 = vadd.f32 0.0, %v8446
    %8448 = vmatmul.f32.gmra.mxu0 %v8332
    %v8449 = vpop.f32.mrf.mxu0
    %v8450 = vadd.f32 0.0, %v8449
    %8451 = vmatmul.f32.gmra.mxu0 %v8335
    %v8452 = vpop.f32.mrf.mxu0
    %v8453 = vadd.f32 0.0, %v8452
    %8454 = vmatmul.f32.gmra.mxu0 %v8338
    %v8455 = vpop.f32.mrf.mxu0
    %8456 = vmatmul.f32.gmra.mxu0 %v8341
    %v8457 = vpop.f32.mrf.mxu0
    %8458 = vmatmul.f32.gmra.mxu0 %v8344
    %v8459 = vpop.f32.mrf.mxu0
    %v8460 = vadd.f32 0.0, %v8459
    %8461 = vmatmul.f32.gmra.mxu0 %v8347
    %v8462 = vpop.f32.mrf.mxu0
    %v8463 = vadd.f32 0.0, %v8462
    %8464 = vmatmul.f32.gmra.mxu0 %v8350
    %v8465 = vpop.f32.mrf.mxu0
    %v8466 = vadd.f32 0.0, %v8465
    %8467 = vmatmul.f32.gmra.mxu0 %v8353
    %v8468 = vpop.f32.mrf.mxu0
    %v8469 = vadd.f32 0.0, %v8468
    %8470 = vmatmul.f32.gmra.mxu0 %v8356
    %v8471 = vpop.f32.mrf.mxu0
    %8472 = vmatmul.f32.gmra.mxu0 %v8359
    %v8473 = vpop.f32.mrf.mxu0
    %8474 = vmatmul.f32.gmra.mxu0 %v8362
    %v8475 = vpop.f32.mrf.mxu0
    %v8476 = vadd.f32 0.0, %v8475
    %8477 = vmatmul.f32.gmra.mxu0 %v8365
    %v8478 = vpop.f32.mrf.mxu0
    %v8479 = vadd.f32 0.0, %v8478
    %8480 = vmatmul.f32.gmra.mxu0 %v8368
    %v8481 = vpop.f32.mrf.mxu0
    %v8482 = vadd.f32 0.0, %v8481
    %8483 = vmatmul.f32.gmra.mxu0 %v8371
    %v8484 = vpop.f32.mrf.mxu0
    %v8485 = vadd.f32 0.0, %v8484
    %8486 = vmatmul.f32.gmra.mxu0 %v8374
    %v8487 = vpop.f32.mrf.mxu0
    %8488 = vmatmul.f32.gmra.mxu0 %v8377
    %v8489 = vpop.f32.mrf.mxu0
    %8490 = vmatmul.f32.gmra.mxu0 %v8380
    %v8491 = vpop.f32.mrf.mxu0
    %v8492 = vadd.f32 0.0, %v8491
    %8493 = vmatmul.f32.gmra.mxu0 %v8383
    %v8494 = vpop.f32.mrf.mxu0
    %v8495 = vadd.f32 0.0, %v8494
    %8496 = vmatmul.f32.gmra.mxu0 %v8386
    %v8497 = vpop.f32.mrf.mxu0
    %v8498 = vadd.f32 0.0, %v8497
    %8499 = vmatmul.f32.gmra.mxu0 %v8389
    %v8500 = vpop.f32.mrf.mxu0
    %v8501 = vadd.f32 0.0, %v8500
    %8502 = vmatmul.f32.gmra.mxu0 %v8392
    %v8503 = vpop.f32.mrf.mxu0
    %8504 = vmatmul.f32.gmra.mxu0 %v8395
    %v8505 = vpop.f32.mrf.mxu0
    %8506 = vmatmul.f32.gmra.mxu0 %v8398
    %v8507 = vpop.f32.mrf.mxu0
    %8508 = vmatmul.f32.gmra.mxu0 %v8401
    %v8509 = vpop.f32.mrf.mxu0
    %8510 = vmatmul.f32.gmra.mxu0 %v8404
    %v8511 = vpop.f32.mrf.mxu0
    %8512 = vmatmul.f32.gmra.mxu0 %v8407
    %v8513 = vpop.f32.mrf.mxu0
    %8514 = vmatmul.f32.gmra.mxu0 %v8410
    %v8515 = vpop.f32.mrf.mxu0
    %8516 = vdwg.mxu0
    %v8517 = vadd.f32 %v8244, %v8444
    %v8518 = vadd.f32 %v8245, %v8447
    %v8519 = vadd.f32 %v8246, %v8450
    %v8520 = vadd.f32 %v8247, %v8453
    %v8521 = vadd.f32 %v8248, %v8460
    %v8522 = vadd.f32 %v8249, %v8463
    %v8523 = vadd.f32 %v8250, %v8466
    %v8524 = vadd.f32 %v8251, %v8469
    %v8525 = vadd.f32 %v8252, %v8476
    %v8526 = vadd.f32 %v8253, %v8479
    %v8527 = vadd.f32 %v8254, %v8482
    %v8528 = vadd.f32 %v8255, %v8485
    %v8529 = vadd.f32 %v8256, %v8492
    %v8530 = vadd.f32 %v8257, %v8495
    %v8531 = vadd.f32 %v8258, %v8498
    %v8532 = vadd.f32 %v8259, %v8501
    %v8533 = vld [vmem:[#allocation3 + $0x38] sm:$0xff]
    %v8534 = vld [vmem:[#allocation3 + $0x40] sm:$0xff]
    %v8535 = vld [vmem:[#allocation3 + $0x48] sm:$0xff]
    %v8536 = vld [vmem:[#allocation3 + $0x50] sm:$0xff]
    %v8537 = vld [vmem:[#allocation3 + $0x58] sm:$0xff]
    %v8538 = vld [vmem:[#allocation3 + $0x60] sm:$0xff]
    %v8539 = vld [vmem:[#allocation3 + $0x68] sm:$0xff]
    %v8540 = vld [vmem:[#allocation3 + $0x70] sm:$0xff]
    %v8541 = vld [vmem:[#allocation3 + $0x78] sm:$0xff]
    %v8542 = vld [vmem:[#allocation3 + $0x80] sm:$0xff]
    %v8543 = vld [vmem:[#allocation3 + $0x88] sm:$0xff]
    %v8544 = vld [vmem:[#allocation3 + $0x90] sm:$0xff]
    %v8545 = vld [vmem:[#allocation3 + $0x98] sm:$0xff]
    %v8546 = vld [vmem:[#allocation3 + $0xa0] sm:$0xff]
    %v8547 = vld [vmem:[#allocation3 + $0xa8] sm:$0xff]
    %v8548 = vld [vmem:[#allocation3 + $0xb0] sm:$0xff]
    %v8549 = vld [vmem:[#allocation3 + $0xb8] sm:$0xff]
    %v8550 = vld [vmem:[#allocation3 + $0xc0] sm:$0xff]
    %v8551 = vld [vmem:[#allocation3 + $0xc8] sm:$0xff]
    %v8552 = vld [vmem:[#allocation3 + $0xd0] sm:$0xff]
    %v8553 = vld [vmem:[#allocation3 + $0xd8] sm:$0xff]
    %v8554 = vld [vmem:[#allocation3 + $0xe0] sm:$0xff]
    %v8555 = vld [vmem:[#allocation3 + $0xe8] sm:$0xff]
    %v8556 = vld [vmem:[#allocation3 + $0xf0] sm:$0xff]
    %v8557 = vld [vmem:[#allocation3 + $0xf8] sm:$0xff]
    %v8558 = vld [vmem:[#allocation3 + $0x100] sm:$0xff]
    %v8559 = vld [vmem:[#allocation3 + $0x108] sm:$0xff]
    %v8560 = vld [vmem:[#allocation3 + $0x110] sm:$0xff]
    %v8561 = vld [vmem:[#allocation3 + $0x118] sm:$0xff]
    %v8562 = vld [vmem:[#allocation3 + $0x120] sm:$0xff]
    %v8563 = vld [vmem:[#allocation3 + $0x128] sm:$0xff]
    %v8564 = vld [vmem:[#allocation3 + $0x130] sm:$0xff]
    %v8565 = vld [vmem:[#allocation3 + $0x138] sm:$0xff]
    %v8566 = vld [vmem:[#allocation3 + $0x140] sm:$0xff]
    %v8567 = vld [vmem:[#allocation3 + $0x148] sm:$0xff]
    %v8568 = vld [vmem:[#allocation3 + $0x150] sm:$0xff]
    %v8569 = vld [vmem:[#allocation7 + $0xe0] sm:$0xff]
    %v8570 = vld [vmem:[#allocation7 + $0xe8] sm:$0xff]
    %v8571 = vld [vmem:[#allocation7 + $0xf0] sm:$0xff]
    %v8572 = vld [vmem:[#allocation7 + $0xf8] sm:$0xff]
    %v8573 = vld [vmem:[#allocation7 + $0x100] sm:$0xff]
    %v8574 = vld [vmem:[#allocation7 + $0x108] sm:$0xff]
    %v8575 = vld [vmem:[#allocation7 + $0x110] sm:$0xff]
    %v8576 = vld [vmem:[#allocation7 + $0x118] sm:$0xff]
    %v8578 = vsel %vm7300, %v8533, 0
    %v8581 = vsel %vm7300, %v8534, 0
    %v8584 = vsel %vm7300, %v8535, 0
    %v8587 = vsel %vm7300, %v8536, 0
    %v8590 = vsel %vm7300, %v8537, 0
    %v8593 = vsel %vm7300, %v8538, 0
    %v8596 = vsel %vm7300, %v8539, 0
    %v8599 = vsel %vm7300, %v8540, 0
    %v8602 = vsel %vm7300, %v8541, 0
    %v8605 = vsel %vm7300, %v8542, 0
    %v8608 = vsel %vm7300, %v8543, 0
    %v8611 = vsel %vm7300, %v8544, 0
    %v8614 = vsel %vm7300, %v8545, 0
    %v8617 = vsel %vm7300, %v8546, 0
    %v8620 = vsel %vm7300, %v8547, 0
    %v8623 = vsel %vm7300, %v8548, 0
    %v8626 = vsel %vm7300, %v8549, 0
    %v8629 = vsel %vm7300, %v8550, 0
    %v8632 = vsel %vm7300, %v8551, 0
    %v8635 = vsel %vm7300, %v8552, 0
    %v8638 = vsel %vm7300, %v8553, 0
    %v8641 = vsel %vm7300, %v8554, 0
    %v8644 = vsel %vm7300, %v8555, 0
    %v8647 = vsel %vm7300, %v8556, 0
    %v8650 = vsel %vm7300, %v8557, 0
    %v8653 = vsel %vm7300, %v8558, 0
    %v8656 = vsel %vm7300, %v8559, 0
    %v8659 = vsel %vm7300, %v8560, 0
    %v8662 = vsel %vm7300, %v8561, 0
    %v8665 = vsel %vm7300, %v8562, 0
    %v8668 = vsel %vm7300, %v8563, 0
    %v8671 = vsel %vm7300, %v8564, 0
    %v8674 = vsel %vm7300, %v8565, 0
    %v8677 = vsel %vm7300, %v8566, 0
    %v8680 = vsel %vm7300, %v8567, 0
    %v8683 = vsel %vm7300, %v8568, 0
    %8685 = vmatpush.msra.mxu0 0.0
    %8686 = vmatpush.msra.mxu0 0.0
    %8687 = vmatpush.msra.mxu0 0.0
    %8688 = vmatpush.msra.mxu0 0.0
    %8689 = vmatpush.msra.mxu0 0.0
    %8690 = vmatpush.msra.mxu0 0.0
    %8691 = vmatpush.msra.mxu0 0.0
    %8692 = vmatpush.msra.mxu0 0.0
    %8693 = vmatpush.msra.mxu0 %v8576
    %8694 = vmatpush.msra.mxu0 %v8575
    %8695 = vmatpush.msra.mxu0 %v8574
    %8696 = vmatpush.msra.mxu0 %v8573
    %8697 = vmatpush.msra.mxu0 %v8572
    %8698 = vmatpush.msra.mxu0 %v8571
    %8699 = vmatpush.msra.mxu0 %v8570
    %8700 = vmatpush.msra.mxu0 %v8569
    %8701 = vmatmul.f32.gmra.mxu0 %v8578
    %v8702 = vpop.f32.mrf.mxu0
    %8703 = vmatmul.f32.gmra.mxu0 %v8581
    %v8704 = vpop.f32.mrf.mxu0
    %8705 = vmatmul.f32.gmra.mxu0 %v8584
    %v8706 = vpop.f32.mrf.mxu0
    %8707 = vmatmul.f32.gmra.mxu0 %v8587
    %v8708 = vpop.f32.mrf.mxu0
    %8709 = vmatmul.f32.gmra.mxu0 %v8590
    %v8710 = vpop.f32.mrf.mxu0
    %8711 = vmatmul.f32.gmra.mxu0 %v8593
    %v8712 = vpop.f32.mrf.mxu0
    %8713 = vmatmul.f32.gmra.mxu0 %v8596
    %v8714 = vpop.f32.mrf.mxu0
    %8715 = vmatmul.f32.gmra.mxu0 %v8599
    %v8716 = vpop.f32.mrf.mxu0
    %v8717 = vadd.f32 0.0, %v8716
    %8718 = vmatmul.f32.gmra.mxu0 %v8602
    %v8719 = vpop.f32.mrf.mxu0
    %v8720 = vadd.f32 0.0, %v8719
    %8721 = vmatmul.f32.gmra.mxu0 %v8605
    %v8722 = vpop.f32.mrf.mxu0
    %v8723 = vadd.f32 0.0, %v8722
    %8724 = vmatmul.f32.gmra.mxu0 %v8608
    %v8725 = vpop.f32.mrf.mxu0
    %v8726 = vadd.f32 0.0, %v8725
    %8727 = vmatmul.f32.gmra.mxu0 %v8611
    %v8728 = vpop.f32.mrf.mxu0
    %8729 = vmatmul.f32.gmra.mxu0 %v8614
    %v8730 = vpop.f32.mrf.mxu0
    %8731 = vmatmul.f32.gmra.mxu0 %v8617
    %v8732 = vpop.f32.mrf.mxu0
    %v8733 = vadd.f32 0.0, %v8732
    %8734 = vmatmul.f32.gmra.mxu0 %v8620
    %v8735 = vpop.f32.mrf.mxu0
    %v8736 = vadd.f32 0.0, %v8735
    %8737 = vmatmul.f32.gmra.mxu0 %v8623
    %v8738 = vpop.f32.mrf.mxu0
    %v8739 = vadd.f32 0.0, %v8738
    %8740 = vmatmul.f32.gmra.mxu0 %v8626
    %v8741 = vpop.f32.mrf.mxu0
    %v8742 = vadd.f32 0.0, %v8741
    %8743 = vmatmul.f32.gmra.mxu0 %v8629
    %v8744 = vpop.f32.mrf.mxu0
    %8745 = vmatmul.f32.gmra.mxu0 %v8632
    %v8746 = vpop.f32.mrf.mxu0
    %8747 = vmatmul.f32.gmra.mxu0 %v8635
    %v8748 = vpop.f32.mrf.mxu0
    %v8749 = vadd.f32 0.0, %v8748
    %8750 = vmatmul.f32.gmra.mxu0 %v8638
    %v8751 = vpop.f32.mrf.mxu0
    %v8752 = vadd.f32 0.0, %v8751
    %8753 = vmatmul.f32.gmra.mxu0 %v8641
    %v8754 = vpop.f32.mrf.mxu0
    %v8755 = vadd.f32 0.0, %v8754
    %8756 = vmatmul.f32.gmra.mxu0 %v8644
    %v8757 = vpop.f32.mrf.mxu0
    %v8758 = vadd.f32 0.0, %v8757
    %8759 = vmatmul.f32.gmra.mxu0 %v8647
    %v8760 = vpop.f32.mrf.mxu0
    %8761 = vmatmul.f32.gmra.mxu0 %v8650
    %v8762 = vpop.f32.mrf.mxu0
    %8763 = vmatmul.f32.gmra.mxu0 %v8653
    %v8764 = vpop.f32.mrf.mxu0
    %v8765 = vadd.f32 0.0, %v8764
    %8766 = vmatmul.f32.gmra.mxu0 %v8656
    %v8767 = vpop.f32.mrf.mxu0
    %v8768 = vadd.f32 0.0, %v8767
    %8769 = vmatmul.f32.gmra.mxu0 %v8659
    %v8770 = vpop.f32.mrf.mxu0
    %v8771 = vadd.f32 0.0, %v8770
    %8772 = vmatmul.f32.gmra.mxu0 %v8662
    %v8773 = vpop.f32.mrf.mxu0
    %v8774 = vadd.f32 0.0, %v8773
    %8775 = vmatmul.f32.gmra.mxu0 %v8665
    %v8776 = vpop.f32.mrf.mxu0
    %8777 = vmatmul.f32.gmra.mxu0 %v8668
    %v8778 = vpop.f32.mrf.mxu0
    %8779 = vmatmul.f32.gmra.mxu0 %v8671
    %v8780 = vpop.f32.mrf.mxu0
    %8781 = vmatmul.f32.gmra.mxu0 %v8674
    %v8782 = vpop.f32.mrf.mxu0
    %8783 = vmatmul.f32.gmra.mxu0 %v8677
    %v8784 = vpop.f32.mrf.mxu0
    %8785 = vmatmul.f32.gmra.mxu0 %v8680
    %v8786 = vpop.f32.mrf.mxu0
    %8787 = vmatmul.f32.gmra.mxu0 %v8683
    %v8788 = vpop.f32.mrf.mxu0
    %8789 = vdwg.mxu0
    %v8790 = vadd.f32 %v8517, %v8717
    %v8791 = vadd.f32 %v8518, %v8720
    %v8792 = vadd.f32 %v8519, %v8723
    %v8793 = vadd.f32 %v8520, %v8726
    %v8794 = vadd.f32 %v8521, %v8733
    %v8795 = vadd.f32 %v8522, %v8736
    %v8796 = vadd.f32 %v8523, %v8739
    %v8797 = vadd.f32 %v8524, %v8742
    %v8798 = vadd.f32 %v8525, %v8749
    %v8799 = vadd.f32 %v8526, %v8752
    %v8800 = vadd.f32 %v8527, %v8755
    %v8801 = vadd.f32 %v8528, %v8758
    %v8802 = vadd.f32 %v8529, %v8765
    %v8803 = vadd.f32 %v8530, %v8768
    %v8804 = vadd.f32 %v8531, %v8771
    %v8805 = vadd.f32 %v8532, %v8774
    %v8806 = vld [vmem:[#allocation3 + $0x40] sm:$0xff]
    %v8807 = vld [vmem:[#allocation3 + $0x48] sm:$0xff]
    %v8808 = vld [vmem:[#allocation3 + $0x50] sm:$0xff]
    %v8809 = vld [vmem:[#allocation3 + $0x58] sm:$0xff]
    %v8810 = vld [vmem:[#allocation3 + $0x60] sm:$0xff]
    %v8811 = vld [vmem:[#allocation3 + $0x68] sm:$0xff]
    %v8812 = vld [vmem:[#allocation3 + $0x70] sm:$0xff]
    %v8813 = vld [vmem:[#allocation3 + $0x78] sm:$0xff]
    %v8814 = vld [vmem:[#allocation3 + $0x80] sm:$0xff]
    %v8815 = vld [vmem:[#allocation3 + $0x88] sm:$0xff]
    %v8816 = vld [vmem:[#allocation3 + $0x90] sm:$0xff]
    %v8817 = vld [vmem:[#allocation3 + $0x98] sm:$0xff]
    %v8818 = vld [vmem:[#allocation3 + $0xa0] sm:$0xff]
    %v8819 = vld [vmem:[#allocation3 + $0xa8] sm:$0xff]
    %v8820 = vld [vmem:[#allocation3 + $0xb0] sm:$0xff]
    %v8821 = vld [vmem:[#allocation3 + $0xb8] sm:$0xff]
    %v8822 = vld [vmem:[#allocation3 + $0xc0] sm:$0xff]
    %v8823 = vld [vmem:[#allocation3 + $0xc8] sm:$0xff]
    %v8824 = vld [vmem:[#allocation3 + $0xd0] sm:$0xff]
    %v8825 = vld [vmem:[#allocation3 + $0xd8] sm:$0xff]
    %v8826 = vld [vmem:[#allocation3 + $0xe0] sm:$0xff]
    %v8827 = vld [vmem:[#allocation3 + $0xe8] sm:$0xff]
    %v8828 = vld [vmem:[#allocation3 + $0xf0] sm:$0xff]
    %v8829 = vld [vmem:[#allocation3 + $0xf8] sm:$0xff]
    %v8830 = vld [vmem:[#allocation3 + $0x100] sm:$0xff]
    %v8831 = vld [vmem:[#allocation3 + $0x108] sm:$0xff]
    %v8832 = vld [vmem:[#allocation3 + $0x110] sm:$0xff]
    %v8833 = vld [vmem:[#allocation3 + $0x118] sm:$0xff]
    %v8834 = vld [vmem:[#allocation3 + $0x120] sm:$0xff]
    %v8835 = vld [vmem:[#allocation3 + $0x128] sm:$0xff]
    %v8836 = vld [vmem:[#allocation3 + $0x130] sm:$0xff]
    %v8837 = vld [vmem:[#allocation3 + $0x138] sm:$0xff]
    %v8838 = vld [vmem:[#allocation3 + $0x140] sm:$0xff]
    %v8839 = vld [vmem:[#allocation3 + $0x148] sm:$0xff]
    %v8840 = vld [vmem:[#allocation3 + $0x150] sm:$0xff]
    %v8841 = vld [vmem:[#allocation3 + $0x158] sm:$0xff]
    %v8842 = vld [vmem:[#allocation7 + $0x120] sm:$0xff]
    %v8843 = vld [vmem:[#allocation7 + $0x128] sm:$0xff]
    %v8845 = vsel %vm7763, %v8806, 0
    %v8848 = vsel %vm7763, %v8807, 0
    %v8851 = vsel %vm7763, %v8808, 0
    %v8854 = vsel %vm7763, %v8809, 0
    %v8857 = vsel %vm7763, %v8810, 0
    %v8860 = vsel %vm7763, %v8811, 0
    %v8863 = vsel %vm7763, %v8812, 0
    %v8866 = vsel %vm7763, %v8813, 0
    %v8869 = vsel %vm7763, %v8814, 0
    %v8872 = vsel %vm7763, %v8815, 0
    %v8875 = vsel %vm7763, %v8816, 0
    %v8878 = vsel %vm7763, %v8817, 0
    %v8881 = vsel %vm7763, %v8818, 0
    %v8884 = vsel %vm7763, %v8819, 0
    %v8887 = vsel %vm7763, %v8820, 0
    %v8890 = vsel %vm7763, %v8821, 0
    %v8893 = vsel %vm7763, %v8822, 0
    %v8896 = vsel %vm7763, %v8823, 0
    %v8899 = vsel %vm7763, %v8824, 0
    %v8902 = vsel %vm7763, %v8825, 0
    %v8905 = vsel %vm7763, %v8826, 0
    %v8908 = vsel %vm7763, %v8827, 0
    %v8911 = vsel %vm7763, %v8828, 0
    %v8914 = vsel %vm7763, %v8829, 0
    %v8917 = vsel %vm7763, %v8830, 0
    %v8920 = vsel %vm7763, %v8831, 0
    %v8923 = vsel %vm7763, %v8832, 0
    %v8926 = vsel %vm7763, %v8833, 0
    %v8929 = vsel %vm7763, %v8834, 0
    %v8932 = vsel %vm7763, %v8835, 0
    %v8935 = vsel %vm7763, %v8836, 0
    %v8938 = vsel %vm7763, %v8837, 0
    %v8941 = vsel %vm7763, %v8838, 0
    %v8944 = vsel %vm7763, %v8839, 0
    %v8947 = vsel %vm7763, %v8840, 0
    %v8950 = vsel %vm7763, %v8841, 0
    %8952 = vmatpush.msra.mxu0 0.0
    %8953 = vmatpush.msra.mxu0 0.0
    %8954 = vmatpush.msra.mxu0 0.0
    %8955 = vmatpush.msra.mxu0 0.0
    %8956 = vmatpush.msra.mxu0 0.0
    %8957 = vmatpush.msra.mxu0 0.0
    %8958 = vmatpush.msra.mxu0 0.0
    %8959 = vmatpush.msra.mxu0 0.0
    %8960 = vmatpush.msra.mxu0 0.0
    %8961 = vmatpush.msra.mxu0 0.0
    %8962 = vmatpush.msra.mxu0 0.0
    %8963 = vmatpush.msra.mxu0 0.0
    %8964 = vmatpush.msra.mxu0 0.0
    %8965 = vmatpush.msra.mxu0 0.0
    %8966 = vmatpush.msra.mxu0 %v8843
    %8967 = vmatpush.msra.mxu0 %v8842
    %8968 = vmatmul.f32.gmra.mxu0 %v8845
    %v8969 = vpop.f32.mrf.mxu0
    %8970 = vmatmul.f32.gmra.mxu0 %v8848
    %v8971 = vpop.f32.mrf.mxu0
    %8972 = vmatmul.f32.gmra.mxu0 %v8851
    %v8973 = vpop.f32.mrf.mxu0
    %8974 = vmatmul.f32.gmra.mxu0 %v8854
    %v8975 = vpop.f32.mrf.mxu0
    %8976 = vmatmul.f32.gmra.mxu0 %v8857
    %v8977 = vpop.f32.mrf.mxu0
    %8978 = vmatmul.f32.gmra.mxu0 %v8860
    %v8979 = vpop.f32.mrf.mxu0
    %8980 = vmatmul.f32.gmra.mxu0 %v8863
    %v8981 = vpop.f32.mrf.mxu0
    %8982 = vmatmul.f32.gmra.mxu0 %v8866
    %v8983 = vpop.f32.mrf.mxu0
    %v8984 = vadd.f32 0.0, %v8983
    %8985 = vmatmul.f32.gmra.mxu0 %v8869
    %v8986 = vpop.f32.mrf.mxu0
    %v8987 = vadd.f32 0.0, %v8986
    %8988 = vmatmul.f32.gmra.mxu0 %v8872
    %v8989 = vpop.f32.mrf.mxu0
    %v8990 = vadd.f32 0.0, %v8989
    %8991 = vmatmul.f32.gmra.mxu0 %v8875
    %v8992 = vpop.f32.mrf.mxu0
    %v8993 = vadd.f32 0.0, %v8992
    %8994 = vmatmul.f32.gmra.mxu0 %v8878
    %v8995 = vpop.f32.mrf.mxu0
    %8996 = vmatmul.f32.gmra.mxu0 %v8881
    %v8997 = vpop.f32.mrf.mxu0
    %8998 = vmatmul.f32.gmra.mxu0 %v8884
    %v8999 = vpop.f32.mrf.mxu0
    %v9000 = vadd.f32 0.0, %v8999
    %9001 = vmatmul.f32.gmra.mxu0 %v8887
    %v9002 = vpop.f32.mrf.mxu0
    %v9003 = vadd.f32 0.0, %v9002
    %9004 = vmatmul.f32.gmra.mxu0 %v8890
    %v9005 = vpop.f32.mrf.mxu0
    %v9006 = vadd.f32 0.0, %v9005
    %9007 = vmatmul.f32.gmra.mxu0 %v8893
    %v9008 = vpop.f32.mrf.mxu0
    %v9009 = vadd.f32 0.0, %v9008
    %9010 = vmatmul.f32.gmra.mxu0 %v8896
    %v9011 = vpop.f32.mrf.mxu0
    %9012 = vmatmul.f32.gmra.mxu0 %v8899
    %v9013 = vpop.f32.mrf.mxu0
    %9014 = vmatmul.f32.gmra.mxu0 %v8902
    %v9015 = vpop.f32.mrf.mxu0
    %v9016 = vadd.f32 0.0, %v9015
    %9017 = vmatmul.f32.gmra.mxu0 %v8905
    %v9018 = vpop.f32.mrf.mxu0
    %v9019 = vadd.f32 0.0, %v9018
    %9020 = vmatmul.f32.gmra.mxu0 %v8908
    %v9021 = vpop.f32.mrf.mxu0
    %v9022 = vadd.f32 0.0, %v9021
    %9023 = vmatmul.f32.gmra.mxu0 %v8911
    %v9024 = vpop.f32.mrf.mxu0
    %v9025 = vadd.f32 0.0, %v9024
    %9026 = vmatmul.f32.gmra.mxu0 %v8914
    %v9027 = vpop.f32.mrf.mxu0
    %9028 = vmatmul.f32.gmra.mxu0 %v8917
    %v9029 = vpop.f32.mrf.mxu0
    %9030 = vmatmul.f32.gmra.mxu0 %v8920
    %v9031 = vpop.f32.mrf.mxu0
    %v9032 = vadd.f32 0.0, %v9031
    %9033 = vmatmul.f32.gmra.mxu0 %v8923
    %v9034 = vpop.f32.mrf.mxu0
    %v9035 = vadd.f32 0.0, %v9034
    %9036 = vmatmul.f32.gmra.mxu0 %v8926
    %v9037 = vpop.f32.mrf.mxu0
    %v9038 = vadd.f32 0.0, %v9037
    %9039 = vmatmul.f32.gmra.mxu0 %v8929
    %v9040 = vpop.f32.mrf.mxu0
    %v9041 = vadd.f32 0.0, %v9040
    %9042 = vmatmul.f32.gmra.mxu0 %v8932
    %v9043 = vpop.f32.mrf.mxu0
    %9044 = vmatmul.f32.gmra.mxu0 %v8935
    %v9045 = vpop.f32.mrf.mxu0
    %9046 = vmatmul.f32.gmra.mxu0 %v8938
    %v9047 = vpop.f32.mrf.mxu0
    %9048 = vmatmul.f32.gmra.mxu0 %v8941
    %v9049 = vpop.f32.mrf.mxu0
    %9050 = vmatmul.f32.gmra.mxu0 %v8944
    %v9051 = vpop.f32.mrf.mxu0
    %9052 = vmatmul.f32.gmra.mxu0 %v8947
    %v9053 = vpop.f32.mrf.mxu0
    %9054 = vmatmul.f32.gmra.mxu0 %v8950
    %v9055 = vpop.f32.mrf.mxu0
    %9056 = vdwg.mxu0
    %v9057 = vadd.f32 %v8790, %v8984
    %v9058 = vadd.f32 %v8791, %v8987
    %v9059 = vadd.f32 %v8792, %v8990
    %v9060 = vadd.f32 %v8793, %v8993
    %v9061 = vadd.f32 %v8794, %v9000
    %v9062 = vadd.f32 %v8795, %v9003
    %v9063 = vadd.f32 %v8796, %v9006
    %v9064 = vadd.f32 %v8797, %v9009
    %v9065 = vadd.f32 %v8798, %v9016
    %v9066 = vadd.f32 %v8799, %v9019
    %v9067 = vadd.f32 %v8800, %v9022
    %v9068 = vadd.f32 %v8801, %v9025
    %v9069 = vadd.f32 %v8802, %v9032
    %v9070 = vadd.f32 %v8803, %v9035
    %v9071 = vadd.f32 %v8804, %v9038
    %v9072 = vadd.f32 %v8805, %v9041
    %v9073 = vld [vmem:[#allocation7 + $0x130] sm:$0xff]
    %v9074 = vld [vmem:[#allocation7 + $0x138] sm:$0xff]
    %9075 = vrot.lane.b32.xlu0 %v8806, 96
    %v9076 = vpop.permute.xlu0 %9075
    %9077 = vrot.lane.b32.xlu0 %v8807, 96
    %v9078 = vpop.permute.xlu0 %9077
    %9079 = vrot.lane.b32.xlu0 %v8808, 96
    %v9080 = vpop.permute.xlu0 %9079
    %9081 = vrot.lane.b32.xlu0 %v8809, 96
    %v9082 = vpop.permute.xlu0 %9081
    %9083 = vrot.lane.b32.xlu0 %v8810, 96
    %v9084 = vpop.permute.xlu0 %9083
    %9085 = vrot.lane.b32.xlu0 %v8811, 96
    %v9086 = vpop.permute.xlu0 %9085
    %9087 = vrot.lane.b32.xlu0 %v8812, 96
    %v9088 = vpop.permute.xlu0 %9087
    %9089 = vrot.lane.b32.xlu0 %v8813, 96
    %v9090 = vpop.permute.xlu0 %9089
    %9091 = vrot.lane.b32.xlu0 %v8814, 96
    %v9092 = vpop.permute.xlu0 %9091
    %9093 = vrot.lane.b32.xlu0 %v8815, 96
    %v9094 = vpop.permute.xlu0 %9093
    %9095 = vrot.lane.b32.xlu0 %v8816, 96
    %v9096 = vpop.permute.xlu0 %9095
    %9097 = vrot.lane.b32.xlu0 %v8817, 96
    %v9098 = vpop.permute.xlu0 %9097
    %9099 = vrot.lane.b32.xlu0 %v8818, 96
    %v9100 = vpop.permute.xlu0 %9099
    %9101 = vrot.lane.b32.xlu0 %v8819, 96
    %v9102 = vpop.permute.xlu0 %9101
    %9103 = vrot.lane.b32.xlu0 %v8820, 96
    %v9104 = vpop.permute.xlu0 %9103
    %9105 = vrot.lane.b32.xlu0 %v8821, 96
    %v9106 = vpop.permute.xlu0 %9105
    %9107 = vrot.lane.b32.xlu0 %v8822, 96
    %v9108 = vpop.permute.xlu0 %9107
    %9109 = vrot.lane.b32.xlu0 %v8823, 96
    %v9110 = vpop.permute.xlu0 %9109
    %9111 = vrot.lane.b32.xlu0 %v8824, 96
    %v9112 = vpop.permute.xlu0 %9111
    %9113 = vrot.lane.b32.xlu0 %v8825, 96
    %v9114 = vpop.permute.xlu0 %9113
    %9115 = vrot.lane.b32.xlu0 %v8826, 96
    %v9116 = vpop.permute.xlu0 %9115
    %9117 = vrot.lane.b32.xlu0 %v8827, 96
    %v9118 = vpop.permute.xlu0 %9117
    %9119 = vrot.lane.b32.xlu0 %v8828, 96
    %v9120 = vpop.permute.xlu0 %9119
    %9121 = vrot.lane.b32.xlu0 %v8829, 96
    %v9122 = vpop.permute.xlu0 %9121
    %9123 = vrot.lane.b32.xlu0 %v8830, 96
    %v9124 = vpop.permute.xlu0 %9123
    %9125 = vrot.lane.b32.xlu0 %v8831, 96
    %v9126 = vpop.permute.xlu0 %9125
    %9127 = vrot.lane.b32.xlu0 %v8832, 96
    %v9128 = vpop.permute.xlu0 %9127
    %9129 = vrot.lane.b32.xlu0 %v8833, 96
    %v9130 = vpop.permute.xlu0 %9129
    %9131 = vrot.lane.b32.xlu0 %v8834, 96
    %v9132 = vpop.permute.xlu0 %9131
    %9133 = vrot.lane.b32.xlu0 %v8835, 96
    %v9134 = vpop.permute.xlu0 %9133
    %9135 = vrot.lane.b32.xlu0 %v8836, 96
    %v9136 = vpop.permute.xlu0 %9135
    %9137 = vrot.lane.b32.xlu0 %v8837, 96
    %v9138 = vpop.permute.xlu0 %9137
    %9139 = vrot.lane.b32.xlu0 %v8838, 96
    %v9140 = vpop.permute.xlu0 %9139
    %9141 = vrot.lane.b32.xlu0 %v8839, 96
    %v9142 = vpop.permute.xlu0 %9141
    %9143 = vrot.lane.b32.xlu0 %v8840, 96
    %v9144 = vpop.permute.xlu0 %9143
    %9145 = vrot.lane.b32.xlu0 %v8841, 96
    %v9146 = vpop.permute.xlu0 %9145
    %v9147 = vsel %vm7763, %v9076, 0
    %v9149 = vsel %vm7763, %v9078, 0
    %v9151 = vsel %vm7763, %v9080, 0
    %v9153 = vsel %vm7763, %v9082, 0
    %v9155 = vsel %vm7763, %v9084, 0
    %v9157 = vsel %vm7763, %v9086, 0
    %v9159 = vsel %vm7763, %v9088, 0
    %v9161 = vsel %vm7763, %v9090, 0
    %v9163 = vsel %vm7763, %v9092, 0
    %v9165 = vsel %vm7763, %v9094, 0
    %v9167 = vsel %vm7763, %v9096, 0
    %v9169 = vsel %vm7763, %v9098, 0
    %v9171 = vsel %vm7763, %v9100, 0
    %v9173 = vsel %vm7763, %v9102, 0
    %v9175 = vsel %vm7763, %v9104, 0
    %v9177 = vsel %vm7763, %v9106, 0
    %v9179 = vsel %vm7763, %v9108, 0
    %v9181 = vsel %vm7763, %v9110, 0
    %v9183 = vsel %vm7763, %v9112, 0
    %v9185 = vsel %vm7763, %v9114, 0
    %v9187 = vsel %vm7763, %v9116, 0
    %v9189 = vsel %vm7763, %v9118, 0
    %v9191 = vsel %vm7763, %v9120, 0
    %v9193 = vsel %vm7763, %v9122, 0
    %v9195 = vsel %vm7763, %v9124, 0
    %v9197 = vsel %vm7763, %v9126, 0
    %v9199 = vsel %vm7763, %v9128, 0
    %v9201 = vsel %vm7763, %v9130, 0
    %v9203 = vsel %vm7763, %v9132, 0
    %v9205 = vsel %vm7763, %v9134, 0
    %v9207 = vsel %vm7763, %v9136, 0
    %v9209 = vsel %vm7763, %v9138, 0
    %v9211 = vsel %vm7763, %v9140, 0
    %v9213 = vsel %vm7763, %v9142, 0
    %v9215 = vsel %vm7763, %v9144, 0
    %v9217 = vsel %vm7763, %v9146, 0
    %9219 = vmatpush.msra.mxu0 0.0
    %9220 = vmatpush.msra.mxu0 0.0
    %9221 = vmatpush.msra.mxu0 0.0
    %9222 = vmatpush.msra.mxu0 0.0
    %9223 = vmatpush.msra.mxu0 0.0
    %9224 = vmatpush.msra.mxu0 0.0
    %9225 = vmatpush.msra.mxu0 0.0
    %9226 = vmatpush.msra.mxu0 0.0
    %9227 = vmatpush.msra.mxu0 0.0
    %9228 = vmatpush.msra.mxu0 0.0
    %9229 = vmatpush.msra.mxu0 0.0
    %9230 = vmatpush.msra.mxu0 0.0
    %9231 = vmatpush.msra.mxu0 0.0
    %9232 = vmatpush.msra.mxu0 0.0
    %9233 = vmatpush.msra.mxu0 %v9074
    %9234 = vmatpush.msra.mxu0 %v9073
    %9235 = vmatmul.f32.gmra.mxu0 %v9147
    %v9236 = vpop.f32.mrf.mxu0
    %9237 = vmatmul.f32.gmra.mxu0 %v9149
    %v9238 = vpop.f32.mrf.mxu0
    %9239 = vmatmul.f32.gmra.mxu0 %v9151
    %v9240 = vpop.f32.mrf.mxu0
    %9241 = vmatmul.f32.gmra.mxu0 %v9153
    %v9242 = vpop.f32.mrf.mxu0
    %9243 = vmatmul.f32.gmra.mxu0 %v9155
    %v9244 = vpop.f32.mrf.mxu0
    %9245 = vmatmul.f32.gmra.mxu0 %v9157
    %v9246 = vpop.f32.mrf.mxu0
    %9247 = vmatmul.f32.gmra.mxu0 %v9159
    %v9248 = vpop.f32.mrf.mxu0
    %9249 = vmatmul.f32.gmra.mxu0 %v9161
    %v9250 = vpop.f32.mrf.mxu0
    %v9251 = vadd.f32 0.0, %v9250
    %9252 = vmatmul.f32.gmra.mxu0 %v9163
    %v9253 = vpop.f32.mrf.mxu0
    %v9254 = vadd.f32 0.0, %v9253
    %9255 = vmatmul.f32.gmra.mxu0 %v9165
    %v9256 = vpop.f32.mrf.mxu0
    %v9257 = vadd.f32 0.0, %v9256
    %9258 = vmatmul.f32.gmra.mxu0 %v9167
    %v9259 = vpop.f32.mrf.mxu0
    %v9260 = vadd.f32 0.0, %v9259
    %9261 = vmatmul.f32.gmra.mxu0 %v9169
    %v9262 = vpop.f32.mrf.mxu0
    %9263 = vmatmul.f32.gmra.mxu0 %v9171
    %v9264 = vpop.f32.mrf.mxu0
    %9265 = vmatmul.f32.gmra.mxu0 %v9173
    %v9266 = vpop.f32.mrf.mxu0
    %v9267 = vadd.f32 0.0, %v9266
    %9268 = vmatmul.f32.gmra.mxu0 %v9175
    %v9269 = vpop.f32.mrf.mxu0
    %v9270 = vadd.f32 0.0, %v9269
    %9271 = vmatmul.f32.gmra.mxu0 %v9177
    %v9272 = vpop.f32.mrf.mxu0
    %v9273 = vadd.f32 0.0, %v9272
    %9274 = vmatmul.f32.gmra.mxu0 %v9179
    %v9275 = vpop.f32.mrf.mxu0
    %v9276 = vadd.f32 0.0, %v9275
    %9277 = vmatmul.f32.gmra.mxu0 %v9181
    %v9278 = vpop.f32.mrf.mxu0
    %9279 = vmatmul.f32.gmra.mxu0 %v9183
    %v9280 = vpop.f32.mrf.mxu0
    %9281 = vmatmul.f32.gmra.mxu0 %v9185
    %v9282 = vpop.f32.mrf.mxu0
    %v9283 = vadd.f32 0.0, %v9282
    %9284 = vmatmul.f32.gmra.mxu0 %v9187
    %v9285 = vpop.f32.mrf.mxu0
    %v9286 = vadd.f32 0.0, %v9285
    %9287 = vmatmul.f32.gmra.mxu0 %v9189
    %v9288 = vpop.f32.mrf.mxu0
    %v9289 = vadd.f32 0.0, %v9288
    %9290 = vmatmul.f32.gmra.mxu0 %v9191
    %v9291 = vpop.f32.mrf.mxu0
    %v9292 = vadd.f32 0.0, %v9291
    %9293 = vmatmul.f32.gmra.mxu0 %v9193
    %v9294 = vpop.f32.mrf.mxu0
    %9295 = vmatmul.f32.gmra.mxu0 %v9195
    %v9296 = vpop.f32.mrf.mxu0
    %9297 = vmatmul.f32.gmra.mxu0 %v9197
    %v9298 = vpop.f32.mrf.mxu0
    %v9299 = vadd.f32 0.0, %v9298
    %9300 = vmatmul.f32.gmra.mxu0 %v9199
    %v9301 = vpop.f32.mrf.mxu0
    %v9302 = vadd.f32 0.0, %v9301
    %9303 = vmatmul.f32.gmra.mxu0 %v9201
    %v9304 = vpop.f32.mrf.mxu0
    %v9305 = vadd.f32 0.0, %v9304
    %9306 = vmatmul.f32.gmra.mxu0 %v9203
    %v9307 = vpop.f32.mrf.mxu0
    %v9308 = vadd.f32 0.0, %v9307
    %9309 = vmatmul.f32.gmra.mxu0 %v9205
    %v9310 = vpop.f32.mrf.mxu0
    %9311 = vmatmul.f32.gmra.mxu0 %v9207
    %v9312 = vpop.f32.mrf.mxu0
    %9313 = vmatmul.f32.gmra.mxu0 %v9209
    %v9314 = vpop.f32.mrf.mxu0
    %9315 = vmatmul.f32.gmra.mxu0 %v9211
    %v9316 = vpop.f32.mrf.mxu0
    %9317 = vmatmul.f32.gmra.mxu0 %v9213
    %v9318 = vpop.f32.mrf.mxu0
    %9319 = vmatmul.f32.gmra.mxu0 %v9215
    %v9320 = vpop.f32.mrf.mxu0
    %9321 = vmatmul.f32.gmra.mxu0 %v9217
    %v9322 = vpop.f32.mrf.mxu0
    %9323 = vdwg.mxu0
    %v9324 = vadd.f32 %v9057, %v9251
    %v9325 = vadd.f32 %v9058, %v9254
    %v9326 = vadd.f32 %v9059, %v9257
    %v9327 = vadd.f32 %v9060, %v9260
    %v9328 = vadd.f32 %v9061, %v9267
    %v9329 = vadd.f32 %v9062, %v9270
    %v9330 = vadd.f32 %v9063, %v9273
    %v9331 = vadd.f32 %v9064, %v9276
    %v9332 = vadd.f32 %v9065, %v9283
    %v9333 = vadd.f32 %v9066, %v9286
    %v9334 = vadd.f32 %v9067, %v9289
    %v9335 = vadd.f32 %v9068, %v9292
    %v9336 = vadd.f32 %v9069, %v9299
    %v9337 = vadd.f32 %v9070, %v9302
    %v9338 = vadd.f32 %v9071, %v9305
    %v9339 = vadd.f32 %v9072, %v9308
    %v9340 = vld [vmem:[#allocation3 + $0x60] sm:$0xff]
    %v9341 = vld [vmem:[#allocation3 + $0x68] sm:$0xff]
    %v9342 = vld [vmem:[#allocation3 + $0x70] sm:$0xff]
    %v9343 = vld [vmem:[#allocation3 + $0x78] sm:$0xff]
    %v9344 = vld [vmem:[#allocation3 + $0x80] sm:$0xff]
    %v9345 = vld [vmem:[#allocation3 + $0x88] sm:$0xff]
    %v9346 = vld [vmem:[#allocation3 + $0x90] sm:$0xff]
    %v9347 = vld [vmem:[#allocation3 + $0x98] sm:$0xff]
    %v9348 = vld [vmem:[#allocation3 + $0xa0] sm:$0xff]
    %v9349 = vld [vmem:[#allocation3 + $0xa8] sm:$0xff]
    %v9350 = vld [vmem:[#allocation3 + $0xb0] sm:$0xff]
    %v9351 = vld [vmem:[#allocation3 + $0xb8] sm:$0xff]
    %v9352 = vld [vmem:[#allocation3 + $0xc0] sm:$0xff]
    %v9353 = vld [vmem:[#allocation3 + $0xc8] sm:$0xff]
    %v9354 = vld [vmem:[#allocation3 + $0xd0] sm:$0xff]
    %v9355 = vld [vmem:[#allocation3 + $0xd8] sm:$0xff]
    %v9356 = vld [vmem:[#allocation3 + $0xe0] sm:$0xff]
    %v9357 = vld [vmem:[#allocation3 + $0xe8] sm:$0xff]
    %v9358 = vld [vmem:[#allocation3 + $0xf0] sm:$0xff]
    %v9359 = vld [vmem:[#allocation3 + $0xf8] sm:$0xff]
    %v9360 = vld [vmem:[#allocation3 + $0x100] sm:$0xff]
    %v9361 = vld [vmem:[#allocation3 + $0x108] sm:$0xff]
    %v9362 = vld [vmem:[#allocation3 + $0x110] sm:$0xff]
    %v9363 = vld [vmem:[#allocation3 + $0x118] sm:$0xff]
    %v9364 = vld [vmem:[#allocation3 + $0x120] sm:$0xff]
    %v9365 = vld [vmem:[#allocation3 + $0x128] sm:$0xff]
    %v9366 = vld [vmem:[#allocation3 + $0x130] sm:$0xff]
    %v9367 = vld [vmem:[#allocation3 + $0x138] sm:$0xff]
    %v9368 = vld [vmem:[#allocation3 + $0x140] sm:$0xff]
    %v9369 = vld [vmem:[#allocation3 + $0x148] sm:$0xff]
    %v9370 = vld [vmem:[#allocation3 + $0x150] sm:$0xff]
    %v9371 = vld [vmem:[#allocation3 + $0x158] sm:$0xff]
    %v9372 = vld [vmem:[#allocation3 + $0x160] sm:$0xff]
    %v9373 = vld [vmem:[#allocation3 + $0x168] sm:$0xff]
    %v9374 = vld [vmem:[#allocation3 + $0x170] sm:$0xff]
    %v9375 = vld [vmem:[#allocation3 + $0x178] sm:$0xff]
    %v9376 = vld [vmem:[#allocation7 + $0x140] sm:$0xff]
    %v9377 = vld [vmem:[#allocation7 + $0x148] sm:$0xff]
    %v9378 = vld [vmem:[#allocation7 + $0x150] sm:$0xff]
    %v9379 = vld [vmem:[#allocation7 + $0x158] sm:$0xff]
    %v9381 = vsel %vm115, %v9340, 0
    %v9384 = vsel %vm115, %v9341, 0
    %v9387 = vsel %vm115, %v9342, 0
    %v9390 = vsel %vm115, %v9343, 0
    %v9393 = vsel %vm115, %v9344, 0
    %v9396 = vsel %vm115, %v9345, 0
    %v9399 = vsel %vm115, %v9346, 0
    %v9402 = vsel %vm115, %v9347, 0
    %v9405 = vsel %vm115, %v9348, 0
    %v9408 = vsel %vm115, %v9349, 0
    %v9411 = vsel %vm115, %v9350, 0
    %v9414 = vsel %vm115, %v9351, 0
    %v9417 = vsel %vm115, %v9352, 0
    %v9420 = vsel %vm115, %v9353, 0
    %v9423 = vsel %vm115, %v9354, 0
    %v9426 = vsel %vm115, %v9355, 0
    %v9429 = vsel %vm115, %v9356, 0
    %v9432 = vsel %vm115, %v9357, 0
    %v9435 = vsel %vm115, %v9358, 0
    %v9438 = vsel %vm115, %v9359, 0
    %v9441 = vsel %vm115, %v9360, 0
    %v9444 = vsel %vm115, %v9361, 0
    %v9447 = vsel %vm115, %v9362, 0
    %v9450 = vsel %vm115, %v9363, 0
    %v9453 = vsel %vm115, %v9364, 0
    %v9456 = vsel %vm115, %v9365, 0
    %v9459 = vsel %vm115, %v9366, 0
    %v9462 = vsel %vm115, %v9367, 0
    %v9465 = vsel %vm115, %v9368, 0
    %v9468 = vsel %vm115, %v9369, 0
    %v9471 = vsel %vm115, %v9370, 0
    %v9474 = vsel %vm115, %v9371, 0
    %v9477 = vsel %vm115, %v9372, 0
    %v9480 = vsel %vm115, %v9373, 0
    %v9483 = vsel %vm115, %v9374, 0
    %v9486 = vsel %vm115, %v9375, 0
    %9488 = vmatpush.msra.mxu0 0.0
    %9489 = vmatpush.msra.mxu0 0.0
    %9490 = vmatpush.msra.mxu0 0.0
    %9491 = vmatpush.msra.mxu0 0.0
    %9492 = vmatpush.msra.mxu0 0.0
    %9493 = vmatpush.msra.mxu0 0.0
    %9494 = vmatpush.msra.mxu0 0.0
    %9495 = vmatpush.msra.mxu0 0.0
    %9496 = vmatpush.msra.mxu0 0.0
    %9497 = vmatpush.msra.mxu0 0.0
    %9498 = vmatpush.msra.mxu0 0.0
    %9499 = vmatpush.msra.mxu0 0.0
    %9500 = vmatpush.msra.mxu0 %v9379
    %9501 = vmatpush.msra.mxu0 %v9378
    %9502 = vmatpush.msra.mxu0 %v9377
    %9503 = vmatpush.msra.mxu0 %v9376
    %9504 = vmatmul.f32.gmra.mxu0 %v9381
    %v9505 = vpop.f32.mrf.mxu0
    %9506 = vmatmul.f32.gmra.mxu0 %v9384
    %v9507 = vpop.f32.mrf.mxu0
    %9508 = vmatmul.f32.gmra.mxu0 %v9387
    %v9509 = vpop.f32.mrf.mxu0
    %9510 = vmatmul.f32.gmra.mxu0 %v9390
    %v9511 = vpop.f32.mrf.mxu0
    %9512 = vmatmul.f32.gmra.mxu0 %v9393
    %v9513 = vpop.f32.mrf.mxu0
    %9514 = vmatmul.f32.gmra.mxu0 %v9396
    %v9515 = vpop.f32.mrf.mxu0
    %9516 = vmatmul.f32.gmra.mxu0 %v9399
    %v9517 = vpop.f32.mrf.mxu0
    %9518 = vmatmul.f32.gmra.mxu0 %v9402
    %v9519 = vpop.f32.mrf.mxu0
    %v9520 = vadd.f32 0.0, %v9519
    %9521 = vmatmul.f32.gmra.mxu0 %v9405
    %v9522 = vpop.f32.mrf.mxu0
    %v9523 = vadd.f32 0.0, %v9522
    %9524 = vmatmul.f32.gmra.mxu0 %v9408
    %v9525 = vpop.f32.mrf.mxu0
    %v9526 = vadd.f32 0.0, %v9525
    %9527 = vmatmul.f32.gmra.mxu0 %v9411
    %v9528 = vpop.f32.mrf.mxu0
    %v9529 = vadd.f32 0.0, %v9528
    %9530 = vmatmul.f32.gmra.mxu0 %v9414
    %v9531 = vpop.f32.mrf.mxu0
    %9532 = vmatmul.f32.gmra.mxu0 %v9417
    %v9533 = vpop.f32.mrf.mxu0
    %9534 = vmatmul.f32.gmra.mxu0 %v9420
    %v9535 = vpop.f32.mrf.mxu0
    %v9536 = vadd.f32 0.0, %v9535
    %9537 = vmatmul.f32.gmra.mxu0 %v9423
    %v9538 = vpop.f32.mrf.mxu0
    %v9539 = vadd.f32 0.0, %v9538
    %9540 = vmatmul.f32.gmra.mxu0 %v9426
    %v9541 = vpop.f32.mrf.mxu0
    %v9542 = vadd.f32 0.0, %v9541
    %9543 = vmatmul.f32.gmra.mxu0 %v9429
    %v9544 = vpop.f32.mrf.mxu0
    %v9545 = vadd.f32 0.0, %v9544
    %9546 = vmatmul.f32.gmra.mxu0 %v9432
    %v9547 = vpop.f32.mrf.mxu0
    %9548 = vmatmul.f32.gmra.mxu0 %v9435
    %v9549 = vpop.f32.mrf.mxu0
    %9550 = vmatmul.f32.gmra.mxu0 %v9438
    %v9551 = vpop.f32.mrf.mxu0
    %v9552 = vadd.f32 0.0, %v9551
    %9553 = vmatmul.f32.gmra.mxu0 %v9441
    %v9554 = vpop.f32.mrf.mxu0
    %v9555 = vadd.f32 0.0, %v9554
    %9556 = vmatmul.f32.gmra.mxu0 %v9444
    %v9557 = vpop.f32.mrf.mxu0
    %v9558 = vadd.f32 0.0, %v9557
    %9559 = vmatmul.f32.gmra.mxu0 %v9447
    %v9560 = vpop.f32.mrf.mxu0
    %v9561 = vadd.f32 0.0, %v9560
    %9562 = vmatmul.f32.gmra.mxu0 %v9450
    %v9563 = vpop.f32.mrf.mxu0
    %9564 = vmatmul.f32.gmra.mxu0 %v9453
    %v9565 = vpop.f32.mrf.mxu0
    %9566 = vmatmul.f32.gmra.mxu0 %v9456
    %v9567 = vpop.f32.mrf.mxu0
    %v9568 = vadd.f32 0.0, %v9567
    %9569 = vmatmul.f32.gmra.mxu0 %v9459
    %v9570 = vpop.f32.mrf.mxu0
    %v9571 = vadd.f32 0.0, %v9570
    %9572 = vmatmul.f32.gmra.mxu0 %v9462
    %v9573 = vpop.f32.mrf.mxu0
    %v9574 = vadd.f32 0.0, %v9573
    %9575 = vmatmul.f32.gmra.mxu0 %v9465
    %v9576 = vpop.f32.mrf.mxu0
    %v9577 = vadd.f32 0.0, %v9576
    %9578 = vmatmul.f32.gmra.mxu0 %v9468
    %v9579 = vpop.f32.mrf.mxu0
    %9580 = vmatmul.f32.gmra.mxu0 %v9471
    %v9581 = vpop.f32.mrf.mxu0
    %9582 = vmatmul.f32.gmra.mxu0 %v9474
    %v9583 = vpop.f32.mrf.mxu0
    %9584 = vmatmul.f32.gmra.mxu0 %v9477
    %v9585 = vpop.f32.mrf.mxu0
    %9586 = vmatmul.f32.gmra.mxu0 %v9480
    %v9587 = vpop.f32.mrf.mxu0
    %9588 = vmatmul.f32.gmra.mxu0 %v9483
    %v9589 = vpop.f32.mrf.mxu0
    %9590 = vmatmul.f32.gmra.mxu0 %v9486
    %v9591 = vpop.f32.mrf.mxu0
    %9592 = vdwg.mxu0
    %v9593 = vadd.f32 %v9324, %v9520
    %v9594 = vadd.f32 %v9325, %v9523
    %v9595 = vadd.f32 %v9326, %v9526
    %v9596 = vadd.f32 %v9327, %v9529
    %v9597 = vadd.f32 %v9328, %v9536
    %v9598 = vadd.f32 %v9329, %v9539
    %v9599 = vadd.f32 %v9330, %v9542
    %v9600 = vadd.f32 %v9331, %v9545
    %v9601 = vadd.f32 %v9332, %v9552
    %v9602 = vadd.f32 %v9333, %v9555
    %v9603 = vadd.f32 %v9334, %v9558
    %v9604 = vadd.f32 %v9335, %v9561
    %v9605 = vadd.f32 %v9336, %v9568
    %v9606 = vadd.f32 %v9337, %v9571
    %v9607 = vadd.f32 %v9338, %v9574
    %v9608 = vadd.f32 %v9339, %v9577
    %v9609 = vld [vmem:[#allocation3 + $0x68] sm:$0xff]
    %v9610 = vld [vmem:[#allocation3 + $0x70] sm:$0xff]
    %v9611 = vld [vmem:[#allocation3 + $0x78] sm:$0xff]
    %v9612 = vld [vmem:[#allocation3 + $0x80] sm:$0xff]
    %v9613 = vld [vmem:[#allocation3 + $0x88] sm:$0xff]
    %v9614 = vld [vmem:[#allocation3 + $0x90] sm:$0xff]
    %v9615 = vld [vmem:[#allocation3 + $0x98] sm:$0xff]
    %v9616 = vld [vmem:[#allocation3 + $0xa0] sm:$0xff]
    %v9617 = vld [vmem:[#allocation3 + $0xa8] sm:$0xff]
    %v9618 = vld [vmem:[#allocation3 + $0xb0] sm:$0xff]
    %v9619 = vld [vmem:[#allocation3 + $0xb8] sm:$0xff]
    %v9620 = vld [vmem:[#allocation3 + $0xc0] sm:$0xff]
    %v9621 = vld [vmem:[#allocation3 + $0xc8] sm:$0xff]
    %v9622 = vld [vmem:[#allocation3 + $0xd0] sm:$0xff]
    %v9623 = vld [vmem:[#allocation3 + $0xd8] sm:$0xff]
    %v9624 = vld [vmem:[#allocation3 + $0xe0] sm:$0xff]
    %v9625 = vld [vmem:[#allocation3 + $0xe8] sm:$0xff]
    %v9626 = vld [vmem:[#allocation3 + $0xf0] sm:$0xff]
    %v9627 = vld [vmem:[#allocation3 + $0xf8] sm:$0xff]
    %v9628 = vld [vmem:[#allocation3 + $0x100] sm:$0xff]
    %v9629 = vld [vmem:[#allocation3 + $0x108] sm:$0xff]
    %v9630 = vld [vmem:[#allocation3 + $0x110] sm:$0xff]
    %v9631 = vld [vmem:[#allocation3 + $0x118] sm:$0xff]
    %v9632 = vld [vmem:[#allocation3 + $0x120] sm:$0xff]
    %v9633 = vld [vmem:[#allocation3 + $0x128] sm:$0xff]
    %v9634 = vld [vmem:[#allocation3 + $0x130] sm:$0xff]
    %v9635 = vld [vmem:[#allocation3 + $0x138] sm:$0xff]
    %v9636 = vld [vmem:[#allocation3 + $0x140] sm:$0xff]
    %v9637 = vld [vmem:[#allocation3 + $0x148] sm:$0xff]
    %v9638 = vld [vmem:[#allocation3 + $0x150] sm:$0xff]
    %v9639 = vld [vmem:[#allocation3 + $0x158] sm:$0xff]
    %v9640 = vld [vmem:[#allocation3 + $0x160] sm:$0xff]
    %v9641 = vld [vmem:[#allocation3 + $0x168] sm:$0xff]
    %v9642 = vld [vmem:[#allocation3 + $0x170] sm:$0xff]
    %v9643 = vld [vmem:[#allocation3 + $0x178] sm:$0xff]
    %v9644 = vld [vmem:[#allocation3 + $0x180] sm:$0xff]
    %v9645 = vld [vmem:[#allocation7 + $0x160] sm:$0xff]
    %v9646 = vld [vmem:[#allocation7 + $0x168] sm:$0xff]
    %v9647 = vld [vmem:[#allocation7 + $0x170] sm:$0xff]
    %v9648 = vld [vmem:[#allocation7 + $0x178] sm:$0xff]
    %v9650 = vsel %vm115, %v9609, 0
    %v9653 = vsel %vm115, %v9610, 0
    %v9656 = vsel %vm115, %v9611, 0
    %v9659 = vsel %vm115, %v9612, 0
    %v9662 = vsel %vm115, %v9613, 0
    %v9665 = vsel %vm115, %v9614, 0
    %v9668 = vsel %vm115, %v9615, 0
    %v9671 = vsel %vm115, %v9616, 0
    %v9674 = vsel %vm115, %v9617, 0
    %v9677 = vsel %vm115, %v9618, 0
    %v9680 = vsel %vm115, %v9619, 0
    %v9683 = vsel %vm115, %v9620, 0
    %v9686 = vsel %vm115, %v9621, 0
    %v9689 = vsel %vm115, %v9622, 0
    %v9692 = vsel %vm115, %v9623, 0
    %v9695 = vsel %vm115, %v9624, 0
    %v9698 = vsel %vm115, %v9625, 0
    %v9701 = vsel %vm115, %v9626, 0
    %v9704 = vsel %vm115, %v9627, 0
    %v9707 = vsel %vm115, %v9628, 0
    %v9710 = vsel %vm115, %v9629, 0
    %v9713 = vsel %vm115, %v9630, 0
    %v9716 = vsel %vm115, %v9631, 0
    %v9719 = vsel %vm115, %v9632, 0
    %v9722 = vsel %vm115, %v9633, 0
    %v9725 = vsel %vm115, %v9634, 0
    %v9728 = vsel %vm115, %v9635, 0
    %v9731 = vsel %vm115, %v9636, 0
    %v9734 = vsel %vm115, %v9637, 0
    %v9737 = vsel %vm115, %v9638, 0
    %v9740 = vsel %vm115, %v9639, 0
    %v9743 = vsel %vm115, %v9640, 0
    %v9746 = vsel %vm115, %v9641, 0
    %v9749 = vsel %vm115, %v9642, 0
    %v9752 = vsel %vm115, %v9643, 0
    %v9755 = vsel %vm115, %v9644, 0
    %9757 = vmatpush.msra.mxu0 0.0
    %9758 = vmatpush.msra.mxu0 0.0
    %9759 = vmatpush.msra.mxu0 0.0
    %9760 = vmatpush.msra.mxu0 0.0
    %9761 = vmatpush.msra.mxu0 0.0
    %9762 = vmatpush.msra.mxu0 0.0
    %9763 = vmatpush.msra.mxu0 0.0
    %9764 = vmatpush.msra.mxu0 0.0
    %9765 = vmatpush.msra.mxu0 0.0
    %9766 = vmatpush.msra.mxu0 0.0
    %9767 = vmatpush.msra.mxu0 0.0
    %9768 = vmatpush.msra.mxu0 0.0
    %9769 = vmatpush.msra.mxu0 %v9648
    %9770 = vmatpush.msra.mxu0 %v9647
    %9771 = vmatpush.msra.mxu0 %v9646
    %9772 = vmatpush.msra.mxu0 %v9645
    %9773 = vmatmul.f32.gmra.mxu0 %v9650
    %v9774 = vpop.f32.mrf.mxu0
    %9775 = vmatmul.f32.gmra.mxu0 %v9653
    %v9776 = vpop.f32.mrf.mxu0
    %9777 = vmatmul.f32.gmra.mxu0 %v9656
    %v9778 = vpop.f32.mrf.mxu0
    %9779 = vmatmul.f32.gmra.mxu0 %v9659
    %v9780 = vpop.f32.mrf.mxu0
    %9781 = vmatmul.f32.gmra.mxu0 %v9662
    %v9782 = vpop.f32.mrf.mxu0
    %9783 = vmatmul.f32.gmra.mxu0 %v9665
    %v9784 = vpop.f32.mrf.mxu0
    %9785 = vmatmul.f32.gmra.mxu0 %v9668
    %v9786 = vpop.f32.mrf.mxu0
    %9787 = vmatmul.f32.gmra.mxu0 %v9671
    %v9788 = vpop.f32.mrf.mxu0
    %v9789 = vadd.f32 0.0, %v9788
    %9790 = vmatmul.f32.gmra.mxu0 %v9674
    %v9791 = vpop.f32.mrf.mxu0
    %v9792 = vadd.f32 0.0, %v9791
    %9793 = vmatmul.f32.gmra.mxu0 %v9677
    %v9794 = vpop.f32.mrf.mxu0
    %v9795 = vadd.f32 0.0, %v9794
    %9796 = vmatmul.f32.gmra.mxu0 %v9680
    %v9797 = vpop.f32.mrf.mxu0
    %v9798 = vadd.f32 0.0, %v9797
    %9799 = vmatmul.f32.gmra.mxu0 %v9683
    %v9800 = vpop.f32.mrf.mxu0
    %9801 = vmatmul.f32.gmra.mxu0 %v9686
    %v9802 = vpop.f32.mrf.mxu0
    %9803 = vmatmul.f32.gmra.mxu0 %v9689
    %v9804 = vpop.f32.mrf.mxu0
    %v9805 = vadd.f32 0.0, %v9804
    %9806 = vmatmul.f32.gmra.mxu0 %v9692
    %v9807 = vpop.f32.mrf.mxu0
    %v9808 = vadd.f32 0.0, %v9807
    %9809 = vmatmul.f32.gmra.mxu0 %v9695
    %v9810 = vpop.f32.mrf.mxu0
    %v9811 = vadd.f32 0.0, %v9810
    %9812 = vmatmul.f32.gmra.mxu0 %v9698
    %v9813 = vpop.f32.mrf.mxu0
    %v9814 = vadd.f32 0.0, %v9813
    %9815 = vmatmul.f32.gmra.mxu0 %v9701
    %v9816 = vpop.f32.mrf.mxu0
    %9817 = vmatmul.f32.gmra.mxu0 %v9704
    %v9818 = vpop.f32.mrf.mxu0
    %9819 = vmatmul.f32.gmra.mxu0 %v9707
    %v9820 = vpop.f32.mrf.mxu0
    %v9821 = vadd.f32 0.0, %v9820
    %9822 = vmatmul.f32.gmra.mxu0 %v9710
    %v9823 = vpop.f32.mrf.mxu0
    %v9824 = vadd.f32 0.0, %v9823
    %9825 = vmatmul.f32.gmra.mxu0 %v9713
    %v9826 = vpop.f32.mrf.mxu0
    %v9827 = vadd.f32 0.0, %v9826
    %9828 = vmatmul.f32.gmra.mxu0 %v9716
    %v9829 = vpop.f32.mrf.mxu0
    %v9830 = vadd.f32 0.0, %v9829
    %9831 = vmatmul.f32.gmra.mxu0 %v9719
    %v9832 = vpop.f32.mrf.mxu0
    %9833 = vmatmul.f32.gmra.mxu0 %v9722
    %v9834 = vpop.f32.mrf.mxu0
    %9835 = vmatmul.f32.gmra.mxu0 %v9725
    %v9836 = vpop.f32.mrf.mxu0
    %v9837 = vadd.f32 0.0, %v9836
    %9838 = vmatmul.f32.gmra.mxu0 %v9728
    %v9839 = vpop.f32.mrf.mxu0
    %v9840 = vadd.f32 0.0, %v9839
    %9841 = vmatmul.f32.gmra.mxu0 %v9731
    %v9842 = vpop.f32.mrf.mxu0
    %v9843 = vadd.f32 0.0, %v9842
    %9844 = vmatmul.f32.gmra.mxu0 %v9734
    %v9845 = vpop.f32.mrf.mxu0
    %v9846 = vadd.f32 0.0, %v9845
    %9847 = vmatmul.f32.gmra.mxu0 %v9737
    %v9848 = vpop.f32.mrf.mxu0
    %9849 = vmatmul.f32.gmra.mxu0 %v9740
    %v9850 = vpop.f32.mrf.mxu0
    %9851 = vmatmul.f32.gmra.mxu0 %v9743
    %v9852 = vpop.f32.mrf.mxu0
    %9853 = vmatmul.f32.gmra.mxu0 %v9746
    %v9854 = vpop.f32.mrf.mxu0
    %9855 = vmatmul.f32.gmra.mxu0 %v9749
    %v9856 = vpop.f32.mrf.mxu0
    %9857 = vmatmul.f32.gmra.mxu0 %v9752
    %v9858 = vpop.f32.mrf.mxu0
    %9859 = vmatmul.f32.gmra.mxu0 %v9755
    %v9860 = vpop.f32.mrf.mxu0
    %9861 = vdwg.mxu0
    %v9862 = vadd.f32 %v9593, %v9789
    %v9863 = vadd.f32 %v9594, %v9792
    %v9864 = vadd.f32 %v9595, %v9795
    %v9865 = vadd.f32 %v9596, %v9798
    %v9866 = vadd.f32 %v9597, %v9805
    %v9867 = vadd.f32 %v9598, %v9808
    %v9868 = vadd.f32 %v9599, %v9811
    %v9869 = vadd.f32 %v9600, %v9814
    %v9870 = vadd.f32 %v9601, %v9821
    %v9871 = vadd.f32 %v9602, %v9824
    %v9872 = vadd.f32 %v9603, %v9827
    %v9873 = vadd.f32 %v9604, %v9830
    %v9874 = vadd.f32 %v9605, %v9837
    %v9875 = vadd.f32 %v9606, %v9840
    %v9876 = vadd.f32 %v9607, %v9843
    %v9877 = vadd.f32 %v9608, %v9846
    %v9878 = vld [vmem:[#allocation3 + $0x70] sm:$0xff]
    %v9879 = vld [vmem:[#allocation3 + $0x78] sm:$0xff]
    %v9880 = vld [vmem:[#allocation3 + $0x80] sm:$0xff]
    %v9881 = vld [vmem:[#allocation3 + $0x88] sm:$0xff]
    %v9882 = vld [vmem:[#allocation3 + $0x90] sm:$0xff]
    %v9883 = vld [vmem:[#allocation3 + $0x98] sm:$0xff]
    %v9884 = vld [vmem:[#allocation3 + $0xa0] sm:$0xff]
    %v9885 = vld [vmem:[#allocation3 + $0xa8] sm:$0xff]
    %v9886 = vld [vmem:[#allocation3 + $0xb0] sm:$0xff]
    %v9887 = vld [vmem:[#allocation3 + $0xb8] sm:$0xff]
    %v9888 = vld [vmem:[#allocation3 + $0xc0] sm:$0xff]
    %v9889 = vld [vmem:[#allocation3 + $0xc8] sm:$0xff]
    %v9890 = vld [vmem:[#allocation3 + $0xd0] sm:$0xff]
    %v9891 = vld [vmem:[#allocation3 + $0xd8] sm:$0xff]
    %v9892 = vld [vmem:[#allocation3 + $0xe0] sm:$0xff]
    %v9893 = vld [vmem:[#allocation3 + $0xe8] sm:$0xff]
    %v9894 = vld [vmem:[#allocation3 + $0xf0] sm:$0xff]
    %v9895 = vld [vmem:[#allocation3 + $0xf8] sm:$0xff]
    %v9896 = vld [vmem:[#allocation3 + $0x100] sm:$0xff]
    %v9897 = vld [vmem:[#allocation3 + $0x108] sm:$0xff]
    %v9898 = vld [vmem:[#allocation3 + $0x110] sm:$0xff]
    %v9899 = vld [vmem:[#allocation3 + $0x118] sm:$0xff]
    %v9900 = vld [vmem:[#allocation3 + $0x120] sm:$0xff]
    %v9901 = vld [vmem:[#allocation3 + $0x128] sm:$0xff]
    %v9902 = vld [vmem:[#allocation3 + $0x130] sm:$0xff]
    %v9903 = vld [vmem:[#allocation3 + $0x138] sm:$0xff]
    %v9904 = vld [vmem:[#allocation3 + $0x140] sm:$0xff]
    %v9905 = vld [vmem:[#allocation3 + $0x148] sm:$0xff]
    %v9906 = vld [vmem:[#allocation3 + $0x150] sm:$0xff]
    %v9907 = vld [vmem:[#allocation3 + $0x158] sm:$0xff]
    %v9908 = vld [vmem:[#allocation3 + $0x160] sm:$0xff]
    %v9909 = vld [vmem:[#allocation3 + $0x168] sm:$0xff]
    %v9910 = vld [vmem:[#allocation3 + $0x170] sm:$0xff]
    %v9911 = vld [vmem:[#allocation3 + $0x178] sm:$0xff]
    %v9912 = vld [vmem:[#allocation3 + $0x180] sm:$0xff]
    %v9913 = vld [vmem:[#allocation3 + $0x188] sm:$0xff]
    %v9914 = vld [vmem:[#allocation7 + $0x180] sm:$0xff]
    %v9915 = vld [vmem:[#allocation7 + $0x188] sm:$0xff]
    %v9917 = vsel %vm7763, %v9878, 0
    %v9920 = vsel %vm7763, %v9879, 0
    %v9923 = vsel %vm7763, %v9880, 0
    %v9926 = vsel %vm7763, %v9881, 0
    %v9929 = vsel %vm7763, %v9882, 0
    %v9932 = vsel %vm7763, %v9883, 0
    %v9935 = vsel %vm7763, %v9884, 0
    %v9938 = vsel %vm7763, %v9885, 0
    %v9941 = vsel %vm7763, %v9886, 0
    %v9944 = vsel %vm7763, %v9887, 0
    %v9947 = vsel %vm7763, %v9888, 0
    %v9950 = vsel %vm7763, %v9889, 0
    %v9953 = vsel %vm7763, %v9890, 0
    %v9956 = vsel %vm7763, %v9891, 0
    %v9959 = vsel %vm7763, %v9892, 0
    %v9962 = vsel %vm7763, %v9893, 0
    %v9965 = vsel %vm7763, %v9894, 0
    %v9968 = vsel %vm7763, %v9895, 0
    %v9971 = vsel %vm7763, %v9896, 0
    %v9974 = vsel %vm7763, %v9897, 0
    %v9977 = vsel %vm7763, %v9898, 0
    %v9980 = vsel %vm7763, %v9899, 0
    %v9983 = vsel %vm7763, %v9900, 0
    %v9986 = vsel %vm7763, %v9901, 0
    %v9989 = vsel %vm7763, %v9902, 0
    %v9992 = vsel %vm7763, %v9903, 0
    %v9995 = vsel %vm7763, %v9904, 0
    %v9998 = vsel %vm7763, %v9905, 0
    %v10001 = vsel %vm7763, %v9906, 0
    %v10004 = vsel %vm7763, %v9907, 0
    %v10007 = vsel %vm7763, %v9908, 0
    %v10010 = vsel %vm7763, %v9909, 0
    %v10013 = vsel %vm7763, %v9910, 0
    %v10016 = vsel %vm7763, %v9911, 0
    %v10019 = vsel %vm7763, %v9912, 0
    %v10022 = vsel %vm7763, %v9913, 0
    %10024 = vmatpush.msra.mxu0 0.0
    %10025 = vmatpush.msra.mxu0 0.0
    %10026 = vmatpush.msra.mxu0 0.0
    %10027 = vmatpush.msra.mxu0 0.0
    %10028 = vmatpush.msra.mxu0 0.0
    %10029 = vmatpush.msra.mxu0 0.0
    %10030 = vmatpush.msra.mxu0 0.0
    %10031 = vmatpush.msra.mxu0 0.0
    %10032 = vmatpush.msra.mxu0 0.0
    %10033 = vmatpush.msra.mxu0 0.0
    %10034 = vmatpush.msra.mxu0 0.0
    %10035 = vmatpush.msra.mxu0 0.0
    %10036 = vmatpush.msra.mxu0 0.0
    %10037 = vmatpush.msra.mxu0 0.0
    %10038 = vmatpush.msra.mxu0 %v9915
    %10039 = vmatpush.msra.mxu0 %v9914
    %10040 = vmatmul.f32.gmra.mxu0 %v9917
    %v10041 = vpop.f32.mrf.mxu0
    %10042 = vmatmul.f32.gmra.mxu0 %v9920
    %v10043 = vpop.f32.mrf.mxu0
    %10044 = vmatmul.f32.gmra.mxu0 %v9923
    %v10045 = vpop.f32.mrf.mxu0
    %10046 = vmatmul.f32.gmra.mxu0 %v9926
    %v10047 = vpop.f32.mrf.mxu0
    %10048 = vmatmul.f32.gmra.mxu0 %v9929
    %v10049 = vpop.f32.mrf.mxu0
    %10050 = vmatmul.f32.gmra.mxu0 %v9932
    %v10051 = vpop.f32.mrf.mxu0
    %10052 = vmatmul.f32.gmra.mxu0 %v9935
    %v10053 = vpop.f32.mrf.mxu0
    %10054 = vmatmul.f32.gmra.mxu0 %v9938
    %v10055 = vpop.f32.mrf.mxu0
    %v10056 = vadd.f32 0.0, %v10055
    %10057 = vmatmul.f32.gmra.mxu0 %v9941
    %v10058 = vpop.f32.mrf.mxu0
    %v10059 = vadd.f32 0.0, %v10058
    %10060 = vmatmul.f32.gmra.mxu0 %v9944
    %v10061 = vpop.f32.mrf.mxu0
    %v10062 = vadd.f32 0.0, %v10061
    %10063 = vmatmul.f32.gmra.mxu0 %v9947
    %v10064 = vpop.f32.mrf.mxu0
    %v10065 = vadd.f32 0.0, %v10064
    %10066 = vmatmul.f32.gmra.mxu0 %v9950
    %v10067 = vpop.f32.mrf.mxu0
    %10068 = vmatmul.f32.gmra.mxu0 %v9953
    %v10069 = vpop.f32.mrf.mxu0
    %10070 = vmatmul.f32.gmra.mxu0 %v9956
    %v10071 = vpop.f32.mrf.mxu0
    %v10072 = vadd.f32 0.0, %v10071
    %10073 = vmatmul.f32.gmra.mxu0 %v9959
    %v10074 = vpop.f32.mrf.mxu0
    %v10075 = vadd.f32 0.0, %v10074
    %10076 = vmatmul.f32.gmra.mxu0 %v9962
    %v10077 = vpop.f32.mrf.mxu0
    %v10078 = vadd.f32 0.0, %v10077
    %10079 = vmatmul.f32.gmra.mxu0 %v9965
    %v10080 = vpop.f32.mrf.mxu0
    %v10081 = vadd.f32 0.0, %v10080
    %10082 = vmatmul.f32.gmra.mxu0 %v9968
    %v10083 = vpop.f32.mrf.mxu0
    %10084 = vmatmul.f32.gmra.mxu0 %v9971
    %v10085 = vpop.f32.mrf.mxu0
    %10086 = vmatmul.f32.gmra.mxu0 %v9974
    %v10087 = vpop.f32.mrf.mxu0
    %v10088 = vadd.f32 0.0, %v10087
    %10089 = vmatmul.f32.gmra.mxu0 %v9977
    %v10090 = vpop.f32.mrf.mxu0
    %v10091 = vadd.f32 0.0, %v10090
    %10092 = vmatmul.f32.gmra.mxu0 %v9980
    %v10093 = vpop.f32.mrf.mxu0
    %v10094 = vadd.f32 0.0, %v10093
    %10095 = vmatmul.f32.gmra.mxu0 %v9983
    %v10096 = vpop.f32.mrf.mxu0
    %v10097 = vadd.f32 0.0, %v10096
    %10098 = vmatmul.f32.gmra.mxu0 %v9986
    %v10099 = vpop.f32.mrf.mxu0
    %10100 = vmatmul.f32.gmra.mxu0 %v9989
    %v10101 = vpop.f32.mrf.mxu0
    %10102 = vmatmul.f32.gmra.mxu0 %v9992
    %v10103 = vpop.f32.mrf.mxu0
    %v10104 = vadd.f32 0.0, %v10103
    %10105 = vmatmul.f32.gmra.mxu0 %v9995
    %v10106 = vpop.f32.mrf.mxu0
    %v10107 = vadd.f32 0.0, %v10106
    %10108 = vmatmul.f32.gmra.mxu0 %v9998
    %v10109 = vpop.f32.mrf.mxu0
    %v10110 = vadd.f32 0.0, %v10109
    %10111 = vmatmul.f32.gmra.mxu0 %v10001
    %v10112 = vpop.f32.mrf.mxu0
    %v10113 = vadd.f32 0.0, %v10112
    %10114 = vmatmul.f32.gmra.mxu0 %v10004
    %v10115 = vpop.f32.mrf.mxu0
    %10116 = vmatmul.f32.gmra.mxu0 %v10007
    %v10117 = vpop.f32.mrf.mxu0
    %10118 = vmatmul.f32.gmra.mxu0 %v10010
    %v10119 = vpop.f32.mrf.mxu0
    %10120 = vmatmul.f32.gmra.mxu0 %v10013
    %v10121 = vpop.f32.mrf.mxu0
    %10122 = vmatmul.f32.gmra.mxu0 %v10016
    %v10123 = vpop.f32.mrf.mxu0
    %10124 = vmatmul.f32.gmra.mxu0 %v10019
    %v10125 = vpop.f32.mrf.mxu0
    %10126 = vmatmul.f32.gmra.mxu0 %v10022
    %v10127 = vpop.f32.mrf.mxu0
    %10128 = vdwg.mxu0
    %v10129 = vadd.f32 %v9862, %v10056
    %v10130 = vadd.f32 %v9863, %v10059
    %v10131 = vadd.f32 %v9864, %v10062
    %v10132 = vadd.f32 %v9865, %v10065
    %v10133 = vadd.f32 %v9866, %v10072
    %v10134 = vadd.f32 %v9867, %v10075
    %v10135 = vadd.f32 %v9868, %v10078
    %v10136 = vadd.f32 %v9869, %v10081
    %v10137 = vadd.f32 %v9870, %v10088
    %v10138 = vadd.f32 %v9871, %v10091
    %v10139 = vadd.f32 %v9872, %v10094
    %v10140 = vadd.f32 %v9873, %v10097
    %v10141 = vadd.f32 %v9874, %v10104
    %v10142 = vadd.f32 %v9875, %v10107
    %v10143 = vadd.f32 %v9876, %v10110
    %v10144 = vadd.f32 %v9877, %v10113
    %v10145 = vld [vmem:[#allocation7 + $0x220] sm:$0x1]
    %v10146 = vperm.slane %v10145, 0
    %v10147 = vadd.f32 %v10129, %v10146
    %v10148 = vadd.f32 %v10130, %v10146
    %v10149 = vadd.f32 %v10131, %v10146
    %v10150 = vadd.f32 %v10132, %v10146
    %v10151 = vadd.f32 %v10133, %v10146
    %v10152 = vadd.f32 %v10134, %v10146
    %v10153 = vadd.f32 %v10135, %v10146
    %v10154 = vadd.f32 %v10136, %v10146
    %v10155 = vadd.f32 %v10137, %v10146
    %v10156 = vadd.f32 %v10138, %v10146
    %v10157 = vadd.f32 %v10139, %v10146
    %v10158 = vadd.f32 %v10140, %v10146
    %v10159 = vadd.f32 %v10141, %v10146
    %v10160 = vadd.f32 %v10142, %v10146
    %v10161 = vadd.f32 %v10143, %v10146
    %v10162 = vadd.f32 %v10144, %v10146
    %v10163 = vmax.f32 %v10147, 0.0
    %v10164 = vmax.f32 %v10148, 0.0
    %v10165 = vmax.f32 %v10149, 0.0
    %v10166 = vmax.f32 %v10150, 0.0
    %v10167 = vmax.f32 %v10151, 0.0
    %v10168 = vmax.f32 %v10152, 0.0
    %v10169 = vmax.f32 %v10153, 0.0
    %v10170 = vmax.f32 %v10154, 0.0
    %v10171 = vmax.f32 %v10155, 0.0
    %v10172 = vmax.f32 %v10156, 0.0
    %v10173 = vmax.f32 %v10157, 0.0
    %v10174 = vmax.f32 %v10158, 0.0
    %v10175 = vmax.f32 %v10159, 0.0
    %v10176 = vmax.f32 %v10160, 0.0
    %v10177 = vmax.f32 %v10161, 0.0
    %v10178 = vmax.f32 %v10162, 0.0
    %v10179 = vmul.f32 %v10163, %v7122
    %v10180 = vmul.f32 %v10164, %v7127
    %v10181 = vmul.f32 %v10165, %v7132
    %v10182 = vmul.f32 %v10166, %v7137
    %v10183 = vmul.f32 %v10167, %v7152
    %v10184 = vmul.f32 %v10168, %v7157
    %v10185 = vmul.f32 %v10169, %v7162
    %v10186 = vmul.f32 %v10170, %v7167
    %v10187 = vmul.f32 %v10171, %v7182
    %v10188 = vmul.f32 %v10172, %v7187
    %v10189 = vmul.f32 %v10173, %v7192
    %v10190 = vmul.f32 %v10174, %v7197
    %v10191 = vmul.f32 %v10175, %v7212
    %v10192 = vmul.f32 %v10176, %v7217
    %v10193 = vmul.f32 %v10177, %v7222
    %v10194 = vmul.f32 %v10178, %v7227
    %vm10195 = vcmask 64512
    %10196 = vst.msk [vmem:[#allocation4] sm:$0xff] %vm10195, %v10179
    %10198 = vrot.lane.b32.xlu0 %v10180, 8
    %v10199 = vpop.permute.xlu0 %10198
    %vm10201 = vcmask 130112
    %10202 = vst.msk [vmem:[#allocation4] sm:$0xff] %vm10201, %v10199
    %10204 = vrot.lane.b32.xlu0 %v10181, 16
    %v10205 = vpop.permute.xlu0 %10204
    %vm10207 = vcmask 195712
    %10208 = vst.msk [vmem:[#allocation4] sm:$0xff] %vm10207, %v10205
    %10210 = vrot.lane.b32.xlu0 %v10182, 24
    %v10211 = vpop.permute.xlu0 %10210
    %vm10213 = vcmask 261312
    %10214 = vst.msk [vmem:[#allocation4] sm:$0xff] %vm10213, %v10211
    %10216 = vrot.lane.b32.xlu0 %v10183, 32
    %v10217 = vpop.permute.xlu0 %10216
    %vm10219 = vcmask 326912
    %10220 = vst.msk [vmem:[#allocation4] sm:$0xff] %vm10219, %v10217
    %10222 = vrot.lane.b32.xlu0 %v10184, 40
    %v10223 = vpop.permute.xlu0 %10222
    %vm10225 = vcmask 392512
    %10226 = vst.msk [vmem:[#allocation4] sm:$0xff] %vm10225, %v10223
    %10228 = vrot.lane.b32.xlu0 %v10185, 48
    %v10229 = vpop.permute.xlu0 %10228
    %vm10231 = vcmask 458112
    %10232 = vst.msk [vmem:[#allocation4] sm:$0xff] %vm10231, %v10229
    %10234 = vrot.lane.b32.xlu0 %v10186, 56
    %v10235 = vpop.permute.xlu0 %10234
    %vm10237 = vcmask 523712
    %10238 = vst.msk [vmem:[#allocation4] sm:$0xff] %vm10237, %v10235
    %10240 = vrot.lane.b32.xlu0 %v10187, 64
    %v10241 = vpop.permute.xlu0 %10240
    %vm10243 = vcmask 589312
    %10244 = vst.msk [vmem:[#allocation4] sm:$0xff] %vm10243, %v10241
    %10246 = vrot.lane.b32.xlu0 %v10188, 72
    %v10247 = vpop.permute.xlu0 %10246
    %vm10249 = vcmask 654912
    %10250 = vst.msk [vmem:[#allocation4] sm:$0xff] %vm10249, %v10247
    %10252 = vrot.lane.b32.xlu0 %v10189, 80
    %v10253 = vpop.permute.xlu0 %10252
    %vm10255 = vcmask 720512
    %10256 = vst.msk [vmem:[#allocation4] sm:$0xff] %vm10255, %v10253
    %10258 = vrot.lane.b32.xlu0 %v10190, 88
    %v10259 = vpop.permute.xlu0 %10258
    %vm10261 = vcmask 786112
    %10262 = vst.msk [vmem:[#allocation4] sm:$0xff] %vm10261, %v10259
    %10264 = vrot.lane.b32.xlu0 %v10191, 96
    %v10265 = vpop.permute.xlu0 %10264
    %vm10267 = vcmask 851712
    %10268 = vst.msk [vmem:[#allocation4] sm:$0xff] %vm10267, %v10265
    %10270 = vrot.lane.b32.xlu0 %v10192, 104
    %v10271 = vpop.permute.xlu0 %10270
    %vm10273 = vcmask 917312
    %10274 = vst.msk [vmem:[#allocation4] sm:$0xff] %vm10273, %v10271
    %10276 = vrot.lane.b32.xlu0 %v10193, 112
    %v10277 = vpop.permute.xlu0 %10276
    %vm10279 = vcmask 982912
    %10280 = vst.msk [vmem:[#allocation4] sm:$0xff] %vm10279, %v10277
    %10282 = vrot.lane.b32.xlu0 %v10194, 120
    %v10283 = vpop.permute.xlu0 %10282
    %vm10285 = vcmask 1048512
    %10286 = vst.msk [vmem:[#allocation4] sm:$0xff] %vm10285, %v10283
    %v10287 = vld [vmem:[#allocation7 + $0x190] sm:$0xff]
    %v10288 = vld [vmem:[#allocation7 + $0x198] sm:$0xff]
    %v10289 = vld [vmem:[#allocation7 + $0x1a0] sm:$0xff]
    %v10290 = vld [vmem:[#allocation7 + $0x1a8] sm:$0xff]
    %v10291 = vld [vmem:[#allocation7 + $0x1b0] sm:$0xff]
    %v10292 = vld [vmem:[#allocation7 + $0x1b8] sm:$0xff]
    %v10293 = vld [vmem:[#allocation7 + $0x1c0] sm:$0xff]
    %v10294 = vld [vmem:[#allocation7 + $0x1c8] sm:$0xff]
    %v10295 = vld [vmem:[#allocation7 + $0x1d0] sm:$0xff]
    %v10296 = vld [vmem:[#allocation7 + $0x1d8] sm:$0xff]
    %v10297 = vld [vmem:[#allocation7 + $0x1e0] sm:$0xff]
    %v10298 = vld [vmem:[#allocation7 + $0x1e8] sm:$0xff]
    %v10299 = vld [vmem:[#allocation7 + $0x1f0] sm:$0xff]
    %v10300 = vld [vmem:[#allocation7 + $0x1f8] sm:$0xff]
    %v10301 = vld [vmem:[#allocation7 + $0x200] sm:$0xff]
    %v10302 = vld [vmem:[#allocation7 + $0x208] sm:$0xff]
    %v10303 = vld [vmem:[#allocation7 + $0x228] sm:$0x1]
    %v10304 = vld [vmem:[#allocation4] sm:$0xff]
    %v10305 = vperm.slane %v10303, 0
    %10306 = vmatpush.msra.mxu0 %v10302
    %10307 = vmatpush.msra.mxu0 %v10301
    %10308 = vmatpush.msra.mxu0 %v10300
    %10309 = vmatpush.msra.mxu0 %v10299
    %10310 = vmatpush.msra.mxu0 %v10298
    %10311 = vmatpush.msra.mxu0 %v10297
    %10312 = vmatpush.msra.mxu0 %v10296
    %10313 = vmatpush.msra.mxu0 %v10295
    %10314 = vmatpush.msra.mxu0 %v10294
    %10315 = vmatpush.msra.mxu0 %v10293
    %10316 = vmatpush.msra.mxu0 %v10292
    %10317 = vmatpush.msra.mxu0 %v10291
    %10318 = vmatpush.msra.mxu0 %v10290
    %10319 = vmatpush.msra.mxu0 %v10289
    %10320 = vmatpush.msra.mxu0 %v10288
    %10321 = vmatpush.msra.mxu0 %v10287
    %10322 = vmatmul.f32.gmra.mxu0 %v10304
    %v10323 = vpop.f32.mrf.mxu0
    %v10324 = vadd.f32 %v10305, %v10323
    %10325 = vdwg.mxu0
    %v10326 = vmax.f32 %v10324, 0.0
    %v10327 = vld [vmem:[#allocation7 + $0x210] sm:$0xf]
    %v10328 = vld [vmem:[#allocation7 + $0x230] sm:$0x1]
    %v10329 = vperm.slane %v10328, 0
    %vm10330 = vcmask 31744
    %v10332 = vsel %vm10330, %v10326, 0
    %vm10334 = vcmask 1043456
    %v10336 = vsel %vm10334, %v10327, 0
    %10338 = vmatpush.msra.mxu0 0.0
    %10339 = vmatpush.msra.mxu0 0.0
    %10340 = vmatpush.msra.mxu0 0.0
    %10341 = vmatpush.msra.mxu0 0.0
    %10342 = vmatpush.msra.mxu0 0.0
    %10343 = vmatpush.msra.mxu0 0.0
    %10344 = vmatpush.msra.mxu0 0.0
    %10345 = vmatpush.msra.mxu0 0.0
    %10346 = vmatpush.msra.mxu0 0.0
    %10347 = vmatpush.msra.mxu0 0.0
    %10348 = vmatpush.msra.mxu0 0.0
    %10349 = vmatpush.msra.mxu0 0.0
    %10350 = vmatpush.msra.mxu0 0.0
    %10351 = vmatpush.msra.mxu0 0.0
    %10352 = vmatpush.msra.mxu0 0.0
    %10353 = vmatpush.msra.mxu0 %v10336
    %10354 = vmatmul.f32.gmra.mxu0 %v10332
    %v10355 = vpop.f32.mrf.mxu0
    %v10356 = vadd.f32 %v10329, %v10355
    %10357 = vdwg.mxu0
    %10358 = vst.msk [vmem:[%s4] sm:$0xff] %vm10195, %v10356
    // Predicated region
    $region26: #{forward.1} parent=1 // pred_check
      _
    $region27: #{forward.1} parent=1 // pred_check_branch
      %10360 = sbr.rel (0) target = $region29
    $region28: #{forward.1} parent=1 // pred_region
      _
    $region29: #{forward.1} parent=1 // pred_fallthru
      _
    // Predicated region
    $region30: #{forward.1} parent=1 // pred_check
      _
    $region31: #{forward.1} parent=1 // pred_check_branch
      %10362 = sbr.rel (0) target = $region33
    $region32: #{forward.1} parent=1 // pred_region
      _
    $region33: #{forward.1} parent=1 // pred_fallthru
      _
    %10363 = vsyncpa [#allocation6], 1
    %10364 = vsyncpa [#allocation8], 1

</llo_original>
